<compile_context>
chip_gen: v5e
topology: v5e:2x2
jax: 0.10.0
libtpu: 0.0.40
codegen_flags: <defaults>
</compile_context>

<pallas_src>
import math
import functools

import jax
import jax.numpy as jnp
from jax.experimental import pallas as pl
from jax.experimental.pallas import tpu as pltpu

# ----------------------- small, module-consistent config -----------------------
NUM_CLASSES = 5
D_MODEL = 32
NHEAD = 2
DH = D_MODEL // NHEAD
DIM_FF = 64
NUM_LAYERS = 3
CHANNELS = 3
HEIGHT = WIDTH = 32          # backbone downsamples by 32 -> 1x1 spatial feature map
FEAT_CH = 512                # resnet18 final channel count
PATCH = 32                   # total downsample factor of the backbone
MAX_LEN = 500
BATCH = 2
FRAMES = 8
LN_EPS = 1e-5
ATTN_SCALE = 1.0 / math.sqrt(DH)
CLS_PAD = 128                # lane-dense classifier width (sliced back to NUM_CLASSES)
NEG_INF = -1e30


def _resident_spec(shape):
    """Whole-array VMEM block with a constant index map (resident across the batch grid)."""
    zeros = (0,) * len(shape)
    return pl.BlockSpec(tuple(shape), lambda b: zeros)


def _layernorm(z, g, b):
    mu = jnp.mean(z, axis=-1, keepdims=True)
    var = jnp.mean((z - mu) ** 2, axis=-1, keepdims=True)
    return (z - mu) * jax.lax.rsqrt(var + LN_EPS) * g + b


# --------- ONE fused kernel: backbone conv + proj + PE + 3 encoder layers + -----
# ---------                    mean pool + classifier + log_softmax          -----
def _fused_forward_kernel(patch_ref, mask_ref,
                          pe_ref, convw_ref, convb_ref, pw_ref, pb_ref,
                          wqkv_ref, bqkv_ref, wo_ref, bo_ref,
                          w1_ref, b1_ref, w2_ref, b2_ref,
                          ln1g_ref, ln1b_ref, ln2g_ref, ln2b_ref,
                          cw_ref, cb_ref, out_ref, *, use_trans):
    # One batch element per grid step.
    # --- backbone stand-in: patchify conv as a single bf16 matmul, f32 accumulate ---
    feat = jnp.dot(patch_ref[...], convw_ref[...],
                   preferred_element_type=jnp.float32) + convb_ref[...]        # (F, 512)

    # --- proj: Linear(feat_dim, d_model) ---
    x = jnp.dot(feat.astype(jnp.bfloat16), pw_ref[...],
                preferred_element_type=jnp.float32) + pb_ref[...]              # (F, E)

    if use_trans:
        x = x + pe_ref[...]                      # positional encoding (dropout = eval identity)
        mask = mask_ref[...]                     # (1, F) additive key-padding mask

        for l in range(NUM_LAYERS):              # static unroll, all weights VMEM-resident
            xb = x.astype(jnp.bfloat16)
            # fused QKV projection: one (F, E) @ (E, 3E) MXU pass
            qkv = jnp.dot(xb, wqkv_ref[l], preferred_element_type=jnp.float32) + bqkv_ref[l]
            # head-batched tensors (NHEAD, F, DH) built from static lane slices
            q = (jnp.stack([qkv[:, h * DH:(h + 1) * DH] for h in range(NHEAD)], axis=0)
                 * ATTN_SCALE).astype(jnp.bfloat16)
            k = jnp.stack([qkv[:, D_MODEL + h * DH:D_MODEL + (h + 1) * DH]
                           for h in range(NHEAD)], axis=0).astype(jnp.bfloat16)
            v = jnp.stack([qkv[:, 2 * D_MODEL + h * DH:2 * D_MODEL + (h + 1) * DH]
                           for h in range(NHEAD)], axis=0).astype(jnp.bfloat16)
            # scores (H, F, F), batched over heads; f32 softmax with exact divide
            s = jnp.einsum("hqd,hkd->hqk", q, k, preferred_element_type=jnp.float32)
            s = s + mask
            s = s - jnp.max(s, axis=-1, keepdims=True)
            p = jnp.exp(s)
            p = p / jnp.sum(p, axis=-1, keepdims=True)
            o = jnp.einsum("hqk,hkd->hqd", p.astype(jnp.bfloat16), v,
                           preferred_element_type=jnp.float32)                 # (H, F, DH)
            # output projection with head-split Wo: concat(heads) @ Wo == sum_h o_h @ Wo_h
            proj_h = jnp.einsum("hqd,hde->hqe", o.astype(jnp.bfloat16), wo_ref[l],
                                preferred_element_type=jnp.float32)            # (H, F, E)
            attn = bo_ref[l] + proj_h[0]
            for h in range(1, NHEAD):
                attn = attn + proj_h[h]
            # post-norm residual blocks (nn.TransformerEncoderLayer default, relu FFN)
            x = _layernorm(x + attn, ln1g_ref[l], ln1b_ref[l])
            hmid = jnp.maximum(
                jnp.dot(x.astype(jnp.bfloat16), w1_ref[l],
                        preferred_element_type=jnp.float32) + b1_ref[l], 0.0)
            ff = jnp.dot(hmid.astype(jnp.bfloat16), w2_ref[l],
                         preferred_element_type=jnp.float32) + b2_ref[l]
            x = _layernorm(x + ff, ln2g_ref[l], ln2b_ref[l])

    # mean over sequence (useTrans) / frames (not useTrans): same unmasked mean
    xm = jnp.mean(x, axis=0, keepdims=True)                                    # (1, E)
    # classifier_vid (padded to 128 lanes; pad logits = -1e30) + LogSoftmax(-1)
    logits = jnp.dot(xm.astype(jnp.bfloat16), cw_ref[...],
                     preferred_element_type=jnp.float32) + cb_ref[...]         # (1, 128)
    z = logits - jnp.max(logits, axis=-1, keepdims=True)
    lse = jnp.log(jnp.sum(jnp.exp(z), axis=-1, keepdims=True))
    out_ref[...] = z - lse


# ------------------------------ full forward pass --------------------------------
def mynet_video_forward(vid, src_key_padding_mask_vid, params, use_trans=True):
    """MyNet.forward, mode='video'. vid: (B, F, C, H, W) -> (B, num_classes) log-probs."""
    bsz, frames, ch, hh, ww = vid.shape
    hp, wp = hh // PATCH, ww // PATCH
    assert hp == 1 and wp == 1, "backbone stand-in assumes a 1x1 spatial feature map"

    # per-batch patchify (stride = kernel = PATCH), C-major flatten like im2col
    patches = (
        vid.astype(jnp.float32)
        .reshape(bsz, frames, ch, hp, PATCH, wp, PATCH)
        .transpose(0, 1, 3, 5, 2, 4, 6)
        .reshape(bsz, frames * hp * wp, ch * PATCH * PATCH)
        .astype(jnp.bfloat16)
    )
    # additive key-padding mask (True = padded -> -inf on keys)
    mask_add = jnp.where(src_key_padding_mask_vid, NEG_INF, 0.0).astype(jnp.float32)[:, None, :]
    pe_f = params["pe"][:frames]                                               # (F, E)

    weight_args = (
        pe_f, params["conv_w"], params["conv_b"],
        params["proj_w"], params["proj_b"],
        params["wqkv"], params["bqkv"], params["wo"], params["bo"],
        params["w1"], params["b1"], params["w2"], params["b2"],
        params["ln1_g"], params["ln1_b"], params["ln2_g"], params["ln2_b"],
        params["cls_w"], params["cls_b"],
    )
    out = pl.pallas_call(
        functools.partial(_fused_forward_kernel, use_trans=use_trans),
        out_shape=jax.ShapeDtypeStruct((bsz, 1, CLS_PAD), jnp.float32),
        grid=(bsz,),
        in_specs=[
            pl.BlockSpec((None, frames * hp * wp, ch * PATCH * PATCH),
                         lambda b: (b, 0, 0)),                        # per-batch patches
            pl.BlockSpec((None, 1, frames), lambda b: (b, 0, 0)),     # per-batch key mask
        ] + [_resident_spec(a.shape) for a in weight_args],           # resident weights
        out_specs=pl.BlockSpec((None, 1, CLS_PAD), lambda b: (b, 0, 0)),
        compiler_params=pltpu.CompilerParams(dimension_semantics=("parallel",)),
    )(patches, mask_add, *weight_args)
    return out.reshape(bsz, CLS_PAD)[:, :NUM_CLASSES]


# ------------------------------ parameter init ----------------------------------
def init_params(key):
    def w(k, shape, scale=0.02, dtype=jnp.bfloat16):
        return (scale * jax.random.normal(k, shape)).astype(dtype)

    keys = jax.random.split(key, 4 + NUM_LAYERS)
    hp, wp = HEIGHT // PATCH, WIDTH // PATCH
    feat_dim = FEAT_CH * hp * wp

    # classifier padded to 128 lanes: zero weights / -1e30 bias beyond NUM_CLASSES so
    # the in-kernel log_softmax over 128 lanes is exact for the real 5 classes.
    cls_w = jnp.zeros((D_MODEL, CLS_PAD), jnp.float32).at[:, :NUM_CLASSES].set(
        0.02 * jax.random.normal(keys[2], (D_MODEL, NUM_CLASSES)))
    cls_b = jnp.full((1, CLS_PAD), NEG_INF, jnp.float32).at[:, :NUM_CLASSES].set(0.0)

    params = {
        # backbone stand-in (patchify conv reshaped to a matmul weight), bf16 operands
        "conv_w": w(keys[0], (CHANNELS * PATCH * PATCH, FEAT_CH)),
        "conv_b": jnp.zeros((1, FEAT_CH), jnp.float32),
        # proj: Linear(512 * ceil(H/32) * ceil(W/32), d_model)
        "proj_w": w(keys[1], (feat_dim, D_MODEL)),
        "proj_b": jnp.zeros((1, D_MODEL), jnp.float32),
        # classifier_vid (lane-padded)
        "cls_w": cls_w.astype(jnp.bfloat16),
        "cls_b": cls_b,
    }

    # PositionalEncoding buffer (max_len=500)
    position = jnp.arange(MAX_LEN, dtype=jnp.float32)[:, None]
    div_term = jnp.exp(
        jnp.arange(0, D_MODEL, 2, dtype=jnp.float32) * (-math.log(10000.0) / D_MODEL))
    pe = jnp.zeros((MAX_LEN, D_MODEL), jnp.float32)
    pe = pe.at[:, 0::2].set(jnp.sin(position * div_term))
    pe = pe.at[:, 1::2].set(jnp.cos(position * div_term))
    params["pe"] = pe                                                        # (MAX_LEN, E)

    wqkv, bqkv, wo, bo, w1, b1, w2, b2 = [], [], [], [], [], [], [], []
    for li in range(NUM_LAYERS):
        lk = jax.random.split(keys[4 + li], 6)
        wqkv.append(jnp.concatenate(
            [w(lk[0], (D_MODEL, D_MODEL)),
             w(lk[1], (D_MODEL, D_MODEL)),
             w(lk[2], (D_MODEL, D_MODEL))], axis=1))                          # (E, 3E) fused QKV
        bqkv.append(jnp.zeros((1, 3 * D_MODEL), jnp.float32))
        # output projection stored head-split (NHEAD, DH, E) for the batched einsum
        wo.append(w(lk[3], (D_MODEL, D_MODEL)).reshape(NHEAD, DH, D_MODEL))
        bo.append(jnp.zeros((1, D_MODEL), jnp.float32))
        w1.append(w(lk[4], (D_MODEL, DIM_FF)))
        b1.append(jnp.zeros((1, DIM_FF), jnp.float32))
        w2.append(w(lk[5], (DIM_FF, D_MODEL)))
        b2.append(jnp.zeros((1, D_MODEL), jnp.float32))

    params.update({
        "wqkv": jnp.stack(wqkv), "bqkv": jnp.stack(bqkv),
        "wo": jnp.stack(wo), "bo": jnp.stack(bo),
        "w1": jnp.stack(w1), "b1": jnp.stack(b1),
        "w2": jnp.stack(w2), "b2": jnp.stack(b2),
        "ln1_g": jnp.ones((NUM_LAYERS, 1, D_MODEL), jnp.float32),
        "ln1_b": jnp.zeros((NUM_LAYERS, 1, D_MODEL), jnp.float32),
        "ln2_g": jnp.ones((NUM_LAYERS, 1, D_MODEL), jnp.float32),
        "ln2_b": jnp.zeros((NUM_LAYERS, 1, D_MODEL), jnp.float32),
    })
    return params


# ----------------------------------- main ---------------------------------------
if __name__ == "__main__":
    key = jax.random.PRNGKey(0)
    k_param, k_vid = jax.random.split(key)

    params = init_params(k_param)

    vid = jax.random.normal(k_vid, (BATCH, FRAMES, CHANNELS, HEIGHT, WIDTH), jnp.float32)
    # key-padding mask: True = padded frame (last two frames of sample 1 padded)
    pad_mask = jnp.zeros((BATCH, FRAMES), dtype=bool).at[1, FRAMES - 2:].set(True)

    fwd = jax.jit(functools.partial(mynet_video_forward, use_trans=True))
    out = jax.block_until_ready(fwd(vid, pad_mask, params))
    assert out.shape == (BATCH, NUM_CLASSES)
    assert bool(jnp.all(jnp.isfinite(out)))

    fwd_nt = jax.jit(functools.partial(mynet_video_forward, use_trans=False))
    out_nt = jax.block_until_ready(fwd_nt(vid, pad_mask, params))
    assert out_nt.shape == (BATCH, NUM_CLASSES)
    assert bool(jnp.all(jnp.isfinite(out_nt)))

    print("KERNEL_OK")
</pallas_src>

<mosaic_0001>
module attributes {stable_mosaic.version = 11 : i64} {
  func.func @_fused_forward_kernel(%arg0: i32, %arg1: memref<1x8x3072xbf16, #tpu.memory_space<vmem>>, %arg2: memref<1x1x8xf32, #tpu.memory_space<vmem>>, %arg3: memref<8x32xf32, #tpu.memory_space<vmem>>, %arg4: memref<3072x512xbf16, #tpu.memory_space<vmem>>, %arg5: memref<1x512xf32, #tpu.memory_space<vmem>>, %arg6: memref<512x32xbf16, #tpu.memory_space<vmem>>, %arg7: memref<1x32xf32, #tpu.memory_space<vmem>>, %arg8: memref<3x32x96xbf16, #tpu.memory_space<vmem>>, %arg9: memref<3x1x96xf32, #tpu.memory_space<vmem>>, %arg10: memref<3x2x16x32xbf16, #tpu.memory_space<vmem>>, %arg11: memref<3x1x32xf32, #tpu.memory_space<vmem>>, %arg12: memref<3x32x64xbf16, #tpu.memory_space<vmem>>, %arg13: memref<3x1x64xf32, #tpu.memory_space<vmem>>, %arg14: memref<3x64x32xbf16, #tpu.memory_space<vmem>>, %arg15: memref<3x1x32xf32, #tpu.memory_space<vmem>>, %arg16: memref<3x1x32xf32, #tpu.memory_space<vmem>>, %arg17: memref<3x1x32xf32, #tpu.memory_space<vmem>>, %arg18: memref<3x1x32xf32, #tpu.memory_space<vmem>>, %arg19: memref<3x1x32xf32, #tpu.memory_space<vmem>>, %arg20: memref<32x128xbf16, #tpu.memory_space<vmem>>, %arg21: memref<1x128xf32, #tpu.memory_space<vmem>>, %arg22: memref<1x1x128xf32, #tpu.memory_space<vmem>>) attributes {dimension_semantics = [#tpu.dimension_semantics<parallel>], iteration_bounds = array<i64: 2>, scalar_prefetch = 0 : i64, scratch_operands = 0 : i64, tpu.core_type = #tpu.core_type<tc>, window_params = [{transform_indices = @transform_0, window_bounds = array<i64: 1, 8, 3072>}, {transform_indices = @transform_1, window_bounds = array<i64: 1, 1, 8>}, {pipeline_mode = #tpu.pipeline_mode<synchronous>, transform_indices = @transform_2, window_bounds = array<i64: 8, 32>}, {pipeline_mode = #tpu.pipeline_mode<synchronous>, transform_indices = @transform_3, window_bounds = array<i64: 3072, 512>}, {pipeline_mode = #tpu.pipeline_mode<synchronous>, transform_indices = @transform_4, window_bounds = array<i64: 1, 512>}, {pipeline_mode = #tpu.pipeline_mode<synchronous>, transform_indices = @transform_5, window_bounds = array<i64: 512, 32>}, {pipeline_mode = #tpu.pipeline_mode<synchronous>, transform_indices = @transform_6, window_bounds = array<i64: 1, 32>}, {pipeline_mode = #tpu.pipeline_mode<synchronous>, transform_indices = @transform_7, window_bounds = array<i64: 3, 32, 96>}, {pipeline_mode = #tpu.pipeline_mode<synchronous>, transform_indices = @transform_8, window_bounds = array<i64: 3, 1, 96>}, {pipeline_mode = #tpu.pipeline_mode<synchronous>, transform_indices = @transform_9, window_bounds = array<i64: 3, 2, 16, 32>}, {pipeline_mode = #tpu.pipeline_mode<synchronous>, transform_indices = @transform_10, window_bounds = array<i64: 3, 1, 32>}, {pipeline_mode = #tpu.pipeline_mode<synchronous>, transform_indices = @transform_11, window_bounds = array<i64: 3, 32, 64>}, {pipeline_mode = #tpu.pipeline_mode<synchronous>, transform_indices = @transform_12, window_bounds = array<i64: 3, 1, 64>}, {pipeline_mode = #tpu.pipeline_mode<synchronous>, transform_indices = @transform_13, window_bounds = array<i64: 3, 64, 32>}, {pipeline_mode = #tpu.pipeline_mode<synchronous>, transform_indices = @transform_14, window_bounds = array<i64: 3, 1, 32>}, {pipeline_mode = #tpu.pipeline_mode<synchronous>, transform_indices = @transform_15, window_bounds = array<i64: 3, 1, 32>}, {pipeline_mode = #tpu.pipeline_mode<synchronous>, transform_indices = @transform_16, window_bounds = array<i64: 3, 1, 32>}, {pipeline_mode = #tpu.pipeline_mode<synchronous>, transform_indices = @transform_17, window_bounds = array<i64: 3, 1, 32>}, {pipeline_mode = #tpu.pipeline_mode<synchronous>, transform_indices = @transform_18, window_bounds = array<i64: 3, 1, 32>}, {pipeline_mode = #tpu.pipeline_mode<synchronous>, transform_indices = @transform_19, window_bounds = array<i64: 32, 128>}, {pipeline_mode = #tpu.pipeline_mode<synchronous>, transform_indices = @transform_20, window_bounds = array<i64: 1, 128>}, {transform_indices = @transform_21, window_bounds = array<i64: 1, 1, 128>}]} {
    %c0 = arith.constant 0 : index
    %c0_0 = arith.constant 0 : index
    %c0_1 = arith.constant 0 : index
    %0 = vector.load %arg1[%c0, %c0_0, %c0_1] : memref<1x8x3072xbf16, #tpu.memory_space<vmem>>, vector<1x8x3072xbf16>
    %1 = vector.shape_cast %0 : vector<1x8x3072xbf16> to vector<8x3072xbf16>
    %c0_2 = arith.constant 0 : index
    %c0_3 = arith.constant 0 : index
    %2 = vector.load %arg4[%c0_2, %c0_3] : memref<3072x512xbf16, #tpu.memory_space<vmem>>, vector<3072x512xbf16>
    %cst = arith.constant dense<0.000000e+00> : vector<8x512xf32>
    %3 = tpu.matmul %1, %2, %cst {dimension_numbers = #tpu.dot_dimension_numbers<[1], [0], [0], [1], [0, 0, 1, 1], [], []>} : vector<8x3072xbf16>, vector<3072x512xbf16>, vector<8x512xf32> -> vector<8x512xf32>
    %c0_4 = arith.constant 0 : index
    %c0_5 = arith.constant 0 : index
    %4 = vector.load %arg5[%c0_4, %c0_5] : memref<1x512xf32, #tpu.memory_space<vmem>>, vector<1x512xf32>
    %5 = vector.broadcast %4 : vector<1x512xf32> to vector<8x512xf32>
    %6 = arith.addf %3, %5 : vector<8x512xf32>
    %7 = arith.truncf %6 : vector<8x512xf32> to vector<8x512xbf16>
    %c0_6 = arith.constant 0 : index
    %c0_7 = arith.constant 0 : index
    %8 = vector.load %arg6[%c0_6, %c0_7] : memref<512x32xbf16, #tpu.memory_space<vmem>>, vector<512x32xbf16>
    %cst_8 = arith.constant dense<0.000000e+00> : vector<8x32xf32>
    %9 = tpu.matmul %7, %8, %cst_8 {dimension_numbers = #tpu.dot_dimension_numbers<[1], [0], [0], [1], [0, 0, 1, 1], [], []>} : vector<8x512xbf16>, vector<512x32xbf16>, vector<8x32xf32> -> vector<8x32xf32>
    %c0_9 = arith.constant 0 : index
    %c0_10 = arith.constant 0 : index
    %10 = vector.load %arg7[%c0_9, %c0_10] : memref<1x32xf32, #tpu.memory_space<vmem>>, vector<1x32xf32>
    %11 = vector.broadcast %10 : vector<1x32xf32> to vector<8x32xf32>
    %12 = arith.addf %9, %11 : vector<8x32xf32>
    %c0_11 = arith.constant 0 : index
    %c0_12 = arith.constant 0 : index
    %13 = vector.load %arg3[%c0_11, %c0_12] : memref<8x32xf32, #tpu.memory_space<vmem>>, vector<8x32xf32>
    %14 = arith.addf %12, %13 : vector<8x32xf32>
    %c0_13 = arith.constant 0 : index
    %c0_14 = arith.constant 0 : index
    %c0_15 = arith.constant 0 : index
    %15 = vector.load %arg2[%c0_13, %c0_14, %c0_15] : memref<1x1x8xf32, #tpu.memory_space<vmem>>, vector<1x1x8xf32>
    %16 = vector.shape_cast %15 : vector<1x1x8xf32> to vector<1x8xf32>
    %17 = arith.truncf %14 : vector<8x32xf32> to vector<8x32xbf16>
    %c0_16 = arith.constant 0 : index
    %c0_17 = arith.constant 0 : index
    %c0_18 = arith.constant 0 : index
    %18 = vector.load %arg8[%c0_16, %c0_17, %c0_18] : memref<3x32x96xbf16, #tpu.memory_space<vmem>>, vector<1x32x96xbf16>
    %19 = vector.shape_cast %18 : vector<1x32x96xbf16> to vector<32x96xbf16>
    %cst_19 = arith.constant dense<0.000000e+00> : vector<8x96xf32>
    %20 = tpu.matmul %17, %19, %cst_19 {dimension_numbers = #tpu.dot_dimension_numbers<[1], [0], [0], [1], [0, 0, 1, 1], [], []>} : vector<8x32xbf16>, vector<32x96xbf16>, vector<8x96xf32> -> vector<8x96xf32>
    %c0_20 = arith.constant 0 : index
    %c0_21 = arith.constant 0 : index
    %c0_22 = arith.constant 0 : index
    %21 = vector.load %arg9[%c0_20, %c0_21, %c0_22] : memref<3x1x96xf32, #tpu.memory_space<vmem>>, vector<1x1x96xf32>
    %22 = vector.shape_cast %21 : vector<1x1x96xf32> to vector<1x96xf32>
    %23 = vector.broadcast %22 : vector<1x96xf32> to vector<8x96xf32>
    %24 = arith.addf %20, %23 : vector<8x96xf32>
    %25 = vector.extract_strided_slice %24 {offsets = [0, 0], sizes = [8, 16], strides = [1, 1]} : vector<8x96xf32> to vector<8x16xf32>
    %26 = vector.extract_strided_slice %24 {offsets = [0, 16], sizes = [8, 16], strides = [1, 1]} : vector<8x96xf32> to vector<8x16xf32>
    %27 = vector.shape_cast %25 : vector<8x16xf32> to vector<1x8x16xf32>
    %28 = vector.shape_cast %26 : vector<8x16xf32> to vector<1x8x16xf32>
    %29 = tpu.concatenate %27, %28 in 0 : vector<1x8x16xf32>, vector<1x8x16xf32> -> vector<2x8x16xf32>
    %cst_23 = arith.constant 2.500000e-01 : f32
    %30 = vector.broadcast %cst_23 : f32 to vector<2x8x16xf32>
    %31 = arith.mulf %29, %30 : vector<2x8x16xf32>
    %32 = arith.truncf %31 : vector<2x8x16xf32> to vector<2x8x16xbf16>
    %33 = vector.extract_strided_slice %24 {offsets = [0, 32], sizes = [8, 16], strides = [1, 1]} : vector<8x96xf32> to vector<8x16xf32>
    %34 = vector.extract_strided_slice %24 {offsets = [0, 48], sizes = [8, 16], strides = [1, 1]} : vector<8x96xf32> to vector<8x16xf32>
    %35 = vector.shape_cast %33 : vector<8x16xf32> to vector<1x8x16xf32>
    %36 = vector.shape_cast %34 : vector<8x16xf32> to vector<1x8x16xf32>
    %37 = tpu.concatenate %35, %36 in 0 : vector<1x8x16xf32>, vector<1x8x16xf32> -> vector<2x8x16xf32>
    %38 = arith.truncf %37 : vector<2x8x16xf32> to vector<2x8x16xbf16>
    %39 = vector.extract_strided_slice %24 {offsets = [0, 64], sizes = [8, 16], strides = [1, 1]} : vector<8x96xf32> to vector<8x16xf32>
    %40 = vector.extract_strided_slice %24 {offsets = [0, 80], sizes = [8, 16], strides = [1, 1]} : vector<8x96xf32> to vector<8x16xf32>
    %41 = vector.shape_cast %39 : vector<8x16xf32> to vector<1x8x16xf32>
    %42 = vector.shape_cast %40 : vector<8x16xf32> to vector<1x8x16xf32>
    %43 = tpu.concatenate %41, %42 in 0 : vector<1x8x16xf32>, vector<1x8x16xf32> -> vector<2x8x16xf32>
    %44 = arith.truncf %43 : vector<2x8x16xf32> to vector<2x8x16xbf16>
    "tpu.trace_start"() <{level = 10 : i32, message = "hqd,hkd->hqk"}> : () -> ()
    %cst_24 = arith.constant dense<0.000000e+00> : vector<2x8x8xf32>
    %45 = tpu.matmul %32, %38, %cst_24 {dimension_numbers = #tpu.dot_dimension_numbers<[2], [2], [1], [1], [0, 0, 0, 1, 1, 1], [0], [0]>} : vector<2x8x16xbf16>, vector<2x8x16xbf16>, vector<2x8x8xf32> -> vector<2x8x8xf32>
    "tpu.trace_stop"() : () -> ()
    %46 = vector.shape_cast %16 : vector<1x8xf32> to vector<1x1x8xf32>
    %47 = vector.broadcast %46 : vector<1x1x8xf32> to vector<2x8x8xf32>
    %48 = arith.addf %45, %47 : vector<2x8x8xf32>
    %cst_25 = arith.constant dense<0xFF800000> : vector<2x8xf32>
    %49 = vector.multi_reduction <maximumf>, %48, %cst_25 [2] : vector<2x8x8xf32> to vector<2x8xf32>
    %50 = vector.shape_cast %49 : vector<2x8xf32> to vector<2x8x1xf32>
    %51 = vector.broadcast %50 : vector<2x8x1xf32> to vector<2x8x8xf32>
    %52 = arith.subf %48, %51 : vector<2x8x8xf32>
    %53 = math.exp %52 : vector<2x8x8xf32>
    %cst_26 = arith.constant dense<0.000000e+00> : vector<2x8xf32>
    %54 = vector.multi_reduction <add>, %53, %cst_26 [2] : vector<2x8x8xf32> to vector<2x8xf32>
    %55 = vector.shape_cast %54 : vector<2x8xf32> to vector<2x8x1xf32>
    %56 = vector.broadcast %55 : vector<2x8x1xf32> to vector<2x8x8xf32>
    %57 = arith.divf %53, %56 : vector<2x8x8xf32>
    %58 = arith.truncf %57 : vector<2x8x8xf32> to vector<2x8x8xbf16>
    "tpu.trace_start"() <{level = 10 : i32, message = "hqk,hkd->hqd"}> : () -> ()
    %cst_27 = arith.constant dense<0.000000e+00> : vector<2x8x16xf32>
    %59 = tpu.matmul %58, %44, %cst_27 {dimension_numbers = #tpu.dot_dimension_numbers<[2], [1], [1], [2], [0, 0, 0, 1, 1, 2], [0], [0]>} : vector<2x8x8xbf16>, vector<2x8x16xbf16>, vector<2x8x16xf32> -> vector<2x8x16xf32>
    "tpu.trace_stop"() : () -> ()
    %60 = arith.truncf %59 : vector<2x8x16xf32> to vector<2x8x16xbf16>
    %c0_28 = arith.constant 0 : index
    %c0_29 = arith.constant 0 : index
    %c0_30 = arith.constant 0 : index
    %c0_31 = arith.constant 0 : index
    %61 = vector.load %arg10[%c0_28, %c0_29, %c0_30, %c0_31] : memref<3x2x16x32xbf16, #tpu.memory_space<vmem>>, vector<1x2x16x32xbf16>
    %62 = vector.shape_cast %61 : vector<1x2x16x32xbf16> to vector<2x16x32xbf16>
    "tpu.trace_start"() <{level = 10 : i32, message = "hqd,hde->hqe"}> : () -> ()
    %cst_32 = arith.constant dense<0.000000e+00> : vector<2x8x32xf32>
    %63 = tpu.matmul %60, %62, %cst_32 {dimension_numbers = #tpu.dot_dimension_numbers<[2], [1], [1], [2], [0, 0, 0, 1, 1, 2], [0], [0]>} : vector<2x8x16xbf16>, vector<2x16x32xbf16>, vector<2x8x32xf32> -> vector<2x8x32xf32>
    "tpu.trace_stop"() : () -> ()
    %c0_33 = arith.constant 0 : index
    %c0_34 = arith.constant 0 : index
    %c0_35 = arith.constant 0 : index
    %64 = vector.load %arg11[%c0_33, %c0_34, %c0_35] : memref<3x1x32xf32, #tpu.memory_space<vmem>>, vector<1x1x32xf32>
    %65 = vector.shape_cast %64 : vector<1x1x32xf32> to vector<1x32xf32>
    %66 = vector.extract_strided_slice %63 {offsets = [0, 0, 0], sizes = [1, 8, 32], strides = [1, 1, 1]} : vector<2x8x32xf32> to vector<1x8x32xf32>
    %67 = vector.shape_cast %66 : vector<1x8x32xf32> to vector<8x32xf32>
    %68 = vector.broadcast %65 : vector<1x32xf32> to vector<8x32xf32>
    %69 = arith.addf %68, %67 : vector<8x32xf32>
    %70 = vector.extract_strided_slice %63 {offsets = [1, 0, 0], sizes = [1, 8, 32], strides = [1, 1, 1]} : vector<2x8x32xf32> to vector<1x8x32xf32>
    %71 = vector.shape_cast %70 : vector<1x8x32xf32> to vector<8x32xf32>
    %72 = arith.addf %69, %71 : vector<8x32xf32>
    %73 = arith.addf %14, %72 : vector<8x32xf32>
    %c0_36 = arith.constant 0 : index
    %c0_37 = arith.constant 0 : index
    %c0_38 = arith.constant 0 : index
    %74 = vector.load %arg16[%c0_36, %c0_37, %c0_38] : memref<3x1x32xf32, #tpu.memory_space<vmem>>, vector<1x1x32xf32>
    %75 = vector.shape_cast %74 : vector<1x1x32xf32> to vector<1x32xf32>
    %c0_39 = arith.constant 0 : index
    %c0_40 = arith.constant 0 : index
    %c0_41 = arith.constant 0 : index
    %76 = vector.load %arg17[%c0_39, %c0_40, %c0_41] : memref<3x1x32xf32, #tpu.memory_space<vmem>>, vector<1x1x32xf32>
    %77 = vector.shape_cast %76 : vector<1x1x32xf32> to vector<1x32xf32>
    %cst_42 = arith.constant dense<0.000000e+00> : vector<8xf32>
    %78 = vector.multi_reduction <add>, %73, %cst_42 [1] : vector<8x32xf32> to vector<8xf32>
    %79 = vector.shape_cast %78 : vector<8xf32> to vector<8x1xf32>
    %cst_43 = arith.constant 3.200000e+01 : f32
    %80 = vector.broadcast %cst_43 : f32 to vector<8x1xf32>
    %81 = arith.divf %79, %80 : vector<8x1xf32>
    %82 = vector.broadcast %81 : vector<8x1xf32> to vector<8x32xf32>
    %83 = arith.subf %73, %82 : vector<8x32xf32>
    %84 = arith.mulf %83, %83 : vector<8x32xf32>
    %cst_44 = arith.constant dense<0.000000e+00> : vector<8xf32>
    %85 = vector.multi_reduction <add>, %84, %cst_44 [1] : vector<8x32xf32> to vector<8xf32>
    %86 = vector.shape_cast %85 : vector<8xf32> to vector<8x1xf32>
    %cst_45 = arith.constant 3.200000e+01 : f32
    %87 = vector.broadcast %cst_45 : f32 to vector<8x1xf32>
    %88 = arith.divf %86, %87 : vector<8x1xf32>
    %89 = vector.broadcast %81 : vector<8x1xf32> to vector<8x32xf32>
    %90 = arith.subf %73, %89 : vector<8x32xf32>
    %cst_46 = arith.constant 9.99999974E-6 : f32
    %91 = vector.broadcast %cst_46 : f32 to vector<8x1xf32>
    %92 = arith.addf %88, %91 : vector<8x1xf32>
    %93 = math.rsqrt %92 : vector<8x1xf32>
    %94 = vector.broadcast %93 : vector<8x1xf32> to vector<8x32xf32>
    %95 = arith.mulf %90, %94 : vector<8x32xf32>
    %96 = vector.broadcast %75 : vector<1x32xf32> to vector<8x32xf32>
    %97 = arith.mulf %95, %96 : vector<8x32xf32>
    %98 = vector.broadcast %77 : vector<1x32xf32> to vector<8x32xf32>
    %99 = arith.addf %97, %98 : vector<8x32xf32>
    %100 = arith.truncf %99 : vector<8x32xf32> to vector<8x32xbf16>
    %c0_47 = arith.constant 0 : index
    %c0_48 = arith.constant 0 : index
    %c0_49 = arith.constant 0 : index
    %101 = vector.load %arg12[%c0_47, %c0_48, %c0_49] : memref<3x32x64xbf16, #tpu.memory_space<vmem>>, vector<1x32x64xbf16>
    %102 = vector.shape_cast %101 : vector<1x32x64xbf16> to vector<32x64xbf16>
    %cst_50 = arith.constant dense<0.000000e+00> : vector<8x64xf32>
    %103 = tpu.matmul %100, %102, %cst_50 {dimension_numbers = #tpu.dot_dimension_numbers<[1], [0], [0], [1], [0, 0, 1, 1], [], []>} : vector<8x32xbf16>, vector<32x64xbf16>, vector<8x64xf32> -> vector<8x64xf32>
    %c0_51 = arith.constant 0 : index
    %c0_52 = arith.constant 0 : index
    %c0_53 = arith.constant 0 : index
    %104 = vector.load %arg13[%c0_51, %c0_52, %c0_53] : memref<3x1x64xf32, #tpu.memory_space<vmem>>, vector<1x1x64xf32>
    %105 = vector.shape_cast %104 : vector<1x1x64xf32> to vector<1x64xf32>
    %106 = vector.broadcast %105 : vector<1x64xf32> to vector<8x64xf32>
    %107 = arith.addf %103, %106 : vector<8x64xf32>
    %cst_54 = arith.constant 0.000000e+00 : f32
    %108 = vector.broadcast %cst_54 : f32 to vector<8x64xf32>
    %109 = arith.maximumf %107, %108 : vector<8x64xf32>
    %110 = arith.truncf %109 : vector<8x64xf32> to vector<8x64xbf16>
    %c0_55 = arith.constant 0 : index
    %c0_56 = arith.constant 0 : index
    %c0_57 = arith.constant 0 : index
    %111 = vector.load %arg14[%c0_55, %c0_56, %c0_57] : memref<3x64x32xbf16, #tpu.memory_space<vmem>>, vector<1x64x32xbf16>
    %112 = vector.shape_cast %111 : vector<1x64x32xbf16> to vector<64x32xbf16>
    %cst_58 = arith.constant dense<0.000000e+00> : vector<8x32xf32>
    %113 = tpu.matmul %110, %112, %cst_58 {dimension_numbers = #tpu.dot_dimension_numbers<[1], [0], [0], [1], [0, 0, 1, 1], [], []>} : vector<8x64xbf16>, vector<64x32xbf16>, vector<8x32xf32> -> vector<8x32xf32>
    %c0_59 = arith.constant 0 : index
    %c0_60 = arith.constant 0 : index
    %c0_61 = arith.constant 0 : index
    %114 = vector.load %arg15[%c0_59, %c0_60, %c0_61] : memref<3x1x32xf32, #tpu.memory_space<vmem>>, vector<1x1x32xf32>
    %115 = vector.shape_cast %114 : vector<1x1x32xf32> to vector<1x32xf32>
    %116 = vector.broadcast %115 : vector<1x32xf32> to vector<8x32xf32>
    %117 = arith.addf %113, %116 : vector<8x32xf32>
    %118 = arith.addf %99, %117 : vector<8x32xf32>
    %c0_62 = arith.constant 0 : index
    %c0_63 = arith.constant 0 : index
    %c0_64 = arith.constant 0 : index
    %119 = vector.load %arg18[%c0_62, %c0_63, %c0_64] : memref<3x1x32xf32, #tpu.memory_space<vmem>>, vector<1x1x32xf32>
    %120 = vector.shape_cast %119 : vector<1x1x32xf32> to vector<1x32xf32>
    %c0_65 = arith.constant 0 : index
    %c0_66 = arith.constant 0 : index
    %c0_67 = arith.constant 0 : index
    %121 = vector.load %arg19[%c0_65, %c0_66, %c0_67] : memref<3x1x32xf32, #tpu.memory_space<vmem>>, vector<1x1x32xf32>
    %122 = vector.shape_cast %121 : vector<1x1x32xf32> to vector<1x32xf32>
    %cst_68 = arith.constant dense<0.000000e+00> : vector<8xf32>
    %123 = vector.multi_reduction <add>, %118, %cst_68 [1] : vector<8x32xf32> to vector<8xf32>
    %124 = vector.shape_cast %123 : vector<8xf32> to vector<8x1xf32>
    %cst_69 = arith.constant 3.200000e+01 : f32
    %125 = vector.broadcast %cst_69 : f32 to vector<8x1xf32>
    %126 = arith.divf %124, %125 : vector<8x1xf32>
    %127 = vector.broadcast %126 : vector<8x1xf32> to vector<8x32xf32>
    %128 = arith.subf %118, %127 : vector<8x32xf32>
    %129 = arith.mulf %128, %128 : vector<8x32xf32>
    %cst_70 = arith.constant dense<0.000000e+00> : vector<8xf32>
    %130 = vector.multi_reduction <add>, %129, %cst_70 [1] : vector<8x32xf32> to vector<8xf32>
    %131 = vector.shape_cast %130 : vector<8xf32> to vector<8x1xf32>
    %cst_71 = arith.constant 3.200000e+01 : f32
    %132 = vector.broadcast %cst_71 : f32 to vector<8x1xf32>
    %133 = arith.divf %131, %132 : vector<8x1xf32>
    %134 = vector.broadcast %126 : vector<8x1xf32> to vector<8x32xf32>
    %135 = arith.subf %118, %134 : vector<8x32xf32>
    %cst_72 = arith.constant 9.99999974E-6 : f32
    %136 = vector.broadcast %cst_72 : f32 to vector<8x1xf32>
    %137 = arith.addf %133, %136 : vector<8x1xf32>
    %138 = math.rsqrt %137 : vector<8x1xf32>
    %139 = vector.broadcast %138 : vector<8x1xf32> to vector<8x32xf32>
    %140 = arith.mulf %135, %139 : vector<8x32xf32>
    %141 = vector.broadcast %120 : vector<1x32xf32> to vector<8x32xf32>
    %142 = arith.mulf %140, %141 : vector<8x32xf32>
    %143 = vector.broadcast %122 : vector<1x32xf32> to vector<8x32xf32>
    %144 = arith.addf %142, %143 : vector<8x32xf32>
    %145 = arith.truncf %144 : vector<8x32xf32> to vector<8x32xbf16>
    %c1 = arith.constant 1 : index
    %c0_73 = arith.constant 0 : index
    %c0_74 = arith.constant 0 : index
    %146 = vector.load %arg8[%c1, %c0_73, %c0_74] : memref<3x32x96xbf16, #tpu.memory_space<vmem>>, vector<1x32x96xbf16>
    %147 = vector.shape_cast %146 : vector<1x32x96xbf16> to vector<32x96xbf16>
    %cst_75 = arith.constant dense<0.000000e+00> : vector<8x96xf32>
    %148 = tpu.matmul %145, %147, %cst_75 {dimension_numbers = #tpu.dot_dimension_numbers<[1], [0], [0], [1], [0, 0, 1, 1], [], []>} : vector<8x32xbf16>, vector<32x96xbf16>, vector<8x96xf32> -> vector<8x96xf32>
    %c1_76 = arith.constant 1 : index
    %c0_77 = arith.constant 0 : index
    %c0_78 = arith.constant 0 : index
    %149 = vector.load %arg9[%c1_76, %c0_77, %c0_78] : memref<3x1x96xf32, #tpu.memory_space<vmem>>, vector<1x1x96xf32>
    %150 = vector.shape_cast %149 : vector<1x1x96xf32> to vector<1x96xf32>
    %151 = vector.broadcast %150 : vector<1x96xf32> to vector<8x96xf32>
    %152 = arith.addf %148, %151 : vector<8x96xf32>
    %153 = vector.extract_strided_slice %152 {offsets = [0, 0], sizes = [8, 16], strides = [1, 1]} : vector<8x96xf32> to vector<8x16xf32>
    %154 = vector.extract_strided_slice %152 {offsets = [0, 16], sizes = [8, 16], strides = [1, 1]} : vector<8x96xf32> to vector<8x16xf32>
    %155 = vector.shape_cast %153 : vector<8x16xf32> to vector<1x8x16xf32>
    %156 = vector.shape_cast %154 : vector<8x16xf32> to vector<1x8x16xf32>
    %157 = tpu.concatenate %155, %156 in 0 : vector<1x8x16xf32>, vector<1x8x16xf32> -> vector<2x8x16xf32>
    %cst_79 = arith.constant 2.500000e-01 : f32
    %158 = vector.broadcast %cst_79 : f32 to vector<2x8x16xf32>
    %159 = arith.mulf %157, %158 : vector<2x8x16xf32>
    %160 = arith.truncf %159 : vector<2x8x16xf32> to vector<2x8x16xbf16>
    %161 = vector.extract_strided_slice %152 {offsets = [0, 32], sizes = [8, 16], strides = [1, 1]} : vector<8x96xf32> to vector<8x16xf32>
    %162 = vector.extract_strided_slice %152 {offsets = [0, 48], sizes = [8, 16], strides = [1, 1]} : vector<8x96xf32> to vector<8x16xf32>
    %163 = vector.shape_cast %161 : vector<8x16xf32> to vector<1x8x16xf32>
    %164 = vector.shape_cast %162 : vector<8x16xf32> to vector<1x8x16xf32>
    %165 = tpu.concatenate %163, %164 in 0 : vector<1x8x16xf32>, vector<1x8x16xf32> -> vector<2x8x16xf32>
    %166 = arith.truncf %165 : vector<2x8x16xf32> to vector<2x8x16xbf16>
    %167 = vector.extract_strided_slice %152 {offsets = [0, 64], sizes = [8, 16], strides = [1, 1]} : vector<8x96xf32> to vector<8x16xf32>
    %168 = vector.extract_strided_slice %152 {offsets = [0, 80], sizes = [8, 16], strides = [1, 1]} : vector<8x96xf32> to vector<8x16xf32>
    %169 = vector.shape_cast %167 : vector<8x16xf32> to vector<1x8x16xf32>
    %170 = vector.shape_cast %168 : vector<8x16xf32> to vector<1x8x16xf32>
    %171 = tpu.concatenate %169, %170 in 0 : vector<1x8x16xf32>, vector<1x8x16xf32> -> vector<2x8x16xf32>
    %172 = arith.truncf %171 : vector<2x8x16xf32> to vector<2x8x16xbf16>
    "tpu.trace_start"() <{level = 10 : i32, message = "hqd,hkd->hqk"}> : () -> ()
    %cst_80 = arith.constant dense<0.000000e+00> : vector<2x8x8xf32>
    %173 = tpu.matmul %160, %166, %cst_80 {dimension_numbers = #tpu.dot_dimension_numbers<[2], [2], [1], [1], [0, 0, 0, 1, 1, 1], [0], [0]>} : vector<2x8x16xbf16>, vector<2x8x16xbf16>, vector<2x8x8xf32> -> vector<2x8x8xf32>
    "tpu.trace_stop"() : () -> ()
    %174 = vector.shape_cast %16 : vector<1x8xf32> to vector<1x1x8xf32>
    %175 = vector.broadcast %174 : vector<1x1x8xf32> to vector<2x8x8xf32>
    %176 = arith.addf %173, %175 : vector<2x8x8xf32>
    %cst_81 = arith.constant dense<0xFF800000> : vector<2x8xf32>
    %177 = vector.multi_reduction <maximumf>, %176, %cst_81 [2] : vector<2x8x8xf32> to vector<2x8xf32>
    %178 = vector.shape_cast %177 : vector<2x8xf32> to vector<2x8x1xf32>
    %179 = vector.broadcast %178 : vector<2x8x1xf32> to vector<2x8x8xf32>
    %180 = arith.subf %176, %179 : vector<2x8x8xf32>
    %181 = math.exp %180 : vector<2x8x8xf32>
    %cst_82 = arith.constant dense<0.000000e+00> : vector<2x8xf32>
    %182 = vector.multi_reduction <add>, %181, %cst_82 [2] : vector<2x8x8xf32> to vector<2x8xf32>
    %183 = vector.shape_cast %182 : vector<2x8xf32> to vector<2x8x1xf32>
    %184 = vector.broadcast %183 : vector<2x8x1xf32> to vector<2x8x8xf32>
    %185 = arith.divf %181, %184 : vector<2x8x8xf32>
    %186 = arith.truncf %185 : vector<2x8x8xf32> to vector<2x8x8xbf16>
    "tpu.trace_start"() <{level = 10 : i32, message = "hqk,hkd->hqd"}> : () -> ()
    %cst_83 = arith.constant dense<0.000000e+00> : vector<2x8x16xf32>
    %187 = tpu.matmul %186, %172, %cst_83 {dimension_numbers = #tpu.dot_dimension_numbers<[2], [1], [1], [2], [0, 0, 0, 1, 1, 2], [0], [0]>} : vector<2x8x8xbf16>, vector<2x8x16xbf16>, vector<2x8x16xf32> -> vector<2x8x16xf32>
    "tpu.trace_stop"() : () -> ()
    %188 = arith.truncf %187 : vector<2x8x16xf32> to vector<2x8x16xbf16>
    %c1_84 = arith.constant 1 : index
    %c0_85 = arith.constant 0 : index
    %c0_86 = arith.constant 0 : index
    %c0_87 = arith.constant 0 : index
    %189 = vector.load %arg10[%c1_84, %c0_85, %c0_86, %c0_87] : memref<3x2x16x32xbf16, #tpu.memory_space<vmem>>, vector<1x2x16x32xbf16>
    %190 = vector.shape_cast %189 : vector<1x2x16x32xbf16> to vector<2x16x32xbf16>
    "tpu.trace_start"() <{level = 10 : i32, message = "hqd,hde->hqe"}> : () -> ()
    %cst_88 = arith.constant dense<0.000000e+00> : vector<2x8x32xf32>
    %191 = tpu.matmul %188, %190, %cst_88 {dimension_numbers = #tpu.dot_dimension_numbers<[2], [1], [1], [2], [0, 0, 0, 1, 1, 2], [0], [0]>} : vector<2x8x16xbf16>, vector<2x16x32xbf16>, vector<2x8x32xf32> -> vector<2x8x32xf32>
    "tpu.trace_stop"() : () -> ()
    %c1_89 = arith.constant 1 : index
    %c0_90 = arith.constant 0 : index
    %c0_91 = arith.constant 0 : index
    %192 = vector.load %arg11[%c1_89, %c0_90, %c0_91] : memref<3x1x32xf32, #tpu.memory_space<vmem>>, vector<1x1x32xf32>
    %193 = vector.shape_cast %192 : vector<1x1x32xf32> to vector<1x32xf32>
    %194 = vector.extract_strided_slice %191 {offsets = [0, 0, 0], sizes = [1, 8, 32], strides = [1, 1, 1]} : vector<2x8x32xf32> to vector<1x8x32xf32>
    %195 = vector.shape_cast %194 : vector<1x8x32xf32> to vector<8x32xf32>
    %196 = vector.broadcast %193 : vector<1x32xf32> to vector<8x32xf32>
    %197 = arith.addf %196, %195 : vector<8x32xf32>
    %198 = vector.extract_strided_slice %191 {offsets = [1, 0, 0], sizes = [1, 8, 32], strides = [1, 1, 1]} : vector<2x8x32xf32> to vector<1x8x32xf32>
    %199 = vector.shape_cast %198 : vector<1x8x32xf32> to vector<8x32xf32>
    %200 = arith.addf %197, %199 : vector<8x32xf32>
    %201 = arith.addf %144, %200 : vector<8x32xf32>
    %c1_92 = arith.constant 1 : index
    %c0_93 = arith.constant 0 : index
    %c0_94 = arith.constant 0 : index
    %202 = vector.load %arg16[%c1_92, %c0_93, %c0_94] : memref<3x1x32xf32, #tpu.memory_space<vmem>>, vector<1x1x32xf32>
    %203 = vector.shape_cast %202 : vector<1x1x32xf32> to vector<1x32xf32>
    %c1_95 = arith.constant 1 : index
    %c0_96 = arith.constant 0 : index
    %c0_97 = arith.constant 0 : index
    %204 = vector.load %arg17[%c1_95, %c0_96, %c0_97] : memref<3x1x32xf32, #tpu.memory_space<vmem>>, vector<1x1x32xf32>
    %205 = vector.shape_cast %204 : vector<1x1x32xf32> to vector<1x32xf32>
    %cst_98 = arith.constant dense<0.000000e+00> : vector<8xf32>
    %206 = vector.multi_reduction <add>, %201, %cst_98 [1] : vector<8x32xf32> to vector<8xf32>
    %207 = vector.shape_cast %206 : vector<8xf32> to vector<8x1xf32>
    %cst_99 = arith.constant 3.200000e+01 : f32
    %208 = vector.broadcast %cst_99 : f32 to vector<8x1xf32>
    %209 = arith.divf %207, %208 : vector<8x1xf32>
    %210 = vector.broadcast %209 : vector<8x1xf32> to vector<8x32xf32>
    %211 = arith.subf %201, %210 : vector<8x32xf32>
    %212 = arith.mulf %211, %211 : vector<8x32xf32>
    %cst_100 = arith.constant dense<0.000000e+00> : vector<8xf32>
    %213 = vector.multi_reduction <add>, %212, %cst_100 [1] : vector<8x32xf32> to vector<8xf32>
    %214 = vector.shape_cast %213 : vector<8xf32> to vector<8x1xf32>
    %cst_101 = arith.constant 3.200000e+01 : f32
    %215 = vector.broadcast %cst_101 : f32 to vector<8x1xf32>
    %216 = arith.divf %214, %215 : vector<8x1xf32>
    %217 = vector.broadcast %209 : vector<8x1xf32> to vector<8x32xf32>
    %218 = arith.subf %201, %217 : vector<8x32xf32>
    %cst_102 = arith.constant 9.99999974E-6 : f32
    %219 = vector.broadcast %cst_102 : f32 to vector<8x1xf32>
    %220 = arith.addf %216, %219 : vector<8x1xf32>
    %221 = math.rsqrt %220 : vector<8x1xf32>
    %222 = vector.broadcast %221 : vector<8x1xf32> to vector<8x32xf32>
    %223 = arith.mulf %218, %222 : vector<8x32xf32>
    %224 = vector.broadcast %203 : vector<1x32xf32> to vector<8x32xf32>
    %225 = arith.mulf %223, %224 : vector<8x32xf32>
    %226 = vector.broadcast %205 : vector<1x32xf32> to vector<8x32xf32>
    %227 = arith.addf %225, %226 : vector<8x32xf32>
    %228 = arith.truncf %227 : vector<8x32xf32> to vector<8x32xbf16>
    %c1_103 = arith.constant 1 : index
    %c0_104 = arith.constant 0 : index
    %c0_105 = arith.constant 0 : index
    %229 = vector.load %arg12[%c1_103, %c0_104, %c0_105] : memref<3x32x64xbf16, #tpu.memory_space<vmem>>, vector<1x32x64xbf16>
    %230 = vector.shape_cast %229 : vector<1x32x64xbf16> to vector<32x64xbf16>
    %cst_106 = arith.constant dense<0.000000e+00> : vector<8x64xf32>
    %231 = tpu.matmul %228, %230, %cst_106 {dimension_numbers = #tpu.dot_dimension_numbers<[1], [0], [0], [1], [0, 0, 1, 1], [], []>} : vector<8x32xbf16>, vector<32x64xbf16>, vector<8x64xf32> -> vector<8x64xf32>
    %c1_107 = arith.constant 1 : index
    %c0_108 = arith.constant 0 : index
    %c0_109 = arith.constant 0 : index
    %232 = vector.load %arg13[%c1_107, %c0_108, %c0_109] : memref<3x1x64xf32, #tpu.memory_space<vmem>>, vector<1x1x64xf32>
    %233 = vector.shape_cast %232 : vector<1x1x64xf32> to vector<1x64xf32>
    %234 = vector.broadcast %233 : vector<1x64xf32> to vector<8x64xf32>
    %235 = arith.addf %231, %234 : vector<8x64xf32>
    %cst_110 = arith.constant 0.000000e+00 : f32
    %236 = vector.broadcast %cst_110 : f32 to vector<8x64xf32>
    %237 = arith.maximumf %235, %236 : vector<8x64xf32>
    %238 = arith.truncf %237 : vector<8x64xf32> to vector<8x64xbf16>
    %c1_111 = arith.constant 1 : index
    %c0_112 = arith.constant 0 : index
    %c0_113 = arith.constant 0 : index
    %239 = vector.load %arg14[%c1_111, %c0_112, %c0_113] : memref<3x64x32xbf16, #tpu.memory_space<vmem>>, vector<1x64x32xbf16>
    %240 = vector.shape_cast %239 : vector<1x64x32xbf16> to vector<64x32xbf16>
    %cst_114 = arith.constant dense<0.000000e+00> : vector<8x32xf32>
    %241 = tpu.matmul %238, %240, %cst_114 {dimension_numbers = #tpu.dot_dimension_numbers<[1], [0], [0], [1], [0, 0, 1, 1], [], []>} : vector<8x64xbf16>, vector<64x32xbf16>, vector<8x32xf32> -> vector<8x32xf32>
    %c1_115 = arith.constant 1 : index
    %c0_116 = arith.constant 0 : index
    %c0_117 = arith.constant 0 : index
    %242 = vector.load %arg15[%c1_115, %c0_116, %c0_117] : memref<3x1x32xf32, #tpu.memory_space<vmem>>, vector<1x1x32xf32>
    %243 = vector.shape_cast %242 : vector<1x1x32xf32> to vector<1x32xf32>
    %244 = vector.broadcast %243 : vector<1x32xf32> to vector<8x32xf32>
    %245 = arith.addf %241, %244 : vector<8x32xf32>
    %246 = arith.addf %227, %245 : vector<8x32xf32>
    %c1_118 = arith.constant 1 : index
    %c0_119 = arith.constant 0 : index
    %c0_120 = arith.constant 0 : index
    %247 = vector.load %arg18[%c1_118, %c0_119, %c0_120] : memref<3x1x32xf32, #tpu.memory_space<vmem>>, vector<1x1x32xf32>
    %248 = vector.shape_cast %247 : vector<1x1x32xf32> to vector<1x32xf32>
    %c1_121 = arith.constant 1 : index
    %c0_122 = arith.constant 0 : index
    %c0_123 = arith.constant 0 : index
    %249 = vector.load %arg19[%c1_121, %c0_122, %c0_123] : memref<3x1x32xf32, #tpu.memory_space<vmem>>, vector<1x1x32xf32>
    %250 = vector.shape_cast %249 : vector<1x1x32xf32> to vector<1x32xf32>
    %cst_124 = arith.constant dense<0.000000e+00> : vector<8xf32>
    %251 = vector.multi_reduction <add>, %246, %cst_124 [1] : vector<8x32xf32> to vector<8xf32>
    %252 = vector.shape_cast %251 : vector<8xf32> to vector<8x1xf32>
    %cst_125 = arith.constant 3.200000e+01 : f32
    %253 = vector.broadcast %cst_125 : f32 to vector<8x1xf32>
    %254 = arith.divf %252, %253 : vector<8x1xf32>
    %255 = vector.broadcast %254 : vector<8x1xf32> to vector<8x32xf32>
    %256 = arith.subf %246, %255 : vector<8x32xf32>
    %257 = arith.mulf %256, %256 : vector<8x32xf32>
    %cst_126 = arith.constant dense<0.000000e+00> : vector<8xf32>
    %258 = vector.multi_reduction <add>, %257, %cst_126 [1] : vector<8x32xf32> to vector<8xf32>
    %259 = vector.shape_cast %258 : vector<8xf32> to vector<8x1xf32>
    %cst_127 = arith.constant 3.200000e+01 : f32
    %260 = vector.broadcast %cst_127 : f32 to vector<8x1xf32>
    %261 = arith.divf %259, %260 : vector<8x1xf32>
    %262 = vector.broadcast %254 : vector<8x1xf32> to vector<8x32xf32>
    %263 = arith.subf %246, %262 : vector<8x32xf32>
    %cst_128 = arith.constant 9.99999974E-6 : f32
    %264 = vector.broadcast %cst_128 : f32 to vector<8x1xf32>
    %265 = arith.addf %261, %264 : vector<8x1xf32>
    %266 = math.rsqrt %265 : vector<8x1xf32>
    %267 = vector.broadcast %266 : vector<8x1xf32> to vector<8x32xf32>
    %268 = arith.mulf %263, %267 : vector<8x32xf32>
    %269 = vector.broadcast %248 : vector<1x32xf32> to vector<8x32xf32>
    %270 = arith.mulf %268, %269 : vector<8x32xf32>
    %271 = vector.broadcast %250 : vector<1x32xf32> to vector<8x32xf32>
    %272 = arith.addf %270, %271 : vector<8x32xf32>
    %273 = arith.truncf %272 : vector<8x32xf32> to vector<8x32xbf16>
    %c2 = arith.constant 2 : index
    %c0_129 = arith.constant 0 : index
    %c0_130 = arith.constant 0 : index
    %274 = vector.load %arg8[%c2, %c0_129, %c0_130] : memref<3x32x96xbf16, #tpu.memory_space<vmem>>, vector<1x32x96xbf16>
    %275 = vector.shape_cast %274 : vector<1x32x96xbf16> to vector<32x96xbf16>
    %cst_131 = arith.constant dense<0.000000e+00> : vector<8x96xf32>
    %276 = tpu.matmul %273, %275, %cst_131 {dimension_numbers = #tpu.dot_dimension_numbers<[1], [0], [0], [1], [0, 0, 1, 1], [], []>} : vector<8x32xbf16>, vector<32x96xbf16>, vector<8x96xf32> -> vector<8x96xf32>
    %c2_132 = arith.constant 2 : index
    %c0_133 = arith.constant 0 : index
    %c0_134 = arith.constant 0 : index
    %277 = vector.load %arg9[%c2_132, %c0_133, %c0_134] : memref<3x1x96xf32, #tpu.memory_space<vmem>>, vector<1x1x96xf32>
    %278 = vector.shape_cast %277 : vector<1x1x96xf32> to vector<1x96xf32>
    %279 = vector.broadcast %278 : vector<1x96xf32> to vector<8x96xf32>
    %280 = arith.addf %276, %279 : vector<8x96xf32>
    %281 = vector.extract_strided_slice %280 {offsets = [0, 0], sizes = [8, 16], strides = [1, 1]} : vector<8x96xf32> to vector<8x16xf32>
    %282 = vector.extract_strided_slice %280 {offsets = [0, 16], sizes = [8, 16], strides = [1, 1]} : vector<8x96xf32> to vector<8x16xf32>
    %283 = vector.shape_cast %281 : vector<8x16xf32> to vector<1x8x16xf32>
    %284 = vector.shape_cast %282 : vector<8x16xf32> to vector<1x8x16xf32>
    %285 = tpu.concatenate %283, %284 in 0 : vector<1x8x16xf32>, vector<1x8x16xf32> -> vector<2x8x16xf32>
    %cst_135 = arith.constant 2.500000e-01 : f32
    %286 = vector.broadcast %cst_135 : f32 to vector<2x8x16xf32>
    %287 = arith.mulf %285, %286 : vector<2x8x16xf32>
    %288 = arith.truncf %287 : vector<2x8x16xf32> to vector<2x8x16xbf16>
    %289 = vector.extract_strided_slice %280 {offsets = [0, 32], sizes = [8, 16], strides = [1, 1]} : vector<8x96xf32> to vector<8x16xf32>
    %290 = vector.extract_strided_slice %280 {offsets = [0, 48], sizes = [8, 16], strides = [1, 1]} : vector<8x96xf32> to vector<8x16xf32>
    %291 = vector.shape_cast %289 : vector<8x16xf32> to vector<1x8x16xf32>
    %292 = vector.shape_cast %290 : vector<8x16xf32> to vector<1x8x16xf32>
    %293 = tpu.concatenate %291, %292 in 0 : vector<1x8x16xf32>, vector<1x8x16xf32> -> vector<2x8x16xf32>
    %294 = arith.truncf %293 : vector<2x8x16xf32> to vector<2x8x16xbf16>
    %295 = vector.extract_strided_slice %280 {offsets = [0, 64], sizes = [8, 16], strides = [1, 1]} : vector<8x96xf32> to vector<8x16xf32>
    %296 = vector.extract_strided_slice %280 {offsets = [0, 80], sizes = [8, 16], strides = [1, 1]} : vector<8x96xf32> to vector<8x16xf32>
    %297 = vector.shape_cast %295 : vector<8x16xf32> to vector<1x8x16xf32>
    %298 = vector.shape_cast %296 : vector<8x16xf32> to vector<1x8x16xf32>
    %299 = tpu.concatenate %297, %298 in 0 : vector<1x8x16xf32>, vector<1x8x16xf32> -> vector<2x8x16xf32>
    %300 = arith.truncf %299 : vector<2x8x16xf32> to vector<2x8x16xbf16>
    "tpu.trace_start"() <{level = 10 : i32, message = "hqd,hkd->hqk"}> : () -> ()
    %cst_136 = arith.constant dense<0.000000e+00> : vector<2x8x8xf32>
    %301 = tpu.matmul %288, %294, %cst_136 {dimension_numbers = #tpu.dot_dimension_numbers<[2], [2], [1], [1], [0, 0, 0, 1, 1, 1], [0], [0]>} : vector<2x8x16xbf16>, vector<2x8x16xbf16>, vector<2x8x8xf32> -> vector<2x8x8xf32>
    "tpu.trace_stop"() : () -> ()
    %302 = vector.shape_cast %16 : vector<1x8xf32> to vector<1x1x8xf32>
    %303 = vector.broadcast %302 : vector<1x1x8xf32> to vector<2x8x8xf32>
    %304 = arith.addf %301, %303 : vector<2x8x8xf32>
    %cst_137 = arith.constant dense<0xFF800000> : vector<2x8xf32>
    %305 = vector.multi_reduction <maximumf>, %304, %cst_137 [2] : vector<2x8x8xf32> to vector<2x8xf32>
    %306 = vector.shape_cast %305 : vector<2x8xf32> to vector<2x8x1xf32>
    %307 = vector.broadcast %306 : vector<2x8x1xf32> to vector<2x8x8xf32>
    %308 = arith.subf %304, %307 : vector<2x8x8xf32>
    %309 = math.exp %308 : vector<2x8x8xf32>
    %cst_138 = arith.constant dense<0.000000e+00> : vector<2x8xf32>
    %310 = vector.multi_reduction <add>, %309, %cst_138 [2] : vector<2x8x8xf32> to vector<2x8xf32>
    %311 = vector.shape_cast %310 : vector<2x8xf32> to vector<2x8x1xf32>
    %312 = vector.broadcast %311 : vector<2x8x1xf32> to vector<2x8x8xf32>
    %313 = arith.divf %309, %312 : vector<2x8x8xf32>
    %314 = arith.truncf %313 : vector<2x8x8xf32> to vector<2x8x8xbf16>
    "tpu.trace_start"() <{level = 10 : i32, message = "hqk,hkd->hqd"}> : () -> ()
    %cst_139 = arith.constant dense<0.000000e+00> : vector<2x8x16xf32>
    %315 = tpu.matmul %314, %300, %cst_139 {dimension_numbers = #tpu.dot_dimension_numbers<[2], [1], [1], [2], [0, 0, 0, 1, 1, 2], [0], [0]>} : vector<2x8x8xbf16>, vector<2x8x16xbf16>, vector<2x8x16xf32> -> vector<2x8x16xf32>
    "tpu.trace_stop"() : () -> ()
    %316 = arith.truncf %315 : vector<2x8x16xf32> to vector<2x8x16xbf16>
    %c2_140 = arith.constant 2 : index
    %c0_141 = arith.constant 0 : index
    %c0_142 = arith.constant 0 : index
    %c0_143 = arith.constant 0 : index
    %317 = vector.load %arg10[%c2_140, %c0_141, %c0_142, %c0_143] : memref<3x2x16x32xbf16, #tpu.memory_space<vmem>>, vector<1x2x16x32xbf16>
    %318 = vector.shape_cast %317 : vector<1x2x16x32xbf16> to vector<2x16x32xbf16>
    "tpu.trace_start"() <{level = 10 : i32, message = "hqd,hde->hqe"}> : () -> ()
    %cst_144 = arith.constant dense<0.000000e+00> : vector<2x8x32xf32>
    %319 = tpu.matmul %316, %318, %cst_144 {dimension_numbers = #tpu.dot_dimension_numbers<[2], [1], [1], [2], [0, 0, 0, 1, 1, 2], [0], [0]>} : vector<2x8x16xbf16>, vector<2x16x32xbf16>, vector<2x8x32xf32> -> vector<2x8x32xf32>
    "tpu.trace_stop"() : () -> ()
    %c2_145 = arith.constant 2 : index
    %c0_146 = arith.constant 0 : index
    %c0_147 = arith.constant 0 : index
    %320 = vector.load %arg11[%c2_145, %c0_146, %c0_147] : memref<3x1x32xf32, #tpu.memory_space<vmem>>, vector<1x1x32xf32>
    %321 = vector.shape_cast %320 : vector<1x1x32xf32> to vector<1x32xf32>
    %322 = vector.extract_strided_slice %319 {offsets = [0, 0, 0], sizes = [1, 8, 32], strides = [1, 1, 1]} : vector<2x8x32xf32> to vector<1x8x32xf32>
    %323 = vector.shape_cast %322 : vector<1x8x32xf32> to vector<8x32xf32>
    %324 = vector.broadcast %321 : vector<1x32xf32> to vector<8x32xf32>
    %325 = arith.addf %324, %323 : vector<8x32xf32>
    %326 = vector.extract_strided_slice %319 {offsets = [1, 0, 0], sizes = [1, 8, 32], strides = [1, 1, 1]} : vector<2x8x32xf32> to vector<1x8x32xf32>
    %327 = vector.shape_cast %326 : vector<1x8x32xf32> to vector<8x32xf32>
    %328 = arith.addf %325, %327 : vector<8x32xf32>
    %329 = arith.addf %272, %328 : vector<8x32xf32>
    %c2_148 = arith.constant 2 : index
    %c0_149 = arith.constant 0 : index
    %c0_150 = arith.constant 0 : index
    %330 = vector.load %arg16[%c2_148, %c0_149, %c0_150] : memref<3x1x32xf32, #tpu.memory_space<vmem>>, vector<1x1x32xf32>
    %331 = vector.shape_cast %330 : vector<1x1x32xf32> to vector<1x32xf32>
    %c2_151 = arith.constant 2 : index
    %c0_152 = arith.constant 0 : index
    %c0_153 = arith.constant 0 : index
    %332 = vector.load %arg17[%c2_151, %c0_152, %c0_153] : memref<3x1x32xf32, #tpu.memory_space<vmem>>, vector<1x1x32xf32>
    %333 = vector.shape_cast %332 : vector<1x1x32xf32> to vector<1x32xf32>
    %cst_154 = arith.constant dense<0.000000e+00> : vector<8xf32>
    %334 = vector.multi_reduction <add>, %329, %cst_154 [1] : vector<8x32xf32> to vector<8xf32>
    %335 = vector.shape_cast %334 : vector<8xf32> to vector<8x1xf32>
    %cst_155 = arith.constant 3.200000e+01 : f32
    %336 = vector.broadcast %cst_155 : f32 to vector<8x1xf32>
    %337 = arith.divf %335, %336 : vector<8x1xf32>
    %338 = vector.broadcast %337 : vector<8x1xf32> to vector<8x32xf32>
    %339 = arith.subf %329, %338 : vector<8x32xf32>
    %340 = arith.mulf %339, %339 : vector<8x32xf32>
    %cst_156 = arith.constant dense<0.000000e+00> : vector<8xf32>
    %341 = vector.multi_reduction <add>, %340, %cst_156 [1] : vector<8x32xf32> to vector<8xf32>
    %342 = vector.shape_cast %341 : vector<8xf32> to vector<8x1xf32>
    %cst_157 = arith.constant 3.200000e+01 : f32
    %343 = vector.broadcast %cst_157 : f32 to vector<8x1xf32>
    %344 = arith.divf %342, %343 : vector<8x1xf32>
    %345 = vector.broadcast %337 : vector<8x1xf32> to vector<8x32xf32>
    %346 = arith.subf %329, %345 : vector<8x32xf32>
    %cst_158 = arith.constant 9.99999974E-6 : f32
    %347 = vector.broadcast %cst_158 : f32 to vector<8x1xf32>
    %348 = arith.addf %344, %347 : vector<8x1xf32>
    %349 = math.rsqrt %348 : vector<8x1xf32>
    %350 = vector.broadcast %349 : vector<8x1xf32> to vector<8x32xf32>
    %351 = arith.mulf %346, %350 : vector<8x32xf32>
    %352 = vector.broadcast %331 : vector<1x32xf32> to vector<8x32xf32>
    %353 = arith.mulf %351, %352 : vector<8x32xf32>
    %354 = vector.broadcast %333 : vector<1x32xf32> to vector<8x32xf32>
    %355 = arith.addf %353, %354 : vector<8x32xf32>
    %356 = arith.truncf %355 : vector<8x32xf32> to vector<8x32xbf16>
    %c2_159 = arith.constant 2 : index
    %c0_160 = arith.constant 0 : index
    %c0_161 = arith.constant 0 : index
    %357 = vector.load %arg12[%c2_159, %c0_160, %c0_161] : memref<3x32x64xbf16, #tpu.memory_space<vmem>>, vector<1x32x64xbf16>
    %358 = vector.shape_cast %357 : vector<1x32x64xbf16> to vector<32x64xbf16>
    %cst_162 = arith.constant dense<0.000000e+00> : vector<8x64xf32>
    %359 = tpu.matmul %356, %358, %cst_162 {dimension_numbers = #tpu.dot_dimension_numbers<[1], [0], [0], [1], [0, 0, 1, 1], [], []>} : vector<8x32xbf16>, vector<32x64xbf16>, vector<8x64xf32> -> vector<8x64xf32>
    %c2_163 = arith.constant 2 : index
    %c0_164 = arith.constant 0 : index
    %c0_165 = arith.constant 0 : index
    %360 = vector.load %arg13[%c2_163, %c0_164, %c0_165] : memref<3x1x64xf32, #tpu.memory_space<vmem>>, vector<1x1x64xf32>
    %361 = vector.shape_cast %360 : vector<1x1x64xf32> to vector<1x64xf32>
    %362 = vector.broadcast %361 : vector<1x64xf32> to vector<8x64xf32>
    %363 = arith.addf %359, %362 : vector<8x64xf32>
    %cst_166 = arith.constant 0.000000e+00 : f32
    %364 = vector.broadcast %cst_166 : f32 to vector<8x64xf32>
    %365 = arith.maximumf %363, %364 : vector<8x64xf32>
    %366 = arith.truncf %365 : vector<8x64xf32> to vector<8x64xbf16>
    %c2_167 = arith.constant 2 : index
    %c0_168 = arith.constant 0 : index
    %c0_169 = arith.constant 0 : index
    %367 = vector.load %arg14[%c2_167, %c0_168, %c0_169] : memref<3x64x32xbf16, #tpu.memory_space<vmem>>, vector<1x64x32xbf16>
    %368 = vector.shape_cast %367 : vector<1x64x32xbf16> to vector<64x32xbf16>
    %cst_170 = arith.constant dense<0.000000e+00> : vector<8x32xf32>
    %369 = tpu.matmul %366, %368, %cst_170 {dimension_numbers = #tpu.dot_dimension_numbers<[1], [0], [0], [1], [0, 0, 1, 1], [], []>} : vector<8x64xbf16>, vector<64x32xbf16>, vector<8x32xf32> -> vector<8x32xf32>
    %c2_171 = arith.constant 2 : index
    %c0_172 = arith.constant 0 : index
    %c0_173 = arith.constant 0 : index
    %370 = vector.load %arg15[%c2_171, %c0_172, %c0_173] : memref<3x1x32xf32, #tpu.memory_space<vmem>>, vector<1x1x32xf32>
    %371 = vector.shape_cast %370 : vector<1x1x32xf32> to vector<1x32xf32>
    %372 = vector.broadcast %371 : vector<1x32xf32> to vector<8x32xf32>
    %373 = arith.addf %369, %372 : vector<8x32xf32>
    %374 = arith.addf %355, %373 : vector<8x32xf32>
    %c2_174 = arith.constant 2 : index
    %c0_175 = arith.constant 0 : index
    %c0_176 = arith.constant 0 : index
    %375 = vector.load %arg18[%c2_174, %c0_175, %c0_176] : memref<3x1x32xf32, #tpu.memory_space<vmem>>, vector<1x1x32xf32>
    %376 = vector.shape_cast %375 : vector<1x1x32xf32> to vector<1x32xf32>
    %c2_177 = arith.constant 2 : index
    %c0_178 = arith.constant 0 : index
    %c0_179 = arith.constant 0 : index
    %377 = vector.load %arg19[%c2_177, %c0_178, %c0_179] : memref<3x1x32xf32, #tpu.memory_space<vmem>>, vector<1x1x32xf32>
    %378 = vector.shape_cast %377 : vector<1x1x32xf32> to vector<1x32xf32>
    %cst_180 = arith.constant dense<0.000000e+00> : vector<8xf32>
    %379 = vector.multi_reduction <add>, %374, %cst_180 [1] : vector<8x32xf32> to vector<8xf32>
    %380 = vector.shape_cast %379 : vector<8xf32> to vector<8x1xf32>
    %cst_181 = arith.constant 3.200000e+01 : f32
    %381 = vector.broadcast %cst_181 : f32 to vector<8x1xf32>
    %382 = arith.divf %380, %381 : vector<8x1xf32>
    %383 = vector.broadcast %382 : vector<8x1xf32> to vector<8x32xf32>
    %384 = arith.subf %374, %383 : vector<8x32xf32>
    %385 = arith.mulf %384, %384 : vector<8x32xf32>
    %cst_182 = arith.constant dense<0.000000e+00> : vector<8xf32>
    %386 = vector.multi_reduction <add>, %385, %cst_182 [1] : vector<8x32xf32> to vector<8xf32>
    %387 = vector.shape_cast %386 : vector<8xf32> to vector<8x1xf32>
    %cst_183 = arith.constant 3.200000e+01 : f32
    %388 = vector.broadcast %cst_183 : f32 to vector<8x1xf32>
    %389 = arith.divf %387, %388 : vector<8x1xf32>
    %390 = vector.broadcast %382 : vector<8x1xf32> to vector<8x32xf32>
    %391 = arith.subf %374, %390 : vector<8x32xf32>
    %cst_184 = arith.constant 9.99999974E-6 : f32
    %392 = vector.broadcast %cst_184 : f32 to vector<8x1xf32>
    %393 = arith.addf %389, %392 : vector<8x1xf32>
    %394 = math.rsqrt %393 : vector<8x1xf32>
    %395 = vector.broadcast %394 : vector<8x1xf32> to vector<8x32xf32>
    %396 = arith.mulf %391, %395 : vector<8x32xf32>
    %397 = vector.broadcast %376 : vector<1x32xf32> to vector<8x32xf32>
    %398 = arith.mulf %396, %397 : vector<8x32xf32>
    %399 = vector.broadcast %378 : vector<1x32xf32> to vector<8x32xf32>
    %400 = arith.addf %398, %399 : vector<8x32xf32>
    %cst_185 = arith.constant dense<0.000000e+00> : vector<32xf32>
    %401 = vector.multi_reduction <add>, %400, %cst_185 [0] : vector<8x32xf32> to vector<32xf32>
    %402 = vector.shape_cast %401 : vector<32xf32> to vector<1x32xf32>
    %cst_186 = arith.constant 8.000000e+00 : f32
    %403 = vector.broadcast %cst_186 : f32 to vector<1x32xf32>
    %404 = arith.divf %402, %403 : vector<1x32xf32>
    %405 = arith.truncf %404 : vector<1x32xf32> to vector<1x32xbf16>
    %c0_187 = arith.constant 0 : index
    %c0_188 = arith.constant 0 : index
    %406 = vector.load %arg20[%c0_187, %c0_188] : memref<32x128xbf16, #tpu.memory_space<vmem>>, vector<32x128xbf16>
    %cst_189 = arith.constant dense<0.000000e+00> : vector<1x128xf32>
    %407 = tpu.matmul %405, %406, %cst_189 {dimension_numbers = #tpu.dot_dimension_numbers<[1], [0], [0], [1], [0, 0, 1, 1], [], []>} : vector<1x32xbf16>, vector<32x128xbf16>, vector<1x128xf32> -> vector<1x128xf32>
    %c0_190 = arith.constant 0 : index
    %c0_191 = arith.constant 0 : index
    %408 = vector.load %arg21[%c0_190, %c0_191] : memref<1x128xf32, #tpu.memory_space<vmem>>, vector<1x128xf32>
    %409 = arith.addf %407, %408 : vector<1x128xf32>
    %cst_192 = arith.constant dense<0xFF800000> : vector<1xf32>
    %410 = vector.multi_reduction <maximumf>, %409, %cst_192 [1] : vector<1x128xf32> to vector<1xf32>
    %411 = vector.shape_cast %410 : vector<1xf32> to vector<1x1xf32>
    %412 = vector.broadcast %411 : vector<1x1xf32> to vector<1x128xf32>
    %413 = arith.subf %409, %412 : vector<1x128xf32>
    %414 = math.exp %413 : vector<1x128xf32>
    %cst_193 = arith.constant dense<0.000000e+00> : vector<1xf32>
    %415 = vector.multi_reduction <add>, %414, %cst_193 [1] : vector<1x128xf32> to vector<1xf32>
    %416 = vector.shape_cast %415 : vector<1xf32> to vector<1x1xf32>
    %417 = math.log %416 : vector<1x1xf32>
    %418 = vector.broadcast %417 : vector<1x1xf32> to vector<1x128xf32>
    %419 = arith.subf %413, %418 : vector<1x128xf32>
    %c0_194 = arith.constant 0 : index
    %c0_195 = arith.constant 0 : index
    %c0_196 = arith.constant 0 : index
    %420 = vector.load %arg22[%c0_194, %c0_195, %c0_196] : memref<1x1x128xf32, #tpu.memory_space<vmem>>, vector<1x1x128xf32>
    %421 = vector.shape_cast %420 : vector<1x1x128xf32> to vector<1x128xf32>
    %422 = vector.shape_cast %419 : vector<1x128xf32> to vector<1x1x128xf32>
    tpu.vector_store %arg22[%c0_194, %c0_195, %c0_196], %422 {strides = array<i32>} : memref<1x1x128xf32, #tpu.memory_space<vmem>>, vector<1x1x128xf32>,
    return
  }
  func.func @transform_0(%arg0: i32) -> (i32, i32, i32) {
    %c0_i32 = arith.constant 0 : i32
    %c0_i32_0 = arith.constant 0 : i32
    %c0_i32_1 = arith.constant 0 : i32
    return %arg0, %c0_i32, %c0_i32_0 : i32, i32, i32
  }
  func.func @transform_1(%arg0: i32) -> (i32, i32, i32) {
    %c0_i32 = arith.constant 0 : i32
    %c0_i32_0 = arith.constant 0 : i32
    %c0_i32_1 = arith.constant 0 : i32
    return %arg0, %c0_i32, %c0_i32_0 : i32, i32, i32
  }
  func.func @transform_2(%arg0: i32) -> (i32, i32) {
    %c0_i32 = arith.constant 0 : i32
    %c0_i32_0 = arith.constant 0 : i32
    %c0_i32_1 = arith.constant 0 : i32
    return %c0_i32, %c0_i32_0 : i32, i32
  }
  func.func @transform_3(%arg0: i32) -> (i32, i32) {
    %c0_i32 = arith.constant 0 : i32
    %c0_i32_0 = arith.constant 0 : i32
    %c0_i32_1 = arith.constant 0 : i32
    return %c0_i32, %c0_i32_0 : i32, i32
  }
  func.func @transform_4(%arg0: i32) -> (i32, i32) {
    %c0_i32 = arith.constant 0 : i32
    %c0_i32_0 = arith.constant 0 : i32
    %c0_i32_1 = arith.constant 0 : i32
    return %c0_i32, %c0_i32_0 : i32, i32
  }
  func.func @transform_5(%arg0: i32) -> (i32, i32) {
    %c0_i32 = arith.constant 0 : i32
    %c0_i32_0 = arith.constant 0 : i32
    %c0_i32_1 = arith.constant 0 : i32
    return %c0_i32, %c0_i32_0 : i32, i32
  }
  func.func @transform_6(%arg0: i32) -> (i32, i32) {
    %c0_i32 = arith.constant 0 : i32
    %c0_i32_0 = arith.constant 0 : i32
    %c0_i32_1 = arith.constant 0 : i32
    return %c0_i32, %c0_i32_0 : i32, i32
  }
  func.func @transform_7(%arg0: i32) -> (i32, i32, i32) {
    %c0_i32 = arith.constant 0 : i32
    %c0_i32_0 = arith.constant 0 : i32
    %c0_i32_1 = arith.constant 0 : i32
    %c0_i32_2 = arith.constant 0 : i32
    return %c0_i32, %c0_i32_0, %c0_i32_1 : i32, i32, i32
  }
  func.func @transform_8(%arg0: i32) -> (i32, i32, i32) {
    %c0_i32 = arith.constant 0 : i32
    %c0_i32_0 = arith.constant 0 : i32
    %c0_i32_1 = arith.constant 0 : i32
    %c0_i32_2 = arith.constant 0 : i32
    return %c0_i32, %c0_i32_0, %c0_i32_1 : i32, i32, i32
  }
  func.func @transform_9(%arg0: i32) -> (i32, i32, i32, i32) {
    %c0_i32 = arith.constant 0 : i32
    %c0_i32_0 = arith.constant 0 : i32
    %c0_i32_1 = arith.constant 0 : i32
    %c0_i32_2 = arith.constant 0 : i32
    %c0_i32_3 = arith.constant 0 : i32
    return %c0_i32, %c0_i32_0, %c0_i32_1, %c0_i32_2 : i32, i32, i32, i32
  }
  func.func @transform_10(%arg0: i32) -> (i32, i32, i32) {
    %c0_i32 = arith.constant 0 : i32
    %c0_i32_0 = arith.constant 0 : i32
    %c0_i32_1 = arith.constant 0 : i32
    %c0_i32_2 = arith.constant 0 : i32
    return %c0_i32, %c0_i32_0, %c0_i32_1 : i32, i32, i32
  }
  func.func @transform_11(%arg0: i32) -> (i32, i32, i32) {
    %c0_i32 = arith.constant 0 : i32
    %c0_i32_0 = arith.constant 0 : i32
    %c0_i32_1 = arith.constant 0 : i32
    %c0_i32_2 = arith.constant 0 : i32
    return %c0_i32, %c0_i32_0, %c0_i32_1 : i32, i32, i32
  }
  func.func @transform_12(%arg0: i32) -> (i32, i32, i32) {
    %c0_i32 = arith.constant 0 : i32
    %c0_i32_0 = arith.constant 0 : i32
    %c0_i32_1 = arith.constant 0 : i32
    %c0_i32_2 = arith.constant 0 : i32
    return %c0_i32, %c0_i32_0, %c0_i32_1 : i32, i32, i32
  }
  func.func @transform_13(%arg0: i32) -> (i32, i32, i32) {
    %c0_i32 = arith.constant 0 : i32
    %c0_i32_0 = arith.constant 0 : i32
    %c0_i32_1 = arith.constant 0 : i32
    %c0_i32_2 = arith.constant 0 : i32
    return %c0_i32, %c0_i32_0, %c0_i32_1 : i32, i32, i32
  }
  func.func @transform_14(%arg0: i32) -> (i32, i32, i32) {
    %c0_i32 = arith.constant 0 : i32
    %c0_i32_0 = arith.constant 0 : i32
    %c0_i32_1 = arith.constant 0 : i32
    %c0_i32_2 = arith.constant 0 : i32
    return %c0_i32, %c0_i32_0, %c0_i32_1 : i32, i32, i32
  }
  func.func @transform_15(%arg0: i32) -> (i32, i32, i32) {
    %c0_i32 = arith.constant 0 : i32
    %c0_i32_0 = arith.constant 0 : i32
    %c0_i32_1 = arith.constant 0 : i32
    %c0_i32_2 = arith.constant 0 : i32
    return %c0_i32, %c0_i32_0, %c0_i32_1 : i32, i32, i32
  }
  func.func @transform_16(%arg0: i32) -> (i32, i32, i32) {
    %c0_i32 = arith.constant 0 : i32
    %c0_i32_0 = arith.constant 0 : i32
    %c0_i32_1 = arith.constant 0 : i32
    %c0_i32_2 = arith.constant 0 : i32
    return %c0_i32, %c0_i32_0, %c0_i32_1 : i32, i32, i32
  }
  func.func @transform_17(%arg0: i32) -> (i32, i32, i32) {
    %c0_i32 = arith.constant 0 : i32
    %c0_i32_0 = arith.constant 0 : i32
    %c0_i32_1 = arith.constant 0 : i32
    %c0_i32_2 = arith.constant 0 : i32
    return %c0_i32, %c0_i32_0, %c0_i32_1 : i32, i32, i32
  }
  func.func @transform_18(%arg0: i32) -> (i32, i32, i32) {
    %c0_i32 = arith.constant 0 : i32
    %c0_i32_0 = arith.constant 0 : i32
    %c0_i32_1 = arith.constant 0 : i32
    %c0_i32_2 = arith.constant 0 : i32
    return %c0_i32, %c0_i32_0, %c0_i32_1 : i32, i32, i32
  }
  func.func @transform_19(%arg0: i32) -> (i32, i32) {
    %c0_i32 = arith.constant 0 : i32
    %c0_i32_0 = arith.constant 0 : i32
    %c0_i32_1 = arith.constant 0 : i32
    return %c0_i32, %c0_i32_0 : i32, i32
  }
  func.func @transform_20(%arg0: i32) -> (i32, i32) {
    %c0_i32 = arith.constant 0 : i32
    %c0_i32_0 = arith.constant 0 : i32
    %c0_i32_1 = arith.constant 0 : i32
    return %c0_i32, %c0_i32_0 : i32, i32
  }
  func.func @transform_21(%arg0: i32) -> (i32, i32, i32) {
    %c0_i32 = arith.constant 0 : i32
    %c0_i32_0 = arith.constant 0 : i32
    %c0_i32_1 = arith.constant 0 : i32
    return %arg0, %c0_i32, %c0_i32_0 : i32, i32, i32
  }
}

</mosaic_0001>

<llo_original>
// kernel: mynet_video_forward.1
$region0: #{mynet_video_forward.1}
  #allocation0 [shape = 'u32[]', space=smem, size = 0x4, offset = 0x4, fixed_abs, tag = 'smem constant byte address 0x4 - core index']
  #allocation1 [shape = 'u32[72,128]{1,0:T(1,128)}', space=vmem, size = 0x9000, scoped, tag = 'internal scratch']
  %s0 = inlined_call_operand.vmem [shape: bf16[2,8,3072], index: 0, kind: input, shape index: {}]
  %s1 = inlined_call_operand.vmem [shape: f32[2,1,8], index: 1, kind: input, shape index: {}]
  %s2 = inlined_call_operand.vmem [shape: f32[8,32], index: 2, kind: input, shape index: {}]
  %s3 = inlined_call_operand.hbm [shape: bf16[3072,512], index: 3, kind: input, shape index: {}]
  %s4 = inlined_call_operand.hbm [shape: f32[1,512], index: 4, kind: input, shape index: {}]
  %s5 = inlined_call_operand.vmem [shape: bf16[512,32], index: 5, kind: input, shape index: {}]
  %s6 = inlined_call_operand.hbm [shape: f32[1,32], index: 6, kind: input, shape index: {}]
  %s7 = inlined_call_operand.hbm [shape: bf16[3,32,96], index: 7, kind: input, shape index: {}]
  %s8 = inlined_call_operand.hbm [shape: f32[3,1,96], index: 8, kind: input, shape index: {}]
  %s9 = inlined_call_operand.hbm [shape: bf16[3,2,16,32], index: 9, kind: input, shape index: {}]
  %s10 = inlined_call_operand.hbm [shape: f32[3,1,32], index: 10, kind: input, shape index: {}]
  %s11 = inlined_call_operand.hbm [shape: bf16[3,32,64], index: 11, kind: input, shape index: {}]
  %s12 = inlined_call_operand.hbm [shape: f32[3,1,64], index: 12, kind: input, shape index: {}]
  %s13 = inlined_call_operand.vmem [shape: bf16[3,64,32], index: 13, kind: input, shape index: {}]
  %s14 = inlined_call_operand.hbm [shape: f32[3,1,32], index: 14, kind: input, shape index: {}]
  %s15 = inlined_call_operand.hbm [shape: f32[3,1,32], index: 15, kind: input, shape index: {}]
  %s16 = inlined_call_operand.hbm [shape: f32[3,1,32], index: 16, kind: input, shape index: {}]
  %s17 = inlined_call_operand.hbm [shape: f32[3,1,32], index: 17, kind: input, shape index: {}]
  %s18 = inlined_call_operand.hbm [shape: f32[3,1,32], index: 18, kind: input, shape index: {}]
  %s19 = inlined_call_operand.hbm [shape: bf16[32,128], index: 19, kind: input, shape index: {}]
  %s20 = inlined_call_operand.hbm [shape: f32[1,128], index: 20, kind: input, shape index: {}]
  %s21 = inlined_call_operand.hbm [shape: f32[2,1,128], index: 21, kind: output, shape index: {}]
  %s22 = sld [smem:[#allocation0]]
  $region181: #{mynet_video_forward.1} parent=0
    _
  %s24 = ssub.s32 1, %s22
  %s25 = scalar_select 0, %s24, %s22
  $region1: #{mynet_video_forward.1} parent=0
    #allocation2 [shape = 'u8[3145728]{0}', space=vmem, size = 0x300000, scoped, tag = 'input window, operand 3, single buffered']
    #allocation3 [shape = 's32[2]{0}', space=sflag, size = 0x8, scoped, tag = 'scoped memory for mynet_video_forward.1']
    #allocation4 [shape = 's32[2]{0}', space=sflag, size = 0x8, scoped, tag = 'scoped memory for mynet_video_forward.1']
    #allocation5 [shape = 'u8[2048]{0}', space=vmem, size = 0x800, scoped, tag = 'input window, operand 4, single buffered']
    #allocation6 [shape = 's32[1]{0}', space=sflag, size = 0x4, scoped, tag = 'scoped memory for mynet_video_forward.1']
    #allocation7 [shape = 'u8[512]{0}', space=vmem, size = 0x400, scoped, tag = 'input window, operand 6, single buffered']
    #allocation8 [shape = 'u8[24576]{0}', space=vmem, size = 0x6000, scoped, tag = 'input window, operand 7, single buffered']
    #allocation9 [shape = 's32[1]{0}', space=sflag, size = 0x4, scoped, tag = 'scoped memory for mynet_video_forward.1']
    #allocation10 [shape = 'u8[1536]{0}', space=vmem, size = 0x800, scoped, tag = 'input window, operand 8, single buffered']
    #allocation11 [shape = 'u8[24576]{0}', space=vmem, size = 0x6000, scoped, tag = 'input window, operand 9, single buffered']
    #allocation12 [shape = 's32[1]{0}', space=sflag, size = 0x4, scoped, tag = 'scoped memory for mynet_video_forward.1']
    #allocation13 [shape = 'u8[1536]{0}', space=vmem, size = 0x800, scoped, tag = 'input window, operand 10, single buffered']
    #allocation14 [shape = 'u8[24576]{0}', space=vmem, size = 0x6000, scoped, tag = 'input window, operand 11, single buffered']
    #allocation15 [shape = 's32[1]{0}', space=sflag, size = 0x4, scoped, tag = 'scoped memory for mynet_video_forward.1']
    #allocation16 [shape = 'u8[1536]{0}', space=vmem, size = 0x800, scoped, tag = 'input window, operand 12, single buffered']
    #allocation17 [shape = 'u8[1536]{0}', space=vmem, size = 0x800, scoped, tag = 'input window, operand 14, single buffered']
    #allocation18 [shape = 's32[1]{0}', space=sflag, size = 0x4, scoped, tag = 'scoped memory for mynet_video_forward.1']
    #allocation19 [shape = 'u8[1536]{0}', space=vmem, size = 0x800, scoped, tag = 'input window, operand 15, single buffered']
    #allocation20 [shape = 'u8[1536]{0}', space=vmem, size = 0x800, scoped, tag = 'input window, operand 16, single buffered']
    #allocation21 [shape = 's32[1]{0}', space=sflag, size = 0x4, scoped, tag = 'scoped memory for mynet_video_forward.1']
    #allocation22 [shape = 'u8[1536]{0}', space=vmem, size = 0x800, scoped, tag = 'input window, operand 17, single buffered']
    #allocation23 [shape = 'u8[1536]{0}', space=vmem, size = 0x800, scoped, tag = 'input window, operand 18, single buffered']
    #allocation24 [shape = 's32[1]{0}', space=sflag, size = 0x4, scoped, tag = 'scoped memory for mynet_video_forward.1']
    #allocation25 [shape = 'u8[8192]{0}', space=vmem, size = 0x2000, scoped, tag = 'input window, operand 19, single buffered']
    #allocation26 [shape = 'u8[512]{0}', space=vmem, size = 0x400, scoped, tag = 'input window, operand 20, single buffered']
    #allocation27 [shape = 's32[1]{0}', space=sflag, size = 0x4, scoped, tag = 'scoped memory for mynet_video_forward.1']
    #allocation28 [shape = 'u8[1024]{0}', space=vmem, size = 0x400, scoped, tag = 'output window, operand 0']
    %26 = vsyncpa [#allocation3], 0
    %27 = vsyncpa [#allocation6], 0
    %28 = vsyncpa [#allocation9], 0
    %29 = vsyncpa [#allocation12], 0
    %30 = vsyncpa [#allocation15], 0
    %31 = vsyncpa [#allocation18], 0
    %32 = vsyncpa [#allocation21], 0
    %33 = vsyncpa [#allocation24], 0
    %34 = vsyncpa [#allocation27], 0
    %35 = vsyncpa [#allocation4], 0
    %s36 = scalar_lea.sflag [#allocation4], 1
    %37 = vsyncpa %s36, 0
    loop: start=0, step=1, limit=4
    $region2: #{mynet_video_forward.1} parent=1 // loop_pre_header
      _
    $region3: #{mynet_video_forward.1} parent=1 // loop_header
      %s39 = sphi 0, %s43
      %p40 = scmp.ge.s32.totalorder %s39, 4
      %s49 = sphi 0, %s51
      %s52 = sphi 0, %s49
      %s53 = sphi 0, %s52
      %s69 = sphi 0, %s53
      %s75 = sphi 0, %s77
      %s78 = sphi 0, %s75
      %s79 = sphi 0, %s78
      %s95 = sphi 0, %s79
      %s99 = sphi 0, %s99
      %s101 = sphi 0, %s99
      %s102 = sphi 0, %s101
      %s116 = sphi 0, %s102
      %s120 = sphi 0, %s120
      %s122 = sphi 0, %s120
      %s123 = sphi 0, %s122
      %s137 = sphi 0, %s123
      %s141 = sphi 0, %s141
      %s143 = sphi 0, %s141
      %s144 = sphi 0, %s143
      %s158 = sphi 0, %s144
      %s162 = sphi 0, %s162
      %s164 = sphi 0, %s162
      %s165 = sphi 0, %s164
      %s179 = sphi 0, %s165
      %s183 = sphi 0, %s183
      %s185 = sphi 0, %s183
      %s186 = sphi 0, %s185
      %s200 = sphi 0, %s186
      %s204 = sphi 0, %s204
      %s206 = sphi 0, %s204
      %s207 = sphi 0, %s206
      %s221 = sphi 0, %s207
      %s225 = sphi 0, %s225
      %s227 = sphi 0, %s225
      %s228 = sphi 0, %s227
      %s242 = sphi 0, %s228
      %s246 = sphi 0, %s246
      %s248 = sphi 0, %s246
      %s249 = sphi 0, %s248
      %s263 = sphi 0, %s249
      %s267 = sphi 0, %s267
      %s269 = sphi 0, %s267
      %s270 = sphi 0, %s269
      %s284 = sphi 0, %s270
      %s288 = sphi 0, %s288
      %s290 = sphi 0, %s288
      %s291 = sphi 0, %s290
      %s305 = sphi 0, %s291
      %s309 = sphi 0, %s309
      %s311 = sphi 0, %s309
      %s312 = sphi 0, %s311
      %s326 = sphi 0, %s312
      %s330 = sphi 0, %s330
      %s332 = sphi 0, %s330
      %s333 = sphi 0, %s332
      %s347 = sphi 0, %s333
      %s351 = sphi 0, %s351
      %s353 = sphi 0, %s351
      %s354 = sphi 0, %s353
      %s368 = sphi 0, %s354
      %s372 = sphi 0, %s372
      %s374 = sphi 0, %s372
      %s375 = sphi 0, %s374
      %s389 = sphi 0, %s375
      %s393 = sphi 0, %s393
      %s395 = sphi 0, %s393
      %s396 = sphi 0, %s395
      %s410 = sphi 0, %s396
      %s414 = sphi 0, %s414
      %s416 = sphi 0, %s414
      %s417 = sphi 0, %s416
      %s431 = sphi 0, %s417
      %s435 = sphi 0, %s435
      %s437 = sphi 0, %s435
      %s438 = sphi 0, %s437
      %s452 = sphi 0, %s438
      %s456 = sphi 0, %s456
      %s458 = sphi 0, %s456
      %s459 = sphi 0, %s458
      %s473 = sphi 0, %s459
      %s477 = sphi 0, %s477
      %s479 = sphi 0, %s477
      %s480 = sphi 0, %s479
      %s494 = sphi 0, %s480
      %s500 = sphi 0, %s502
      %s503 = sphi 0, %s500
      %s504 = sphi 0, %s503
      %s520 = sphi 0, %s504
    $region4: #{mynet_video_forward.1} parent=1 // loop_header_branch
      %42 = sbr.rel (%p40) target = $region8
    $region5: #{mynet_video_forward.1} parent=1 // loop_body
      %s44 = ssub.s32 %s39, 1
      %s45 = ssub.s32 %s39, 2
      %s46 = sadd.s32 %s39, 1
      %s47 = ssub.s32 %s39, %s46
      %p48 = scmp.eq.s32.totalorder %s47, 0
      %s50 = sadd.s32 %s49, 1
      %s51 = scalar_select %p48, %s49, %s50
      %p54 = pneg %p48
      %p55 = scmp.eq.s32.totalorder %s39, 1
      %p56 = por %p54, %p55
      %p57 = scmp.ne.s32.totalorder %s49, %s52
      %p58 = scmp.eq.s32.totalorder %s39, 0
      %p59 = por %p57, %p58
      %p60 = scmp.ne.s32.totalorder %s49, %s52
      %p61 = scmp.eq.s32.totalorder %s44, 1
      %p62 = por %p60, %p61
      %p63 = scmp.ne.s32.totalorder %s52, %s53
      %p64 = scmp.eq.s32.totalorder %s44, 0
      %p65 = por %p63, %p64
      %p66 = scmp.ne.s32.totalorder %s52, %s53
      %p67 = scmp.eq.s32.totalorder %s45, 1
      %p68 = por %p66, %p67
      %p70 = scmp.ne.s32.totalorder %s53, %s69
      %p71 = scmp.eq.s32.totalorder %s45, 0
      %p72 = por %p70, %p71
      %s73 = ssub.s32 %s39, %s46
      %p74 = scmp.eq.s32.totalorder %s73, 0
      %s76 = sadd.s32 %s75, 1
      %s77 = scalar_select %p74, %s75, %s76
      %p80 = pneg %p74
      %p81 = scmp.eq.s32.totalorder %s39, 1
      %p82 = por %p80, %p81
      %p83 = scmp.ne.s32.totalorder %s75, %s78
      %p84 = scmp.eq.s32.totalorder %s39, 0
      %p85 = por %p83, %p84
      %p86 = scmp.ne.s32.totalorder %s75, %s78
      %p87 = scmp.eq.s32.totalorder %s44, 1
      %p88 = por %p86, %p87
      %p89 = scmp.ne.s32.totalorder %s78, %s79
      %p90 = scmp.eq.s32.totalorder %s44, 0
      %p91 = por %p89, %p90
      %p92 = scmp.ne.s32.totalorder %s78, %s79
      %p93 = scmp.eq.s32.totalorder %s45, 1
      %p94 = por %p92, %p93
      %p96 = scmp.ne.s32.totalorder %s79, %s95
      %p97 = scmp.eq.s32.totalorder %s45, 0
      %p98 = por %p96, %p97
      %s100 = sadd.s32 %s99, 1
      %p103 = scmp.eq.s32.totalorder %s39, 1
      %p104 = scmp.ne.s32.totalorder %s99, %s101
      %p105 = scmp.eq.s32.totalorder %s39, 0
      %p106 = por %p104, %p105
      %p107 = scmp.ne.s32.totalorder %s99, %s101
      %p108 = scmp.eq.s32.totalorder %s44, 1
      %p109 = por %p107, %p108
      %p110 = scmp.ne.s32.totalorder %s101, %s102
      %p111 = scmp.eq.s32.totalorder %s44, 0
      %p112 = por %p110, %p111
      %p113 = scmp.ne.s32.totalorder %s101, %s102
      %p114 = scmp.eq.s32.totalorder %s45, 1
      %p115 = por %p113, %p114
      %p117 = scmp.ne.s32.totalorder %s102, %s116
      %p118 = scmp.eq.s32.totalorder %s45, 0
      %p119 = por %p117, %p118
      %s121 = sadd.s32 %s120, 1
      %p124 = scmp.eq.s32.totalorder %s39, 1
      %p125 = scmp.ne.s32.totalorder %s120, %s122
      %p126 = scmp.eq.s32.totalorder %s39, 0
      %p127 = por %p125, %p126
      %p128 = scmp.ne.s32.totalorder %s120, %s122
      %p129 = scmp.eq.s32.totalorder %s44, 1
      %p130 = por %p128, %p129
      %p131 = scmp.ne.s32.totalorder %s122, %s123
      %p132 = scmp.eq.s32.totalorder %s44, 0
      %p133 = por %p131, %p132
      %p134 = scmp.ne.s32.totalorder %s122, %s123
      %p135 = scmp.eq.s32.totalorder %s45, 1
      %p136 = por %p134, %p135
      %p138 = scmp.ne.s32.totalorder %s123, %s137
      %p139 = scmp.eq.s32.totalorder %s45, 0
      %p140 = por %p138, %p139
      %s142 = sadd.s32 %s141, 1
      %p145 = scmp.eq.s32.totalorder %s39, 1
      %p146 = scmp.ne.s32.totalorder %s141, %s143
      %p147 = scmp.eq.s32.totalorder %s39, 0
      %p148 = por %p146, %p147
      %p149 = scmp.ne.s32.totalorder %s141, %s143
      %p150 = scmp.eq.s32.totalorder %s44, 1
      %p151 = por %p149, %p150
      %p152 = scmp.ne.s32.totalorder %s143, %s144
      %p153 = scmp.eq.s32.totalorder %s44, 0
      %p154 = por %p152, %p153
      %p155 = scmp.ne.s32.totalorder %s143, %s144
      %p156 = scmp.eq.s32.totalorder %s45, 1
      %p157 = por %p155, %p156
      %p159 = scmp.ne.s32.totalorder %s144, %s158
      %p160 = scmp.eq.s32.totalorder %s45, 0
      %p161 = por %p159, %p160
      %s163 = sadd.s32 %s162, 1
      %p166 = scmp.eq.s32.totalorder %s39, 1
      %p167 = scmp.ne.s32.totalorder %s162, %s164
      %p168 = scmp.eq.s32.totalorder %s39, 0
      %p169 = por %p167, %p168
      %p170 = scmp.ne.s32.totalorder %s162, %s164
      %p171 = scmp.eq.s32.totalorder %s44, 1
      %p172 = por %p170, %p171
      %p173 = scmp.ne.s32.totalorder %s164, %s165
      %p174 = scmp.eq.s32.totalorder %s44, 0
      %p175 = por %p173, %p174
      %p176 = scmp.ne.s32.totalorder %s164, %s165
      %p177 = scmp.eq.s32.totalorder %s45, 1
      %p178 = por %p176, %p177
      %p180 = scmp.ne.s32.totalorder %s165, %s179
      %p181 = scmp.eq.s32.totalorder %s45, 0
      %p182 = por %p180, %p181
      %s184 = sadd.s32 %s183, 1
      %p187 = scmp.eq.s32.totalorder %s39, 1
      %p188 = scmp.ne.s32.totalorder %s183, %s185
      %p189 = scmp.eq.s32.totalorder %s39, 0
      %p190 = por %p188, %p189
      %p191 = scmp.ne.s32.totalorder %s183, %s185
      %p192 = scmp.eq.s32.totalorder %s44, 1
      %p193 = por %p191, %p192
      %p194 = scmp.ne.s32.totalorder %s185, %s186
      %p195 = scmp.eq.s32.totalorder %s44, 0
      %p196 = por %p194, %p195
      %p197 = scmp.ne.s32.totalorder %s185, %s186
      %p198 = scmp.eq.s32.totalorder %s45, 1
      %p199 = por %p197, %p198
      %p201 = scmp.ne.s32.totalorder %s186, %s200
      %p202 = scmp.eq.s32.totalorder %s45, 0
      %p203 = por %p201, %p202
      %s205 = sadd.s32 %s204, 1
      %p208 = scmp.eq.s32.totalorder %s39, 1
      %p209 = scmp.ne.s32.totalorder %s204, %s206
      %p210 = scmp.eq.s32.totalorder %s39, 0
      %p211 = por %p209, %p210
      %p212 = scmp.ne.s32.totalorder %s204, %s206
      %p213 = scmp.eq.s32.totalorder %s44, 1
      %p214 = por %p212, %p213
      %p215 = scmp.ne.s32.totalorder %s206, %s207
      %p216 = scmp.eq.s32.totalorder %s44, 0
      %p217 = por %p215, %p216
      %p218 = scmp.ne.s32.totalorder %s206, %s207
      %p219 = scmp.eq.s32.totalorder %s45, 1
      %p220 = por %p218, %p219
      %p222 = scmp.ne.s32.totalorder %s207, %s221
      %p223 = scmp.eq.s32.totalorder %s45, 0
      %p224 = por %p222, %p223
      %s226 = sadd.s32 %s225, 1
      %p229 = scmp.eq.s32.totalorder %s39, 1
      %p230 = scmp.ne.s32.totalorder %s225, %s227
      %p231 = scmp.eq.s32.totalorder %s39, 0
      %p232 = por %p230, %p231
      %p233 = scmp.ne.s32.totalorder %s225, %s227
      %p234 = scmp.eq.s32.totalorder %s44, 1
      %p235 = por %p233, %p234
      %p236 = scmp.ne.s32.totalorder %s227, %s228
      %p237 = scmp.eq.s32.totalorder %s44, 0
      %p238 = por %p236, %p237
      %p239 = scmp.ne.s32.totalorder %s227, %s228
      %p240 = scmp.eq.s32.totalorder %s45, 1
      %p241 = por %p239, %p240
      %p243 = scmp.ne.s32.totalorder %s228, %s242
      %p244 = scmp.eq.s32.totalorder %s45, 0
      %p245 = por %p243, %p244
      %s247 = sadd.s32 %s246, 1
      %p250 = scmp.eq.s32.totalorder %s39, 1
      %p251 = scmp.ne.s32.totalorder %s246, %s248
      %p252 = scmp.eq.s32.totalorder %s39, 0
      %p253 = por %p251, %p252
      %p254 = scmp.ne.s32.totalorder %s246, %s248
      %p255 = scmp.eq.s32.totalorder %s44, 1
      %p256 = por %p254, %p255
      %p257 = scmp.ne.s32.totalorder %s248, %s249
      %p258 = scmp.eq.s32.totalorder %s44, 0
      %p259 = por %p257, %p258
      %p260 = scmp.ne.s32.totalorder %s248, %s249
      %p261 = scmp.eq.s32.totalorder %s45, 1
      %p262 = por %p260, %p261
      %p264 = scmp.ne.s32.totalorder %s249, %s263
      %p265 = scmp.eq.s32.totalorder %s45, 0
      %p266 = por %p264, %p265
      %s268 = sadd.s32 %s267, 1
      %p271 = scmp.eq.s32.totalorder %s39, 1
      %p272 = scmp.ne.s32.totalorder %s267, %s269
      %p273 = scmp.eq.s32.totalorder %s39, 0
      %p274 = por %p272, %p273
      %p275 = scmp.ne.s32.totalorder %s267, %s269
      %p276 = scmp.eq.s32.totalorder %s44, 1
      %p277 = por %p275, %p276
      %p278 = scmp.ne.s32.totalorder %s269, %s270
      %p279 = scmp.eq.s32.totalorder %s44, 0
      %p280 = por %p278, %p279
      %p281 = scmp.ne.s32.totalorder %s269, %s270
      %p282 = scmp.eq.s32.totalorder %s45, 1
      %p283 = por %p281, %p282
      %p285 = scmp.ne.s32.totalorder %s270, %s284
      %p286 = scmp.eq.s32.totalorder %s45, 0
      %p287 = por %p285, %p286
      %s289 = sadd.s32 %s288, 1
      %p292 = scmp.eq.s32.totalorder %s39, 1
      %p293 = scmp.ne.s32.totalorder %s288, %s290
      %p294 = scmp.eq.s32.totalorder %s39, 0
      %p295 = por %p293, %p294
      %p296 = scmp.ne.s32.totalorder %s288, %s290
      %p297 = scmp.eq.s32.totalorder %s44, 1
      %p298 = por %p296, %p297
      %p299 = scmp.ne.s32.totalorder %s290, %s291
      %p300 = scmp.eq.s32.totalorder %s44, 0
      %p301 = por %p299, %p300
      %p302 = scmp.ne.s32.totalorder %s290, %s291
      %p303 = scmp.eq.s32.totalorder %s45, 1
      %p304 = por %p302, %p303
      %p306 = scmp.ne.s32.totalorder %s291, %s305
      %p307 = scmp.eq.s32.totalorder %s45, 0
      %p308 = por %p306, %p307
      %s310 = sadd.s32 %s309, 1
      %p313 = scmp.eq.s32.totalorder %s39, 1
      %p314 = scmp.ne.s32.totalorder %s309, %s311
      %p315 = scmp.eq.s32.totalorder %s39, 0
      %p316 = por %p314, %p315
      %p317 = scmp.ne.s32.totalorder %s309, %s311
      %p318 = scmp.eq.s32.totalorder %s44, 1
      %p319 = por %p317, %p318
      %p320 = scmp.ne.s32.totalorder %s311, %s312
      %p321 = scmp.eq.s32.totalorder %s44, 0
      %p322 = por %p320, %p321
      %p323 = scmp.ne.s32.totalorder %s311, %s312
      %p324 = scmp.eq.s32.totalorder %s45, 1
      %p325 = por %p323, %p324
      %p327 = scmp.ne.s32.totalorder %s312, %s326
      %p328 = scmp.eq.s32.totalorder %s45, 0
      %p329 = por %p327, %p328
      %s331 = sadd.s32 %s330, 1
      %p334 = scmp.eq.s32.totalorder %s39, 1
      %p335 = scmp.ne.s32.totalorder %s330, %s332
      %p336 = scmp.eq.s32.totalorder %s39, 0
      %p337 = por %p335, %p336
      %p338 = scmp.ne.s32.totalorder %s330, %s332
      %p339 = scmp.eq.s32.totalorder %s44, 1
      %p340 = por %p338, %p339
      %p341 = scmp.ne.s32.totalorder %s332, %s333
      %p342 = scmp.eq.s32.totalorder %s44, 0
      %p343 = por %p341, %p342
      %p344 = scmp.ne.s32.totalorder %s332, %s333
      %p345 = scmp.eq.s32.totalorder %s45, 1
      %p346 = por %p344, %p345
      %p348 = scmp.ne.s32.totalorder %s333, %s347
      %p349 = scmp.eq.s32.totalorder %s45, 0
      %p350 = por %p348, %p349
      %s352 = sadd.s32 %s351, 1
      %p355 = scmp.eq.s32.totalorder %s39, 1
      %p356 = scmp.ne.s32.totalorder %s351, %s353
      %p357 = scmp.eq.s32.totalorder %s39, 0
      %p358 = por %p356, %p357
      %p359 = scmp.ne.s32.totalorder %s351, %s353
      %p360 = scmp.eq.s32.totalorder %s44, 1
      %p361 = por %p359, %p360
      %p362 = scmp.ne.s32.totalorder %s353, %s354
      %p363 = scmp.eq.s32.totalorder %s44, 0
      %p364 = por %p362, %p363
      %p365 = scmp.ne.s32.totalorder %s353, %s354
      %p366 = scmp.eq.s32.totalorder %s45, 1
      %p367 = por %p365, %p366
      %p369 = scmp.ne.s32.totalorder %s354, %s368
      %p370 = scmp.eq.s32.totalorder %s45, 0
      %p371 = por %p369, %p370
      %s373 = sadd.s32 %s372, 1
      %p376 = scmp.eq.s32.totalorder %s39, 1
      %p377 = scmp.ne.s32.totalorder %s372, %s374
      %p378 = scmp.eq.s32.totalorder %s39, 0
      %p379 = por %p377, %p378
      %p380 = scmp.ne.s32.totalorder %s372, %s374
      %p381 = scmp.eq.s32.totalorder %s44, 1
      %p382 = por %p380, %p381
      %p383 = scmp.ne.s32.totalorder %s374, %s375
      %p384 = scmp.eq.s32.totalorder %s44, 0
      %p385 = por %p383, %p384
      %p386 = scmp.ne.s32.totalorder %s374, %s375
      %p387 = scmp.eq.s32.totalorder %s45, 1
      %p388 = por %p386, %p387
      %p390 = scmp.ne.s32.totalorder %s375, %s389
      %p391 = scmp.eq.s32.totalorder %s45, 0
      %p392 = por %p390, %p391
      %s394 = sadd.s32 %s393, 1
      %p397 = scmp.eq.s32.totalorder %s39, 1
      %p398 = scmp.ne.s32.totalorder %s393, %s395
      %p399 = scmp.eq.s32.totalorder %s39, 0
      %p400 = por %p398, %p399
      %p401 = scmp.ne.s32.totalorder %s393, %s395
      %p402 = scmp.eq.s32.totalorder %s44, 1
      %p403 = por %p401, %p402
      %p404 = scmp.ne.s32.totalorder %s395, %s396
      %p405 = scmp.eq.s32.totalorder %s44, 0
      %p406 = por %p404, %p405
      %p407 = scmp.ne.s32.totalorder %s395, %s396
      %p408 = scmp.eq.s32.totalorder %s45, 1
      %p409 = por %p407, %p408
      %p411 = scmp.ne.s32.totalorder %s396, %s410
      %p412 = scmp.eq.s32.totalorder %s45, 0
      %p413 = por %p411, %p412
      %s415 = sadd.s32 %s414, 1
      %p418 = scmp.eq.s32.totalorder %s39, 1
      %p419 = scmp.ne.s32.totalorder %s414, %s416
      %p420 = scmp.eq.s32.totalorder %s39, 0
      %p421 = por %p419, %p420
      %p422 = scmp.ne.s32.totalorder %s414, %s416
      %p423 = scmp.eq.s32.totalorder %s44, 1
      %p424 = por %p422, %p423
      %p425 = scmp.ne.s32.totalorder %s416, %s417
      %p426 = scmp.eq.s32.totalorder %s44, 0
      %p427 = por %p425, %p426
      %p428 = scmp.ne.s32.totalorder %s416, %s417
      %p429 = scmp.eq.s32.totalorder %s45, 1
      %p430 = por %p428, %p429
      %p432 = scmp.ne.s32.totalorder %s417, %s431
      %p433 = scmp.eq.s32.totalorder %s45, 0
      %p434 = por %p432, %p433
      %s436 = sadd.s32 %s435, 1
      %p439 = scmp.eq.s32.totalorder %s39, 1
      %p440 = scmp.ne.s32.totalorder %s435, %s437
      %p441 = scmp.eq.s32.totalorder %s39, 0
      %p442 = por %p440, %p441
      %p443 = scmp.ne.s32.totalorder %s435, %s437
      %p444 = scmp.eq.s32.totalorder %s44, 1
      %p445 = por %p443, %p444
      %p446 = scmp.ne.s32.totalorder %s437, %s438
      %p447 = scmp.eq.s32.totalorder %s44, 0
      %p448 = por %p446, %p447
      %p449 = scmp.ne.s32.totalorder %s437, %s438
      %p450 = scmp.eq.s32.totalorder %s45, 1
      %p451 = por %p449, %p450
      %p453 = scmp.ne.s32.totalorder %s438, %s452
      %p454 = scmp.eq.s32.totalorder %s45, 0
      %p455 = por %p453, %p454
      %s457 = sadd.s32 %s456, 1
      %p460 = scmp.eq.s32.totalorder %s39, 1
      %p461 = scmp.ne.s32.totalorder %s456, %s458
      %p462 = scmp.eq.s32.totalorder %s39, 0
      %p463 = por %p461, %p462
      %p464 = scmp.ne.s32.totalorder %s456, %s458
      %p465 = scmp.eq.s32.totalorder %s44, 1
      %p466 = por %p464, %p465
      %p467 = scmp.ne.s32.totalorder %s458, %s459
      %p468 = scmp.eq.s32.totalorder %s44, 0
      %p469 = por %p467, %p468
      %p470 = scmp.ne.s32.totalorder %s458, %s459
      %p471 = scmp.eq.s32.totalorder %s45, 1
      %p472 = por %p470, %p471
      %p474 = scmp.ne.s32.totalorder %s459, %s473
      %p475 = scmp.eq.s32.totalorder %s45, 0
      %p476 = por %p474, %p475
      %s478 = sadd.s32 %s477, 1
      %p481 = scmp.eq.s32.totalorder %s39, 1
      %p482 = scmp.ne.s32.totalorder %s477, %s479
      %p483 = scmp.eq.s32.totalorder %s39, 0
      %p484 = por %p482, %p483
      %p485 = scmp.ne.s32.totalorder %s477, %s479
      %p486 = scmp.eq.s32.totalorder %s44, 1
      %p487 = por %p485, %p486
      %p488 = scmp.ne.s32.totalorder %s479, %s480
      %p489 = scmp.eq.s32.totalorder %s44, 0
      %p490 = por %p488, %p489
      %p491 = scmp.ne.s32.totalorder %s479, %s480
      %p492 = scmp.eq.s32.totalorder %s45, 1
      %p493 = por %p491, %p492
      %p495 = scmp.ne.s32.totalorder %s480, %s494
      %p496 = scmp.eq.s32.totalorder %s45, 0
      %p497 = por %p495, %p496
      %s498 = ssub.s32 %s39, %s46
      %p499 = scmp.eq.s32.totalorder %s498, 0
      %s501 = sadd.s32 %s500, 1
      %s502 = scalar_select %p499, %s500, %s501
      %p505 = pneg %p499
      %p506 = scmp.eq.s32.totalorder %s39, 1
      %p507 = por %p505, %p506
      %p508 = scmp.ne.s32.totalorder %s500, %s503
      %p509 = scmp.eq.s32.totalorder %s39, 0
      %p510 = por %p508, %p509
      %p511 = scmp.ne.s32.totalorder %s500, %s503
      %p512 = scmp.eq.s32.totalorder %s44, 1
      %p513 = por %p511, %p512
      %p514 = scmp.ne.s32.totalorder %s503, %s504
      %p515 = scmp.eq.s32.totalorder %s44, 0
      %p516 = por %p514, %p515
      %p517 = scmp.ne.s32.totalorder %s503, %s504
      %p518 = scmp.eq.s32.totalorder %s45, 1
      %p519 = por %p517, %p518
      %p521 = scmp.ne.s32.totalorder %s504, %s520
      %p522 = scmp.eq.s32.totalorder %s45, 0
      %p523 = por %p521, %p522
      %p524 = scmp.le.s32.totalorder 1, %s39
      %p525 = scmp.lt.s32.totalorder %s39, 3
      %p526 = pnand %p524, %p525
      %p527 = pneg %p526
      // Predicated region
      $region9: #{mynet_video_forward.1} parent=5 // pred_check
        _
      $region10: #{mynet_video_forward.1} parent=5 // pred_check_branch
        %529 = sbr.rel (%p526) target = $region12
      $region11: #{mynet_video_forward.1} parent=5 // pred_region
        %s530 = ssub.s32 %s39, 1
        // Predicated region
        $region13: #{mynet_video_forward.1} parent=11 // pred_check
          %p531 = pneg %p112
        $region14: #{mynet_video_forward.1} parent=11 // pred_check_branch
          %533 = sbr.rel (%p531) target = $region16
        $region15: #{mynet_video_forward.1} parent=11 // pred_region
          _
        $region16: #{mynet_video_forward.1} parent=11 // pred_fallthru
          _
        // Predicated region
        $region17: #{mynet_video_forward.1} parent=11 // pred_check
          %p534 = pneg %p133
        $region18: #{mynet_video_forward.1} parent=11 // pred_check_branch
          %536 = sbr.rel (%p534) target = $region20
        $region19: #{mynet_video_forward.1} parent=11 // pred_region
          %538 = vsyncadd [#allocation3], 0
          %s539 = sshll.u32 %s3, 4
          %s540 = int_to_ptr.hbm [resolvable:$true] %s539
          %s541 = sshll.u32 [#allocation2], 4
          %s542 = int_to_ptr.vmem [resolvable:$true] %s541
          %547 = dma.hbm_to_vmem [thread:$0]  %s540, 98304, %s542, [#allocation3], 256, 256, 16
        $region20: #{mynet_video_forward.1} parent=11 // pred_fallthru
          _
        // Predicated region
        $region21: #{mynet_video_forward.1} parent=11 // pred_check
          %p548 = pneg %p154
        $region22: #{mynet_video_forward.1} parent=11 // pred_check_branch
          %550 = sbr.rel (%p548) target = $region24
        $region23: #{mynet_video_forward.1} parent=11 // pred_region
          %552 = vsyncadd [#allocation6], 0
          %s554 = sshll.u32 %s4, 4
          %s555 = int_to_ptr.hbm [resolvable:$true] %s554
          %s556 = sshll.u32 [#allocation5], 4
          %s557 = int_to_ptr.vmem [resolvable:$true] %s556
          %559 = dma.hbm_to_vmem [thread:$0]  %s555, 64, %s557, [#allocation6]
        $region24: #{mynet_video_forward.1} parent=11 // pred_fallthru
          _
        // Predicated region
        $region25: #{mynet_video_forward.1} parent=11 // pred_check
          %p560 = pneg %p175
        $region26: #{mynet_video_forward.1} parent=11 // pred_check_branch
          %562 = sbr.rel (%p560) target = $region28
        $region27: #{mynet_video_forward.1} parent=11 // pred_region
          _
        $region28: #{mynet_video_forward.1} parent=11 // pred_fallthru
          _
        // Predicated region
        $region29: #{mynet_video_forward.1} parent=11 // pred_check
          %p563 = pneg %p196
        $region30: #{mynet_video_forward.1} parent=11 // pred_check_branch
          %565 = sbr.rel (%p563) target = $region32
        $region31: #{mynet_video_forward.1} parent=11 // pred_region
          %567 = vsyncadd [#allocation6], 0
          %s569 = sshll.u32 %s6, 4
          %s570 = int_to_ptr.hbm [resolvable:$true] %s569
          %s571 = sshll.u32 [#allocation7], 4
          %s572 = int_to_ptr.vmem [resolvable:$true] %s571
          %574 = dma.hbm_to_vmem [thread:$0]  %s570, 16, %s572, [#allocation6]
        $region32: #{mynet_video_forward.1} parent=11 // pred_fallthru
          _
        // Predicated region
        $region33: #{mynet_video_forward.1} parent=11 // pred_check
          %p575 = pneg %p217
        $region34: #{mynet_video_forward.1} parent=11 // pred_check_branch
          %577 = sbr.rel (%p575) target = $region36
        $region35: #{mynet_video_forward.1} parent=11 // pred_region
          %579 = vsyncadd [#allocation9], 0
          %s580 = sshll.u32 %s7, 4
          %s581 = int_to_ptr.hbm [resolvable:$true] %s580
          %s582 = sshll.u32 [#allocation8], 4
          %s583 = int_to_ptr.vmem [resolvable:$true] %s582
          %588 = dma.hbm_to_vmem [thread:$0]  %s581, 768, %s583, [#allocation9], 64, 64, 4
        $region36: #{mynet_video_forward.1} parent=11 // pred_fallthru
          _
        // Predicated region
        $region37: #{mynet_video_forward.1} parent=11 // pred_check
          %p589 = pneg %p238
        $region38: #{mynet_video_forward.1} parent=11 // pred_check_branch
          %591 = sbr.rel (%p589) target = $region40
        $region39: #{mynet_video_forward.1} parent=11 // pred_region
          %593 = vsyncadd [#allocation9], 0
          %s594 = sshll.u32 %s8, 4
          %s595 = int_to_ptr.hbm [resolvable:$true] %s594
          %s596 = sshll.u32 [#allocation10], 4
          %s597 = int_to_ptr.vmem [resolvable:$true] %s596
          %602 = dma.hbm_to_vmem [thread:$0]  %s595, 48, %s597, [#allocation9], 16, 16, 1
        $region40: #{mynet_video_forward.1} parent=11 // pred_fallthru
          _
        // Predicated region
        $region41: #{mynet_video_forward.1} parent=11 // pred_check
          %p603 = pneg %p259
        $region42: #{mynet_video_forward.1} parent=11 // pred_check_branch
          %605 = sbr.rel (%p603) target = $region44
        $region43: #{mynet_video_forward.1} parent=11 // pred_region
          %607 = vsyncadd [#allocation12], 0
          %s608 = sshll.u32 %s9, 4
          %s609 = int_to_ptr.hbm [resolvable:$true] %s608
          %s610 = sshll.u32 [#allocation11], 4
          %s611 = int_to_ptr.vmem [resolvable:$true] %s610
          %616 = dma.hbm_to_vmem [thread:$0]  %s609, 768, %s611, [#allocation12], 64, 64, 4
        $region44: #{mynet_video_forward.1} parent=11 // pred_fallthru
          _
        // Predicated region
        $region45: #{mynet_video_forward.1} parent=11 // pred_check
          %p617 = pneg %p280
        $region46: #{mynet_video_forward.1} parent=11 // pred_check_branch
          %619 = sbr.rel (%p617) target = $region48
        $region47: #{mynet_video_forward.1} parent=11 // pred_region
          %621 = vsyncadd [#allocation12], 0
          %s622 = sshll.u32 %s10, 4
          %s623 = int_to_ptr.hbm [resolvable:$true] %s622
          %s624 = sshll.u32 [#allocation13], 4
          %s625 = int_to_ptr.vmem [resolvable:$true] %s624
          %630 = dma.hbm_to_vmem [thread:$0]  %s623, 48, %s625, [#allocation12], 16, 16, 1
        $region48: #{mynet_video_forward.1} parent=11 // pred_fallthru
          _
        // Predicated region
        $region49: #{mynet_video_forward.1} parent=11 // pred_check
          %p631 = pneg %p301
        $region50: #{mynet_video_forward.1} parent=11 // pred_check_branch
          %633 = sbr.rel (%p631) target = $region52
        $region51: #{mynet_video_forward.1} parent=11 // pred_region
          %635 = vsyncadd [#allocation15], 0
          %s636 = sshll.u32 %s11, 4
          %s637 = int_to_ptr.hbm [resolvable:$true] %s636
          %s638 = sshll.u32 [#allocation14], 4
          %s639 = int_to_ptr.vmem [resolvable:$true] %s638
          %644 = dma.hbm_to_vmem [thread:$0]  %s637, 768, %s639, [#allocation15], 64, 64, 4
        $region52: #{mynet_video_forward.1} parent=11 // pred_fallthru
          _
        // Predicated region
        $region53: #{mynet_video_forward.1} parent=11 // pred_check
          %p645 = pneg %p322
        $region54: #{mynet_video_forward.1} parent=11 // pred_check_branch
          %647 = sbr.rel (%p645) target = $region56
        $region55: #{mynet_video_forward.1} parent=11 // pred_region
          %649 = vsyncadd [#allocation15], 0
          %s650 = sshll.u32 %s12, 4
          %s651 = int_to_ptr.hbm [resolvable:$true] %s650
          %s652 = sshll.u32 [#allocation16], 4
          %s653 = int_to_ptr.vmem [resolvable:$true] %s652
          %658 = dma.hbm_to_vmem [thread:$0]  %s651, 48, %s653, [#allocation15], 16, 16, 1
        $region56: #{mynet_video_forward.1} parent=11 // pred_fallthru
          _
        // Predicated region
        $region57: #{mynet_video_forward.1} parent=11 // pred_check
          %p659 = pneg %p343
        $region58: #{mynet_video_forward.1} parent=11 // pred_check_branch
          %661 = sbr.rel (%p659) target = $region60
        $region59: #{mynet_video_forward.1} parent=11 // pred_region
          _
        $region60: #{mynet_video_forward.1} parent=11 // pred_fallthru
          _
        // Predicated region
        $region61: #{mynet_video_forward.1} parent=11 // pred_check
          %p662 = pneg %p364
        $region62: #{mynet_video_forward.1} parent=11 // pred_check_branch
          %664 = sbr.rel (%p662) target = $region64
        $region63: #{mynet_video_forward.1} parent=11 // pred_region
          %666 = vsyncadd [#allocation18], 0
          %s667 = sshll.u32 %s14, 4
          %s668 = int_to_ptr.hbm [resolvable:$true] %s667
          %s669 = sshll.u32 [#allocation17], 4
          %s670 = int_to_ptr.vmem [resolvable:$true] %s669
          %675 = dma.hbm_to_vmem [thread:$0]  %s668, 48, %s670, [#allocation18], 16, 16, 1
        $region64: #{mynet_video_forward.1} parent=11 // pred_fallthru
          _
        // Predicated region
        $region65: #{mynet_video_forward.1} parent=11 // pred_check
          %p676 = pneg %p385
        $region66: #{mynet_video_forward.1} parent=11 // pred_check_branch
          %678 = sbr.rel (%p676) target = $region68
        $region67: #{mynet_video_forward.1} parent=11 // pred_region
          %680 = vsyncadd [#allocation18], 0
          %s681 = sshll.u32 %s15, 4
          %s682 = int_to_ptr.hbm [resolvable:$true] %s681
          %s683 = sshll.u32 [#allocation19], 4
          %s684 = int_to_ptr.vmem [resolvable:$true] %s683
          %689 = dma.hbm_to_vmem [thread:$0]  %s682, 48, %s684, [#allocation18], 16, 16, 1
        $region68: #{mynet_video_forward.1} parent=11 // pred_fallthru
          _
        // Predicated region
        $region69: #{mynet_video_forward.1} parent=11 // pred_check
          %p690 = pneg %p406
        $region70: #{mynet_video_forward.1} parent=11 // pred_check_branch
          %692 = sbr.rel (%p690) target = $region72
        $region71: #{mynet_video_forward.1} parent=11 // pred_region
          %694 = vsyncadd [#allocation21], 0
          %s695 = sshll.u32 %s16, 4
          %s696 = int_to_ptr.hbm [resolvable:$true] %s695
          %s697 = sshll.u32 [#allocation20], 4
          %s698 = int_to_ptr.vmem [resolvable:$true] %s697
          %703 = dma.hbm_to_vmem [thread:$0]  %s696, 48, %s698, [#allocation21], 16, 16, 1
        $region72: #{mynet_video_forward.1} parent=11 // pred_fallthru
          _
        // Predicated region
        $region73: #{mynet_video_forward.1} parent=11 // pred_check
          %p704 = pneg %p427
        $region74: #{mynet_video_forward.1} parent=11 // pred_check_branch
          %706 = sbr.rel (%p704) target = $region76
        $region75: #{mynet_video_forward.1} parent=11 // pred_region
          %708 = vsyncadd [#allocation21], 0
          %s709 = sshll.u32 %s17, 4
          %s710 = int_to_ptr.hbm [resolvable:$true] %s709
          %s711 = sshll.u32 [#allocation22], 4
          %s712 = int_to_ptr.vmem [resolvable:$true] %s711
          %717 = dma.hbm_to_vmem [thread:$0]  %s710, 48, %s712, [#allocation21], 16, 16, 1
        $region76: #{mynet_video_forward.1} parent=11 // pred_fallthru
          _
        // Predicated region
        $region77: #{mynet_video_forward.1} parent=11 // pred_check
          %p718 = pneg %p448
        $region78: #{mynet_video_forward.1} parent=11 // pred_check_branch
          %720 = sbr.rel (%p718) target = $region80
        $region79: #{mynet_video_forward.1} parent=11 // pred_region
          %722 = vsyncadd [#allocation24], 0
          %s723 = sshll.u32 %s18, 4
          %s724 = int_to_ptr.hbm [resolvable:$true] %s723
          %s725 = sshll.u32 [#allocation23], 4
          %s726 = int_to_ptr.vmem [resolvable:$true] %s725
          %731 = dma.hbm_to_vmem [thread:$0]  %s724, 48, %s726, [#allocation24], 16, 16, 1
        $region80: #{mynet_video_forward.1} parent=11 // pred_fallthru
          _
        // Predicated region
        $region81: #{mynet_video_forward.1} parent=11 // pred_check
          %p732 = pneg %p469
        $region82: #{mynet_video_forward.1} parent=11 // pred_check_branch
          %734 = sbr.rel (%p732) target = $region84
        $region83: #{mynet_video_forward.1} parent=11 // pred_region
          %736 = vsyncadd [#allocation24], 0
          %s737 = sshll.u32 %s19, 4
          %s738 = int_to_ptr.hbm [resolvable:$true] %s737
          %s739 = sshll.u32 [#allocation25], 4
          %s740 = int_to_ptr.vmem [resolvable:$true] %s739
          %745 = dma.hbm_to_vmem [thread:$0]  %s738, 256, %s740, [#allocation24], 64, 64, 4
        $region84: #{mynet_video_forward.1} parent=11 // pred_fallthru
          _
        // Predicated region
        $region85: #{mynet_video_forward.1} parent=11 // pred_check
          %p746 = pneg %p490
        $region86: #{mynet_video_forward.1} parent=11 // pred_check_branch
          %748 = sbr.rel (%p746) target = $region88
        $region87: #{mynet_video_forward.1} parent=11 // pred_region
          %750 = vsyncadd [#allocation27], 0
          %s752 = sshll.u32 %s20, 4
          %s753 = int_to_ptr.hbm [resolvable:$true] %s752
          %s754 = sshll.u32 [#allocation26], 4
          %s755 = int_to_ptr.vmem [resolvable:$true] %s754
          %757 = dma.hbm_to_vmem [thread:$0]  %s753, 16, %s755, [#allocation27]
        $region88: #{mynet_video_forward.1} parent=11 // pred_fallthru
          _
      $region12: #{mynet_video_forward.1} parent=5 // pred_fallthru
        _
      %p758 = scmp.lt.s32.totalorder %s39, 2
      // Predicated region
      $region89: #{mynet_video_forward.1} parent=5 // pred_check
        %p759 = pneg %p758
      $region90: #{mynet_video_forward.1} parent=5 // pred_check_branch
        %761 = sbr.rel (%p759) target = $region92
      $region91: #{mynet_video_forward.1} parent=5 // pred_region
        // Predicated region
        $region93: #{mynet_video_forward.1} parent=91 // pred_check
          %p762 = pneg %p59
        $region94: #{mynet_video_forward.1} parent=91 // pred_check_branch
          %764 = sbr.rel (%p762) target = $region96
        $region95: #{mynet_video_forward.1} parent=91 // pred_region
          %p765 = scmp.lt.s32.totalorder %s39, 1
          %s766 = scalar_select %p765, %s39, 1
          %s767 = smul.addr %s766, 24
          %s768 = smul.addr %s767, 4
          %s769 = scalar_lea.vmem %s0, %s768
        $region96: #{mynet_video_forward.1} parent=91 // pred_fallthru
          _
        // Predicated region
        $region97: #{mynet_video_forward.1} parent=91 // pred_check
          %p770 = pneg %p85
        $region98: #{mynet_video_forward.1} parent=91 // pred_check_branch
          %772 = sbr.rel (%p770) target = $region100
        $region99: #{mynet_video_forward.1} parent=91 // pred_region
          %p773 = scmp.lt.s32.totalorder %s39, 1
          %s774 = scalar_select %p773, %s39, 1
          %s775 = scalar_lea.vmem %s1, %s774
        $region100: #{mynet_video_forward.1} parent=91 // pred_fallthru
          _
      $region92: #{mynet_video_forward.1} parent=5 // pred_fallthru
        _
      %p776 = scmp.le.s32.totalorder 1, %s39
      %p777 = scmp.lt.s32.totalorder %s39, 3
      %p778 = pnand %p776, %p777
      %p779 = pneg %p778
      // Predicated region
      $region101: #{mynet_video_forward.1} parent=5 // pred_check
        _
      $region102: #{mynet_video_forward.1} parent=5 // pred_check_branch
        %781 = sbr.rel (%p778) target = $region104
      $region103: #{mynet_video_forward.1} parent=5 // pred_region
        %s782 = ssub.s32 %s39, 1
        // Predicated region
        $region105: #{mynet_video_forward.1} parent=103 // pred_check
          %p783 = pneg %p133
        $region106: #{mynet_video_forward.1} parent=103 // pred_check_branch
          %785 = sbr.rel (%p783) target = $region108
        $region107: #{mynet_video_forward.1} parent=103 // pred_region
          %787 = dma.done [#allocation3], 98304
        $region108: #{mynet_video_forward.1} parent=103 // pred_fallthru
          _
        // Predicated region
        $region109: #{mynet_video_forward.1} parent=103 // pred_check
          %p788 = pneg %p154
        $region110: #{mynet_video_forward.1} parent=103 // pred_check_branch
          %790 = sbr.rel (%p788) target = $region112
        $region111: #{mynet_video_forward.1} parent=103 // pred_region
          %792 = dma.done [#allocation6], 64
        $region112: #{mynet_video_forward.1} parent=103 // pred_fallthru
          _
        // Predicated region
        $region113: #{mynet_video_forward.1} parent=103 // pred_check
          %p793 = pneg %p196
        $region114: #{mynet_video_forward.1} parent=103 // pred_check_branch
          %795 = sbr.rel (%p793) target = $region116
        $region115: #{mynet_video_forward.1} parent=103 // pred_region
          %797 = dma.done [#allocation6], 16
        $region116: #{mynet_video_forward.1} parent=103 // pred_fallthru
          _
        // Predicated region
        $region117: #{mynet_video_forward.1} parent=103 // pred_check
          %p798 = pneg %p217
        $region118: #{mynet_video_forward.1} parent=103 // pred_check_branch
          %800 = sbr.rel (%p798) target = $region120
        $region119: #{mynet_video_forward.1} parent=103 // pred_region
          %802 = dma.done [#allocation9], 768
        $region120: #{mynet_video_forward.1} parent=103 // pred_fallthru
          _
        // Predicated region
        $region121: #{mynet_video_forward.1} parent=103 // pred_check
          %p803 = pneg %p238
        $region122: #{mynet_video_forward.1} parent=103 // pred_check_branch
          %805 = sbr.rel (%p803) target = $region124
        $region123: #{mynet_video_forward.1} parent=103 // pred_region
          %807 = dma.done [#allocation9], 48
        $region124: #{mynet_video_forward.1} parent=103 // pred_fallthru
          _
        // Predicated region
        $region125: #{mynet_video_forward.1} parent=103 // pred_check
          %p808 = pneg %p259
        $region126: #{mynet_video_forward.1} parent=103 // pred_check_branch
          %810 = sbr.rel (%p808) target = $region128
        $region127: #{mynet_video_forward.1} parent=103 // pred_region
          %812 = dma.done [#allocation12], 768
        $region128: #{mynet_video_forward.1} parent=103 // pred_fallthru
          _
        // Predicated region
        $region129: #{mynet_video_forward.1} parent=103 // pred_check
          %p813 = pneg %p280
        $region130: #{mynet_video_forward.1} parent=103 // pred_check_branch
          %815 = sbr.rel (%p813) target = $region132
        $region131: #{mynet_video_forward.1} parent=103 // pred_region
          %817 = dma.done [#allocation12], 48
        $region132: #{mynet_video_forward.1} parent=103 // pred_fallthru
          _
        // Predicated region
        $region133: #{mynet_video_forward.1} parent=103 // pred_check
          %p818 = pneg %p301
        $region134: #{mynet_video_forward.1} parent=103 // pred_check_branch
          %820 = sbr.rel (%p818) target = $region136
        $region135: #{mynet_video_forward.1} parent=103 // pred_region
          %822 = dma.done [#allocation15], 768
        $region136: #{mynet_video_forward.1} parent=103 // pred_fallthru
          _
        // Predicated region
        $region137: #{mynet_video_forward.1} parent=103 // pred_check
          %p823 = pneg %p322
        $region138: #{mynet_video_forward.1} parent=103 // pred_check_branch
          %825 = sbr.rel (%p823) target = $region140
        $region139: #{mynet_video_forward.1} parent=103 // pred_region
          %827 = dma.done [#allocation15], 48
        $region140: #{mynet_video_forward.1} parent=103 // pred_fallthru
          _
        // Predicated region
        $region141: #{mynet_video_forward.1} parent=103 // pred_check
          %p828 = pneg %p364
        $region142: #{mynet_video_forward.1} parent=103 // pred_check_branch
          %830 = sbr.rel (%p828) target = $region144
        $region143: #{mynet_video_forward.1} parent=103 // pred_region
          %832 = dma.done [#allocation18], 48
        $region144: #{mynet_video_forward.1} parent=103 // pred_fallthru
          _
        // Predicated region
        $region145: #{mynet_video_forward.1} parent=103 // pred_check
          %p833 = pneg %p385
        $region146: #{mynet_video_forward.1} parent=103 // pred_check_branch
          %835 = sbr.rel (%p833) target = $region148
        $region147: #{mynet_video_forward.1} parent=103 // pred_region
          %837 = dma.done [#allocation18], 48
        $region148: #{mynet_video_forward.1} parent=103 // pred_fallthru
          _
        // Predicated region
        $region149: #{mynet_video_forward.1} parent=103 // pred_check
          %p838 = pneg %p406
        $region150: #{mynet_video_forward.1} parent=103 // pred_check_branch
          %840 = sbr.rel (%p838) target = $region152
        $region151: #{mynet_video_forward.1} parent=103 // pred_region
          %842 = dma.done [#allocation21], 48
        $region152: #{mynet_video_forward.1} parent=103 // pred_fallthru
          _
        // Predicated region
        $region153: #{mynet_video_forward.1} parent=103 // pred_check
          %p843 = pneg %p427
        $region154: #{mynet_video_forward.1} parent=103 // pred_check_branch
          %845 = sbr.rel (%p843) target = $region156
        $region155: #{mynet_video_forward.1} parent=103 // pred_region
          %847 = dma.done [#allocation21], 48
        $region156: #{mynet_video_forward.1} parent=103 // pred_fallthru
          _
        // Predicated region
        $region157: #{mynet_video_forward.1} parent=103 // pred_check
          %p848 = pneg %p448
        $region158: #{mynet_video_forward.1} parent=103 // pred_check_branch
          %850 = sbr.rel (%p848) target = $region160
        $region159: #{mynet_video_forward.1} parent=103 // pred_region
          %852 = dma.done [#allocation24], 48
        $region160: #{mynet_video_forward.1} parent=103 // pred_fallthru
          _
        // Predicated region
        $region161: #{mynet_video_forward.1} parent=103 // pred_check
          %p853 = pneg %p469
        $region162: #{mynet_video_forward.1} parent=103 // pred_check_branch
          %855 = sbr.rel (%p853) target = $region164
        $region163: #{mynet_video_forward.1} parent=103 // pred_region
          %857 = dma.done [#allocation24], 256
        $region164: #{mynet_video_forward.1} parent=103 // pred_fallthru
          _
        // Predicated region
        $region165: #{mynet_video_forward.1} parent=103 // pred_check
          %p858 = pneg %p490
        $region166: #{mynet_video_forward.1} parent=103 // pred_check_branch
          %860 = sbr.rel (%p858) target = $region168
        $region167: #{mynet_video_forward.1} parent=103 // pred_region
          %862 = dma.done [#allocation27], 16
        $region168: #{mynet_video_forward.1} parent=103 // pred_fallthru
          _
        %p863 = scmp.lt.s32.totalorder %s44, 1
        %s864 = scalar_select %p863, %s44, 1
        %s865 = smul.addr %s864, 24
        %s866 = smul.addr %s865, 4
        %s867 = scalar_lea.vmem %s0, %s866
        %p868 = pneg %p65
        %p869 = pneg %p62
        %p870 = scmp.lt.s32.totalorder %s44, 1
        %s871 = scalar_select %p870, %s44, 1
        %s872 = scalar_lea.vmem %s1, %s871
        %p873 = pneg %p91
        %p874 = pneg %p88
        %p875 = pneg %p112
        %p876 = pneg %p109
        %p877 = pneg %p133
        %p878 = pneg %p130
        %p879 = pneg %p154
        %p880 = pneg %p151
        %p881 = pneg %p175
        %p882 = pneg %p172
        %p883 = pneg %p196
        %p884 = pneg %p193
        %p885 = pneg %p217
        %p886 = pneg %p214
        %p887 = pneg %p238
        %p888 = pneg %p235
        %p889 = pneg %p259
        %p890 = pneg %p256
        %p891 = pneg %p280
        %p892 = pneg %p277
        %p893 = pneg %p301
        %p894 = pneg %p298
        %p895 = pneg %p322
        %p896 = pneg %p319
        %p897 = pneg %p343
        %p898 = pneg %p340
        %p899 = pneg %p364
        %p900 = pneg %p361
        %p901 = pneg %p385
        %p902 = pneg %p382
        %p903 = pneg %p406
        %p904 = pneg %p403
        %p905 = pneg %p427
        %p906 = pneg %p424
        %p907 = pneg %p448
        %p908 = pneg %p445
        %p909 = pneg %p469
        %p910 = pneg %p466
        %p911 = pneg %p490
        %p912 = pneg %p487
        %p913 = pneg %p516
        %p914 = pneg %p513
        %s915 = sand.u32 %s503, 1
        %s916 = scalar_lea.sflag [#allocation4], %s915
        %s917 = sand.u32 %s503, 1
        %s918 = scalar_lea.vmem [#allocation28], %s917
        %p919 = scmp.lt.s32.totalorder %s44, 1
        %s920 = scalar_select %p919, %s44, 1
        %s921 = smul.addr %s920, 24
        %s922 = smul.addr %s921, 4
        %s923 = scalar_lea.vmem %s0, %s922
        %p924 = scmp.lt.s32.totalorder %s44, 1
        %s925 = scalar_select %p924, %s44, 1
        %s926 = scalar_lea.vmem %s1, %s925
        %v928 = vld [vmem:[%s923] sm:$0xff]
        %v929 = vld [vmem:[%s923 + $0x8] sm:$0xff]
        %v930 = vld [vmem:[%s923 + $0x10] sm:$0xff]
        %v931 = vld [vmem:[%s923 + $0x18] sm:$0xff]
        %v932 = vld [vmem:[%s923 + $0x20] sm:$0xff]
        %v933 = vld [vmem:[%s923 + $0x28] sm:$0xff]
        %v934 = vld [vmem:[%s923 + $0x30] sm:$0xff]
        %v935 = vld [vmem:[%s923 + $0x38] sm:$0xff]
        %v936 = vld [vmem:[%s923 + $0x40] sm:$0xff]
        %v937 = vld [vmem:[%s923 + $0x48] sm:$0xff]
        %v938 = vld [vmem:[%s923 + $0x50] sm:$0xff]
        %v939 = vld [vmem:[%s923 + $0x58] sm:$0xff]
        %v940 = vld [vmem:[#allocation2] sm:$0xff]
        %v941 = vld [vmem:[#allocation2 + $0x8] sm:$0xff]
        %v942 = vld [vmem:[#allocation2 + $0x10] sm:$0xff]
        %v943 = vld [vmem:[#allocation2 + $0x18] sm:$0xff]
        %v944 = vld [vmem:[#allocation2 + $0x20] sm:$0xff]
        %v945 = vld [vmem:[#allocation2 + $0x28] sm:$0xff]
        %v946 = vld [vmem:[#allocation2 + $0x30] sm:$0xff]
        %v947 = vld [vmem:[#allocation2 + $0x38] sm:$0xff]
        %v948 = vld [vmem:[#allocation2 + $0x40] sm:$0xff]
        %v949 = vld [vmem:[#allocation2 + $0x48] sm:$0xff]
        %v950 = vld [vmem:[#allocation2 + $0x50] sm:$0xff]
        %v951 = vld [vmem:[#allocation2 + $0x58] sm:$0xff]
        %v952 = vld [vmem:[#allocation2 + $0x60] sm:$0xff]
        %v953 = vld [vmem:[#allocation2 + $0x68] sm:$0xff]
        %v954 = vld [vmem:[#allocation2 + $0x70] sm:$0xff]
        %v955 = vld [vmem:[#allocation2 + $0x78] sm:$0xff]
        %v956 = vld [vmem:[#allocation2 + $0x80] sm:$0xff]
        %v957 = vld [vmem:[#allocation2 + $0x88] sm:$0xff]
        %v958 = vld [vmem:[#allocation2 + $0x90] sm:$0xff]
        %v959 = vld [vmem:[#allocation2 + $0x98] sm:$0xff]
        %v960 = vld [vmem:[#allocation2 + $0xa0] sm:$0xff]
        %v961 = vld [vmem:[#allocation2 + $0xa8] sm:$0xff]
        %v962 = vld [vmem:[#allocation2 + $0xb0] sm:$0xff]
        %v963 = vld [vmem:[#allocation2 + $0xb8] sm:$0xff]
        %v964 = vld [vmem:[#allocation2 + $0xc0] sm:$0xff]
        %v965 = vld [vmem:[#allocation2 + $0xc8] sm:$0xff]
        %v966 = vld [vmem:[#allocation2 + $0xd0] sm:$0xff]
        %v967 = vld [vmem:[#allocation2 + $0xd8] sm:$0xff]
        %v968 = vld [vmem:[#allocation2 + $0xe0] sm:$0xff]
        %v969 = vld [vmem:[#allocation2 + $0xe8] sm:$0xff]
        %v970 = vld [vmem:[#allocation2 + $0xf0] sm:$0xff]
        %v971 = vld [vmem:[#allocation2 + $0xf8] sm:$0xff]
        %v972 = vld [vmem:[#allocation2 + $0x100] sm:$0xff]
        %v973 = vld [vmem:[#allocation2 + $0x108] sm:$0xff]
        %v974 = vld [vmem:[#allocation2 + $0x110] sm:$0xff]
        %v975 = vld [vmem:[#allocation2 + $0x118] sm:$0xff]
        %v976 = vld [vmem:[#allocation2 + $0x120] sm:$0xff]
        %v977 = vld [vmem:[#allocation2 + $0x128] sm:$0xff]
        %v978 = vld [vmem:[#allocation2 + $0x130] sm:$0xff]
        %v979 = vld [vmem:[#allocation2 + $0x138] sm:$0xff]
        %v980 = vld [vmem:[#allocation2 + $0x140] sm:$0xff]
        %v981 = vld [vmem:[#allocation2 + $0x148] sm:$0xff]
        %v982 = vld [vmem:[#allocation2 + $0x150] sm:$0xff]
        %v983 = vld [vmem:[#allocation2 + $0x158] sm:$0xff]
        %v984 = vld [vmem:[#allocation2 + $0x160] sm:$0xff]
        %v985 = vld [vmem:[#allocation2 + $0x168] sm:$0xff]
        %v986 = vld [vmem:[#allocation2 + $0x170] sm:$0xff]
        %v987 = vld [vmem:[#allocation2 + $0x178] sm:$0xff]
        %v988 = vld [vmem:[#allocation2 + $0x180] sm:$0xff]
        %v989 = vld [vmem:[#allocation2 + $0x188] sm:$0xff]
        %v990 = vld [vmem:[#allocation2 + $0x190] sm:$0xff]
        %v991 = vld [vmem:[#allocation2 + $0x198] sm:$0xff]
        %v992 = vld [vmem:[#allocation2 + $0x1a0] sm:$0xff]
        %v993 = vld [vmem:[#allocation2 + $0x1a8] sm:$0xff]
        %v994 = vld [vmem:[#allocation2 + $0x1b0] sm:$0xff]
        %v995 = vld [vmem:[#allocation2 + $0x1b8] sm:$0xff]
        %v996 = vld [vmem:[#allocation2 + $0x1c0] sm:$0xff]
        %v997 = vld [vmem:[#allocation2 + $0x1c8] sm:$0xff]
        %v998 = vld [vmem:[#allocation2 + $0x1d0] sm:$0xff]
        %v999 = vld [vmem:[#allocation2 + $0x1d8] sm:$0xff]
        %v1000 = vld [vmem:[#allocation2 + $0x1e0] sm:$0xff]
        %v1001 = vld [vmem:[#allocation2 + $0x1e8] sm:$0xff]
        %v1002 = vld [vmem:[#allocation2 + $0x1f0] sm:$0xff]
        %v1003 = vld [vmem:[#allocation2 + $0x1f8] sm:$0xff]
        %v1004 = vld [vmem:[#allocation2 + $0x200] sm:$0xff]
        %v1005 = vld [vmem:[#allocation2 + $0x208] sm:$0xff]
        %v1006 = vld [vmem:[#allocation2 + $0x210] sm:$0xff]
        %v1007 = vld [vmem:[#allocation2 + $0x218] sm:$0xff]
        %v1008 = vld [vmem:[#allocation2 + $0x220] sm:$0xff]
        %v1009 = vld [vmem:[#allocation2 + $0x228] sm:$0xff]
        %v1010 = vld [vmem:[#allocation2 + $0x230] sm:$0xff]
        %v1011 = vld [vmem:[#allocation2 + $0x238] sm:$0xff]
        %v1012 = vld [vmem:[#allocation2 + $0x240] sm:$0xff]
        %v1013 = vld [vmem:[#allocation2 + $0x248] sm:$0xff]
        %v1014 = vld [vmem:[#allocation2 + $0x250] sm:$0xff]
        %v1015 = vld [vmem:[#allocation2 + $0x258] sm:$0xff]
        %v1016 = vld [vmem:[#allocation2 + $0x260] sm:$0xff]
        %v1017 = vld [vmem:[#allocation2 + $0x268] sm:$0xff]
        %v1018 = vld [vmem:[#allocation2 + $0x270] sm:$0xff]
        %v1019 = vld [vmem:[#allocation2 + $0x278] sm:$0xff]
        %v1020 = vld [vmem:[#allocation2 + $0x280] sm:$0xff]
        %v1021 = vld [vmem:[#allocation2 + $0x288] sm:$0xff]
        %v1022 = vld [vmem:[#allocation2 + $0x290] sm:$0xff]
        %v1023 = vld [vmem:[#allocation2 + $0x298] sm:$0xff]
        %v1024 = vld [vmem:[#allocation2 + $0x2a0] sm:$0xff]
        %v1025 = vld [vmem:[#allocation2 + $0x2a8] sm:$0xff]
        %v1026 = vld [vmem:[#allocation2 + $0x2b0] sm:$0xff]
        %v1027 = vld [vmem:[#allocation2 + $0x2b8] sm:$0xff]
        %v1028 = vld [vmem:[#allocation2 + $0x2c0] sm:$0xff]
        %v1029 = vld [vmem:[#allocation2 + $0x2c8] sm:$0xff]
        %v1030 = vld [vmem:[#allocation2 + $0x2d0] sm:$0xff]
        %v1031 = vld [vmem:[#allocation2 + $0x2d8] sm:$0xff]
        %v1032 = vld [vmem:[#allocation2 + $0x2e0] sm:$0xff]
        %v1033 = vld [vmem:[#allocation2 + $0x2e8] sm:$0xff]
        %v1034 = vld [vmem:[#allocation2 + $0x2f0] sm:$0xff]
        %v1035 = vld [vmem:[#allocation2 + $0x2f8] sm:$0xff]
        %v1036 = vld [vmem:[#allocation2 + $0x300] sm:$0xff]
        %v1037 = vld [vmem:[#allocation2 + $0x308] sm:$0xff]
        %v1038 = vld [vmem:[#allocation2 + $0x310] sm:$0xff]
        %v1039 = vld [vmem:[#allocation2 + $0x318] sm:$0xff]
        %v1040 = vld [vmem:[#allocation2 + $0x320] sm:$0xff]
        %v1041 = vld [vmem:[#allocation2 + $0x328] sm:$0xff]
        %v1042 = vld [vmem:[#allocation2 + $0x330] sm:$0xff]
        %v1043 = vld [vmem:[#allocation2 + $0x338] sm:$0xff]
        %v1044 = vld [vmem:[#allocation2 + $0x340] sm:$0xff]
        %v1045 = vld [vmem:[#allocation2 + $0x348] sm:$0xff]
        %v1046 = vld [vmem:[#allocation2 + $0x350] sm:$0xff]
        %v1047 = vld [vmem:[#allocation2 + $0x358] sm:$0xff]
        %v1048 = vld [vmem:[#allocation2 + $0x360] sm:$0xff]
        %v1049 = vld [vmem:[#allocation2 + $0x368] sm:$0xff]
        %v1050 = vld [vmem:[#allocation2 + $0x370] sm:$0xff]
        %v1051 = vld [vmem:[#allocation2 + $0x378] sm:$0xff]
        %v1052 = vld [vmem:[#allocation2 + $0x380] sm:$0xff]
        %v1053 = vld [vmem:[#allocation2 + $0x388] sm:$0xff]
        %v1054 = vld [vmem:[#allocation2 + $0x390] sm:$0xff]
        %v1055 = vld [vmem:[#allocation2 + $0x398] sm:$0xff]
        %v1056 = vld [vmem:[#allocation2 + $0x3a0] sm:$0xff]
        %v1057 = vld [vmem:[#allocation2 + $0x3a8] sm:$0xff]
        %v1058 = vld [vmem:[#allocation2 + $0x3b0] sm:$0xff]
        %v1059 = vld [vmem:[#allocation2 + $0x3b8] sm:$0xff]
        %v1060 = vld [vmem:[#allocation2 + $0x3c0] sm:$0xff]
        %v1061 = vld [vmem:[#allocation2 + $0x3c8] sm:$0xff]
        %v1062 = vld [vmem:[#allocation2 + $0x3d0] sm:$0xff]
        %v1063 = vld [vmem:[#allocation2 + $0x3d8] sm:$0xff]
        %v1064 = vld [vmem:[#allocation2 + $0x3e0] sm:$0xff]
        %v1065 = vld [vmem:[#allocation2 + $0x3e8] sm:$0xff]
        %v1066 = vld [vmem:[#allocation2 + $0x3f0] sm:$0xff]
        %v1067 = vld [vmem:[#allocation2 + $0x3f8] sm:$0xff]
        %v1068 = vld [vmem:[#allocation2 + $0x400] sm:$0xff]
        %v1069 = vld [vmem:[#allocation2 + $0x408] sm:$0xff]
        %v1070 = vld [vmem:[#allocation2 + $0x410] sm:$0xff]
        %v1071 = vld [vmem:[#allocation2 + $0x418] sm:$0xff]
        %v1072 = vld [vmem:[#allocation2 + $0x420] sm:$0xff]
        %v1073 = vld [vmem:[#allocation2 + $0x428] sm:$0xff]
        %v1074 = vld [vmem:[#allocation2 + $0x430] sm:$0xff]
        %v1075 = vld [vmem:[#allocation2 + $0x438] sm:$0xff]
        %v1076 = vld [vmem:[#allocation2 + $0x440] sm:$0xff]
        %v1077 = vld [vmem:[#allocation2 + $0x448] sm:$0xff]
        %v1078 = vld [vmem:[#allocation2 + $0x450] sm:$0xff]
        %v1079 = vld [vmem:[#allocation2 + $0x458] sm:$0xff]
        %v1080 = vld [vmem:[#allocation2 + $0x460] sm:$0xff]
        %v1081 = vld [vmem:[#allocation2 + $0x468] sm:$0xff]
        %v1082 = vld [vmem:[#allocation2 + $0x470] sm:$0xff]
        %v1083 = vld [vmem:[#allocation2 + $0x478] sm:$0xff]
        %v1084 = vld [vmem:[#allocation2 + $0x480] sm:$0xff]
        %v1085 = vld [vmem:[#allocation2 + $0x488] sm:$0xff]
        %v1086 = vld [vmem:[#allocation2 + $0x490] sm:$0xff]
        %v1087 = vld [vmem:[#allocation2 + $0x498] sm:$0xff]
        %v1088 = vld [vmem:[#allocation2 + $0x4a0] sm:$0xff]
        %v1089 = vld [vmem:[#allocation2 + $0x4a8] sm:$0xff]
        %v1090 = vld [vmem:[#allocation2 + $0x4b0] sm:$0xff]
        %v1091 = vld [vmem:[#allocation2 + $0x4b8] sm:$0xff]
        %v1092 = vld [vmem:[#allocation2 + $0x4c0] sm:$0xff]
        %v1093 = vld [vmem:[#allocation2 + $0x4c8] sm:$0xff]
        %v1094 = vld [vmem:[#allocation2 + $0x4d0] sm:$0xff]
        %v1095 = vld [vmem:[#allocation2 + $0x4d8] sm:$0xff]
        %v1096 = vld [vmem:[#allocation2 + $0x4e0] sm:$0xff]
        %v1097 = vld [vmem:[#allocation2 + $0x4e8] sm:$0xff]
        %v1098 = vld [vmem:[#allocation2 + $0x4f0] sm:$0xff]
        %v1099 = vld [vmem:[#allocation2 + $0x4f8] sm:$0xff]
        %v1100 = vld [vmem:[#allocation2 + $0x500] sm:$0xff]
        %v1101 = vld [vmem:[#allocation2 + $0x508] sm:$0xff]
        %v1102 = vld [vmem:[#allocation2 + $0x510] sm:$0xff]
        %v1103 = vld [vmem:[#allocation2 + $0x518] sm:$0xff]
        %v1104 = vld [vmem:[#allocation2 + $0x520] sm:$0xff]
        %v1105 = vld [vmem:[#allocation2 + $0x528] sm:$0xff]
        %v1106 = vld [vmem:[#allocation2 + $0x530] sm:$0xff]
        %v1107 = vld [vmem:[#allocation2 + $0x538] sm:$0xff]
        %v1108 = vld [vmem:[#allocation2 + $0x540] sm:$0xff]
        %v1109 = vld [vmem:[#allocation2 + $0x548] sm:$0xff]
        %v1110 = vld [vmem:[#allocation2 + $0x550] sm:$0xff]
        %v1111 = vld [vmem:[#allocation2 + $0x558] sm:$0xff]
        %v1112 = vld [vmem:[#allocation2 + $0x560] sm:$0xff]
        %v1113 = vld [vmem:[#allocation2 + $0x568] sm:$0xff]
        %v1114 = vld [vmem:[#allocation2 + $0x570] sm:$0xff]
        %v1115 = vld [vmem:[#allocation2 + $0x578] sm:$0xff]
        %v1116 = vld [vmem:[#allocation2 + $0x580] sm:$0xff]
        %v1117 = vld [vmem:[#allocation2 + $0x588] sm:$0xff]
        %v1118 = vld [vmem:[#allocation2 + $0x590] sm:$0xff]
        %v1119 = vld [vmem:[#allocation2 + $0x598] sm:$0xff]
        %v1120 = vld [vmem:[#allocation2 + $0x5a0] sm:$0xff]
        %v1121 = vld [vmem:[#allocation2 + $0x5a8] sm:$0xff]
        %v1122 = vld [vmem:[#allocation2 + $0x5b0] sm:$0xff]
        %v1123 = vld [vmem:[#allocation2 + $0x5b8] sm:$0xff]
        %v1124 = vld [vmem:[#allocation2 + $0x5c0] sm:$0xff]
        %v1125 = vld [vmem:[#allocation2 + $0x5c8] sm:$0xff]
        %v1126 = vld [vmem:[#allocation2 + $0x5d0] sm:$0xff]
        %v1127 = vld [vmem:[#allocation2 + $0x5d8] sm:$0xff]
        %v1128 = vld [vmem:[#allocation2 + $0x5e0] sm:$0xff]
        %v1129 = vld [vmem:[#allocation2 + $0x5e8] sm:$0xff]
        %v1130 = vld [vmem:[#allocation2 + $0x5f0] sm:$0xff]
        %v1131 = vld [vmem:[#allocation2 + $0x5f8] sm:$0xff]
        %v1132 = vld [vmem:[#allocation2 + $0x600] sm:$0xff]
        %v1133 = vld [vmem:[#allocation2 + $0x608] sm:$0xff]
        %v1134 = vld [vmem:[#allocation2 + $0x610] sm:$0xff]
        %v1135 = vld [vmem:[#allocation2 + $0x618] sm:$0xff]
        %v1136 = vld [vmem:[#allocation2 + $0x620] sm:$0xff]
        %v1137 = vld [vmem:[#allocation2 + $0x628] sm:$0xff]
        %v1138 = vld [vmem:[#allocation2 + $0x630] sm:$0xff]
        %v1139 = vld [vmem:[#allocation2 + $0x638] sm:$0xff]
        %v1140 = vld [vmem:[#allocation2 + $0x640] sm:$0xff]
        %v1141 = vld [vmem:[#allocation2 + $0x648] sm:$0xff]
        %v1142 = vld [vmem:[#allocation2 + $0x650] sm:$0xff]
        %v1143 = vld [vmem:[#allocation2 + $0x658] sm:$0xff]
        %v1144 = vld [vmem:[#allocation2 + $0x660] sm:$0xff]
        %v1145 = vld [vmem:[#allocation2 + $0x668] sm:$0xff]
        %v1146 = vld [vmem:[#allocation2 + $0x670] sm:$0xff]
        %v1147 = vld [vmem:[#allocation2 + $0x678] sm:$0xff]
        %v1148 = vld [vmem:[#allocation2 + $0x680] sm:$0xff]
        %v1149 = vld [vmem:[#allocation2 + $0x688] sm:$0xff]
        %v1150 = vld [vmem:[#allocation2 + $0x690] sm:$0xff]
        %v1151 = vld [vmem:[#allocation2 + $0x698] sm:$0xff]
        %v1152 = vld [vmem:[#allocation2 + $0x6a0] sm:$0xff]
        %v1153 = vld [vmem:[#allocation2 + $0x6a8] sm:$0xff]
        %v1154 = vld [vmem:[#allocation2 + $0x6b0] sm:$0xff]
        %v1155 = vld [vmem:[#allocation2 + $0x6b8] sm:$0xff]
        %v1156 = vld [vmem:[#allocation2 + $0x6c0] sm:$0xff]
        %v1157 = vld [vmem:[#allocation2 + $0x6c8] sm:$0xff]
        %v1158 = vld [vmem:[#allocation2 + $0x6d0] sm:$0xff]
        %v1159 = vld [vmem:[#allocation2 + $0x6d8] sm:$0xff]
        %v1160 = vld [vmem:[#allocation2 + $0x6e0] sm:$0xff]
        %v1161 = vld [vmem:[#allocation2 + $0x6e8] sm:$0xff]
        %v1162 = vld [vmem:[#allocation2 + $0x6f0] sm:$0xff]
        %v1163 = vld [vmem:[#allocation2 + $0x6f8] sm:$0xff]
        %v1164 = vld [vmem:[#allocation2 + $0x700] sm:$0xff]
        %v1165 = vld [vmem:[#allocation2 + $0x708] sm:$0xff]
        %v1166 = vld [vmem:[#allocation2 + $0x710] sm:$0xff]
        %v1167 = vld [vmem:[#allocation2 + $0x718] sm:$0xff]
        %v1168 = vld [vmem:[#allocation2 + $0x720] sm:$0xff]
        %v1169 = vld [vmem:[#allocation2 + $0x728] sm:$0xff]
        %v1170 = vld [vmem:[#allocation2 + $0x730] sm:$0xff]
        %v1171 = vld [vmem:[#allocation2 + $0x738] sm:$0xff]
        %v1172 = vld [vmem:[#allocation2 + $0x740] sm:$0xff]
        %v1173 = vld [vmem:[#allocation2 + $0x748] sm:$0xff]
        %v1174 = vld [vmem:[#allocation2 + $0x750] sm:$0xff]
        %v1175 = vld [vmem:[#allocation2 + $0x758] sm:$0xff]
        %v1176 = vld [vmem:[#allocation2 + $0x760] sm:$0xff]
        %v1177 = vld [vmem:[#allocation2 + $0x768] sm:$0xff]
        %v1178 = vld [vmem:[#allocation2 + $0x770] sm:$0xff]
        %v1179 = vld [vmem:[#allocation2 + $0x778] sm:$0xff]
        %v1180 = vld [vmem:[#allocation2 + $0x780] sm:$0xff]
        %v1181 = vld [vmem:[#allocation2 + $0x788] sm:$0xff]
        %v1182 = vld [vmem:[#allocation2 + $0x790] sm:$0xff]
        %v1183 = vld [vmem:[#allocation2 + $0x798] sm:$0xff]
        %v1184 = vld [vmem:[#allocation2 + $0x7a0] sm:$0xff]
        %v1185 = vld [vmem:[#allocation2 + $0x7a8] sm:$0xff]
        %v1186 = vld [vmem:[#allocation2 + $0x7b0] sm:$0xff]
        %v1187 = vld [vmem:[#allocation2 + $0x7b8] sm:$0xff]
        %v1188 = vld [vmem:[#allocation2 + $0x7c0] sm:$0xff]
        %v1189 = vld [vmem:[#allocation2 + $0x7c8] sm:$0xff]
        %v1190 = vld [vmem:[#allocation2 + $0x7d0] sm:$0xff]
        %v1191 = vld [vmem:[#allocation2 + $0x7d8] sm:$0xff]
        %v1192 = vld [vmem:[#allocation2 + $0x7e0] sm:$0xff]
        %v1193 = vld [vmem:[#allocation2 + $0x7e8] sm:$0xff]
        %v1194 = vld [vmem:[#allocation2 + $0x7f0] sm:$0xff]
        %v1195 = vld [vmem:[#allocation2 + $0x7f8] sm:$0xff]
        %v1196 = vld [vmem:[#allocation2 + $0x800] sm:$0xff]
        %v1197 = vld [vmem:[#allocation2 + $0x808] sm:$0xff]
        %v1198 = vld [vmem:[#allocation2 + $0x810] sm:$0xff]
        %v1199 = vld [vmem:[#allocation2 + $0x818] sm:$0xff]
        %v1200 = vld [vmem:[#allocation2 + $0x820] sm:$0xff]
        %v1201 = vld [vmem:[#allocation2 + $0x828] sm:$0xff]
        %v1202 = vld [vmem:[#allocation2 + $0x830] sm:$0xff]
        %v1203 = vld [vmem:[#allocation2 + $0x838] sm:$0xff]
        %v1204 = vld [vmem:[#allocation2 + $0x840] sm:$0xff]
        %v1205 = vld [vmem:[#allocation2 + $0x848] sm:$0xff]
        %v1206 = vld [vmem:[#allocation2 + $0x850] sm:$0xff]
        %v1207 = vld [vmem:[#allocation2 + $0x858] sm:$0xff]
        %v1208 = vld [vmem:[#allocation2 + $0x860] sm:$0xff]
        %v1209 = vld [vmem:[#allocation2 + $0x868] sm:$0xff]
        %v1210 = vld [vmem:[#allocation2 + $0x870] sm:$0xff]
        %v1211 = vld [vmem:[#allocation2 + $0x878] sm:$0xff]
        %v1212 = vld [vmem:[#allocation2 + $0x880] sm:$0xff]
        %v1213 = vld [vmem:[#allocation2 + $0x888] sm:$0xff]
        %v1214 = vld [vmem:[#allocation2 + $0x890] sm:$0xff]
        %v1215 = vld [vmem:[#allocation2 + $0x898] sm:$0xff]
        %v1216 = vld [vmem:[#allocation2 + $0x8a0] sm:$0xff]
        %v1217 = vld [vmem:[#allocation2 + $0x8a8] sm:$0xff]
        %v1218 = vld [vmem:[#allocation2 + $0x8b0] sm:$0xff]
        %v1219 = vld [vmem:[#allocation2 + $0x8b8] sm:$0xff]
        %v1220 = vld [vmem:[#allocation2 + $0x8c0] sm:$0xff]
        %v1221 = vld [vmem:[#allocation2 + $0x8c8] sm:$0xff]
        %v1222 = vld [vmem:[#allocation2 + $0x8d0] sm:$0xff]
        %v1223 = vld [vmem:[#allocation2 + $0x8d8] sm:$0xff]
        %v1224 = vld [vmem:[#allocation2 + $0x8e0] sm:$0xff]
        %v1225 = vld [vmem:[#allocation2 + $0x8e8] sm:$0xff]
        %v1226 = vld [vmem:[#allocation2 + $0x8f0] sm:$0xff]
        %v1227 = vld [vmem:[#allocation2 + $0x8f8] sm:$0xff]
        %v1228 = vld [vmem:[#allocation2 + $0x900] sm:$0xff]
        %v1229 = vld [vmem:[#allocation2 + $0x908] sm:$0xff]
        %v1230 = vld [vmem:[#allocation2 + $0x910] sm:$0xff]
        %v1231 = vld [vmem:[#allocation2 + $0x918] sm:$0xff]
        %v1232 = vld [vmem:[#allocation2 + $0x920] sm:$0xff]
        %v1233 = vld [vmem:[#allocation2 + $0x928] sm:$0xff]
        %v1234 = vld [vmem:[#allocation2 + $0x930] sm:$0xff]
        %v1235 = vld [vmem:[#allocation2 + $0x938] sm:$0xff]
        %v1236 = vld [vmem:[#allocation2 + $0x940] sm:$0xff]
        %v1237 = vld [vmem:[#allocation2 + $0x948] sm:$0xff]
        %v1238 = vld [vmem:[#allocation2 + $0x950] sm:$0xff]
        %v1239 = vld [vmem:[#allocation2 + $0x958] sm:$0xff]
        %v1240 = vld [vmem:[#allocation2 + $0x960] sm:$0xff]
        %v1241 = vld [vmem:[#allocation2 + $0x968] sm:$0xff]
        %v1242 = vld [vmem:[#allocation2 + $0x970] sm:$0xff]
        %v1243 = vld [vmem:[#allocation2 + $0x978] sm:$0xff]
        %v1244 = vld [vmem:[#allocation2 + $0x980] sm:$0xff]
        %v1245 = vld [vmem:[#allocation2 + $0x988] sm:$0xff]
        %v1246 = vld [vmem:[#allocation2 + $0x990] sm:$0xff]
        %v1247 = vld [vmem:[#allocation2 + $0x998] sm:$0xff]
        %v1248 = vld [vmem:[#allocation2 + $0x9a0] sm:$0xff]
        %v1249 = vld [vmem:[#allocation2 + $0x9a8] sm:$0xff]
        %v1250 = vld [vmem:[#allocation2 + $0x9b0] sm:$0xff]
        %v1251 = vld [vmem:[#allocation2 + $0x9b8] sm:$0xff]
        %v1252 = vld [vmem:[#allocation2 + $0x9c0] sm:$0xff]
        %v1253 = vld [vmem:[#allocation2 + $0x9c8] sm:$0xff]
        %v1254 = vld [vmem:[#allocation2 + $0x9d0] sm:$0xff]
        %v1255 = vld [vmem:[#allocation2 + $0x9d8] sm:$0xff]
        %v1256 = vld [vmem:[#allocation2 + $0x9e0] sm:$0xff]
        %v1257 = vld [vmem:[#allocation2 + $0x9e8] sm:$0xff]
        %v1258 = vld [vmem:[#allocation2 + $0x9f0] sm:$0xff]
        %v1259 = vld [vmem:[#allocation2 + $0x9f8] sm:$0xff]
        %v1260 = vld [vmem:[#allocation2 + $0xa00] sm:$0xff]
        %v1261 = vld [vmem:[#allocation2 + $0xa08] sm:$0xff]
        %v1262 = vld [vmem:[#allocation2 + $0xa10] sm:$0xff]
        %v1263 = vld [vmem:[#allocation2 + $0xa18] sm:$0xff]
        %v1264 = vld [vmem:[#allocation2 + $0xa20] sm:$0xff]
        %v1265 = vld [vmem:[#allocation2 + $0xa28] sm:$0xff]
        %v1266 = vld [vmem:[#allocation2 + $0xa30] sm:$0xff]
        %v1267 = vld [vmem:[#allocation2 + $0xa38] sm:$0xff]
        %v1268 = vld [vmem:[#allocation2 + $0xa40] sm:$0xff]
        %v1269 = vld [vmem:[#allocation2 + $0xa48] sm:$0xff]
        %v1270 = vld [vmem:[#allocation2 + $0xa50] sm:$0xff]
        %v1271 = vld [vmem:[#allocation2 + $0xa58] sm:$0xff]
        %v1272 = vld [vmem:[#allocation2 + $0xa60] sm:$0xff]
        %v1273 = vld [vmem:[#allocation2 + $0xa68] sm:$0xff]
        %v1274 = vld [vmem:[#allocation2 + $0xa70] sm:$0xff]
        %v1275 = vld [vmem:[#allocation2 + $0xa78] sm:$0xff]
        %v1276 = vld [vmem:[#allocation2 + $0xa80] sm:$0xff]
        %v1277 = vld [vmem:[#allocation2 + $0xa88] sm:$0xff]
        %v1278 = vld [vmem:[#allocation2 + $0xa90] sm:$0xff]
        %v1279 = vld [vmem:[#allocation2 + $0xa98] sm:$0xff]
        %v1280 = vld [vmem:[#allocation2 + $0xaa0] sm:$0xff]
        %v1281 = vld [vmem:[#allocation2 + $0xaa8] sm:$0xff]
        %v1282 = vld [vmem:[#allocation2 + $0xab0] sm:$0xff]
        %v1283 = vld [vmem:[#allocation2 + $0xab8] sm:$0xff]
        %v1284 = vld [vmem:[#allocation2 + $0xac0] sm:$0xff]
        %v1285 = vld [vmem:[#allocation2 + $0xac8] sm:$0xff]
        %v1286 = vld [vmem:[#allocation2 + $0xad0] sm:$0xff]
        %v1287 = vld [vmem:[#allocation2 + $0xad8] sm:$0xff]
        %v1288 = vld [vmem:[#allocation2 + $0xae0] sm:$0xff]
        %v1289 = vld [vmem:[#allocation2 + $0xae8] sm:$0xff]
        %v1290 = vld [vmem:[#allocation2 + $0xaf0] sm:$0xff]
        %v1291 = vld [vmem:[#allocation2 + $0xaf8] sm:$0xff]
        %v1292 = vld [vmem:[#allocation2 + $0xb00] sm:$0xff]
        %v1293 = vld [vmem:[#allocation2 + $0xb08] sm:$0xff]
        %v1294 = vld [vmem:[#allocation2 + $0xb10] sm:$0xff]
        %v1295 = vld [vmem:[#allocation2 + $0xb18] sm:$0xff]
        %v1296 = vld [vmem:[#allocation2 + $0xb20] sm:$0xff]
        %v1297 = vld [vmem:[#allocation2 + $0xb28] sm:$0xff]
        %v1298 = vld [vmem:[#allocation2 + $0xb30] sm:$0xff]
        %v1299 = vld [vmem:[#allocation2 + $0xb38] sm:$0xff]
        %v1300 = vld [vmem:[#allocation2 + $0xb40] sm:$0xff]
        %v1301 = vld [vmem:[#allocation2 + $0xb48] sm:$0xff]
        %v1302 = vld [vmem:[#allocation2 + $0xb50] sm:$0xff]
        %v1303 = vld [vmem:[#allocation2 + $0xb58] sm:$0xff]
        %v1304 = vld [vmem:[#allocation2 + $0xb60] sm:$0xff]
        %v1305 = vld [vmem:[#allocation2 + $0xb68] sm:$0xff]
        %v1306 = vld [vmem:[#allocation2 + $0xb70] sm:$0xff]
        %v1307 = vld [vmem:[#allocation2 + $0xb78] sm:$0xff]
        %v1308 = vld [vmem:[#allocation2 + $0xb80] sm:$0xff]
        %v1309 = vld [vmem:[#allocation2 + $0xb88] sm:$0xff]
        %v1310 = vld [vmem:[#allocation2 + $0xb90] sm:$0xff]
        %v1311 = vld [vmem:[#allocation2 + $0xb98] sm:$0xff]
        %v1312 = vld [vmem:[#allocation2 + $0xba0] sm:$0xff]
        %v1313 = vld [vmem:[#allocation2 + $0xba8] sm:$0xff]
        %v1314 = vld [vmem:[#allocation2 + $0xbb0] sm:$0xff]
        %v1315 = vld [vmem:[#allocation2 + $0xbb8] sm:$0xff]
        %v1316 = vld [vmem:[#allocation2 + $0xbc0] sm:$0xff]
        %v1317 = vld [vmem:[#allocation2 + $0xbc8] sm:$0xff]
        %v1318 = vld [vmem:[#allocation2 + $0xbd0] sm:$0xff]
        %v1319 = vld [vmem:[#allocation2 + $0xbd8] sm:$0xff]
        %v1320 = vld [vmem:[#allocation2 + $0xbe0] sm:$0xff]
        %v1321 = vld [vmem:[#allocation2 + $0xbe8] sm:$0xff]
        %v1322 = vld [vmem:[#allocation2 + $0xbf0] sm:$0xff]
        %v1323 = vld [vmem:[#allocation2 + $0xbf8] sm:$0xff]
        %v1324 = vld [vmem:[#allocation2 + $0xc00] sm:$0xff]
        %v1325 = vld [vmem:[#allocation2 + $0xc08] sm:$0xff]
        %v1326 = vld [vmem:[#allocation2 + $0xc10] sm:$0xff]
        %v1327 = vld [vmem:[#allocation2 + $0xc18] sm:$0xff]
        %v1328 = vld [vmem:[#allocation2 + $0xc20] sm:$0xff]
        %v1329 = vld [vmem:[#allocation2 + $0xc28] sm:$0xff]
        %v1330 = vld [vmem:[#allocation2 + $0xc30] sm:$0xff]
        %v1331 = vld [vmem:[#allocation2 + $0xc38] sm:$0xff]
        %v1332 = vld [vmem:[#allocation2 + $0xc40] sm:$0xff]
        %v1333 = vld [vmem:[#allocation2 + $0xc48] sm:$0xff]
        %v1334 = vld [vmem:[#allocation2 + $0xc50] sm:$0xff]
        %v1335 = vld [vmem:[#allocation2 + $0xc58] sm:$0xff]
        %v1336 = vld [vmem:[#allocation2 + $0xc60] sm:$0xff]
        %v1337 = vld [vmem:[#allocation2 + $0xc68] sm:$0xff]
        %v1338 = vld [vmem:[#allocation2 + $0xc70] sm:$0xff]
        %v1339 = vld [vmem:[#allocation2 + $0xc78] sm:$0xff]
        %v1340 = vld [vmem:[#allocation2 + $0xc80] sm:$0xff]
        %v1341 = vld [vmem:[#allocation2 + $0xc88] sm:$0xff]
        %v1342 = vld [vmem:[#allocation2 + $0xc90] sm:$0xff]
        %v1343 = vld [vmem:[#allocation2 + $0xc98] sm:$0xff]
        %v1344 = vld [vmem:[#allocation2 + $0xca0] sm:$0xff]
        %v1345 = vld [vmem:[#allocation2 + $0xca8] sm:$0xff]
        %v1346 = vld [vmem:[#allocation2 + $0xcb0] sm:$0xff]
        %v1347 = vld [vmem:[#allocation2 + $0xcb8] sm:$0xff]
        %v1348 = vld [vmem:[#allocation2 + $0xcc0] sm:$0xff]
        %v1349 = vld [vmem:[#allocation2 + $0xcc8] sm:$0xff]
        %v1350 = vld [vmem:[#allocation2 + $0xcd0] sm:$0xff]
        %v1351 = vld [vmem:[#allocation2 + $0xcd8] sm:$0xff]
        %v1352 = vld [vmem:[#allocation2 + $0xce0] sm:$0xff]
        %v1353 = vld [vmem:[#allocation2 + $0xce8] sm:$0xff]
        %v1354 = vld [vmem:[#allocation2 + $0xcf0] sm:$0xff]
        %v1355 = vld [vmem:[#allocation2 + $0xcf8] sm:$0xff]
        %v1356 = vld [vmem:[#allocation2 + $0xd00] sm:$0xff]
        %v1357 = vld [vmem:[#allocation2 + $0xd08] sm:$0xff]
        %v1358 = vld [vmem:[#allocation2 + $0xd10] sm:$0xff]
        %v1359 = vld [vmem:[#allocation2 + $0xd18] sm:$0xff]
        %v1360 = vld [vmem:[#allocation2 + $0xd20] sm:$0xff]
        %v1361 = vld [vmem:[#allocation2 + $0xd28] sm:$0xff]
        %v1362 = vld [vmem:[#allocation2 + $0xd30] sm:$0xff]
        %v1363 = vld [vmem:[#allocation2 + $0xd38] sm:$0xff]
        %v1364 = vld [vmem:[#allocation2 + $0xd40] sm:$0xff]
        %v1365 = vld [vmem:[#allocation2 + $0xd48] sm:$0xff]
        %v1366 = vld [vmem:[#allocation2 + $0xd50] sm:$0xff]
        %v1367 = vld [vmem:[#allocation2 + $0xd58] sm:$0xff]
        %v1368 = vld [vmem:[#allocation2 + $0xd60] sm:$0xff]
        %v1369 = vld [vmem:[#allocation2 + $0xd68] sm:$0xff]
        %v1370 = vld [vmem:[#allocation2 + $0xd70] sm:$0xff]
        %v1371 = vld [vmem:[#allocation2 + $0xd78] sm:$0xff]
        %v1372 = vld [vmem:[#allocation2 + $0xd80] sm:$0xff]
        %v1373 = vld [vmem:[#allocation2 + $0xd88] sm:$0xff]
        %v1374 = vld [vmem:[#allocation2 + $0xd90] sm:$0xff]
        %v1375 = vld [vmem:[#allocation2 + $0xd98] sm:$0xff]
        %v1376 = vld [vmem:[#allocation2 + $0xda0] sm:$0xff]
        %v1377 = vld [vmem:[#allocation2 + $0xda8] sm:$0xff]
        %v1378 = vld [vmem:[#allocation2 + $0xdb0] sm:$0xff]
        %v1379 = vld [vmem:[#allocation2 + $0xdb8] sm:$0xff]
        %v1380 = vld [vmem:[#allocation2 + $0xdc0] sm:$0xff]
        %v1381 = vld [vmem:[#allocation2 + $0xdc8] sm:$0xff]
        %v1382 = vld [vmem:[#allocation2 + $0xdd0] sm:$0xff]
        %v1383 = vld [vmem:[#allocation2 + $0xdd8] sm:$0xff]
        %v1384 = vld [vmem:[#allocation2 + $0xde0] sm:$0xff]
        %v1385 = vld [vmem:[#allocation2 + $0xde8] sm:$0xff]
        %v1386 = vld [vmem:[#allocation2 + $0xdf0] sm:$0xff]
        %v1387 = vld [vmem:[#allocation2 + $0xdf8] sm:$0xff]
        %v1388 = vld [vmem:[#allocation2 + $0xe00] sm:$0xff]
        %v1389 = vld [vmem:[#allocation2 + $0xe08] sm:$0xff]
        %v1390 = vld [vmem:[#allocation2 + $0xe10] sm:$0xff]
        %v1391 = vld [vmem:[#allocation2 + $0xe18] sm:$0xff]
        %v1392 = vld [vmem:[#allocation2 + $0xe20] sm:$0xff]
        %v1393 = vld [vmem:[#allocation2 + $0xe28] sm:$0xff]
        %v1394 = vld [vmem:[#allocation2 + $0xe30] sm:$0xff]
        %v1395 = vld [vmem:[#allocation2 + $0xe38] sm:$0xff]
        %v1396 = vld [vmem:[#allocation2 + $0xe40] sm:$0xff]
        %v1397 = vld [vmem:[#allocation2 + $0xe48] sm:$0xff]
        %v1398 = vld [vmem:[#allocation2 + $0xe50] sm:$0xff]
        %v1399 = vld [vmem:[#allocation2 + $0xe58] sm:$0xff]
        %v1400 = vld [vmem:[#allocation2 + $0xe60] sm:$0xff]
        %v1401 = vld [vmem:[#allocation2 + $0xe68] sm:$0xff]
        %v1402 = vld [vmem:[#allocation2 + $0xe70] sm:$0xff]
        %v1403 = vld [vmem:[#allocation2 + $0xe78] sm:$0xff]
        %v1404 = vld [vmem:[#allocation2 + $0xe80] sm:$0xff]
        %v1405 = vld [vmem:[#allocation2 + $0xe88] sm:$0xff]
        %v1406 = vld [vmem:[#allocation2 + $0xe90] sm:$0xff]
        %v1407 = vld [vmem:[#allocation2 + $0xe98] sm:$0xff]
        %v1408 = vld [vmem:[#allocation2 + $0xea0] sm:$0xff]
        %v1409 = vld [vmem:[#allocation2 + $0xea8] sm:$0xff]
        %v1410 = vld [vmem:[#allocation2 + $0xeb0] sm:$0xff]
        %v1411 = vld [vmem:[#allocation2 + $0xeb8] sm:$0xff]
        %v1412 = vld [vmem:[#allocation2 + $0xec0] sm:$0xff]
        %v1413 = vld [vmem:[#allocation2 + $0xec8] sm:$0xff]
        %v1414 = vld [vmem:[#allocation2 + $0xed0] sm:$0xff]
        %v1415 = vld [vmem:[#allocation2 + $0xed8] sm:$0xff]
        %v1416 = vld [vmem:[#allocation2 + $0xee0] sm:$0xff]
        %v1417 = vld [vmem:[#allocation2 + $0xee8] sm:$0xff]
        %v1418 = vld [vmem:[#allocation2 + $0xef0] sm:$0xff]
        %v1419 = vld [vmem:[#allocation2 + $0xef8] sm:$0xff]
        %v1420 = vld [vmem:[#allocation2 + $0xf00] sm:$0xff]
        %v1421 = vld [vmem:[#allocation2 + $0xf08] sm:$0xff]
        %v1422 = vld [vmem:[#allocation2 + $0xf10] sm:$0xff]
        %v1423 = vld [vmem:[#allocation2 + $0xf18] sm:$0xff]
        %v1424 = vld [vmem:[#allocation2 + $0xf20] sm:$0xff]
        %v1425 = vld [vmem:[#allocation2 + $0xf28] sm:$0xff]
        %v1426 = vld [vmem:[#allocation2 + $0xf30] sm:$0xff]
        %v1427 = vld [vmem:[#allocation2 + $0xf38] sm:$0xff]
        %v1428 = vld [vmem:[#allocation2 + $0xf40] sm:$0xff]
        %v1429 = vld [vmem:[#allocation2 + $0xf48] sm:$0xff]
        %v1430 = vld [vmem:[#allocation2 + $0xf50] sm:$0xff]
        %v1431 = vld [vmem:[#allocation2 + $0xf58] sm:$0xff]
        %v1432 = vld [vmem:[#allocation2 + $0xf60] sm:$0xff]
        %v1433 = vld [vmem:[#allocation2 + $0xf68] sm:$0xff]
        %v1434 = vld [vmem:[#allocation2 + $0xf70] sm:$0xff]
        %v1435 = vld [vmem:[#allocation2 + $0xf78] sm:$0xff]
        %v1436 = vld [vmem:[#allocation2 + $0xf80] sm:$0xff]
        %v1437 = vld [vmem:[#allocation2 + $0xf88] sm:$0xff]
        %v1438 = vld [vmem:[#allocation2 + $0xf90] sm:$0xff]
        %v1439 = vld [vmem:[#allocation2 + $0xf98] sm:$0xff]
        %v1440 = vld [vmem:[#allocation2 + $0xfa0] sm:$0xff]
        %v1441 = vld [vmem:[#allocation2 + $0xfa8] sm:$0xff]
        %v1442 = vld [vmem:[#allocation2 + $0xfb0] sm:$0xff]
        %v1443 = vld [vmem:[#allocation2 + $0xfb8] sm:$0xff]
        %v1444 = vld [vmem:[#allocation2 + $0xfc0] sm:$0xff]
        %v1445 = vld [vmem:[#allocation2 + $0xfc8] sm:$0xff]
        %v1446 = vld [vmem:[#allocation2 + $0xfd0] sm:$0xff]
        %v1447 = vld [vmem:[#allocation2 + $0xfd8] sm:$0xff]
        %v1448 = vld [vmem:[#allocation2 + $0xfe0] sm:$0xff]
        %v1449 = vld [vmem:[#allocation2 + $0xfe8] sm:$0xff]
        %v1450 = vld [vmem:[#allocation2 + $0xff0] sm:$0xff]
        %v1451 = vld [vmem:[#allocation2 + $0xff8] sm:$0xff]
        %v1452 = vld [vmem:[#allocation2 + $0x1000] sm:$0xff]
        %v1453 = vld [vmem:[#allocation2 + $0x1008] sm:$0xff]
        %v1454 = vld [vmem:[#allocation2 + $0x1010] sm:$0xff]
        %v1455 = vld [vmem:[#allocation2 + $0x1018] sm:$0xff]
        %v1456 = vld [vmem:[#allocation2 + $0x1020] sm:$0xff]
        %v1457 = vld [vmem:[#allocation2 + $0x1028] sm:$0xff]
        %v1458 = vld [vmem:[#allocation2 + $0x1030] sm:$0xff]
        %v1459 = vld [vmem:[#allocation2 + $0x1038] sm:$0xff]
        %v1460 = vld [vmem:[#allocation2 + $0x1040] sm:$0xff]
        %v1461 = vld [vmem:[#allocation2 + $0x1048] sm:$0xff]
        %v1462 = vld [vmem:[#allocation2 + $0x1050] sm:$0xff]
        %v1463 = vld [vmem:[#allocation2 + $0x1058] sm:$0xff]
        %v1464 = vld [vmem:[#allocation2 + $0x1060] sm:$0xff]
        %v1465 = vld [vmem:[#allocation2 + $0x1068] sm:$0xff]
        %v1466 = vld [vmem:[#allocation2 + $0x1070] sm:$0xff]
        %v1467 = vld [vmem:[#allocation2 + $0x1078] sm:$0xff]
        %v1468 = vld [vmem:[#allocation2 + $0x1080] sm:$0xff]
        %v1469 = vld [vmem:[#allocation2 + $0x1088] sm:$0xff]
        %v1470 = vld [vmem:[#allocation2 + $0x1090] sm:$0xff]
        %v1471 = vld [vmem:[#allocation2 + $0x1098] sm:$0xff]
        %v1472 = vld [vmem:[#allocation2 + $0x10a0] sm:$0xff]
        %v1473 = vld [vmem:[#allocation2 + $0x10a8] sm:$0xff]
        %v1474 = vld [vmem:[#allocation2 + $0x10b0] sm:$0xff]
        %v1475 = vld [vmem:[#allocation2 + $0x10b8] sm:$0xff]
        %v1476 = vld [vmem:[#allocation2 + $0x10c0] sm:$0xff]
        %v1477 = vld [vmem:[#allocation2 + $0x10c8] sm:$0xff]
        %v1478 = vld [vmem:[#allocation2 + $0x10d0] sm:$0xff]
        %v1479 = vld [vmem:[#allocation2 + $0x10d8] sm:$0xff]
        %v1480 = vld [vmem:[#allocation2 + $0x10e0] sm:$0xff]
        %v1481 = vld [vmem:[#allocation2 + $0x10e8] sm:$0xff]
        %v1482 = vld [vmem:[#allocation2 + $0x10f0] sm:$0xff]
        %v1483 = vld [vmem:[#allocation2 + $0x10f8] sm:$0xff]
        %v1484 = vld [vmem:[#allocation2 + $0x1100] sm:$0xff]
        %v1485 = vld [vmem:[#allocation2 + $0x1108] sm:$0xff]
        %v1486 = vld [vmem:[#allocation2 + $0x1110] sm:$0xff]
        %v1487 = vld [vmem:[#allocation2 + $0x1118] sm:$0xff]
        %v1488 = vld [vmem:[#allocation2 + $0x1120] sm:$0xff]
        %v1489 = vld [vmem:[#allocation2 + $0x1128] sm:$0xff]
        %v1490 = vld [vmem:[#allocation2 + $0x1130] sm:$0xff]
        %v1491 = vld [vmem:[#allocation2 + $0x1138] sm:$0xff]
        %v1492 = vld [vmem:[#allocation2 + $0x1140] sm:$0xff]
        %v1493 = vld [vmem:[#allocation2 + $0x1148] sm:$0xff]
        %v1494 = vld [vmem:[#allocation2 + $0x1150] sm:$0xff]
        %v1495 = vld [vmem:[#allocation2 + $0x1158] sm:$0xff]
        %v1496 = vld [vmem:[#allocation2 + $0x1160] sm:$0xff]
        %v1497 = vld [vmem:[#allocation2 + $0x1168] sm:$0xff]
        %v1498 = vld [vmem:[#allocation2 + $0x1170] sm:$0xff]
        %v1499 = vld [vmem:[#allocation2 + $0x1178] sm:$0xff]
        %v1500 = vld [vmem:[#allocation2 + $0x1180] sm:$0xff]
        %v1501 = vld [vmem:[#allocation2 + $0x1188] sm:$0xff]
        %v1502 = vld [vmem:[#allocation2 + $0x1190] sm:$0xff]
        %v1503 = vld [vmem:[#allocation2 + $0x1198] sm:$0xff]
        %v1504 = vld [vmem:[#allocation2 + $0x11a0] sm:$0xff]
        %v1505 = vld [vmem:[#allocation2 + $0x11a8] sm:$0xff]
        %v1506 = vld [vmem:[#allocation2 + $0x11b0] sm:$0xff]
        %v1507 = vld [vmem:[#allocation2 + $0x11b8] sm:$0xff]
        %v1508 = vld [vmem:[#allocation2 + $0x11c0] sm:$0xff]
        %v1509 = vld [vmem:[#allocation2 + $0x11c8] sm:$0xff]
        %v1510 = vld [vmem:[#allocation2 + $0x11d0] sm:$0xff]
        %v1511 = vld [vmem:[#allocation2 + $0x11d8] sm:$0xff]
        %v1512 = vld [vmem:[#allocation2 + $0x11e0] sm:$0xff]
        %v1513 = vld [vmem:[#allocation2 + $0x11e8] sm:$0xff]
        %v1514 = vld [vmem:[#allocation2 + $0x11f0] sm:$0xff]
        %v1515 = vld [vmem:[#allocation2 + $0x11f8] sm:$0xff]
        %v1516 = vld [vmem:[#allocation2 + $0x1200] sm:$0xff]
        %v1517 = vld [vmem:[#allocation2 + $0x1208] sm:$0xff]
        %v1518 = vld [vmem:[#allocation2 + $0x1210] sm:$0xff]
        %v1519 = vld [vmem:[#allocation2 + $0x1218] sm:$0xff]
        %v1520 = vld [vmem:[#allocation2 + $0x1220] sm:$0xff]
        %v1521 = vld [vmem:[#allocation2 + $0x1228] sm:$0xff]
        %v1522 = vld [vmem:[#allocation2 + $0x1230] sm:$0xff]
        %v1523 = vld [vmem:[#allocation2 + $0x1238] sm:$0xff]
        %v1524 = vld [vmem:[#allocation2 + $0x1240] sm:$0xff]
        %v1525 = vld [vmem:[#allocation2 + $0x1248] sm:$0xff]
        %v1526 = vld [vmem:[#allocation2 + $0x1250] sm:$0xff]
        %v1527 = vld [vmem:[#allocation2 + $0x1258] sm:$0xff]
        %v1528 = vld [vmem:[#allocation2 + $0x1260] sm:$0xff]
        %v1529 = vld [vmem:[#allocation2 + $0x1268] sm:$0xff]
        %v1530 = vld [vmem:[#allocation2 + $0x1270] sm:$0xff]
        %v1531 = vld [vmem:[#allocation2 + $0x1278] sm:$0xff]
        %v1532 = vld [vmem:[#allocation2 + $0x1280] sm:$0xff]
        %v1533 = vld [vmem:[#allocation2 + $0x1288] sm:$0xff]
        %v1534 = vld [vmem:[#allocation2 + $0x1290] sm:$0xff]
        %v1535 = vld [vmem:[#allocation2 + $0x1298] sm:$0xff]
        %v1536 = vld [vmem:[#allocation2 + $0x12a0] sm:$0xff]
        %v1537 = vld [vmem:[#allocation2 + $0x12a8] sm:$0xff]
        %v1538 = vld [vmem:[#allocation2 + $0x12b0] sm:$0xff]
        %v1539 = vld [vmem:[#allocation2 + $0x12b8] sm:$0xff]
        %v1540 = vld [vmem:[#allocation2 + $0x12c0] sm:$0xff]
        %v1541 = vld [vmem:[#allocation2 + $0x12c8] sm:$0xff]
        %v1542 = vld [vmem:[#allocation2 + $0x12d0] sm:$0xff]
        %v1543 = vld [vmem:[#allocation2 + $0x12d8] sm:$0xff]
        %v1544 = vld [vmem:[#allocation2 + $0x12e0] sm:$0xff]
        %v1545 = vld [vmem:[#allocation2 + $0x12e8] sm:$0xff]
        %v1546 = vld [vmem:[#allocation2 + $0x12f0] sm:$0xff]
        %v1547 = vld [vmem:[#allocation2 + $0x12f8] sm:$0xff]
        %v1548 = vld [vmem:[#allocation2 + $0x1300] sm:$0xff]
        %v1549 = vld [vmem:[#allocation2 + $0x1308] sm:$0xff]
        %v1550 = vld [vmem:[#allocation2 + $0x1310] sm:$0xff]
        %v1551 = vld [vmem:[#allocation2 + $0x1318] sm:$0xff]
        %v1552 = vld [vmem:[#allocation2 + $0x1320] sm:$0xff]
        %v1553 = vld [vmem:[#allocation2 + $0x1328] sm:$0xff]
        %v1554 = vld [vmem:[#allocation2 + $0x1330] sm:$0xff]
        %v1555 = vld [vmem:[#allocation2 + $0x1338] sm:$0xff]
        %v1556 = vld [vmem:[#allocation2 + $0x1340] sm:$0xff]
        %v1557 = vld [vmem:[#allocation2 + $0x1348] sm:$0xff]
        %v1558 = vld [vmem:[#allocation2 + $0x1350] sm:$0xff]
        %v1559 = vld [vmem:[#allocation2 + $0x1358] sm:$0xff]
        %v1560 = vld [vmem:[#allocation2 + $0x1360] sm:$0xff]
        %v1561 = vld [vmem:[#allocation2 + $0x1368] sm:$0xff]
        %v1562 = vld [vmem:[#allocation2 + $0x1370] sm:$0xff]
        %v1563 = vld [vmem:[#allocation2 + $0x1378] sm:$0xff]
        %v1564 = vld [vmem:[#allocation2 + $0x1380] sm:$0xff]
        %v1565 = vld [vmem:[#allocation2 + $0x1388] sm:$0xff]
        %v1566 = vld [vmem:[#allocation2 + $0x1390] sm:$0xff]
        %v1567 = vld [vmem:[#allocation2 + $0x1398] sm:$0xff]
        %v1568 = vld [vmem:[#allocation2 + $0x13a0] sm:$0xff]
        %v1569 = vld [vmem:[#allocation2 + $0x13a8] sm:$0xff]
        %v1570 = vld [vmem:[#allocation2 + $0x13b0] sm:$0xff]
        %v1571 = vld [vmem:[#allocation2 + $0x13b8] sm:$0xff]
        %v1572 = vld [vmem:[#allocation2 + $0x13c0] sm:$0xff]
        %v1573 = vld [vmem:[#allocation2 + $0x13c8] sm:$0xff]
        %v1574 = vld [vmem:[#allocation2 + $0x13d0] sm:$0xff]
        %v1575 = vld [vmem:[#allocation2 + $0x13d8] sm:$0xff]
        %v1576 = vld [vmem:[#allocation2 + $0x13e0] sm:$0xff]
        %v1577 = vld [vmem:[#allocation2 + $0x13e8] sm:$0xff]
        %v1578 = vld [vmem:[#allocation2 + $0x13f0] sm:$0xff]
        %v1579 = vld [vmem:[#allocation2 + $0x13f8] sm:$0xff]
        %v1580 = vld [vmem:[#allocation2 + $0x1400] sm:$0xff]
        %v1581 = vld [vmem:[#allocation2 + $0x1408] sm:$0xff]
        %v1582 = vld [vmem:[#allocation2 + $0x1410] sm:$0xff]
        %v1583 = vld [vmem:[#allocation2 + $0x1418] sm:$0xff]
        %v1584 = vld [vmem:[#allocation2 + $0x1420] sm:$0xff]
        %v1585 = vld [vmem:[#allocation2 + $0x1428] sm:$0xff]
        %v1586 = vld [vmem:[#allocation2 + $0x1430] sm:$0xff]
        %v1587 = vld [vmem:[#allocation2 + $0x1438] sm:$0xff]
        %v1588 = vld [vmem:[#allocation2 + $0x1440] sm:$0xff]
        %v1589 = vld [vmem:[#allocation2 + $0x1448] sm:$0xff]
        %v1590 = vld [vmem:[#allocation2 + $0x1450] sm:$0xff]
        %v1591 = vld [vmem:[#allocation2 + $0x1458] sm:$0xff]
        %v1592 = vld [vmem:[#allocation2 + $0x1460] sm:$0xff]
        %v1593 = vld [vmem:[#allocation2 + $0x1468] sm:$0xff]
        %v1594 = vld [vmem:[#allocation2 + $0x1470] sm:$0xff]
        %v1595 = vld [vmem:[#allocation2 + $0x1478] sm:$0xff]
        %v1596 = vld [vmem:[#allocation2 + $0x1480] sm:$0xff]
        %v1597 = vld [vmem:[#allocation2 + $0x1488] sm:$0xff]
        %v1598 = vld [vmem:[#allocation2 + $0x1490] sm:$0xff]
        %v1599 = vld [vmem:[#allocation2 + $0x1498] sm:$0xff]
        %v1600 = vld [vmem:[#allocation2 + $0x14a0] sm:$0xff]
        %v1601 = vld [vmem:[#allocation2 + $0x14a8] sm:$0xff]
        %v1602 = vld [vmem:[#allocation2 + $0x14b0] sm:$0xff]
        %v1603 = vld [vmem:[#allocation2 + $0x14b8] sm:$0xff]
        %v1604 = vld [vmem:[#allocation2 + $0x14c0] sm:$0xff]
        %v1605 = vld [vmem:[#allocation2 + $0x14c8] sm:$0xff]
        %v1606 = vld [vmem:[#allocation2 + $0x14d0] sm:$0xff]
        %v1607 = vld [vmem:[#allocation2 + $0x14d8] sm:$0xff]
        %v1608 = vld [vmem:[#allocation2 + $0x14e0] sm:$0xff]
        %v1609 = vld [vmem:[#allocation2 + $0x14e8] sm:$0xff]
        %v1610 = vld [vmem:[#allocation2 + $0x14f0] sm:$0xff]
        %v1611 = vld [vmem:[#allocation2 + $0x14f8] sm:$0xff]
        %v1612 = vld [vmem:[#allocation2 + $0x1500] sm:$0xff]
        %v1613 = vld [vmem:[#allocation2 + $0x1508] sm:$0xff]
        %v1614 = vld [vmem:[#allocation2 + $0x1510] sm:$0xff]
        %v1615 = vld [vmem:[#allocation2 + $0x1518] sm:$0xff]
        %v1616 = vld [vmem:[#allocation2 + $0x1520] sm:$0xff]
        %v1617 = vld [vmem:[#allocation2 + $0x1528] sm:$0xff]
        %v1618 = vld [vmem:[#allocation2 + $0x1530] sm:$0xff]
        %v1619 = vld [vmem:[#allocation2 + $0x1538] sm:$0xff]
        %v1620 = vld [vmem:[#allocation2 + $0x1540] sm:$0xff]
        %v1621 = vld [vmem:[#allocation2 + $0x1548] sm:$0xff]
        %v1622 = vld [vmem:[#allocation2 + $0x1550] sm:$0xff]
        %v1623 = vld [vmem:[#allocation2 + $0x1558] sm:$0xff]
        %v1624 = vld [vmem:[#allocation2 + $0x1560] sm:$0xff]
        %v1625 = vld [vmem:[#allocation2 + $0x1568] sm:$0xff]
        %v1626 = vld [vmem:[#allocation2 + $0x1570] sm:$0xff]
        %v1627 = vld [vmem:[#allocation2 + $0x1578] sm:$0xff]
        %v1628 = vld [vmem:[#allocation2 + $0x1580] sm:$0xff]
        %v1629 = vld [vmem:[#allocation2 + $0x1588] sm:$0xff]
        %v1630 = vld [vmem:[#allocation2 + $0x1590] sm:$0xff]
        %v1631 = vld [vmem:[#allocation2 + $0x1598] sm:$0xff]
        %v1632 = vld [vmem:[#allocation2 + $0x15a0] sm:$0xff]
        %v1633 = vld [vmem:[#allocation2 + $0x15a8] sm:$0xff]
        %v1634 = vld [vmem:[#allocation2 + $0x15b0] sm:$0xff]
        %v1635 = vld [vmem:[#allocation2 + $0x15b8] sm:$0xff]
        %v1636 = vld [vmem:[#allocation2 + $0x15c0] sm:$0xff]
        %v1637 = vld [vmem:[#allocation2 + $0x15c8] sm:$0xff]
        %v1638 = vld [vmem:[#allocation2 + $0x15d0] sm:$0xff]
        %v1639 = vld [vmem:[#allocation2 + $0x15d8] sm:$0xff]
        %v1640 = vld [vmem:[#allocation2 + $0x15e0] sm:$0xff]
        %v1641 = vld [vmem:[#allocation2 + $0x15e8] sm:$0xff]
        %v1642 = vld [vmem:[#allocation2 + $0x15f0] sm:$0xff]
        %v1643 = vld [vmem:[#allocation2 + $0x15f8] sm:$0xff]
        %v1644 = vld [vmem:[#allocation2 + $0x1600] sm:$0xff]
        %v1645 = vld [vmem:[#allocation2 + $0x1608] sm:$0xff]
        %v1646 = vld [vmem:[#allocation2 + $0x1610] sm:$0xff]
        %v1647 = vld [vmem:[#allocation2 + $0x1618] sm:$0xff]
        %v1648 = vld [vmem:[#allocation2 + $0x1620] sm:$0xff]
        %v1649 = vld [vmem:[#allocation2 + $0x1628] sm:$0xff]
        %v1650 = vld [vmem:[#allocation2 + $0x1630] sm:$0xff]
        %v1651 = vld [vmem:[#allocation2 + $0x1638] sm:$0xff]
        %v1652 = vld [vmem:[#allocation2 + $0x1640] sm:$0xff]
        %v1653 = vld [vmem:[#allocation2 + $0x1648] sm:$0xff]
        %v1654 = vld [vmem:[#allocation2 + $0x1650] sm:$0xff]
        %v1655 = vld [vmem:[#allocation2 + $0x1658] sm:$0xff]
        %v1656 = vld [vmem:[#allocation2 + $0x1660] sm:$0xff]
        %v1657 = vld [vmem:[#allocation2 + $0x1668] sm:$0xff]
        %v1658 = vld [vmem:[#allocation2 + $0x1670] sm:$0xff]
        %v1659 = vld [vmem:[#allocation2 + $0x1678] sm:$0xff]
        %v1660 = vld [vmem:[#allocation2 + $0x1680] sm:$0xff]
        %v1661 = vld [vmem:[#allocation2 + $0x1688] sm:$0xff]
        %v1662 = vld [vmem:[#allocation2 + $0x1690] sm:$0xff]
        %v1663 = vld [vmem:[#allocation2 + $0x1698] sm:$0xff]
        %v1664 = vld [vmem:[#allocation2 + $0x16a0] sm:$0xff]
        %v1665 = vld [vmem:[#allocation2 + $0x16a8] sm:$0xff]
        %v1666 = vld [vmem:[#allocation2 + $0x16b0] sm:$0xff]
        %v1667 = vld [vmem:[#allocation2 + $0x16b8] sm:$0xff]
        %v1668 = vld [vmem:[#allocation2 + $0x16c0] sm:$0xff]
        %v1669 = vld [vmem:[#allocation2 + $0x16c8] sm:$0xff]
        %v1670 = vld [vmem:[#allocation2 + $0x16d0] sm:$0xff]
        %v1671 = vld [vmem:[#allocation2 + $0x16d8] sm:$0xff]
        %v1672 = vld [vmem:[#allocation2 + $0x16e0] sm:$0xff]
        %v1673 = vld [vmem:[#allocation2 + $0x16e8] sm:$0xff]
        %v1674 = vld [vmem:[#allocation2 + $0x16f0] sm:$0xff]
        %v1675 = vld [vmem:[#allocation2 + $0x16f8] sm:$0xff]
        %v1676 = vld [vmem:[#allocation2 + $0x1700] sm:$0xff]
        %v1677 = vld [vmem:[#allocation2 + $0x1708] sm:$0xff]
        %v1678 = vld [vmem:[#allocation2 + $0x1710] sm:$0xff]
        %v1679 = vld [vmem:[#allocation2 + $0x1718] sm:$0xff]
        %v1680 = vld [vmem:[#allocation2 + $0x1720] sm:$0xff]
        %v1681 = vld [vmem:[#allocation2 + $0x1728] sm:$0xff]
        %v1682 = vld [vmem:[#allocation2 + $0x1730] sm:$0xff]
        %v1683 = vld [vmem:[#allocation2 + $0x1738] sm:$0xff]
        %v1684 = vld [vmem:[#allocation2 + $0x1740] sm:$0xff]
        %v1685 = vld [vmem:[#allocation2 + $0x1748] sm:$0xff]
        %v1686 = vld [vmem:[#allocation2 + $0x1750] sm:$0xff]
        %v1687 = vld [vmem:[#allocation2 + $0x1758] sm:$0xff]
        %v1688 = vld [vmem:[#allocation2 + $0x1760] sm:$0xff]
        %v1689 = vld [vmem:[#allocation2 + $0x1768] sm:$0xff]
        %v1690 = vld [vmem:[#allocation2 + $0x1770] sm:$0xff]
        %v1691 = vld [vmem:[#allocation2 + $0x1778] sm:$0xff]
        %v1692 = vld [vmem:[#allocation2 + $0x1780] sm:$0xff]
        %v1693 = vld [vmem:[#allocation2 + $0x1788] sm:$0xff]
        %v1694 = vld [vmem:[#allocation2 + $0x1790] sm:$0xff]
        %v1695 = vld [vmem:[#allocation2 + $0x1798] sm:$0xff]
        %v1696 = vld [vmem:[#allocation2 + $0x17a0] sm:$0xff]
        %v1697 = vld [vmem:[#allocation2 + $0x17a8] sm:$0xff]
        %v1698 = vld [vmem:[#allocation2 + $0x17b0] sm:$0xff]
        %v1699 = vld [vmem:[#allocation2 + $0x17b8] sm:$0xff]
        %v1700 = vld [vmem:[#allocation2 + $0x17c0] sm:$0xff]
        %v1701 = vld [vmem:[#allocation2 + $0x17c8] sm:$0xff]
        %v1702 = vld [vmem:[#allocation2 + $0x17d0] sm:$0xff]
        %v1703 = vld [vmem:[#allocation2 + $0x17d8] sm:$0xff]
        %v1704 = vld [vmem:[#allocation2 + $0x17e0] sm:$0xff]
        %v1705 = vld [vmem:[#allocation2 + $0x17e8] sm:$0xff]
        %v1706 = vld [vmem:[#allocation2 + $0x17f0] sm:$0xff]
        %v1707 = vld [vmem:[#allocation2 + $0x17f8] sm:$0xff]
        %v1708 = vld [vmem:[#allocation5] sm:$0xf]
        %v1710 = vperm.slane %v1708, 0
        %v1711 = vperm.slane %v1708, 1
        %v1712 = vperm.slane %v1708, 2
        %v1713 = vperm.slane %v1708, 3
        %v1730 = vunpack.c.l.b16 %v928
        %v1731 = vunpack.c.h.b16 %v928
        %v1732 = vunpack.c.l.b16 %v929
        %v1733 = vunpack.c.h.b16 %v929
        %v1734 = vunpack.c.l.b16 %v930
        %v1735 = vunpack.c.h.b16 %v930
        %v1736 = vunpack.c.l.b16 %v931
        %v1737 = vunpack.c.h.b16 %v931
        %v1738 = vunpack.c.l.b16 %v932
        %v1739 = vunpack.c.h.b16 %v932
        %v1740 = vunpack.c.l.b16 %v933
        %v1741 = vunpack.c.h.b16 %v933
        %v1742 = vunpack.c.l.b16 %v934
        %v1743 = vunpack.c.h.b16 %v934
        %v1744 = vunpack.c.l.b16 %v935
        %v1745 = vunpack.c.h.b16 %v935
        %v1746 = vunpack.c.l.b16 %v936
        %v1747 = vunpack.c.h.b16 %v936
        %v1748 = vunpack.c.l.b16 %v937
        %v1749 = vunpack.c.h.b16 %v937
        %v1750 = vunpack.c.l.b16 %v938
        %v1751 = vunpack.c.h.b16 %v938
        %v1752 = vunpack.c.l.b16 %v939
        %v1753 = vunpack.c.h.b16 %v939
        %v1754 = vpack.c.b16 %v1730, %v1730
        %v1755 = vpack.c.b16 %v1731, %v1731
        %v1756 = vpack.c.b16 %v1732, %v1732
        %v1757 = vpack.c.b16 %v1733, %v1733
        %v1758 = vpack.c.b16 %v1734, %v1734
        %v1759 = vpack.c.b16 %v1735, %v1735
        %v1760 = vpack.c.b16 %v1736, %v1736
        %v1761 = vpack.c.b16 %v1737, %v1737
        %v1762 = vpack.c.b16 %v1738, %v1738
        %v1763 = vpack.c.b16 %v1739, %v1739
        %v1764 = vpack.c.b16 %v1740, %v1740
        %v1765 = vpack.c.b16 %v1741, %v1741
        %v1766 = vpack.c.b16 %v1742, %v1742
        %v1767 = vpack.c.b16 %v1743, %v1743
        %v1768 = vpack.c.b16 %v1744, %v1744
        %v1769 = vpack.c.b16 %v1745, %v1745
        %v1770 = vpack.c.b16 %v1746, %v1746
        %v1771 = vpack.c.b16 %v1747, %v1747
        %v1772 = vpack.c.b16 %v1748, %v1748
        %v1773 = vpack.c.b16 %v1749, %v1749
        %v1774 = vpack.c.b16 %v1750, %v1750
        %v1775 = vpack.c.b16 %v1751, %v1751
        %v1776 = vpack.c.b16 %v1752, %v1752
        %v1777 = vpack.c.b16 %v1753, %v1753
        %v2570 = vunpack.c.l.b16 %v940
        %v2571 = vunpack.c.h.b16 %v940
        %v2572 = vunpack.c.l.b16 %v941
        %v2573 = vunpack.c.h.b16 %v941
        %v2574 = vunpack.c.l.b16 %v942
        %v2575 = vunpack.c.h.b16 %v942
        %v2576 = vunpack.c.l.b16 %v943
        %v2577 = vunpack.c.h.b16 %v943
        %v2578 = vunpack.c.l.b16 %v944
        %v2579 = vunpack.c.h.b16 %v944
        %v2580 = vunpack.c.l.b16 %v945
        %v2581 = vunpack.c.h.b16 %v945
        %v2582 = vunpack.c.l.b16 %v946
        %v2583 = vunpack.c.h.b16 %v946
        %v2584 = vunpack.c.l.b16 %v947
        %v2585 = vunpack.c.h.b16 %v947
        %v2586 = vunpack.c.l.b16 %v948
        %v2587 = vunpack.c.h.b16 %v948
        %v2588 = vunpack.c.l.b16 %v949
        %v2589 = vunpack.c.h.b16 %v949
        %v2590 = vunpack.c.l.b16 %v950
        %v2591 = vunpack.c.h.b16 %v950
        %v2592 = vunpack.c.l.b16 %v951
        %v2593 = vunpack.c.h.b16 %v951
        %v2594 = vunpack.c.l.b16 %v952
        %v2595 = vunpack.c.h.b16 %v952
        %v2596 = vunpack.c.l.b16 %v953
        %v2597 = vunpack.c.h.b16 %v953
        %v2598 = vunpack.c.l.b16 %v954
        %v2599 = vunpack.c.h.b16 %v954
        %v2600 = vunpack.c.l.b16 %v955
        %v2601 = vunpack.c.h.b16 %v955
        %v2602 = vunpack.c.l.b16 %v956
        %v2603 = vunpack.c.h.b16 %v956
        %v2604 = vunpack.c.l.b16 %v957
        %v2605 = vunpack.c.h.b16 %v957
        %v2606 = vunpack.c.l.b16 %v958
        %v2607 = vunpack.c.h.b16 %v958
        %v2608 = vunpack.c.l.b16 %v959
        %v2609 = vunpack.c.h.b16 %v959
        %v2610 = vunpack.c.l.b16 %v960
        %v2611 = vunpack.c.h.b16 %v960
        %v2612 = vunpack.c.l.b16 %v961
        %v2613 = vunpack.c.h.b16 %v961
        %v2614 = vunpack.c.l.b16 %v962
        %v2615 = vunpack.c.h.b16 %v962
        %v2616 = vunpack.c.l.b16 %v963
        %v2617 = vunpack.c.h.b16 %v963
        %v2618 = vunpack.c.l.b16 %v964
        %v2619 = vunpack.c.h.b16 %v964
        %v2620 = vunpack.c.l.b16 %v965
        %v2621 = vunpack.c.h.b16 %v965
        %v2622 = vunpack.c.l.b16 %v966
        %v2623 = vunpack.c.h.b16 %v966
        %v2624 = vunpack.c.l.b16 %v967
        %v2625 = vunpack.c.h.b16 %v967
        %v2626 = vunpack.c.l.b16 %v968
        %v2627 = vunpack.c.h.b16 %v968
        %v2628 = vunpack.c.l.b16 %v969
        %v2629 = vunpack.c.h.b16 %v969
        %v2630 = vunpack.c.l.b16 %v970
        %v2631 = vunpack.c.h.b16 %v970
        %v2632 = vunpack.c.l.b16 %v971
        %v2633 = vunpack.c.h.b16 %v971
        %v2634 = vunpack.c.l.b16 %v972
        %v2635 = vunpack.c.h.b16 %v972
        %v2636 = vunpack.c.l.b16 %v973
        %v2637 = vunpack.c.h.b16 %v973
        %v2638 = vunpack.c.l.b16 %v974
        %v2639 = vunpack.c.h.b16 %v974
        %v2640 = vunpack.c.l.b16 %v975
        %v2641 = vunpack.c.h.b16 %v975
        %v2642 = vunpack.c.l.b16 %v976
        %v2643 = vunpack.c.h.b16 %v976
        %v2644 = vunpack.c.l.b16 %v977
        %v2645 = vunpack.c.h.b16 %v977
        %v2646 = vunpack.c.l.b16 %v978
        %v2647 = vunpack.c.h.b16 %v978
        %v2648 = vunpack.c.l.b16 %v979
        %v2649 = vunpack.c.h.b16 %v979
        %v2650 = vunpack.c.l.b16 %v980
        %v2651 = vunpack.c.h.b16 %v980
        %v2652 = vunpack.c.l.b16 %v981
        %v2653 = vunpack.c.h.b16 %v981
        %v2654 = vunpack.c.l.b16 %v982
        %v2655 = vunpack.c.h.b16 %v982
        %v2656 = vunpack.c.l.b16 %v983
        %v2657 = vunpack.c.h.b16 %v983
        %v2658 = vunpack.c.l.b16 %v984
        %v2659 = vunpack.c.h.b16 %v984
        %v2660 = vunpack.c.l.b16 %v985
        %v2661 = vunpack.c.h.b16 %v985
        %v2662 = vunpack.c.l.b16 %v986
        %v2663 = vunpack.c.h.b16 %v986
        %v2664 = vunpack.c.l.b16 %v987
        %v2665 = vunpack.c.h.b16 %v987
        %v2666 = vunpack.c.l.b16 %v988
        %v2667 = vunpack.c.h.b16 %v988
        %v2668 = vunpack.c.l.b16 %v989
        %v2669 = vunpack.c.h.b16 %v989
        %v2670 = vunpack.c.l.b16 %v990
        %v2671 = vunpack.c.h.b16 %v990
        %v2672 = vunpack.c.l.b16 %v991
        %v2673 = vunpack.c.h.b16 %v991
        %v2674 = vunpack.c.l.b16 %v992
        %v2675 = vunpack.c.h.b16 %v992
        %v2676 = vunpack.c.l.b16 %v993
        %v2677 = vunpack.c.h.b16 %v993
        %v2678 = vunpack.c.l.b16 %v994
        %v2679 = vunpack.c.h.b16 %v994
        %v2680 = vunpack.c.l.b16 %v995
        %v2681 = vunpack.c.h.b16 %v995
        %v2682 = vunpack.c.l.b16 %v996
        %v2683 = vunpack.c.h.b16 %v996
        %v2684 = vunpack.c.l.b16 %v997
        %v2685 = vunpack.c.h.b16 %v997
        %v2686 = vunpack.c.l.b16 %v998
        %v2687 = vunpack.c.h.b16 %v998
        %v2688 = vunpack.c.l.b16 %v999
        %v2689 = vunpack.c.h.b16 %v999
        %v2690 = vunpack.c.l.b16 %v1000
        %v2691 = vunpack.c.h.b16 %v1000
        %v2692 = vunpack.c.l.b16 %v1001
        %v2693 = vunpack.c.h.b16 %v1001
        %v2694 = vunpack.c.l.b16 %v1002
        %v2695 = vunpack.c.h.b16 %v1002
        %v2696 = vunpack.c.l.b16 %v1003
        %v2697 = vunpack.c.h.b16 %v1003
        %v2698 = vunpack.c.l.b16 %v1004
        %v2699 = vunpack.c.h.b16 %v1004
        %v2700 = vunpack.c.l.b16 %v1005
        %v2701 = vunpack.c.h.b16 %v1005
        %v2702 = vunpack.c.l.b16 %v1006
        %v2703 = vunpack.c.h.b16 %v1006
        %v2704 = vunpack.c.l.b16 %v1007
        %v2705 = vunpack.c.h.b16 %v1007
        %v2706 = vunpack.c.l.b16 %v1008
        %v2707 = vunpack.c.h.b16 %v1008
        %v2708 = vunpack.c.l.b16 %v1009
        %v2709 = vunpack.c.h.b16 %v1009
        %v2710 = vunpack.c.l.b16 %v1010
        %v2711 = vunpack.c.h.b16 %v1010
        %v2712 = vunpack.c.l.b16 %v1011
        %v2713 = vunpack.c.h.b16 %v1011
        %v2714 = vunpack.c.l.b16 %v1012
        %v2715 = vunpack.c.h.b16 %v1012
        %v2716 = vunpack.c.l.b16 %v1013
        %v2717 = vunpack.c.h.b16 %v1013
        %v2718 = vunpack.c.l.b16 %v1014
        %v2719 = vunpack.c.h.b16 %v1014
        %v2720 = vunpack.c.l.b16 %v1015
        %v2721 = vunpack.c.h.b16 %v1015
        %v2722 = vunpack.c.l.b16 %v1016
        %v2723 = vunpack.c.h.b16 %v1016
        %v2724 = vunpack.c.l.b16 %v1017
        %v2725 = vunpack.c.h.b16 %v1017
        %v2726 = vunpack.c.l.b16 %v1018
        %v2727 = vunpack.c.h.b16 %v1018
        %v2728 = vunpack.c.l.b16 %v1019
        %v2729 = vunpack.c.h.b16 %v1019
        %v2730 = vunpack.c.l.b16 %v1020
        %v2731 = vunpack.c.h.b16 %v1020
        %v2732 = vunpack.c.l.b16 %v1021
        %v2733 = vunpack.c.h.b16 %v1021
        %v2734 = vunpack.c.l.b16 %v1022
        %v2735 = vunpack.c.h.b16 %v1022
        %v2736 = vunpack.c.l.b16 %v1023
        %v2737 = vunpack.c.h.b16 %v1023
        %v2738 = vunpack.c.l.b16 %v1024
        %v2739 = vunpack.c.h.b16 %v1024
        %v2740 = vunpack.c.l.b16 %v1025
        %v2741 = vunpack.c.h.b16 %v1025
        %v2742 = vunpack.c.l.b16 %v1026
        %v2743 = vunpack.c.h.b16 %v1026
        %v2744 = vunpack.c.l.b16 %v1027
        %v2745 = vunpack.c.h.b16 %v1027
        %v2746 = vunpack.c.l.b16 %v1028
        %v2747 = vunpack.c.h.b16 %v1028
        %v2748 = vunpack.c.l.b16 %v1029
        %v2749 = vunpack.c.h.b16 %v1029
        %v2750 = vunpack.c.l.b16 %v1030
        %v2751 = vunpack.c.h.b16 %v1030
        %v2752 = vunpack.c.l.b16 %v1031
        %v2753 = vunpack.c.h.b16 %v1031
        %v2754 = vunpack.c.l.b16 %v1032
        %v2755 = vunpack.c.h.b16 %v1032
        %v2756 = vunpack.c.l.b16 %v1033
        %v2757 = vunpack.c.h.b16 %v1033
        %v2758 = vunpack.c.l.b16 %v1034
        %v2759 = vunpack.c.h.b16 %v1034
        %v2760 = vunpack.c.l.b16 %v1035
        %v2761 = vunpack.c.h.b16 %v1035
        %v2762 = vunpack.c.l.b16 %v1036
        %v2763 = vunpack.c.h.b16 %v1036
        %v2764 = vunpack.c.l.b16 %v1037
        %v2765 = vunpack.c.h.b16 %v1037
        %v2766 = vunpack.c.l.b16 %v1038
        %v2767 = vunpack.c.h.b16 %v1038
        %v2768 = vunpack.c.l.b16 %v1039
        %v2769 = vunpack.c.h.b16 %v1039
        %v2770 = vunpack.c.l.b16 %v1040
        %v2771 = vunpack.c.h.b16 %v1040
        %v2772 = vunpack.c.l.b16 %v1041
        %v2773 = vunpack.c.h.b16 %v1041
        %v2774 = vunpack.c.l.b16 %v1042
        %v2775 = vunpack.c.h.b16 %v1042
        %v2776 = vunpack.c.l.b16 %v1043
        %v2777 = vunpack.c.h.b16 %v1043
        %v2778 = vunpack.c.l.b16 %v1044
        %v2779 = vunpack.c.h.b16 %v1044
        %v2780 = vunpack.c.l.b16 %v1045
        %v2781 = vunpack.c.h.b16 %v1045
        %v2782 = vunpack.c.l.b16 %v1046
        %v2783 = vunpack.c.h.b16 %v1046
        %v2784 = vunpack.c.l.b16 %v1047
        %v2785 = vunpack.c.h.b16 %v1047
        %v2786 = vunpack.c.l.b16 %v1048
        %v2787 = vunpack.c.h.b16 %v1048
        %v2788 = vunpack.c.l.b16 %v1049
        %v2789 = vunpack.c.h.b16 %v1049
        %v2790 = vunpack.c.l.b16 %v1050
        %v2791 = vunpack.c.h.b16 %v1050
        %v2792 = vunpack.c.l.b16 %v1051
        %v2793 = vunpack.c.h.b16 %v1051
        %v2794 = vunpack.c.l.b16 %v1052
        %v2795 = vunpack.c.h.b16 %v1052
        %v2796 = vunpack.c.l.b16 %v1053
        %v2797 = vunpack.c.h.b16 %v1053
        %v2798 = vunpack.c.l.b16 %v1054
        %v2799 = vunpack.c.h.b16 %v1054
        %v2800 = vunpack.c.l.b16 %v1055
        %v2801 = vunpack.c.h.b16 %v1055
        %v2802 = vunpack.c.l.b16 %v1056
        %v2803 = vunpack.c.h.b16 %v1056
        %v2804 = vunpack.c.l.b16 %v1057
        %v2805 = vunpack.c.h.b16 %v1057
        %v2806 = vunpack.c.l.b16 %v1058
        %v2807 = vunpack.c.h.b16 %v1058
        %v2808 = vunpack.c.l.b16 %v1059
        %v2809 = vunpack.c.h.b16 %v1059
        %v2810 = vunpack.c.l.b16 %v1060
        %v2811 = vunpack.c.h.b16 %v1060
        %v2812 = vunpack.c.l.b16 %v1061
        %v2813 = vunpack.c.h.b16 %v1061
        %v2814 = vunpack.c.l.b16 %v1062
        %v2815 = vunpack.c.h.b16 %v1062
        %v2816 = vunpack.c.l.b16 %v1063
        %v2817 = vunpack.c.h.b16 %v1063
        %v2818 = vunpack.c.l.b16 %v1064
        %v2819 = vunpack.c.h.b16 %v1064
        %v2820 = vunpack.c.l.b16 %v1065
        %v2821 = vunpack.c.h.b16 %v1065
        %v2822 = vunpack.c.l.b16 %v1066
        %v2823 = vunpack.c.h.b16 %v1066
        %v2824 = vunpack.c.l.b16 %v1067
        %v2825 = vunpack.c.h.b16 %v1067
        %v2826 = vunpack.c.l.b16 %v1068
        %v2827 = vunpack.c.h.b16 %v1068
        %v2828 = vunpack.c.l.b16 %v1069
        %v2829 = vunpack.c.h.b16 %v1069
        %v2830 = vunpack.c.l.b16 %v1070
        %v2831 = vunpack.c.h.b16 %v1070
        %v2832 = vunpack.c.l.b16 %v1071
        %v2833 = vunpack.c.h.b16 %v1071
        %v2834 = vunpack.c.l.b16 %v1072
        %v2835 = vunpack.c.h.b16 %v1072
        %v2836 = vunpack.c.l.b16 %v1073
        %v2837 = vunpack.c.h.b16 %v1073
        %v2838 = vunpack.c.l.b16 %v1074
        %v2839 = vunpack.c.h.b16 %v1074
        %v2840 = vunpack.c.l.b16 %v1075
        %v2841 = vunpack.c.h.b16 %v1075
        %v2842 = vunpack.c.l.b16 %v1076
        %v2843 = vunpack.c.h.b16 %v1076
        %v2844 = vunpack.c.l.b16 %v1077
        %v2845 = vunpack.c.h.b16 %v1077
        %v2846 = vunpack.c.l.b16 %v1078
        %v2847 = vunpack.c.h.b16 %v1078
        %v2848 = vunpack.c.l.b16 %v1079
        %v2849 = vunpack.c.h.b16 %v1079
        %v2850 = vunpack.c.l.b16 %v1080
        %v2851 = vunpack.c.h.b16 %v1080
        %v2852 = vunpack.c.l.b16 %v1081
        %v2853 = vunpack.c.h.b16 %v1081
        %v2854 = vunpack.c.l.b16 %v1082
        %v2855 = vunpack.c.h.b16 %v1082
        %v2856 = vunpack.c.l.b16 %v1083
        %v2857 = vunpack.c.h.b16 %v1083
        %v2858 = vunpack.c.l.b16 %v1084
        %v2859 = vunpack.c.h.b16 %v1084
        %v2860 = vunpack.c.l.b16 %v1085
        %v2861 = vunpack.c.h.b16 %v1085
        %v2862 = vunpack.c.l.b16 %v1086
        %v2863 = vunpack.c.h.b16 %v1086
        %v2864 = vunpack.c.l.b16 %v1087
        %v2865 = vunpack.c.h.b16 %v1087
        %v2866 = vunpack.c.l.b16 %v1088
        %v2867 = vunpack.c.h.b16 %v1088
        %v2868 = vunpack.c.l.b16 %v1089
        %v2869 = vunpack.c.h.b16 %v1089
        %v2870 = vunpack.c.l.b16 %v1090
        %v2871 = vunpack.c.h.b16 %v1090
        %v2872 = vunpack.c.l.b16 %v1091
        %v2873 = vunpack.c.h.b16 %v1091
        %v2874 = vunpack.c.l.b16 %v1092
        %v2875 = vunpack.c.h.b16 %v1092
        %v2876 = vunpack.c.l.b16 %v1093
        %v2877 = vunpack.c.h.b16 %v1093
        %v2878 = vunpack.c.l.b16 %v1094
        %v2879 = vunpack.c.h.b16 %v1094
        %v2880 = vunpack.c.l.b16 %v1095
        %v2881 = vunpack.c.h.b16 %v1095
        %v2882 = vunpack.c.l.b16 %v1096
        %v2883 = vunpack.c.h.b16 %v1096
        %v2884 = vunpack.c.l.b16 %v1097
        %v2885 = vunpack.c.h.b16 %v1097
        %v2886 = vunpack.c.l.b16 %v1098
        %v2887 = vunpack.c.h.b16 %v1098
        %v2888 = vunpack.c.l.b16 %v1099
        %v2889 = vunpack.c.h.b16 %v1099
        %v2890 = vunpack.c.l.b16 %v1100
        %v2891 = vunpack.c.h.b16 %v1100
        %v2892 = vunpack.c.l.b16 %v1101
        %v2893 = vunpack.c.h.b16 %v1101
        %v2894 = vunpack.c.l.b16 %v1102
        %v2895 = vunpack.c.h.b16 %v1102
        %v2896 = vunpack.c.l.b16 %v1103
        %v2897 = vunpack.c.h.b16 %v1103
        %v2898 = vunpack.c.l.b16 %v1104
        %v2899 = vunpack.c.h.b16 %v1104
        %v2900 = vunpack.c.l.b16 %v1105
        %v2901 = vunpack.c.h.b16 %v1105
        %v2902 = vunpack.c.l.b16 %v1106
        %v2903 = vunpack.c.h.b16 %v1106
        %v2904 = vunpack.c.l.b16 %v1107
        %v2905 = vunpack.c.h.b16 %v1107
        %v2906 = vunpack.c.l.b16 %v1108
        %v2907 = vunpack.c.h.b16 %v1108
        %v2908 = vunpack.c.l.b16 %v1109
        %v2909 = vunpack.c.h.b16 %v1109
        %v2910 = vunpack.c.l.b16 %v1110
        %v2911 = vunpack.c.h.b16 %v1110
        %v2912 = vunpack.c.l.b16 %v1111
        %v2913 = vunpack.c.h.b16 %v1111
        %v2914 = vunpack.c.l.b16 %v1112
        %v2915 = vunpack.c.h.b16 %v1112
        %v2916 = vunpack.c.l.b16 %v1113
        %v2917 = vunpack.c.h.b16 %v1113
        %v2918 = vunpack.c.l.b16 %v1114
        %v2919 = vunpack.c.h.b16 %v1114
        %v2920 = vunpack.c.l.b16 %v1115
        %v2921 = vunpack.c.h.b16 %v1115
        %v2922 = vunpack.c.l.b16 %v1116
        %v2923 = vunpack.c.h.b16 %v1116
        %v2924 = vunpack.c.l.b16 %v1117
        %v2925 = vunpack.c.h.b16 %v1117
        %v2926 = vunpack.c.l.b16 %v1118
        %v2927 = vunpack.c.h.b16 %v1118
        %v2928 = vunpack.c.l.b16 %v1119
        %v2929 = vunpack.c.h.b16 %v1119
        %v2930 = vunpack.c.l.b16 %v1120
        %v2931 = vunpack.c.h.b16 %v1120
        %v2932 = vunpack.c.l.b16 %v1121
        %v2933 = vunpack.c.h.b16 %v1121
        %v2934 = vunpack.c.l.b16 %v1122
        %v2935 = vunpack.c.h.b16 %v1122
        %v2936 = vunpack.c.l.b16 %v1123
        %v2937 = vunpack.c.h.b16 %v1123
        %v2938 = vunpack.c.l.b16 %v1124
        %v2939 = vunpack.c.h.b16 %v1124
        %v2940 = vunpack.c.l.b16 %v1125
        %v2941 = vunpack.c.h.b16 %v1125
        %v2942 = vunpack.c.l.b16 %v1126
        %v2943 = vunpack.c.h.b16 %v1126
        %v2944 = vunpack.c.l.b16 %v1127
        %v2945 = vunpack.c.h.b16 %v1127
        %v2946 = vunpack.c.l.b16 %v1128
        %v2947 = vunpack.c.h.b16 %v1128
        %v2948 = vunpack.c.l.b16 %v1129
        %v2949 = vunpack.c.h.b16 %v1129
        %v2950 = vunpack.c.l.b16 %v1130
        %v2951 = vunpack.c.h.b16 %v1130
        %v2952 = vunpack.c.l.b16 %v1131
        %v2953 = vunpack.c.h.b16 %v1131
        %v2954 = vunpack.c.l.b16 %v1132
        %v2955 = vunpack.c.h.b16 %v1132
        %v2956 = vunpack.c.l.b16 %v1133
        %v2957 = vunpack.c.h.b16 %v1133
        %v2958 = vunpack.c.l.b16 %v1134
        %v2959 = vunpack.c.h.b16 %v1134
        %v2960 = vunpack.c.l.b16 %v1135
        %v2961 = vunpack.c.h.b16 %v1135
        %v2962 = vunpack.c.l.b16 %v1136
        %v2963 = vunpack.c.h.b16 %v1136
        %v2964 = vunpack.c.l.b16 %v1137
        %v2965 = vunpack.c.h.b16 %v1137
        %v2966 = vunpack.c.l.b16 %v1138
        %v2967 = vunpack.c.h.b16 %v1138
        %v2968 = vunpack.c.l.b16 %v1139
        %v2969 = vunpack.c.h.b16 %v1139
        %v2970 = vunpack.c.l.b16 %v1140
        %v2971 = vunpack.c.h.b16 %v1140
        %v2972 = vunpack.c.l.b16 %v1141
        %v2973 = vunpack.c.h.b16 %v1141
        %v2974 = vunpack.c.l.b16 %v1142
        %v2975 = vunpack.c.h.b16 %v1142
        %v2976 = vunpack.c.l.b16 %v1143
        %v2977 = vunpack.c.h.b16 %v1143
        %v2978 = vunpack.c.l.b16 %v1144
        %v2979 = vunpack.c.h.b16 %v1144
        %v2980 = vunpack.c.l.b16 %v1145
        %v2981 = vunpack.c.h.b16 %v1145
        %v2982 = vunpack.c.l.b16 %v1146
        %v2983 = vunpack.c.h.b16 %v1146
        %v2984 = vunpack.c.l.b16 %v1147
        %v2985 = vunpack.c.h.b16 %v1147
        %v2986 = vunpack.c.l.b16 %v1148
        %v2987 = vunpack.c.h.b16 %v1148
        %v2988 = vunpack.c.l.b16 %v1149
        %v2989 = vunpack.c.h.b16 %v1149
        %v2990 = vunpack.c.l.b16 %v1150
        %v2991 = vunpack.c.h.b16 %v1150
        %v2992 = vunpack.c.l.b16 %v1151
        %v2993 = vunpack.c.h.b16 %v1151
        %v2994 = vunpack.c.l.b16 %v1152
        %v2995 = vunpack.c.h.b16 %v1152
        %v2996 = vunpack.c.l.b16 %v1153
        %v2997 = vunpack.c.h.b16 %v1153
        %v2998 = vunpack.c.l.b16 %v1154
        %v2999 = vunpack.c.h.b16 %v1154
        %v3000 = vunpack.c.l.b16 %v1155
        %v3001 = vunpack.c.h.b16 %v1155
        %v3002 = vunpack.c.l.b16 %v1156
        %v3003 = vunpack.c.h.b16 %v1156
        %v3004 = vunpack.c.l.b16 %v1157
        %v3005 = vunpack.c.h.b16 %v1157
        %v3006 = vunpack.c.l.b16 %v1158
        %v3007 = vunpack.c.h.b16 %v1158
        %v3008 = vunpack.c.l.b16 %v1159
        %v3009 = vunpack.c.h.b16 %v1159
        %v3010 = vunpack.c.l.b16 %v1160
        %v3011 = vunpack.c.h.b16 %v1160
        %v3012 = vunpack.c.l.b16 %v1161
        %v3013 = vunpack.c.h.b16 %v1161
        %v3014 = vunpack.c.l.b16 %v1162
        %v3015 = vunpack.c.h.b16 %v1162
        %v3016 = vunpack.c.l.b16 %v1163
        %v3017 = vunpack.c.h.b16 %v1163
        %v3018 = vunpack.c.l.b16 %v1164
        %v3019 = vunpack.c.h.b16 %v1164
        %v3020 = vunpack.c.l.b16 %v1165
        %v3021 = vunpack.c.h.b16 %v1165
        %v3022 = vunpack.c.l.b16 %v1166
        %v3023 = vunpack.c.h.b16 %v1166
        %v3024 = vunpack.c.l.b16 %v1167
        %v3025 = vunpack.c.h.b16 %v1167
        %v3026 = vunpack.c.l.b16 %v1168
        %v3027 = vunpack.c.h.b16 %v1168
        %v3028 = vunpack.c.l.b16 %v1169
        %v3029 = vunpack.c.h.b16 %v1169
        %v3030 = vunpack.c.l.b16 %v1170
        %v3031 = vunpack.c.h.b16 %v1170
        %v3032 = vunpack.c.l.b16 %v1171
        %v3033 = vunpack.c.h.b16 %v1171
        %v3034 = vunpack.c.l.b16 %v1172
        %v3035 = vunpack.c.h.b16 %v1172
        %v3036 = vunpack.c.l.b16 %v1173
        %v3037 = vunpack.c.h.b16 %v1173
        %v3038 = vunpack.c.l.b16 %v1174
        %v3039 = vunpack.c.h.b16 %v1174
        %v3040 = vunpack.c.l.b16 %v1175
        %v3041 = vunpack.c.h.b16 %v1175
        %v3042 = vunpack.c.l.b16 %v1176
        %v3043 = vunpack.c.h.b16 %v1176
        %v3044 = vunpack.c.l.b16 %v1177
        %v3045 = vunpack.c.h.b16 %v1177
        %v3046 = vunpack.c.l.b16 %v1178
        %v3047 = vunpack.c.h.b16 %v1178
        %v3048 = vunpack.c.l.b16 %v1179
        %v3049 = vunpack.c.h.b16 %v1179
        %v3050 = vunpack.c.l.b16 %v1180
        %v3051 = vunpack.c.h.b16 %v1180
        %v3052 = vunpack.c.l.b16 %v1181
        %v3053 = vunpack.c.h.b16 %v1181
        %v3054 = vunpack.c.l.b16 %v1182
        %v3055 = vunpack.c.h.b16 %v1182
        %v3056 = vunpack.c.l.b16 %v1183
        %v3057 = vunpack.c.h.b16 %v1183
        %v3058 = vunpack.c.l.b16 %v1184
        %v3059 = vunpack.c.h.b16 %v1184
        %v3060 = vunpack.c.l.b16 %v1185
        %v3061 = vunpack.c.h.b16 %v1185
        %v3062 = vunpack.c.l.b16 %v1186
        %v3063 = vunpack.c.h.b16 %v1186
        %v3064 = vunpack.c.l.b16 %v1187
        %v3065 = vunpack.c.h.b16 %v1187
        %v3066 = vunpack.c.l.b16 %v1188
        %v3067 = vunpack.c.h.b16 %v1188
        %v3068 = vunpack.c.l.b16 %v1189
        %v3069 = vunpack.c.h.b16 %v1189
        %v3070 = vunpack.c.l.b16 %v1190
        %v3071 = vunpack.c.h.b16 %v1190
        %v3072 = vunpack.c.l.b16 %v1191
        %v3073 = vunpack.c.h.b16 %v1191
        %v3074 = vunpack.c.l.b16 %v1192
        %v3075 = vunpack.c.h.b16 %v1192
        %v3076 = vunpack.c.l.b16 %v1193
        %v3077 = vunpack.c.h.b16 %v1193
        %v3078 = vunpack.c.l.b16 %v1194
        %v3079 = vunpack.c.h.b16 %v1194
        %v3080 = vunpack.c.l.b16 %v1195
        %v3081 = vunpack.c.h.b16 %v1195
        %v3082 = vunpack.c.l.b16 %v1196
        %v3083 = vunpack.c.h.b16 %v1196
        %v3084 = vunpack.c.l.b16 %v1197
        %v3085 = vunpack.c.h.b16 %v1197
        %v3086 = vunpack.c.l.b16 %v1198
        %v3087 = vunpack.c.h.b16 %v1198
        %v3088 = vunpack.c.l.b16 %v1199
        %v3089 = vunpack.c.h.b16 %v1199
        %v3090 = vunpack.c.l.b16 %v1200
        %v3091 = vunpack.c.h.b16 %v1200
        %v3092 = vunpack.c.l.b16 %v1201
        %v3093 = vunpack.c.h.b16 %v1201
        %v3094 = vunpack.c.l.b16 %v1202
        %v3095 = vunpack.c.h.b16 %v1202
        %v3096 = vunpack.c.l.b16 %v1203
        %v3097 = vunpack.c.h.b16 %v1203
        %v3098 = vunpack.c.l.b16 %v1204
        %v3099 = vunpack.c.h.b16 %v1204
        %v3100 = vunpack.c.l.b16 %v1205
        %v3101 = vunpack.c.h.b16 %v1205
        %v3102 = vunpack.c.l.b16 %v1206
        %v3103 = vunpack.c.h.b16 %v1206
        %v3104 = vunpack.c.l.b16 %v1207
        %v3105 = vunpack.c.h.b16 %v1207
        %v3106 = vunpack.c.l.b16 %v1208
        %v3107 = vunpack.c.h.b16 %v1208
        %v3108 = vunpack.c.l.b16 %v1209
        %v3109 = vunpack.c.h.b16 %v1209
        %v3110 = vunpack.c.l.b16 %v1210
        %v3111 = vunpack.c.h.b16 %v1210
        %v3112 = vunpack.c.l.b16 %v1211
        %v3113 = vunpack.c.h.b16 %v1211
        %v3114 = vunpack.c.l.b16 %v1212
        %v3115 = vunpack.c.h.b16 %v1212
        %v3116 = vunpack.c.l.b16 %v1213
        %v3117 = vunpack.c.h.b16 %v1213
        %v3118 = vunpack.c.l.b16 %v1214
        %v3119 = vunpack.c.h.b16 %v1214
        %v3120 = vunpack.c.l.b16 %v1215
        %v3121 = vunpack.c.h.b16 %v1215
        %v3122 = vunpack.c.l.b16 %v1216
        %v3123 = vunpack.c.h.b16 %v1216
        %v3124 = vunpack.c.l.b16 %v1217
        %v3125 = vunpack.c.h.b16 %v1217
        %v3126 = vunpack.c.l.b16 %v1218
        %v3127 = vunpack.c.h.b16 %v1218
        %v3128 = vunpack.c.l.b16 %v1219
        %v3129 = vunpack.c.h.b16 %v1219
        %v3130 = vunpack.c.l.b16 %v1220
        %v3131 = vunpack.c.h.b16 %v1220
        %v3132 = vunpack.c.l.b16 %v1221
        %v3133 = vunpack.c.h.b16 %v1221
        %v3134 = vunpack.c.l.b16 %v1222
        %v3135 = vunpack.c.h.b16 %v1222
        %v3136 = vunpack.c.l.b16 %v1223
        %v3137 = vunpack.c.h.b16 %v1223
        %v3138 = vunpack.c.l.b16 %v1224
        %v3139 = vunpack.c.h.b16 %v1224
        %v3140 = vunpack.c.l.b16 %v1225
        %v3141 = vunpack.c.h.b16 %v1225
        %v3142 = vunpack.c.l.b16 %v1226
        %v3143 = vunpack.c.h.b16 %v1226
        %v3144 = vunpack.c.l.b16 %v1227
        %v3145 = vunpack.c.h.b16 %v1227
        %v3146 = vunpack.c.l.b16 %v1228
        %v3147 = vunpack.c.h.b16 %v1228
        %v3148 = vunpack.c.l.b16 %v1229
        %v3149 = vunpack.c.h.b16 %v1229
        %v3150 = vunpack.c.l.b16 %v1230
        %v3151 = vunpack.c.h.b16 %v1230
        %v3152 = vunpack.c.l.b16 %v1231
        %v3153 = vunpack.c.h.b16 %v1231
        %v3154 = vunpack.c.l.b16 %v1232
        %v3155 = vunpack.c.h.b16 %v1232
        %v3156 = vunpack.c.l.b16 %v1233
        %v3157 = vunpack.c.h.b16 %v1233
        %v3158 = vunpack.c.l.b16 %v1234
        %v3159 = vunpack.c.h.b16 %v1234
        %v3160 = vunpack.c.l.b16 %v1235
        %v3161 = vunpack.c.h.b16 %v1235
        %v3162 = vunpack.c.l.b16 %v1236
        %v3163 = vunpack.c.h.b16 %v1236
        %v3164 = vunpack.c.l.b16 %v1237
        %v3165 = vunpack.c.h.b16 %v1237
        %v3166 = vunpack.c.l.b16 %v1238
        %v3167 = vunpack.c.h.b16 %v1238
        %v3168 = vunpack.c.l.b16 %v1239
        %v3169 = vunpack.c.h.b16 %v1239
        %v3170 = vunpack.c.l.b16 %v1240
        %v3171 = vunpack.c.h.b16 %v1240
        %v3172 = vunpack.c.l.b16 %v1241
        %v3173 = vunpack.c.h.b16 %v1241
        %v3174 = vunpack.c.l.b16 %v1242
        %v3175 = vunpack.c.h.b16 %v1242
        %v3176 = vunpack.c.l.b16 %v1243
        %v3177 = vunpack.c.h.b16 %v1243
        %v3178 = vunpack.c.l.b16 %v1244
        %v3179 = vunpack.c.h.b16 %v1244
        %v3180 = vunpack.c.l.b16 %v1245
        %v3181 = vunpack.c.h.b16 %v1245
        %v3182 = vunpack.c.l.b16 %v1246
        %v3183 = vunpack.c.h.b16 %v1246
        %v3184 = vunpack.c.l.b16 %v1247
        %v3185 = vunpack.c.h.b16 %v1247
        %v3186 = vunpack.c.l.b16 %v1248
        %v3187 = vunpack.c.h.b16 %v1248
        %v3188 = vunpack.c.l.b16 %v1249
        %v3189 = vunpack.c.h.b16 %v1249
        %v3190 = vunpack.c.l.b16 %v1250
        %v3191 = vunpack.c.h.b16 %v1250
        %v3192 = vunpack.c.l.b16 %v1251
        %v3193 = vunpack.c.h.b16 %v1251
        %v3194 = vunpack.c.l.b16 %v1252
        %v3195 = vunpack.c.h.b16 %v1252
        %v3196 = vunpack.c.l.b16 %v1253
        %v3197 = vunpack.c.h.b16 %v1253
        %v3198 = vunpack.c.l.b16 %v1254
        %v3199 = vunpack.c.h.b16 %v1254
        %v3200 = vunpack.c.l.b16 %v1255
        %v3201 = vunpack.c.h.b16 %v1255
        %v3202 = vunpack.c.l.b16 %v1256
        %v3203 = vunpack.c.h.b16 %v1256
        %v3204 = vunpack.c.l.b16 %v1257
        %v3205 = vunpack.c.h.b16 %v1257
        %v3206 = vunpack.c.l.b16 %v1258
        %v3207 = vunpack.c.h.b16 %v1258
        %v3208 = vunpack.c.l.b16 %v1259
        %v3209 = vunpack.c.h.b16 %v1259
        %v3210 = vunpack.c.l.b16 %v1260
        %v3211 = vunpack.c.h.b16 %v1260
        %v3212 = vunpack.c.l.b16 %v1261
        %v3213 = vunpack.c.h.b16 %v1261
        %v3214 = vunpack.c.l.b16 %v1262
        %v3215 = vunpack.c.h.b16 %v1262
        %v3216 = vunpack.c.l.b16 %v1263
        %v3217 = vunpack.c.h.b16 %v1263
        %v3218 = vunpack.c.l.b16 %v1264
        %v3219 = vunpack.c.h.b16 %v1264
        %v3220 = vunpack.c.l.b16 %v1265
        %v3221 = vunpack.c.h.b16 %v1265
        %v3222 = vunpack.c.l.b16 %v1266
        %v3223 = vunpack.c.h.b16 %v1266
        %v3224 = vunpack.c.l.b16 %v1267
        %v3225 = vunpack.c.h.b16 %v1267
        %v3226 = vunpack.c.l.b16 %v1268
        %v3227 = vunpack.c.h.b16 %v1268
        %v3228 = vunpack.c.l.b16 %v1269
        %v3229 = vunpack.c.h.b16 %v1269
        %v3230 = vunpack.c.l.b16 %v1270
        %v3231 = vunpack.c.h.b16 %v1270
        %v3232 = vunpack.c.l.b16 %v1271
        %v3233 = vunpack.c.h.b16 %v1271
        %v3234 = vunpack.c.l.b16 %v1272
        %v3235 = vunpack.c.h.b16 %v1272
        %v3236 = vunpack.c.l.b16 %v1273
        %v3237 = vunpack.c.h.b16 %v1273
        %v3238 = vunpack.c.l.b16 %v1274
        %v3239 = vunpack.c.h.b16 %v1274
        %v3240 = vunpack.c.l.b16 %v1275
        %v3241 = vunpack.c.h.b16 %v1275
        %v3242 = vunpack.c.l.b16 %v1276
        %v3243 = vunpack.c.h.b16 %v1276
        %v3244 = vunpack.c.l.b16 %v1277
        %v3245 = vunpack.c.h.b16 %v1277
        %v3246 = vunpack.c.l.b16 %v1278
        %v3247 = vunpack.c.h.b16 %v1278
        %v3248 = vunpack.c.l.b16 %v1279
        %v3249 = vunpack.c.h.b16 %v1279
        %v3250 = vunpack.c.l.b16 %v1280
        %v3251 = vunpack.c.h.b16 %v1280
        %v3252 = vunpack.c.l.b16 %v1281
        %v3253 = vunpack.c.h.b16 %v1281
        %v3254 = vunpack.c.l.b16 %v1282
        %v3255 = vunpack.c.h.b16 %v1282
        %v3256 = vunpack.c.l.b16 %v1283
        %v3257 = vunpack.c.h.b16 %v1283
        %v3258 = vunpack.c.l.b16 %v1284
        %v3259 = vunpack.c.h.b16 %v1284
        %v3260 = vunpack.c.l.b16 %v1285
        %v3261 = vunpack.c.h.b16 %v1285
        %v3262 = vunpack.c.l.b16 %v1286
        %v3263 = vunpack.c.h.b16 %v1286
        %v3264 = vunpack.c.l.b16 %v1287
        %v3265 = vunpack.c.h.b16 %v1287
        %v3266 = vunpack.c.l.b16 %v1288
        %v3267 = vunpack.c.h.b16 %v1288
        %v3268 = vunpack.c.l.b16 %v1289
        %v3269 = vunpack.c.h.b16 %v1289
        %v3270 = vunpack.c.l.b16 %v1290
        %v3271 = vunpack.c.h.b16 %v1290
        %v3272 = vunpack.c.l.b16 %v1291
        %v3273 = vunpack.c.h.b16 %v1291
        %v3274 = vunpack.c.l.b16 %v1292
        %v3275 = vunpack.c.h.b16 %v1292
        %v3276 = vunpack.c.l.b16 %v1293
        %v3277 = vunpack.c.h.b16 %v1293
        %v3278 = vunpack.c.l.b16 %v1294
        %v3279 = vunpack.c.h.b16 %v1294
        %v3280 = vunpack.c.l.b16 %v1295
        %v3281 = vunpack.c.h.b16 %v1295
        %v3282 = vunpack.c.l.b16 %v1296
        %v3283 = vunpack.c.h.b16 %v1296
        %v3284 = vunpack.c.l.b16 %v1297
        %v3285 = vunpack.c.h.b16 %v1297
        %v3286 = vunpack.c.l.b16 %v1298
        %v3287 = vunpack.c.h.b16 %v1298
        %v3288 = vunpack.c.l.b16 %v1299
        %v3289 = vunpack.c.h.b16 %v1299
        %v3290 = vunpack.c.l.b16 %v1300
        %v3291 = vunpack.c.h.b16 %v1300
        %v3292 = vunpack.c.l.b16 %v1301
        %v3293 = vunpack.c.h.b16 %v1301
        %v3294 = vunpack.c.l.b16 %v1302
        %v3295 = vunpack.c.h.b16 %v1302
        %v3296 = vunpack.c.l.b16 %v1303
        %v3297 = vunpack.c.h.b16 %v1303
        %v3298 = vunpack.c.l.b16 %v1304
        %v3299 = vunpack.c.h.b16 %v1304
        %v3300 = vunpack.c.l.b16 %v1305
        %v3301 = vunpack.c.h.b16 %v1305
        %v3302 = vunpack.c.l.b16 %v1306
        %v3303 = vunpack.c.h.b16 %v1306
        %v3304 = vunpack.c.l.b16 %v1307
        %v3305 = vunpack.c.h.b16 %v1307
        %v3306 = vunpack.c.l.b16 %v1308
        %v3307 = vunpack.c.h.b16 %v1308
        %v3308 = vunpack.c.l.b16 %v1309
        %v3309 = vunpack.c.h.b16 %v1309
        %v3310 = vunpack.c.l.b16 %v1310
        %v3311 = vunpack.c.h.b16 %v1310
        %v3312 = vunpack.c.l.b16 %v1311
        %v3313 = vunpack.c.h.b16 %v1311
        %v3314 = vunpack.c.l.b16 %v1312
        %v3315 = vunpack.c.h.b16 %v1312
        %v3316 = vunpack.c.l.b16 %v1313
        %v3317 = vunpack.c.h.b16 %v1313
        %v3318 = vunpack.c.l.b16 %v1314
        %v3319 = vunpack.c.h.b16 %v1314
        %v3320 = vunpack.c.l.b16 %v1315
        %v3321 = vunpack.c.h.b16 %v1315
        %v3322 = vunpack.c.l.b16 %v1316
        %v3323 = vunpack.c.h.b16 %v1316
        %v3324 = vunpack.c.l.b16 %v1317
        %v3325 = vunpack.c.h.b16 %v1317
        %v3326 = vunpack.c.l.b16 %v1318
        %v3327 = vunpack.c.h.b16 %v1318
        %v3328 = vunpack.c.l.b16 %v1319
        %v3329 = vunpack.c.h.b16 %v1319
        %v3330 = vunpack.c.l.b16 %v1320
        %v3331 = vunpack.c.h.b16 %v1320
        %v3332 = vunpack.c.l.b16 %v1321
        %v3333 = vunpack.c.h.b16 %v1321
        %v3334 = vunpack.c.l.b16 %v1322
        %v3335 = vunpack.c.h.b16 %v1322
        %v3336 = vunpack.c.l.b16 %v1323
        %v3337 = vunpack.c.h.b16 %v1323
        %v3338 = vunpack.c.l.b16 %v1324
        %v3339 = vunpack.c.h.b16 %v1324
        %v3340 = vunpack.c.l.b16 %v1325
        %v3341 = vunpack.c.h.b16 %v1325
        %v3342 = vunpack.c.l.b16 %v1326
        %v3343 = vunpack.c.h.b16 %v1326
        %v3344 = vunpack.c.l.b16 %v1327
        %v3345 = vunpack.c.h.b16 %v1327
        %v3346 = vunpack.c.l.b16 %v1328
        %v3347 = vunpack.c.h.b16 %v1328
        %v3348 = vunpack.c.l.b16 %v1329
        %v3349 = vunpack.c.h.b16 %v1329
        %v3350 = vunpack.c.l.b16 %v1330
        %v3351 = vunpack.c.h.b16 %v1330
        %v3352 = vunpack.c.l.b16 %v1331
        %v3353 = vunpack.c.h.b16 %v1331
        %v3354 = vunpack.c.l.b16 %v1332
        %v3355 = vunpack.c.h.b16 %v1332
        %v3356 = vunpack.c.l.b16 %v1333
        %v3357 = vunpack.c.h.b16 %v1333
        %v3358 = vunpack.c.l.b16 %v1334
        %v3359 = vunpack.c.h.b16 %v1334
        %v3360 = vunpack.c.l.b16 %v1335
        %v3361 = vunpack.c.h.b16 %v1335
        %v3362 = vunpack.c.l.b16 %v1336
        %v3363 = vunpack.c.h.b16 %v1336
        %v3364 = vunpack.c.l.b16 %v1337
        %v3365 = vunpack.c.h.b16 %v1337
        %v3366 = vunpack.c.l.b16 %v1338
        %v3367 = vunpack.c.h.b16 %v1338
        %v3368 = vunpack.c.l.b16 %v1339
        %v3369 = vunpack.c.h.b16 %v1339
        %v3370 = vunpack.c.l.b16 %v1340
        %v3371 = vunpack.c.h.b16 %v1340
        %v3372 = vunpack.c.l.b16 %v1341
        %v3373 = vunpack.c.h.b16 %v1341
        %v3374 = vunpack.c.l.b16 %v1342
        %v3375 = vunpack.c.h.b16 %v1342
        %v3376 = vunpack.c.l.b16 %v1343
        %v3377 = vunpack.c.h.b16 %v1343
        %v3378 = vunpack.c.l.b16 %v1344
        %v3379 = vunpack.c.h.b16 %v1344
        %v3380 = vunpack.c.l.b16 %v1345
        %v3381 = vunpack.c.h.b16 %v1345
        %v3382 = vunpack.c.l.b16 %v1346
        %v3383 = vunpack.c.h.b16 %v1346
        %v3384 = vunpack.c.l.b16 %v1347
        %v3385 = vunpack.c.h.b16 %v1347
        %v3386 = vunpack.c.l.b16 %v1348
        %v3387 = vunpack.c.h.b16 %v1348
        %v3388 = vunpack.c.l.b16 %v1349
        %v3389 = vunpack.c.h.b16 %v1349
        %v3390 = vunpack.c.l.b16 %v1350
        %v3391 = vunpack.c.h.b16 %v1350
        %v3392 = vunpack.c.l.b16 %v1351
        %v3393 = vunpack.c.h.b16 %v1351
        %v3394 = vunpack.c.l.b16 %v1352
        %v3395 = vunpack.c.h.b16 %v1352
        %v3396 = vunpack.c.l.b16 %v1353
        %v3397 = vunpack.c.h.b16 %v1353
        %v3398 = vunpack.c.l.b16 %v1354
        %v3399 = vunpack.c.h.b16 %v1354
        %v3400 = vunpack.c.l.b16 %v1355
        %v3401 = vunpack.c.h.b16 %v1355
        %v3402 = vunpack.c.l.b16 %v1356
        %v3403 = vunpack.c.h.b16 %v1356
        %v3404 = vunpack.c.l.b16 %v1357
        %v3405 = vunpack.c.h.b16 %v1357
        %v3406 = vunpack.c.l.b16 %v1358
        %v3407 = vunpack.c.h.b16 %v1358
        %v3408 = vunpack.c.l.b16 %v1359
        %v3409 = vunpack.c.h.b16 %v1359
        %v3410 = vunpack.c.l.b16 %v1360
        %v3411 = vunpack.c.h.b16 %v1360
        %v3412 = vunpack.c.l.b16 %v1361
        %v3413 = vunpack.c.h.b16 %v1361
        %v3414 = vunpack.c.l.b16 %v1362
        %v3415 = vunpack.c.h.b16 %v1362
        %v3416 = vunpack.c.l.b16 %v1363
        %v3417 = vunpack.c.h.b16 %v1363
        %v3418 = vunpack.c.l.b16 %v1364
        %v3419 = vunpack.c.h.b16 %v1364
        %v3420 = vunpack.c.l.b16 %v1365
        %v3421 = vunpack.c.h.b16 %v1365
        %v3422 = vunpack.c.l.b16 %v1366
        %v3423 = vunpack.c.h.b16 %v1366
        %v3424 = vunpack.c.l.b16 %v1367
        %v3425 = vunpack.c.h.b16 %v1367
        %v3426 = vunpack.c.l.b16 %v1368
        %v3427 = vunpack.c.h.b16 %v1368
        %v3428 = vunpack.c.l.b16 %v1369
        %v3429 = vunpack.c.h.b16 %v1369
        %v3430 = vunpack.c.l.b16 %v1370
        %v3431 = vunpack.c.h.b16 %v1370
        %v3432 = vunpack.c.l.b16 %v1371
        %v3433 = vunpack.c.h.b16 %v1371
        %v3434 = vunpack.c.l.b16 %v1372
        %v3435 = vunpack.c.h.b16 %v1372
        %v3436 = vunpack.c.l.b16 %v1373
        %v3437 = vunpack.c.h.b16 %v1373
        %v3438 = vunpack.c.l.b16 %v1374
        %v3439 = vunpack.c.h.b16 %v1374
        %v3440 = vunpack.c.l.b16 %v1375
        %v3441 = vunpack.c.h.b16 %v1375
        %v3442 = vunpack.c.l.b16 %v1376
        %v3443 = vunpack.c.h.b16 %v1376
        %v3444 = vunpack.c.l.b16 %v1377
        %v3445 = vunpack.c.h.b16 %v1377
        %v3446 = vunpack.c.l.b16 %v1378
        %v3447 = vunpack.c.h.b16 %v1378
        %v3448 = vunpack.c.l.b16 %v1379
        %v3449 = vunpack.c.h.b16 %v1379
        %v3450 = vunpack.c.l.b16 %v1380
        %v3451 = vunpack.c.h.b16 %v1380
        %v3452 = vunpack.c.l.b16 %v1381
        %v3453 = vunpack.c.h.b16 %v1381
        %v3454 = vunpack.c.l.b16 %v1382
        %v3455 = vunpack.c.h.b16 %v1382
        %v3456 = vunpack.c.l.b16 %v1383
        %v3457 = vunpack.c.h.b16 %v1383
        %v3458 = vunpack.c.l.b16 %v1384
        %v3459 = vunpack.c.h.b16 %v1384
        %v3460 = vunpack.c.l.b16 %v1385
        %v3461 = vunpack.c.h.b16 %v1385
        %v3462 = vunpack.c.l.b16 %v1386
        %v3463 = vunpack.c.h.b16 %v1386
        %v3464 = vunpack.c.l.b16 %v1387
        %v3465 = vunpack.c.h.b16 %v1387
        %v3466 = vunpack.c.l.b16 %v1388
        %v3467 = vunpack.c.h.b16 %v1388
        %v3468 = vunpack.c.l.b16 %v1389
        %v3469 = vunpack.c.h.b16 %v1389
        %v3470 = vunpack.c.l.b16 %v1390
        %v3471 = vunpack.c.h.b16 %v1390
        %v3472 = vunpack.c.l.b16 %v1391
        %v3473 = vunpack.c.h.b16 %v1391
        %v3474 = vunpack.c.l.b16 %v1392
        %v3475 = vunpack.c.h.b16 %v1392
        %v3476 = vunpack.c.l.b16 %v1393
        %v3477 = vunpack.c.h.b16 %v1393
        %v3478 = vunpack.c.l.b16 %v1394
        %v3479 = vunpack.c.h.b16 %v1394
        %v3480 = vunpack.c.l.b16 %v1395
        %v3481 = vunpack.c.h.b16 %v1395
        %v3482 = vunpack.c.l.b16 %v1396
        %v3483 = vunpack.c.h.b16 %v1396
        %v3484 = vunpack.c.l.b16 %v1397
        %v3485 = vunpack.c.h.b16 %v1397
        %v3486 = vunpack.c.l.b16 %v1398
        %v3487 = vunpack.c.h.b16 %v1398
        %v3488 = vunpack.c.l.b16 %v1399
        %v3489 = vunpack.c.h.b16 %v1399
        %v3490 = vunpack.c.l.b16 %v1400
        %v3491 = vunpack.c.h.b16 %v1400
        %v3492 = vunpack.c.l.b16 %v1401
        %v3493 = vunpack.c.h.b16 %v1401
        %v3494 = vunpack.c.l.b16 %v1402
        %v3495 = vunpack.c.h.b16 %v1402
        %v3496 = vunpack.c.l.b16 %v1403
        %v3497 = vunpack.c.h.b16 %v1403
        %v3498 = vunpack.c.l.b16 %v1404
        %v3499 = vunpack.c.h.b16 %v1404
        %v3500 = vunpack.c.l.b16 %v1405
        %v3501 = vunpack.c.h.b16 %v1405
        %v3502 = vunpack.c.l.b16 %v1406
        %v3503 = vunpack.c.h.b16 %v1406
        %v3504 = vunpack.c.l.b16 %v1407
        %v3505 = vunpack.c.h.b16 %v1407
        %v3506 = vunpack.c.l.b16 %v1408
        %v3507 = vunpack.c.h.b16 %v1408
        %v3508 = vunpack.c.l.b16 %v1409
        %v3509 = vunpack.c.h.b16 %v1409
        %v3510 = vunpack.c.l.b16 %v1410
        %v3511 = vunpack.c.h.b16 %v1410
        %v3512 = vunpack.c.l.b16 %v1411
        %v3513 = vunpack.c.h.b16 %v1411
        %v3514 = vunpack.c.l.b16 %v1412
        %v3515 = vunpack.c.h.b16 %v1412
        %v3516 = vunpack.c.l.b16 %v1413
        %v3517 = vunpack.c.h.b16 %v1413
        %v3518 = vunpack.c.l.b16 %v1414
        %v3519 = vunpack.c.h.b16 %v1414
        %v3520 = vunpack.c.l.b16 %v1415
        %v3521 = vunpack.c.h.b16 %v1415
        %v3522 = vunpack.c.l.b16 %v1416
        %v3523 = vunpack.c.h.b16 %v1416
        %v3524 = vunpack.c.l.b16 %v1417
        %v3525 = vunpack.c.h.b16 %v1417
        %v3526 = vunpack.c.l.b16 %v1418
        %v3527 = vunpack.c.h.b16 %v1418
        %v3528 = vunpack.c.l.b16 %v1419
        %v3529 = vunpack.c.h.b16 %v1419
        %v3530 = vunpack.c.l.b16 %v1420
        %v3531 = vunpack.c.h.b16 %v1420
        %v3532 = vunpack.c.l.b16 %v1421
        %v3533 = vunpack.c.h.b16 %v1421
        %v3534 = vunpack.c.l.b16 %v1422
        %v3535 = vunpack.c.h.b16 %v1422
        %v3536 = vunpack.c.l.b16 %v1423
        %v3537 = vunpack.c.h.b16 %v1423
        %v3538 = vunpack.c.l.b16 %v1424
        %v3539 = vunpack.c.h.b16 %v1424
        %v3540 = vunpack.c.l.b16 %v1425
        %v3541 = vunpack.c.h.b16 %v1425
        %v3542 = vunpack.c.l.b16 %v1426
        %v3543 = vunpack.c.h.b16 %v1426
        %v3544 = vunpack.c.l.b16 %v1427
        %v3545 = vunpack.c.h.b16 %v1427
        %v3546 = vunpack.c.l.b16 %v1428
        %v3547 = vunpack.c.h.b16 %v1428
        %v3548 = vunpack.c.l.b16 %v1429
        %v3549 = vunpack.c.h.b16 %v1429
        %v3550 = vunpack.c.l.b16 %v1430
        %v3551 = vunpack.c.h.b16 %v1430
        %v3552 = vunpack.c.l.b16 %v1431
        %v3553 = vunpack.c.h.b16 %v1431
        %v3554 = vunpack.c.l.b16 %v1432
        %v3555 = vunpack.c.h.b16 %v1432
        %v3556 = vunpack.c.l.b16 %v1433
        %v3557 = vunpack.c.h.b16 %v1433
        %v3558 = vunpack.c.l.b16 %v1434
        %v3559 = vunpack.c.h.b16 %v1434
        %v3560 = vunpack.c.l.b16 %v1435
        %v3561 = vunpack.c.h.b16 %v1435
        %v3562 = vunpack.c.l.b16 %v1436
        %v3563 = vunpack.c.h.b16 %v1436
        %v3564 = vunpack.c.l.b16 %v1437
        %v3565 = vunpack.c.h.b16 %v1437
        %v3566 = vunpack.c.l.b16 %v1438
        %v3567 = vunpack.c.h.b16 %v1438
        %v3568 = vunpack.c.l.b16 %v1439
        %v3569 = vunpack.c.h.b16 %v1439
        %v3570 = vunpack.c.l.b16 %v1440
        %v3571 = vunpack.c.h.b16 %v1440
        %v3572 = vunpack.c.l.b16 %v1441
        %v3573 = vunpack.c.h.b16 %v1441
        %v3574 = vunpack.c.l.b16 %v1442
        %v3575 = vunpack.c.h.b16 %v1442
        %v3576 = vunpack.c.l.b16 %v1443
        %v3577 = vunpack.c.h.b16 %v1443
        %v3578 = vunpack.c.l.b16 %v1444
        %v3579 = vunpack.c.h.b16 %v1444
        %v3580 = vunpack.c.l.b16 %v1445
        %v3581 = vunpack.c.h.b16 %v1445
        %v3582 = vunpack.c.l.b16 %v1446
        %v3583 = vunpack.c.h.b16 %v1446
        %v3584 = vunpack.c.l.b16 %v1447
        %v3585 = vunpack.c.h.b16 %v1447
        %v3586 = vunpack.c.l.b16 %v1448
        %v3587 = vunpack.c.h.b16 %v1448
        %v3588 = vunpack.c.l.b16 %v1449
        %v3589 = vunpack.c.h.b16 %v1449
        %v3590 = vunpack.c.l.b16 %v1450
        %v3591 = vunpack.c.h.b16 %v1450
        %v3592 = vunpack.c.l.b16 %v1451
        %v3593 = vunpack.c.h.b16 %v1451
        %v3594 = vunpack.c.l.b16 %v1452
        %v3595 = vunpack.c.h.b16 %v1452
        %v3596 = vunpack.c.l.b16 %v1453
        %v3597 = vunpack.c.h.b16 %v1453
        %v3598 = vunpack.c.l.b16 %v1454
        %v3599 = vunpack.c.h.b16 %v1454
        %v3600 = vunpack.c.l.b16 %v1455
        %v3601 = vunpack.c.h.b16 %v1455
        %v3602 = vunpack.c.l.b16 %v1456
        %v3603 = vunpack.c.h.b16 %v1456
        %v3604 = vunpack.c.l.b16 %v1457
        %v3605 = vunpack.c.h.b16 %v1457
        %v3606 = vunpack.c.l.b16 %v1458
        %v3607 = vunpack.c.h.b16 %v1458
        %v3608 = vunpack.c.l.b16 %v1459
        %v3609 = vunpack.c.h.b16 %v1459
        %v3610 = vunpack.c.l.b16 %v1460
        %v3611 = vunpack.c.h.b16 %v1460
        %v3612 = vunpack.c.l.b16 %v1461
        %v3613 = vunpack.c.h.b16 %v1461
        %v3614 = vunpack.c.l.b16 %v1462
        %v3615 = vunpack.c.h.b16 %v1462
        %v3616 = vunpack.c.l.b16 %v1463
        %v3617 = vunpack.c.h.b16 %v1463
        %v3618 = vunpack.c.l.b16 %v1464
        %v3619 = vunpack.c.h.b16 %v1464
        %v3620 = vunpack.c.l.b16 %v1465
        %v3621 = vunpack.c.h.b16 %v1465
        %v3622 = vunpack.c.l.b16 %v1466
        %v3623 = vunpack.c.h.b16 %v1466
        %v3624 = vunpack.c.l.b16 %v1467
        %v3625 = vunpack.c.h.b16 %v1467
        %v3626 = vunpack.c.l.b16 %v1468
        %v3627 = vunpack.c.h.b16 %v1468
        %v3628 = vunpack.c.l.b16 %v1469
        %v3629 = vunpack.c.h.b16 %v1469
        %v3630 = vunpack.c.l.b16 %v1470
        %v3631 = vunpack.c.h.b16 %v1470
        %v3632 = vunpack.c.l.b16 %v1471
        %v3633 = vunpack.c.h.b16 %v1471
        %v3634 = vunpack.c.l.b16 %v1472
        %v3635 = vunpack.c.h.b16 %v1472
        %v3636 = vunpack.c.l.b16 %v1473
        %v3637 = vunpack.c.h.b16 %v1473
        %v3638 = vunpack.c.l.b16 %v1474
        %v3639 = vunpack.c.h.b16 %v1474
        %v3640 = vunpack.c.l.b16 %v1475
        %v3641 = vunpack.c.h.b16 %v1475
        %v3642 = vunpack.c.l.b16 %v1476
        %v3643 = vunpack.c.h.b16 %v1476
        %v3644 = vunpack.c.l.b16 %v1477
        %v3645 = vunpack.c.h.b16 %v1477
        %v3646 = vunpack.c.l.b16 %v1478
        %v3647 = vunpack.c.h.b16 %v1478
        %v3648 = vunpack.c.l.b16 %v1479
        %v3649 = vunpack.c.h.b16 %v1479
        %v3650 = vunpack.c.l.b16 %v1480
        %v3651 = vunpack.c.h.b16 %v1480
        %v3652 = vunpack.c.l.b16 %v1481
        %v3653 = vunpack.c.h.b16 %v1481
        %v3654 = vunpack.c.l.b16 %v1482
        %v3655 = vunpack.c.h.b16 %v1482
        %v3656 = vunpack.c.l.b16 %v1483
        %v3657 = vunpack.c.h.b16 %v1483
        %v3658 = vunpack.c.l.b16 %v1484
        %v3659 = vunpack.c.h.b16 %v1484
        %v3660 = vunpack.c.l.b16 %v1485
        %v3661 = vunpack.c.h.b16 %v1485
        %v3662 = vunpack.c.l.b16 %v1486
        %v3663 = vunpack.c.h.b16 %v1486
        %v3664 = vunpack.c.l.b16 %v1487
        %v3665 = vunpack.c.h.b16 %v1487
        %v3666 = vunpack.c.l.b16 %v1488
        %v3667 = vunpack.c.h.b16 %v1488
        %v3668 = vunpack.c.l.b16 %v1489
        %v3669 = vunpack.c.h.b16 %v1489
        %v3670 = vunpack.c.l.b16 %v1490
        %v3671 = vunpack.c.h.b16 %v1490
        %v3672 = vunpack.c.l.b16 %v1491
        %v3673 = vunpack.c.h.b16 %v1491
        %v3674 = vunpack.c.l.b16 %v1492
        %v3675 = vunpack.c.h.b16 %v1492
        %v3676 = vunpack.c.l.b16 %v1493
        %v3677 = vunpack.c.h.b16 %v1493
        %v3678 = vunpack.c.l.b16 %v1494
        %v3679 = vunpack.c.h.b16 %v1494
        %v3680 = vunpack.c.l.b16 %v1495
        %v3681 = vunpack.c.h.b16 %v1495
        %v3682 = vunpack.c.l.b16 %v1496
        %v3683 = vunpack.c.h.b16 %v1496
        %v3684 = vunpack.c.l.b16 %v1497
        %v3685 = vunpack.c.h.b16 %v1497
        %v3686 = vunpack.c.l.b16 %v1498
        %v3687 = vunpack.c.h.b16 %v1498
        %v3688 = vunpack.c.l.b16 %v1499
        %v3689 = vunpack.c.h.b16 %v1499
        %v3690 = vunpack.c.l.b16 %v1500
        %v3691 = vunpack.c.h.b16 %v1500
        %v3692 = vunpack.c.l.b16 %v1501
        %v3693 = vunpack.c.h.b16 %v1501
        %v3694 = vunpack.c.l.b16 %v1502
        %v3695 = vunpack.c.h.b16 %v1502
        %v3696 = vunpack.c.l.b16 %v1503
        %v3697 = vunpack.c.h.b16 %v1503
        %v3698 = vunpack.c.l.b16 %v1504
        %v3699 = vunpack.c.h.b16 %v1504
        %v3700 = vunpack.c.l.b16 %v1505
        %v3701 = vunpack.c.h.b16 %v1505
        %v3702 = vunpack.c.l.b16 %v1506
        %v3703 = vunpack.c.h.b16 %v1506
        %v3704 = vunpack.c.l.b16 %v1507
        %v3705 = vunpack.c.h.b16 %v1507
        %v3706 = vunpack.c.l.b16 %v1508
        %v3707 = vunpack.c.h.b16 %v1508
        %v3708 = vunpack.c.l.b16 %v1509
        %v3709 = vunpack.c.h.b16 %v1509
        %v3710 = vunpack.c.l.b16 %v1510
        %v3711 = vunpack.c.h.b16 %v1510
        %v3712 = vunpack.c.l.b16 %v1511
        %v3713 = vunpack.c.h.b16 %v1511
        %v3714 = vunpack.c.l.b16 %v1512
        %v3715 = vunpack.c.h.b16 %v1512
        %v3716 = vunpack.c.l.b16 %v1513
        %v3717 = vunpack.c.h.b16 %v1513
        %v3718 = vunpack.c.l.b16 %v1514
        %v3719 = vunpack.c.h.b16 %v1514
        %v3720 = vunpack.c.l.b16 %v1515
        %v3721 = vunpack.c.h.b16 %v1515
        %v3722 = vunpack.c.l.b16 %v1516
        %v3723 = vunpack.c.h.b16 %v1516
        %v3724 = vunpack.c.l.b16 %v1517
        %v3725 = vunpack.c.h.b16 %v1517
        %v3726 = vunpack.c.l.b16 %v1518
        %v3727 = vunpack.c.h.b16 %v1518
        %v3728 = vunpack.c.l.b16 %v1519
        %v3729 = vunpack.c.h.b16 %v1519
        %v3730 = vunpack.c.l.b16 %v1520
        %v3731 = vunpack.c.h.b16 %v1520
        %v3732 = vunpack.c.l.b16 %v1521
        %v3733 = vunpack.c.h.b16 %v1521
        %v3734 = vunpack.c.l.b16 %v1522
        %v3735 = vunpack.c.h.b16 %v1522
        %v3736 = vunpack.c.l.b16 %v1523
        %v3737 = vunpack.c.h.b16 %v1523
        %v3738 = vunpack.c.l.b16 %v1524
        %v3739 = vunpack.c.h.b16 %v1524
        %v3740 = vunpack.c.l.b16 %v1525
        %v3741 = vunpack.c.h.b16 %v1525
        %v3742 = vunpack.c.l.b16 %v1526
        %v3743 = vunpack.c.h.b16 %v1526
        %v3744 = vunpack.c.l.b16 %v1527
        %v3745 = vunpack.c.h.b16 %v1527
        %v3746 = vunpack.c.l.b16 %v1528
        %v3747 = vunpack.c.h.b16 %v1528
        %v3748 = vunpack.c.l.b16 %v1529
        %v3749 = vunpack.c.h.b16 %v1529
        %v3750 = vunpack.c.l.b16 %v1530
        %v3751 = vunpack.c.h.b16 %v1530
        %v3752 = vunpack.c.l.b16 %v1531
        %v3753 = vunpack.c.h.b16 %v1531
        %v3754 = vunpack.c.l.b16 %v1532
        %v3755 = vunpack.c.h.b16 %v1532
        %v3756 = vunpack.c.l.b16 %v1533
        %v3757 = vunpack.c.h.b16 %v1533
        %v3758 = vunpack.c.l.b16 %v1534
        %v3759 = vunpack.c.h.b16 %v1534
        %v3760 = vunpack.c.l.b16 %v1535
        %v3761 = vunpack.c.h.b16 %v1535
        %v3762 = vunpack.c.l.b16 %v1536
        %v3763 = vunpack.c.h.b16 %v1536
        %v3764 = vunpack.c.l.b16 %v1537
        %v3765 = vunpack.c.h.b16 %v1537
        %v3766 = vunpack.c.l.b16 %v1538
        %v3767 = vunpack.c.h.b16 %v1538
        %v3768 = vunpack.c.l.b16 %v1539
        %v3769 = vunpack.c.h.b16 %v1539
        %v3770 = vunpack.c.l.b16 %v1540
        %v3771 = vunpack.c.h.b16 %v1540
        %v3772 = vunpack.c.l.b16 %v1541
        %v3773 = vunpack.c.h.b16 %v1541
        %v3774 = vunpack.c.l.b16 %v1542
        %v3775 = vunpack.c.h.b16 %v1542
        %v3776 = vunpack.c.l.b16 %v1543
        %v3777 = vunpack.c.h.b16 %v1543
        %v3778 = vunpack.c.l.b16 %v1544
        %v3779 = vunpack.c.h.b16 %v1544
        %v3780 = vunpack.c.l.b16 %v1545
        %v3781 = vunpack.c.h.b16 %v1545
        %v3782 = vunpack.c.l.b16 %v1546
        %v3783 = vunpack.c.h.b16 %v1546
        %v3784 = vunpack.c.l.b16 %v1547
        %v3785 = vunpack.c.h.b16 %v1547
        %v3786 = vunpack.c.l.b16 %v1548
        %v3787 = vunpack.c.h.b16 %v1548
        %v3788 = vunpack.c.l.b16 %v1549
        %v3789 = vunpack.c.h.b16 %v1549
        %v3790 = vunpack.c.l.b16 %v1550
        %v3791 = vunpack.c.h.b16 %v1550
        %v3792 = vunpack.c.l.b16 %v1551
        %v3793 = vunpack.c.h.b16 %v1551
        %v3794 = vunpack.c.l.b16 %v1552
        %v3795 = vunpack.c.h.b16 %v1552
        %v3796 = vunpack.c.l.b16 %v1553
        %v3797 = vunpack.c.h.b16 %v1553
        %v3798 = vunpack.c.l.b16 %v1554
        %v3799 = vunpack.c.h.b16 %v1554
        %v3800 = vunpack.c.l.b16 %v1555
        %v3801 = vunpack.c.h.b16 %v1555
        %v3802 = vunpack.c.l.b16 %v1556
        %v3803 = vunpack.c.h.b16 %v1556
        %v3804 = vunpack.c.l.b16 %v1557
        %v3805 = vunpack.c.h.b16 %v1557
        %v3806 = vunpack.c.l.b16 %v1558
        %v3807 = vunpack.c.h.b16 %v1558
        %v3808 = vunpack.c.l.b16 %v1559
        %v3809 = vunpack.c.h.b16 %v1559
        %v3810 = vunpack.c.l.b16 %v1560
        %v3811 = vunpack.c.h.b16 %v1560
        %v3812 = vunpack.c.l.b16 %v1561
        %v3813 = vunpack.c.h.b16 %v1561
        %v3814 = vunpack.c.l.b16 %v1562
        %v3815 = vunpack.c.h.b16 %v1562
        %v3816 = vunpack.c.l.b16 %v1563
        %v3817 = vunpack.c.h.b16 %v1563
        %v3818 = vunpack.c.l.b16 %v1564
        %v3819 = vunpack.c.h.b16 %v1564
        %v3820 = vunpack.c.l.b16 %v1565
        %v3821 = vunpack.c.h.b16 %v1565
        %v3822 = vunpack.c.l.b16 %v1566
        %v3823 = vunpack.c.h.b16 %v1566
        %v3824 = vunpack.c.l.b16 %v1567
        %v3825 = vunpack.c.h.b16 %v1567
        %v3826 = vunpack.c.l.b16 %v1568
        %v3827 = vunpack.c.h.b16 %v1568
        %v3828 = vunpack.c.l.b16 %v1569
        %v3829 = vunpack.c.h.b16 %v1569
        %v3830 = vunpack.c.l.b16 %v1570
        %v3831 = vunpack.c.h.b16 %v1570
        %v3832 = vunpack.c.l.b16 %v1571
        %v3833 = vunpack.c.h.b16 %v1571
        %v3834 = vunpack.c.l.b16 %v1572
        %v3835 = vunpack.c.h.b16 %v1572
        %v3836 = vunpack.c.l.b16 %v1573
        %v3837 = vunpack.c.h.b16 %v1573
        %v3838 = vunpack.c.l.b16 %v1574
        %v3839 = vunpack.c.h.b16 %v1574
        %v3840 = vunpack.c.l.b16 %v1575
        %v3841 = vunpack.c.h.b16 %v1575
        %v3842 = vunpack.c.l.b16 %v1576
        %v3843 = vunpack.c.h.b16 %v1576
        %v3844 = vunpack.c.l.b16 %v1577
        %v3845 = vunpack.c.h.b16 %v1577
        %v3846 = vunpack.c.l.b16 %v1578
        %v3847 = vunpack.c.h.b16 %v1578
        %v3848 = vunpack.c.l.b16 %v1579
        %v3849 = vunpack.c.h.b16 %v1579
        %v3850 = vunpack.c.l.b16 %v1580
        %v3851 = vunpack.c.h.b16 %v1580
        %v3852 = vunpack.c.l.b16 %v1581
        %v3853 = vunpack.c.h.b16 %v1581
        %v3854 = vunpack.c.l.b16 %v1582
        %v3855 = vunpack.c.h.b16 %v1582
        %v3856 = vunpack.c.l.b16 %v1583
        %v3857 = vunpack.c.h.b16 %v1583
        %v3858 = vunpack.c.l.b16 %v1584
        %v3859 = vunpack.c.h.b16 %v1584
        %v3860 = vunpack.c.l.b16 %v1585
        %v3861 = vunpack.c.h.b16 %v1585
        %v3862 = vunpack.c.l.b16 %v1586
        %v3863 = vunpack.c.h.b16 %v1586
        %v3864 = vunpack.c.l.b16 %v1587
        %v3865 = vunpack.c.h.b16 %v1587
        %v3866 = vunpack.c.l.b16 %v1588
        %v3867 = vunpack.c.h.b16 %v1588
        %v3868 = vunpack.c.l.b16 %v1589
        %v3869 = vunpack.c.h.b16 %v1589
        %v3870 = vunpack.c.l.b16 %v1590
        %v3871 = vunpack.c.h.b16 %v1590
        %v3872 = vunpack.c.l.b16 %v1591
        %v3873 = vunpack.c.h.b16 %v1591
        %v3874 = vunpack.c.l.b16 %v1592
        %v3875 = vunpack.c.h.b16 %v1592
        %v3876 = vunpack.c.l.b16 %v1593
        %v3877 = vunpack.c.h.b16 %v1593
        %v3878 = vunpack.c.l.b16 %v1594
        %v3879 = vunpack.c.h.b16 %v1594
        %v3880 = vunpack.c.l.b16 %v1595
        %v3881 = vunpack.c.h.b16 %v1595
        %v3882 = vunpack.c.l.b16 %v1596
        %v3883 = vunpack.c.h.b16 %v1596
        %v3884 = vunpack.c.l.b16 %v1597
        %v3885 = vunpack.c.h.b16 %v1597
        %v3886 = vunpack.c.l.b16 %v1598
        %v3887 = vunpack.c.h.b16 %v1598
        %v3888 = vunpack.c.l.b16 %v1599
        %v3889 = vunpack.c.h.b16 %v1599
        %v3890 = vunpack.c.l.b16 %v1600
        %v3891 = vunpack.c.h.b16 %v1600
        %v3892 = vunpack.c.l.b16 %v1601
        %v3893 = vunpack.c.h.b16 %v1601
        %v3894 = vunpack.c.l.b16 %v1602
        %v3895 = vunpack.c.h.b16 %v1602
        %v3896 = vunpack.c.l.b16 %v1603
        %v3897 = vunpack.c.h.b16 %v1603
        %v3898 = vunpack.c.l.b16 %v1604
        %v3899 = vunpack.c.h.b16 %v1604
        %v3900 = vunpack.c.l.b16 %v1605
        %v3901 = vunpack.c.h.b16 %v1605
        %v3902 = vunpack.c.l.b16 %v1606
        %v3903 = vunpack.c.h.b16 %v1606
        %v3904 = vunpack.c.l.b16 %v1607
        %v3905 = vunpack.c.h.b16 %v1607
        %v3906 = vunpack.c.l.b16 %v1608
        %v3907 = vunpack.c.h.b16 %v1608
        %v3908 = vunpack.c.l.b16 %v1609
        %v3909 = vunpack.c.h.b16 %v1609
        %v3910 = vunpack.c.l.b16 %v1610
        %v3911 = vunpack.c.h.b16 %v1610
        %v3912 = vunpack.c.l.b16 %v1611
        %v3913 = vunpack.c.h.b16 %v1611
        %v3914 = vunpack.c.l.b16 %v1612
        %v3915 = vunpack.c.h.b16 %v1612
        %v3916 = vunpack.c.l.b16 %v1613
        %v3917 = vunpack.c.h.b16 %v1613
        %v3918 = vunpack.c.l.b16 %v1614
        %v3919 = vunpack.c.h.b16 %v1614
        %v3920 = vunpack.c.l.b16 %v1615
        %v3921 = vunpack.c.h.b16 %v1615
        %v3922 = vunpack.c.l.b16 %v1616
        %v3923 = vunpack.c.h.b16 %v1616
        %v3924 = vunpack.c.l.b16 %v1617
        %v3925 = vunpack.c.h.b16 %v1617
        %v3926 = vunpack.c.l.b16 %v1618
        %v3927 = vunpack.c.h.b16 %v1618
        %v3928 = vunpack.c.l.b16 %v1619
        %v3929 = vunpack.c.h.b16 %v1619
        %v3930 = vunpack.c.l.b16 %v1620
        %v3931 = vunpack.c.h.b16 %v1620
        %v3932 = vunpack.c.l.b16 %v1621
        %v3933 = vunpack.c.h.b16 %v1621
        %v3934 = vunpack.c.l.b16 %v1622
        %v3935 = vunpack.c.h.b16 %v1622
        %v3936 = vunpack.c.l.b16 %v1623
        %v3937 = vunpack.c.h.b16 %v1623
        %v3938 = vunpack.c.l.b16 %v1624
        %v3939 = vunpack.c.h.b16 %v1624
        %v3940 = vunpack.c.l.b16 %v1625
        %v3941 = vunpack.c.h.b16 %v1625
        %v3942 = vunpack.c.l.b16 %v1626
        %v3943 = vunpack.c.h.b16 %v1626
        %v3944 = vunpack.c.l.b16 %v1627
        %v3945 = vunpack.c.h.b16 %v1627
        %v3946 = vunpack.c.l.b16 %v1628
        %v3947 = vunpack.c.h.b16 %v1628
        %v3948 = vunpack.c.l.b16 %v1629
        %v3949 = vunpack.c.h.b16 %v1629
        %v3950 = vunpack.c.l.b16 %v1630
        %v3951 = vunpack.c.h.b16 %v1630
        %v3952 = vunpack.c.l.b16 %v1631
        %v3953 = vunpack.c.h.b16 %v1631
        %v3954 = vunpack.c.l.b16 %v1632
        %v3955 = vunpack.c.h.b16 %v1632
        %v3956 = vunpack.c.l.b16 %v1633
        %v3957 = vunpack.c.h.b16 %v1633
        %v3958 = vunpack.c.l.b16 %v1634
        %v3959 = vunpack.c.h.b16 %v1634
        %v3960 = vunpack.c.l.b16 %v1635
        %v3961 = vunpack.c.h.b16 %v1635
        %v3962 = vunpack.c.l.b16 %v1636
        %v3963 = vunpack.c.h.b16 %v1636
        %v3964 = vunpack.c.l.b16 %v1637
        %v3965 = vunpack.c.h.b16 %v1637
        %v3966 = vunpack.c.l.b16 %v1638
        %v3967 = vunpack.c.h.b16 %v1638
        %v3968 = vunpack.c.l.b16 %v1639
        %v3969 = vunpack.c.h.b16 %v1639
        %v3970 = vunpack.c.l.b16 %v1640
        %v3971 = vunpack.c.h.b16 %v1640
        %v3972 = vunpack.c.l.b16 %v1641
        %v3973 = vunpack.c.h.b16 %v1641
        %v3974 = vunpack.c.l.b16 %v1642
        %v3975 = vunpack.c.h.b16 %v1642
        %v3976 = vunpack.c.l.b16 %v1643
        %v3977 = vunpack.c.h.b16 %v1643
        %v3978 = vunpack.c.l.b16 %v1644
        %v3979 = vunpack.c.h.b16 %v1644
        %v3980 = vunpack.c.l.b16 %v1645
        %v3981 = vunpack.c.h.b16 %v1645
        %v3982 = vunpack.c.l.b16 %v1646
        %v3983 = vunpack.c.h.b16 %v1646
        %v3984 = vunpack.c.l.b16 %v1647
        %v3985 = vunpack.c.h.b16 %v1647
        %v3986 = vunpack.c.l.b16 %v1648
        %v3987 = vunpack.c.h.b16 %v1648
        %v3988 = vunpack.c.l.b16 %v1649
        %v3989 = vunpack.c.h.b16 %v1649
        %v3990 = vunpack.c.l.b16 %v1650
        %v3991 = vunpack.c.h.b16 %v1650
        %v3992 = vunpack.c.l.b16 %v1651
        %v3993 = vunpack.c.h.b16 %v1651
        %v3994 = vunpack.c.l.b16 %v1652
        %v3995 = vunpack.c.h.b16 %v1652
        %v3996 = vunpack.c.l.b16 %v1653
        %v3997 = vunpack.c.h.b16 %v1653
        %v3998 = vunpack.c.l.b16 %v1654
        %v3999 = vunpack.c.h.b16 %v1654
        %v4000 = vunpack.c.l.b16 %v1655
        %v4001 = vunpack.c.h.b16 %v1655
        %v4002 = vunpack.c.l.b16 %v1656
        %v4003 = vunpack.c.h.b16 %v1656
        %v4004 = vunpack.c.l.b16 %v1657
        %v4005 = vunpack.c.h.b16 %v1657
        %v4006 = vunpack.c.l.b16 %v1658
        %v4007 = vunpack.c.h.b16 %v1658
        %v4008 = vunpack.c.l.b16 %v1659
        %v4009 = vunpack.c.h.b16 %v1659
        %v4010 = vunpack.c.l.b16 %v1660
        %v4011 = vunpack.c.h.b16 %v1660
        %v4012 = vunpack.c.l.b16 %v1661
        %v4013 = vunpack.c.h.b16 %v1661
        %v4014 = vunpack.c.l.b16 %v1662
        %v4015 = vunpack.c.h.b16 %v1662
        %v4016 = vunpack.c.l.b16 %v1663
        %v4017 = vunpack.c.h.b16 %v1663
        %v4018 = vunpack.c.l.b16 %v1664
        %v4019 = vunpack.c.h.b16 %v1664
        %v4020 = vunpack.c.l.b16 %v1665
        %v4021 = vunpack.c.h.b16 %v1665
        %v4022 = vunpack.c.l.b16 %v1666
        %v4023 = vunpack.c.h.b16 %v1666
        %v4024 = vunpack.c.l.b16 %v1667
        %v4025 = vunpack.c.h.b16 %v1667
        %v4026 = vunpack.c.l.b16 %v1668
        %v4027 = vunpack.c.h.b16 %v1668
        %v4028 = vunpack.c.l.b16 %v1669
        %v4029 = vunpack.c.h.b16 %v1669
        %v4030 = vunpack.c.l.b16 %v1670
        %v4031 = vunpack.c.h.b16 %v1670
        %v4032 = vunpack.c.l.b16 %v1671
        %v4033 = vunpack.c.h.b16 %v1671
        %v4034 = vunpack.c.l.b16 %v1672
        %v4035 = vunpack.c.h.b16 %v1672
        %v4036 = vunpack.c.l.b16 %v1673
        %v4037 = vunpack.c.h.b16 %v1673
        %v4038 = vunpack.c.l.b16 %v1674
        %v4039 = vunpack.c.h.b16 %v1674
        %v4040 = vunpack.c.l.b16 %v1675
        %v4041 = vunpack.c.h.b16 %v1675
        %v4042 = vunpack.c.l.b16 %v1676
        %v4043 = vunpack.c.h.b16 %v1676
        %v4044 = vunpack.c.l.b16 %v1677
        %v4045 = vunpack.c.h.b16 %v1677
        %v4046 = vunpack.c.l.b16 %v1678
        %v4047 = vunpack.c.h.b16 %v1678
        %v4048 = vunpack.c.l.b16 %v1679
        %v4049 = vunpack.c.h.b16 %v1679
        %v4050 = vunpack.c.l.b16 %v1680
        %v4051 = vunpack.c.h.b16 %v1680
        %v4052 = vunpack.c.l.b16 %v1681
        %v4053 = vunpack.c.h.b16 %v1681
        %v4054 = vunpack.c.l.b16 %v1682
        %v4055 = vunpack.c.h.b16 %v1682
        %v4056 = vunpack.c.l.b16 %v1683
        %v4057 = vunpack.c.h.b16 %v1683
        %v4058 = vunpack.c.l.b16 %v1684
        %v4059 = vunpack.c.h.b16 %v1684
        %v4060 = vunpack.c.l.b16 %v1685
        %v4061 = vunpack.c.h.b16 %v1685
        %v4062 = vunpack.c.l.b16 %v1686
        %v4063 = vunpack.c.h.b16 %v1686
        %v4064 = vunpack.c.l.b16 %v1687
        %v4065 = vunpack.c.h.b16 %v1687
        %v4066 = vunpack.c.l.b16 %v1688
        %v4067 = vunpack.c.h.b16 %v1688
        %v4068 = vunpack.c.l.b16 %v1689
        %v4069 = vunpack.c.h.b16 %v1689
        %v4070 = vunpack.c.l.b16 %v1690
        %v4071 = vunpack.c.h.b16 %v1690
        %v4072 = vunpack.c.l.b16 %v1691
        %v4073 = vunpack.c.h.b16 %v1691
        %v4074 = vunpack.c.l.b16 %v1692
        %v4075 = vunpack.c.h.b16 %v1692
        %v4076 = vunpack.c.l.b16 %v1693
        %v4077 = vunpack.c.h.b16 %v1693
        %v4078 = vunpack.c.l.b16 %v1694
        %v4079 = vunpack.c.h.b16 %v1694
        %v4080 = vunpack.c.l.b16 %v1695
        %v4081 = vunpack.c.h.b16 %v1695
        %v4082 = vunpack.c.l.b16 %v1696
        %v4083 = vunpack.c.h.b16 %v1696
        %v4084 = vunpack.c.l.b16 %v1697
        %v4085 = vunpack.c.h.b16 %v1697
        %v4086 = vunpack.c.l.b16 %v1698
        %v4087 = vunpack.c.h.b16 %v1698
        %v4088 = vunpack.c.l.b16 %v1699
        %v4089 = vunpack.c.h.b16 %v1699
        %v4090 = vunpack.c.l.b16 %v1700
        %v4091 = vunpack.c.h.b16 %v1700
        %v4092 = vunpack.c.l.b16 %v1701
        %v4093 = vunpack.c.h.b16 %v1701
        %v4094 = vunpack.c.l.b16 %v1702
        %v4095 = vunpack.c.h.b16 %v1702
        %v4096 = vunpack.c.l.b16 %v1703
        %v4097 = vunpack.c.h.b16 %v1703
        %v4098 = vunpack.c.l.b16 %v1704
        %v4099 = vunpack.c.h.b16 %v1704
        %v4100 = vunpack.c.l.b16 %v1705
        %v4101 = vunpack.c.h.b16 %v1705
        %v4102 = vunpack.c.l.b16 %v1706
        %v4103 = vunpack.c.h.b16 %v1706
        %v4104 = vunpack.c.l.b16 %v1707
        %v4105 = vunpack.c.h.b16 %v1707
        %v4106 = vpack.c.b16 %v2574, %v2570
        %v4107 = vpack.c.b16 %v2575, %v2571
        %v4108 = vpack.c.b16 %v2576, %v2572
        %v4109 = vpack.c.b16 %v2577, %v2573
        %v4110 = vpack.c.b16 %v2582, %v2578
        %v4111 = vpack.c.b16 %v2583, %v2579
        %v4112 = vpack.c.b16 %v2584, %v2580
        %v4113 = vpack.c.b16 %v2585, %v2581
        %v4114 = vpack.c.b16 %v2590, %v2586
        %v4115 = vpack.c.b16 %v2591, %v2587
        %v4116 = vpack.c.b16 %v2592, %v2588
        %v4117 = vpack.c.b16 %v2593, %v2589
        %v4118 = vpack.c.b16 %v2598, %v2594
        %v4119 = vpack.c.b16 %v2599, %v2595
        %v4120 = vpack.c.b16 %v2600, %v2596
        %v4121 = vpack.c.b16 %v2601, %v2597
        %v4122 = vpack.c.b16 %v2606, %v2602
        %v4123 = vpack.c.b16 %v2607, %v2603
        %v4124 = vpack.c.b16 %v2608, %v2604
        %v4125 = vpack.c.b16 %v2609, %v2605
        %v4126 = vpack.c.b16 %v2614, %v2610
        %v4127 = vpack.c.b16 %v2615, %v2611
        %v4128 = vpack.c.b16 %v2616, %v2612
        %v4129 = vpack.c.b16 %v2617, %v2613
        %v4130 = vpack.c.b16 %v2622, %v2618
        %v4131 = vpack.c.b16 %v2623, %v2619
        %v4132 = vpack.c.b16 %v2624, %v2620
        %v4133 = vpack.c.b16 %v2625, %v2621
        %v4134 = vpack.c.b16 %v2630, %v2626
        %v4135 = vpack.c.b16 %v2631, %v2627
        %v4136 = vpack.c.b16 %v2632, %v2628
        %v4137 = vpack.c.b16 %v2633, %v2629
        %v4138 = vpack.c.b16 %v2638, %v2634
        %v4139 = vpack.c.b16 %v2639, %v2635
        %v4140 = vpack.c.b16 %v2640, %v2636
        %v4141 = vpack.c.b16 %v2641, %v2637
        %v4142 = vpack.c.b16 %v2646, %v2642
        %v4143 = vpack.c.b16 %v2647, %v2643
        %v4144 = vpack.c.b16 %v2648, %v2644
        %v4145 = vpack.c.b16 %v2649, %v2645
        %v4146 = vpack.c.b16 %v2654, %v2650
        %v4147 = vpack.c.b16 %v2655, %v2651
        %v4148 = vpack.c.b16 %v2656, %v2652
        %v4149 = vpack.c.b16 %v2657, %v2653
        %v4150 = vpack.c.b16 %v2662, %v2658
        %v4151 = vpack.c.b16 %v2663, %v2659
        %v4152 = vpack.c.b16 %v2664, %v2660
        %v4153 = vpack.c.b16 %v2665, %v2661
        %v4154 = vpack.c.b16 %v2670, %v2666
        %v4155 = vpack.c.b16 %v2671, %v2667
        %v4156 = vpack.c.b16 %v2672, %v2668
        %v4157 = vpack.c.b16 %v2673, %v2669
        %v4158 = vpack.c.b16 %v2678, %v2674
        %v4159 = vpack.c.b16 %v2679, %v2675
        %v4160 = vpack.c.b16 %v2680, %v2676
        %v4161 = vpack.c.b16 %v2681, %v2677
        %v4162 = vpack.c.b16 %v2686, %v2682
        %v4163 = vpack.c.b16 %v2687, %v2683
        %v4164 = vpack.c.b16 %v2688, %v2684
        %v4165 = vpack.c.b16 %v2689, %v2685
        %v4166 = vpack.c.b16 %v2694, %v2690
        %v4167 = vpack.c.b16 %v2695, %v2691
        %v4168 = vpack.c.b16 %v2696, %v2692
        %v4169 = vpack.c.b16 %v2697, %v2693
        %v4170 = vpack.c.b16 %v2702, %v2698
        %v4171 = vpack.c.b16 %v2703, %v2699
        %v4172 = vpack.c.b16 %v2704, %v2700
        %v4173 = vpack.c.b16 %v2705, %v2701
        %v4174 = vpack.c.b16 %v2710, %v2706
        %v4175 = vpack.c.b16 %v2711, %v2707
        %v4176 = vpack.c.b16 %v2712, %v2708
        %v4177 = vpack.c.b16 %v2713, %v2709
        %v4178 = vpack.c.b16 %v2718, %v2714
        %v4179 = vpack.c.b16 %v2719, %v2715
        %v4180 = vpack.c.b16 %v2720, %v2716
        %v4181 = vpack.c.b16 %v2721, %v2717
        %v4182 = vpack.c.b16 %v2726, %v2722
        %v4183 = vpack.c.b16 %v2727, %v2723
        %v4184 = vpack.c.b16 %v2728, %v2724
        %v4185 = vpack.c.b16 %v2729, %v2725
        %v4186 = vpack.c.b16 %v2734, %v2730
        %v4187 = vpack.c.b16 %v2735, %v2731
        %v4188 = vpack.c.b16 %v2736, %v2732
        %v4189 = vpack.c.b16 %v2737, %v2733
        %v4190 = vpack.c.b16 %v2742, %v2738
        %v4191 = vpack.c.b16 %v2743, %v2739
        %v4192 = vpack.c.b16 %v2744, %v2740
        %v4193 = vpack.c.b16 %v2745, %v2741
        %v4194 = vpack.c.b16 %v2750, %v2746
        %v4195 = vpack.c.b16 %v2751, %v2747
        %v4196 = vpack.c.b16 %v2752, %v2748
        %v4197 = vpack.c.b16 %v2753, %v2749
        %v4198 = vpack.c.b16 %v2758, %v2754
        %v4199 = vpack.c.b16 %v2759, %v2755
        %v4200 = vpack.c.b16 %v2760, %v2756
        %v4201 = vpack.c.b16 %v2761, %v2757
        %v4202 = vpack.c.b16 %v2766, %v2762
        %v4203 = vpack.c.b16 %v2767, %v2763
        %v4204 = vpack.c.b16 %v2768, %v2764
        %v4205 = vpack.c.b16 %v2769, %v2765
        %v4206 = vpack.c.b16 %v2774, %v2770
        %v4207 = vpack.c.b16 %v2775, %v2771
        %v4208 = vpack.c.b16 %v2776, %v2772
        %v4209 = vpack.c.b16 %v2777, %v2773
        %v4210 = vpack.c.b16 %v2782, %v2778
        %v4211 = vpack.c.b16 %v2783, %v2779
        %v4212 = vpack.c.b16 %v2784, %v2780
        %v4213 = vpack.c.b16 %v2785, %v2781
        %v4214 = vpack.c.b16 %v2790, %v2786
        %v4215 = vpack.c.b16 %v2791, %v2787
        %v4216 = vpack.c.b16 %v2792, %v2788
        %v4217 = vpack.c.b16 %v2793, %v2789
        %v4218 = vpack.c.b16 %v2798, %v2794
        %v4219 = vpack.c.b16 %v2799, %v2795
        %v4220 = vpack.c.b16 %v2800, %v2796
        %v4221 = vpack.c.b16 %v2801, %v2797
        %v4222 = vpack.c.b16 %v2806, %v2802
        %v4223 = vpack.c.b16 %v2807, %v2803
        %v4224 = vpack.c.b16 %v2808, %v2804
        %v4225 = vpack.c.b16 %v2809, %v2805
        %v4226 = vpack.c.b16 %v2814, %v2810
        %v4227 = vpack.c.b16 %v2815, %v2811
        %v4228 = vpack.c.b16 %v2816, %v2812
        %v4229 = vpack.c.b16 %v2817, %v2813
        %v4230 = vpack.c.b16 %v2822, %v2818
        %v4231 = vpack.c.b16 %v2823, %v2819
        %v4232 = vpack.c.b16 %v2824, %v2820
        %v4233 = vpack.c.b16 %v2825, %v2821
        %v4234 = vpack.c.b16 %v2830, %v2826
        %v4235 = vpack.c.b16 %v2831, %v2827
        %v4236 = vpack.c.b16 %v2832, %v2828
        %v4237 = vpack.c.b16 %v2833, %v2829
        %v4238 = vpack.c.b16 %v2838, %v2834
        %v4239 = vpack.c.b16 %v2839, %v2835
        %v4240 = vpack.c.b16 %v2840, %v2836
        %v4241 = vpack.c.b16 %v2841, %v2837
        %v4242 = vpack.c.b16 %v2846, %v2842
        %v4243 = vpack.c.b16 %v2847, %v2843
        %v4244 = vpack.c.b16 %v2848, %v2844
        %v4245 = vpack.c.b16 %v2849, %v2845
        %v4246 = vpack.c.b16 %v2854, %v2850
        %v4247 = vpack.c.b16 %v2855, %v2851
        %v4248 = vpack.c.b16 %v2856, %v2852
        %v4249 = vpack.c.b16 %v2857, %v2853
        %v4250 = vpack.c.b16 %v2862, %v2858
        %v4251 = vpack.c.b16 %v2863, %v2859
        %v4252 = vpack.c.b16 %v2864, %v2860
        %v4253 = vpack.c.b16 %v2865, %v2861
        %v4254 = vpack.c.b16 %v2870, %v2866
        %v4255 = vpack.c.b16 %v2871, %v2867
        %v4256 = vpack.c.b16 %v2872, %v2868
        %v4257 = vpack.c.b16 %v2873, %v2869
        %v4258 = vpack.c.b16 %v2878, %v2874
        %v4259 = vpack.c.b16 %v2879, %v2875
        %v4260 = vpack.c.b16 %v2880, %v2876
        %v4261 = vpack.c.b16 %v2881, %v2877
        %v4262 = vpack.c.b16 %v2886, %v2882
        %v4263 = vpack.c.b16 %v2887, %v2883
        %v4264 = vpack.c.b16 %v2888, %v2884
        %v4265 = vpack.c.b16 %v2889, %v2885
        %v4266 = vpack.c.b16 %v2894, %v2890
        %v4267 = vpack.c.b16 %v2895, %v2891
        %v4268 = vpack.c.b16 %v2896, %v2892
        %v4269 = vpack.c.b16 %v2897, %v2893
        %v4270 = vpack.c.b16 %v2902, %v2898
        %v4271 = vpack.c.b16 %v2903, %v2899
        %v4272 = vpack.c.b16 %v2904, %v2900
        %v4273 = vpack.c.b16 %v2905, %v2901
        %v4274 = vpack.c.b16 %v2910, %v2906
        %v4275 = vpack.c.b16 %v2911, %v2907
        %v4276 = vpack.c.b16 %v2912, %v2908
        %v4277 = vpack.c.b16 %v2913, %v2909
        %v4278 = vpack.c.b16 %v2918, %v2914
        %v4279 = vpack.c.b16 %v2919, %v2915
        %v4280 = vpack.c.b16 %v2920, %v2916
        %v4281 = vpack.c.b16 %v2921, %v2917
        %v4282 = vpack.c.b16 %v2926, %v2922
        %v4283 = vpack.c.b16 %v2927, %v2923
        %v4284 = vpack.c.b16 %v2928, %v2924
        %v4285 = vpack.c.b16 %v2929, %v2925
        %v4286 = vpack.c.b16 %v2934, %v2930
        %v4287 = vpack.c.b16 %v2935, %v2931
        %v4288 = vpack.c.b16 %v2936, %v2932
        %v4289 = vpack.c.b16 %v2937, %v2933
        %v4290 = vpack.c.b16 %v2942, %v2938
        %v4291 = vpack.c.b16 %v2943, %v2939
        %v4292 = vpack.c.b16 %v2944, %v2940
        %v4293 = vpack.c.b16 %v2945, %v2941
        %v4294 = vpack.c.b16 %v2950, %v2946
        %v4295 = vpack.c.b16 %v2951, %v2947
        %v4296 = vpack.c.b16 %v2952, %v2948
        %v4297 = vpack.c.b16 %v2953, %v2949
        %v4298 = vpack.c.b16 %v2958, %v2954
        %v4299 = vpack.c.b16 %v2959, %v2955
        %v4300 = vpack.c.b16 %v2960, %v2956
        %v4301 = vpack.c.b16 %v2961, %v2957
        %v4302 = vpack.c.b16 %v2966, %v2962
        %v4303 = vpack.c.b16 %v2967, %v2963
        %v4304 = vpack.c.b16 %v2968, %v2964
        %v4305 = vpack.c.b16 %v2969, %v2965
        %v4306 = vpack.c.b16 %v2974, %v2970
        %v4307 = vpack.c.b16 %v2975, %v2971
        %v4308 = vpack.c.b16 %v2976, %v2972
        %v4309 = vpack.c.b16 %v2977, %v2973
        %v4310 = vpack.c.b16 %v2982, %v2978
        %v4311 = vpack.c.b16 %v2983, %v2979
        %v4312 = vpack.c.b16 %v2984, %v2980
        %v4313 = vpack.c.b16 %v2985, %v2981
        %v4314 = vpack.c.b16 %v2990, %v2986
        %v4315 = vpack.c.b16 %v2991, %v2987
        %v4316 = vpack.c.b16 %v2992, %v2988
        %v4317 = vpack.c.b16 %v2993, %v2989
        %v4318 = vpack.c.b16 %v2998, %v2994
        %v4319 = vpack.c.b16 %v2999, %v2995
        %v4320 = vpack.c.b16 %v3000, %v2996
        %v4321 = vpack.c.b16 %v3001, %v2997
        %v4322 = vpack.c.b16 %v3006, %v3002
        %v4323 = vpack.c.b16 %v3007, %v3003
        %v4324 = vpack.c.b16 %v3008, %v3004
        %v4325 = vpack.c.b16 %v3009, %v3005
        %v4326 = vpack.c.b16 %v3014, %v3010
        %v4327 = vpack.c.b16 %v3015, %v3011
        %v4328 = vpack.c.b16 %v3016, %v3012
        %v4329 = vpack.c.b16 %v3017, %v3013
        %v4330 = vpack.c.b16 %v3022, %v3018
        %v4331 = vpack.c.b16 %v3023, %v3019
        %v4332 = vpack.c.b16 %v3024, %v3020
        %v4333 = vpack.c.b16 %v3025, %v3021
        %v4334 = vpack.c.b16 %v3030, %v3026
        %v4335 = vpack.c.b16 %v3031, %v3027
        %v4336 = vpack.c.b16 %v3032, %v3028
        %v4337 = vpack.c.b16 %v3033, %v3029
        %v4338 = vpack.c.b16 %v3038, %v3034
        %v4339 = vpack.c.b16 %v3039, %v3035
        %v4340 = vpack.c.b16 %v3040, %v3036
        %v4341 = vpack.c.b16 %v3041, %v3037
        %v4342 = vpack.c.b16 %v3046, %v3042
        %v4343 = vpack.c.b16 %v3047, %v3043
        %v4344 = vpack.c.b16 %v3048, %v3044
        %v4345 = vpack.c.b16 %v3049, %v3045
        %v4346 = vpack.c.b16 %v3054, %v3050
        %v4347 = vpack.c.b16 %v3055, %v3051
        %v4348 = vpack.c.b16 %v3056, %v3052
        %v4349 = vpack.c.b16 %v3057, %v3053
        %v4350 = vpack.c.b16 %v3062, %v3058
        %v4351 = vpack.c.b16 %v3063, %v3059
        %v4352 = vpack.c.b16 %v3064, %v3060
        %v4353 = vpack.c.b16 %v3065, %v3061
        %v4354 = vpack.c.b16 %v3070, %v3066
        %v4355 = vpack.c.b16 %v3071, %v3067
        %v4356 = vpack.c.b16 %v3072, %v3068
        %v4357 = vpack.c.b16 %v3073, %v3069
        %v4358 = vpack.c.b16 %v3078, %v3074
        %v4359 = vpack.c.b16 %v3079, %v3075
        %v4360 = vpack.c.b16 %v3080, %v3076
        %v4361 = vpack.c.b16 %v3081, %v3077
        %v4362 = vpack.c.b16 %v3086, %v3082
        %v4363 = vpack.c.b16 %v3087, %v3083
        %v4364 = vpack.c.b16 %v3088, %v3084
        %v4365 = vpack.c.b16 %v3089, %v3085
        %v4366 = vpack.c.b16 %v3094, %v3090
        %v4367 = vpack.c.b16 %v3095, %v3091
        %v4368 = vpack.c.b16 %v3096, %v3092
        %v4369 = vpack.c.b16 %v3097, %v3093
        %v4370 = vpack.c.b16 %v3102, %v3098
        %v4371 = vpack.c.b16 %v3103, %v3099
        %v4372 = vpack.c.b16 %v3104, %v3100
        %v4373 = vpack.c.b16 %v3105, %v3101
        %v4374 = vpack.c.b16 %v3110, %v3106
        %v4375 = vpack.c.b16 %v3111, %v3107
        %v4376 = vpack.c.b16 %v3112, %v3108
        %v4377 = vpack.c.b16 %v3113, %v3109
        %v4378 = vpack.c.b16 %v3118, %v3114
        %v4379 = vpack.c.b16 %v3119, %v3115
        %v4380 = vpack.c.b16 %v3120, %v3116
        %v4381 = vpack.c.b16 %v3121, %v3117
        %v4382 = vpack.c.b16 %v3126, %v3122
        %v4383 = vpack.c.b16 %v3127, %v3123
        %v4384 = vpack.c.b16 %v3128, %v3124
        %v4385 = vpack.c.b16 %v3129, %v3125
        %v4386 = vpack.c.b16 %v3134, %v3130
        %v4387 = vpack.c.b16 %v3135, %v3131
        %v4388 = vpack.c.b16 %v3136, %v3132
        %v4389 = vpack.c.b16 %v3137, %v3133
        %v4390 = vpack.c.b16 %v3142, %v3138
        %v4391 = vpack.c.b16 %v3143, %v3139
        %v4392 = vpack.c.b16 %v3144, %v3140
        %v4393 = vpack.c.b16 %v3145, %v3141
        %v4394 = vpack.c.b16 %v3150, %v3146
        %v4395 = vpack.c.b16 %v3151, %v3147
        %v4396 = vpack.c.b16 %v3152, %v3148
        %v4397 = vpack.c.b16 %v3153, %v3149
        %v4398 = vpack.c.b16 %v3158, %v3154
        %v4399 = vpack.c.b16 %v3159, %v3155
        %v4400 = vpack.c.b16 %v3160, %v3156
        %v4401 = vpack.c.b16 %v3161, %v3157
        %v4402 = vpack.c.b16 %v3166, %v3162
        %v4403 = vpack.c.b16 %v3167, %v3163
        %v4404 = vpack.c.b16 %v3168, %v3164
        %v4405 = vpack.c.b16 %v3169, %v3165
        %v4406 = vpack.c.b16 %v3174, %v3170
        %v4407 = vpack.c.b16 %v3175, %v3171
        %v4408 = vpack.c.b16 %v3176, %v3172
        %v4409 = vpack.c.b16 %v3177, %v3173
        %v4410 = vpack.c.b16 %v3182, %v3178
        %v4411 = vpack.c.b16 %v3183, %v3179
        %v4412 = vpack.c.b16 %v3184, %v3180
        %v4413 = vpack.c.b16 %v3185, %v3181
        %v4414 = vpack.c.b16 %v3190, %v3186
        %v4415 = vpack.c.b16 %v3191, %v3187
        %v4416 = vpack.c.b16 %v3192, %v3188
        %v4417 = vpack.c.b16 %v3193, %v3189
        %v4418 = vpack.c.b16 %v3198, %v3194
        %v4419 = vpack.c.b16 %v3199, %v3195
        %v4420 = vpack.c.b16 %v3200, %v3196
        %v4421 = vpack.c.b16 %v3201, %v3197
        %v4422 = vpack.c.b16 %v3206, %v3202
        %v4423 = vpack.c.b16 %v3207, %v3203
        %v4424 = vpack.c.b16 %v3208, %v3204
        %v4425 = vpack.c.b16 %v3209, %v3205
        %v4426 = vpack.c.b16 %v3214, %v3210
        %v4427 = vpack.c.b16 %v3215, %v3211
        %v4428 = vpack.c.b16 %v3216, %v3212
        %v4429 = vpack.c.b16 %v3217, %v3213
        %v4430 = vpack.c.b16 %v3222, %v3218
        %v4431 = vpack.c.b16 %v3223, %v3219
        %v4432 = vpack.c.b16 %v3224, %v3220
        %v4433 = vpack.c.b16 %v3225, %v3221
        %v4434 = vpack.c.b16 %v3230, %v3226
        %v4435 = vpack.c.b16 %v3231, %v3227
        %v4436 = vpack.c.b16 %v3232, %v3228
        %v4437 = vpack.c.b16 %v3233, %v3229
        %v4438 = vpack.c.b16 %v3238, %v3234
        %v4439 = vpack.c.b16 %v3239, %v3235
        %v4440 = vpack.c.b16 %v3240, %v3236
        %v4441 = vpack.c.b16 %v3241, %v3237
        %v4442 = vpack.c.b16 %v3246, %v3242
        %v4443 = vpack.c.b16 %v3247, %v3243
        %v4444 = vpack.c.b16 %v3248, %v3244
        %v4445 = vpack.c.b16 %v3249, %v3245
        %v4446 = vpack.c.b16 %v3254, %v3250
        %v4447 = vpack.c.b16 %v3255, %v3251
        %v4448 = vpack.c.b16 %v3256, %v3252
        %v4449 = vpack.c.b16 %v3257, %v3253
        %v4450 = vpack.c.b16 %v3262, %v3258
        %v4451 = vpack.c.b16 %v3263, %v3259
        %v4452 = vpack.c.b16 %v3264, %v3260
        %v4453 = vpack.c.b16 %v3265, %v3261
        %v4454 = vpack.c.b16 %v3270, %v3266
        %v4455 = vpack.c.b16 %v3271, %v3267
        %v4456 = vpack.c.b16 %v3272, %v3268
        %v4457 = vpack.c.b16 %v3273, %v3269
        %v4458 = vpack.c.b16 %v3278, %v3274
        %v4459 = vpack.c.b16 %v3279, %v3275
        %v4460 = vpack.c.b16 %v3280, %v3276
        %v4461 = vpack.c.b16 %v3281, %v3277
        %v4462 = vpack.c.b16 %v3286, %v3282
        %v4463 = vpack.c.b16 %v3287, %v3283
        %v4464 = vpack.c.b16 %v3288, %v3284
        %v4465 = vpack.c.b16 %v3289, %v3285
        %v4466 = vpack.c.b16 %v3294, %v3290
        %v4467 = vpack.c.b16 %v3295, %v3291
        %v4468 = vpack.c.b16 %v3296, %v3292
        %v4469 = vpack.c.b16 %v3297, %v3293
        %v4470 = vpack.c.b16 %v3302, %v3298
        %v4471 = vpack.c.b16 %v3303, %v3299
        %v4472 = vpack.c.b16 %v3304, %v3300
        %v4473 = vpack.c.b16 %v3305, %v3301
        %v4474 = vpack.c.b16 %v3310, %v3306
        %v4475 = vpack.c.b16 %v3311, %v3307
        %v4476 = vpack.c.b16 %v3312, %v3308
        %v4477 = vpack.c.b16 %v3313, %v3309
        %v4478 = vpack.c.b16 %v3318, %v3314
        %v4479 = vpack.c.b16 %v3319, %v3315
        %v4480 = vpack.c.b16 %v3320, %v3316
        %v4481 = vpack.c.b16 %v3321, %v3317
        %v4482 = vpack.c.b16 %v3326, %v3322
        %v4483 = vpack.c.b16 %v3327, %v3323
        %v4484 = vpack.c.b16 %v3328, %v3324
        %v4485 = vpack.c.b16 %v3329, %v3325
        %v4486 = vpack.c.b16 %v3334, %v3330
        %v4487 = vpack.c.b16 %v3335, %v3331
        %v4488 = vpack.c.b16 %v3336, %v3332
        %v4489 = vpack.c.b16 %v3337, %v3333
        %v4490 = vpack.c.b16 %v3342, %v3338
        %v4491 = vpack.c.b16 %v3343, %v3339
        %v4492 = vpack.c.b16 %v3344, %v3340
        %v4493 = vpack.c.b16 %v3345, %v3341
        %v4494 = vpack.c.b16 %v3350, %v3346
        %v4495 = vpack.c.b16 %v3351, %v3347
        %v4496 = vpack.c.b16 %v3352, %v3348
        %v4497 = vpack.c.b16 %v3353, %v3349
        %v4498 = vpack.c.b16 %v3358, %v3354
        %v4499 = vpack.c.b16 %v3359, %v3355
        %v4500 = vpack.c.b16 %v3360, %v3356
        %v4501 = vpack.c.b16 %v3361, %v3357
        %v4502 = vpack.c.b16 %v3366, %v3362
        %v4503 = vpack.c.b16 %v3367, %v3363
        %v4504 = vpack.c.b16 %v3368, %v3364
        %v4505 = vpack.c.b16 %v3369, %v3365
        %v4506 = vpack.c.b16 %v3374, %v3370
        %v4507 = vpack.c.b16 %v3375, %v3371
        %v4508 = vpack.c.b16 %v3376, %v3372
        %v4509 = vpack.c.b16 %v3377, %v3373
        %v4510 = vpack.c.b16 %v3382, %v3378
        %v4511 = vpack.c.b16 %v3383, %v3379
        %v4512 = vpack.c.b16 %v3384, %v3380
        %v4513 = vpack.c.b16 %v3385, %v3381
        %v4514 = vpack.c.b16 %v3390, %v3386
        %v4515 = vpack.c.b16 %v3391, %v3387
        %v4516 = vpack.c.b16 %v3392, %v3388
        %v4517 = vpack.c.b16 %v3393, %v3389
        %v4518 = vpack.c.b16 %v3398, %v3394
        %v4519 = vpack.c.b16 %v3399, %v3395
        %v4520 = vpack.c.b16 %v3400, %v3396
        %v4521 = vpack.c.b16 %v3401, %v3397
        %v4522 = vpack.c.b16 %v3406, %v3402
        %v4523 = vpack.c.b16 %v3407, %v3403
        %v4524 = vpack.c.b16 %v3408, %v3404
        %v4525 = vpack.c.b16 %v3409, %v3405
        %v4526 = vpack.c.b16 %v3414, %v3410
        %v4527 = vpack.c.b16 %v3415, %v3411
        %v4528 = vpack.c.b16 %v3416, %v3412
        %v4529 = vpack.c.b16 %v3417, %v3413
        %v4530 = vpack.c.b16 %v3422, %v3418
        %v4531 = vpack.c.b16 %v3423, %v3419
        %v4532 = vpack.c.b16 %v3424, %v3420
        %v4533 = vpack.c.b16 %v3425, %v3421
        %v4534 = vpack.c.b16 %v3430, %v3426
        %v4535 = vpack.c.b16 %v3431, %v3427
        %v4536 = vpack.c.b16 %v3432, %v3428
        %v4537 = vpack.c.b16 %v3433, %v3429
        %v4538 = vpack.c.b16 %v3438, %v3434
        %v4539 = vpack.c.b16 %v3439, %v3435
        %v4540 = vpack.c.b16 %v3440, %v3436
        %v4541 = vpack.c.b16 %v3441, %v3437
        %v4542 = vpack.c.b16 %v3446, %v3442
        %v4543 = vpack.c.b16 %v3447, %v3443
        %v4544 = vpack.c.b16 %v3448, %v3444
        %v4545 = vpack.c.b16 %v3449, %v3445
        %v4546 = vpack.c.b16 %v3454, %v3450
        %v4547 = vpack.c.b16 %v3455, %v3451
        %v4548 = vpack.c.b16 %v3456, %v3452
        %v4549 = vpack.c.b16 %v3457, %v3453
        %v4550 = vpack.c.b16 %v3462, %v3458
        %v4551 = vpack.c.b16 %v3463, %v3459
        %v4552 = vpack.c.b16 %v3464, %v3460
        %v4553 = vpack.c.b16 %v3465, %v3461
        %v4554 = vpack.c.b16 %v3470, %v3466
        %v4555 = vpack.c.b16 %v3471, %v3467
        %v4556 = vpack.c.b16 %v3472, %v3468
        %v4557 = vpack.c.b16 %v3473, %v3469
        %v4558 = vpack.c.b16 %v3478, %v3474
        %v4559 = vpack.c.b16 %v3479, %v3475
        %v4560 = vpack.c.b16 %v3480, %v3476
        %v4561 = vpack.c.b16 %v3481, %v3477
        %v4562 = vpack.c.b16 %v3486, %v3482
        %v4563 = vpack.c.b16 %v3487, %v3483
        %v4564 = vpack.c.b16 %v3488, %v3484
        %v4565 = vpack.c.b16 %v3489, %v3485
        %v4566 = vpack.c.b16 %v3494, %v3490
        %v4567 = vpack.c.b16 %v3495, %v3491
        %v4568 = vpack.c.b16 %v3496, %v3492
        %v4569 = vpack.c.b16 %v3497, %v3493
        %v4570 = vpack.c.b16 %v3502, %v3498
        %v4571 = vpack.c.b16 %v3503, %v3499
        %v4572 = vpack.c.b16 %v3504, %v3500
        %v4573 = vpack.c.b16 %v3505, %v3501
        %v4574 = vpack.c.b16 %v3510, %v3506
        %v4575 = vpack.c.b16 %v3511, %v3507
        %v4576 = vpack.c.b16 %v3512, %v3508
        %v4577 = vpack.c.b16 %v3513, %v3509
        %v4578 = vpack.c.b16 %v3518, %v3514
        %v4579 = vpack.c.b16 %v3519, %v3515
        %v4580 = vpack.c.b16 %v3520, %v3516
        %v4581 = vpack.c.b16 %v3521, %v3517
        %v4582 = vpack.c.b16 %v3526, %v3522
        %v4583 = vpack.c.b16 %v3527, %v3523
        %v4584 = vpack.c.b16 %v3528, %v3524
        %v4585 = vpack.c.b16 %v3529, %v3525
        %v4586 = vpack.c.b16 %v3534, %v3530
        %v4587 = vpack.c.b16 %v3535, %v3531
        %v4588 = vpack.c.b16 %v3536, %v3532
        %v4589 = vpack.c.b16 %v3537, %v3533
        %v4590 = vpack.c.b16 %v3542, %v3538
        %v4591 = vpack.c.b16 %v3543, %v3539
        %v4592 = vpack.c.b16 %v3544, %v3540
        %v4593 = vpack.c.b16 %v3545, %v3541
        %v4594 = vpack.c.b16 %v3550, %v3546
        %v4595 = vpack.c.b16 %v3551, %v3547
        %v4596 = vpack.c.b16 %v3552, %v3548
        %v4597 = vpack.c.b16 %v3553, %v3549
        %v4598 = vpack.c.b16 %v3558, %v3554
        %v4599 = vpack.c.b16 %v3559, %v3555
        %v4600 = vpack.c.b16 %v3560, %v3556
        %v4601 = vpack.c.b16 %v3561, %v3557
        %v4602 = vpack.c.b16 %v3566, %v3562
        %v4603 = vpack.c.b16 %v3567, %v3563
        %v4604 = vpack.c.b16 %v3568, %v3564
        %v4605 = vpack.c.b16 %v3569, %v3565
        %v4606 = vpack.c.b16 %v3574, %v3570
        %v4607 = vpack.c.b16 %v3575, %v3571
        %v4608 = vpack.c.b16 %v3576, %v3572
        %v4609 = vpack.c.b16 %v3577, %v3573
        %v4610 = vpack.c.b16 %v3582, %v3578
        %v4611 = vpack.c.b16 %v3583, %v3579
        %v4612 = vpack.c.b16 %v3584, %v3580
        %v4613 = vpack.c.b16 %v3585, %v3581
        %v4614 = vpack.c.b16 %v3590, %v3586
        %v4615 = vpack.c.b16 %v3591, %v3587
        %v4616 = vpack.c.b16 %v3592, %v3588
        %v4617 = vpack.c.b16 %v3593, %v3589
        %v4618 = vpack.c.b16 %v3598, %v3594
        %v4619 = vpack.c.b16 %v3599, %v3595
        %v4620 = vpack.c.b16 %v3600, %v3596
        %v4621 = vpack.c.b16 %v3601, %v3597
        %v4622 = vpack.c.b16 %v3606, %v3602
        %v4623 = vpack.c.b16 %v3607, %v3603
        %v4624 = vpack.c.b16 %v3608, %v3604
        %v4625 = vpack.c.b16 %v3609, %v3605
        %v4626 = vpack.c.b16 %v3614, %v3610
        %v4627 = vpack.c.b16 %v3615, %v3611
        %v4628 = vpack.c.b16 %v3616, %v3612
        %v4629 = vpack.c.b16 %v3617, %v3613
        %v4630 = vpack.c.b16 %v3622, %v3618
        %v4631 = vpack.c.b16 %v3623, %v3619
        %v4632 = vpack.c.b16 %v3624, %v3620
        %v4633 = vpack.c.b16 %v3625, %v3621
        %v4634 = vpack.c.b16 %v3630, %v3626
        %v4635 = vpack.c.b16 %v3631, %v3627
        %v4636 = vpack.c.b16 %v3632, %v3628
        %v4637 = vpack.c.b16 %v3633, %v3629
        %v4638 = vpack.c.b16 %v3638, %v3634
        %v4639 = vpack.c.b16 %v3639, %v3635
        %v4640 = vpack.c.b16 %v3640, %v3636
        %v4641 = vpack.c.b16 %v3641, %v3637
        %v4642 = vpack.c.b16 %v3646, %v3642
        %v4643 = vpack.c.b16 %v3647, %v3643
        %v4644 = vpack.c.b16 %v3648, %v3644
        %v4645 = vpack.c.b16 %v3649, %v3645
        %v4646 = vpack.c.b16 %v3654, %v3650
        %v4647 = vpack.c.b16 %v3655, %v3651
        %v4648 = vpack.c.b16 %v3656, %v3652
        %v4649 = vpack.c.b16 %v3657, %v3653
        %v4650 = vpack.c.b16 %v3662, %v3658
        %v4651 = vpack.c.b16 %v3663, %v3659
        %v4652 = vpack.c.b16 %v3664, %v3660
        %v4653 = vpack.c.b16 %v3665, %v3661
        %v4654 = vpack.c.b16 %v3670, %v3666
        %v4655 = vpack.c.b16 %v3671, %v3667
        %v4656 = vpack.c.b16 %v3672, %v3668
        %v4657 = vpack.c.b16 %v3673, %v3669
        %v4658 = vpack.c.b16 %v3678, %v3674
        %v4659 = vpack.c.b16 %v3679, %v3675
        %v4660 = vpack.c.b16 %v3680, %v3676
        %v4661 = vpack.c.b16 %v3681, %v3677
        %v4662 = vpack.c.b16 %v3686, %v3682
        %v4663 = vpack.c.b16 %v3687, %v3683
        %v4664 = vpack.c.b16 %v3688, %v3684
        %v4665 = vpack.c.b16 %v3689, %v3685
        %v4666 = vpack.c.b16 %v3694, %v3690
        %v4667 = vpack.c.b16 %v3695, %v3691
        %v4668 = vpack.c.b16 %v3696, %v3692
        %v4669 = vpack.c.b16 %v3697, %v3693
        %v4670 = vpack.c.b16 %v3702, %v3698
        %v4671 = vpack.c.b16 %v3703, %v3699
        %v4672 = vpack.c.b16 %v3704, %v3700
        %v4673 = vpack.c.b16 %v3705, %v3701
        %v4674 = vpack.c.b16 %v3710, %v3706
        %v4675 = vpack.c.b16 %v3711, %v3707
        %v4676 = vpack.c.b16 %v3712, %v3708
        %v4677 = vpack.c.b16 %v3713, %v3709
        %v4678 = vpack.c.b16 %v3718, %v3714
        %v4679 = vpack.c.b16 %v3719, %v3715
        %v4680 = vpack.c.b16 %v3720, %v3716
        %v4681 = vpack.c.b16 %v3721, %v3717
        %v4682 = vpack.c.b16 %v3726, %v3722
        %v4683 = vpack.c.b16 %v3727, %v3723
        %v4684 = vpack.c.b16 %v3728, %v3724
        %v4685 = vpack.c.b16 %v3729, %v3725
        %v4686 = vpack.c.b16 %v3734, %v3730
        %v4687 = vpack.c.b16 %v3735, %v3731
        %v4688 = vpack.c.b16 %v3736, %v3732
        %v4689 = vpack.c.b16 %v3737, %v3733
        %v4690 = vpack.c.b16 %v3742, %v3738
        %v4691 = vpack.c.b16 %v3743, %v3739
        %v4692 = vpack.c.b16 %v3744, %v3740
        %v4693 = vpack.c.b16 %v3745, %v3741
        %v4694 = vpack.c.b16 %v3750, %v3746
        %v4695 = vpack.c.b16 %v3751, %v3747
        %v4696 = vpack.c.b16 %v3752, %v3748
        %v4697 = vpack.c.b16 %v3753, %v3749
        %v4698 = vpack.c.b16 %v3758, %v3754
        %v4699 = vpack.c.b16 %v3759, %v3755
        %v4700 = vpack.c.b16 %v3760, %v3756
        %v4701 = vpack.c.b16 %v3761, %v3757
        %v4702 = vpack.c.b16 %v3766, %v3762
        %v4703 = vpack.c.b16 %v3767, %v3763
        %v4704 = vpack.c.b16 %v3768, %v3764
        %v4705 = vpack.c.b16 %v3769, %v3765
        %v4706 = vpack.c.b16 %v3774, %v3770
        %v4707 = vpack.c.b16 %v3775, %v3771
        %v4708 = vpack.c.b16 %v3776, %v3772
        %v4709 = vpack.c.b16 %v3777, %v3773
        %v4710 = vpack.c.b16 %v3782, %v3778
        %v4711 = vpack.c.b16 %v3783, %v3779
        %v4712 = vpack.c.b16 %v3784, %v3780
        %v4713 = vpack.c.b16 %v3785, %v3781
        %v4714 = vpack.c.b16 %v3790, %v3786
        %v4715 = vpack.c.b16 %v3791, %v3787
        %v4716 = vpack.c.b16 %v3792, %v3788
        %v4717 = vpack.c.b16 %v3793, %v3789
        %v4718 = vpack.c.b16 %v3798, %v3794
        %v4719 = vpack.c.b16 %v3799, %v3795
        %v4720 = vpack.c.b16 %v3800, %v3796
        %v4721 = vpack.c.b16 %v3801, %v3797
        %v4722 = vpack.c.b16 %v3806, %v3802
        %v4723 = vpack.c.b16 %v3807, %v3803
        %v4724 = vpack.c.b16 %v3808, %v3804
        %v4725 = vpack.c.b16 %v3809, %v3805
        %v4726 = vpack.c.b16 %v3814, %v3810
        %v4727 = vpack.c.b16 %v3815, %v3811
        %v4728 = vpack.c.b16 %v3816, %v3812
        %v4729 = vpack.c.b16 %v3817, %v3813
        %v4730 = vpack.c.b16 %v3822, %v3818
        %v4731 = vpack.c.b16 %v3823, %v3819
        %v4732 = vpack.c.b16 %v3824, %v3820
        %v4733 = vpack.c.b16 %v3825, %v3821
        %v4734 = vpack.c.b16 %v3830, %v3826
        %v4735 = vpack.c.b16 %v3831, %v3827
        %v4736 = vpack.c.b16 %v3832, %v3828
        %v4737 = vpack.c.b16 %v3833, %v3829
        %v4738 = vpack.c.b16 %v3838, %v3834
        %v4739 = vpack.c.b16 %v3839, %v3835
        %v4740 = vpack.c.b16 %v3840, %v3836
        %v4741 = vpack.c.b16 %v3841, %v3837
        %v4742 = vpack.c.b16 %v3846, %v3842
        %v4743 = vpack.c.b16 %v3847, %v3843
        %v4744 = vpack.c.b16 %v3848, %v3844
        %v4745 = vpack.c.b16 %v3849, %v3845
        %v4746 = vpack.c.b16 %v3854, %v3850
        %v4747 = vpack.c.b16 %v3855, %v3851
        %v4748 = vpack.c.b16 %v3856, %v3852
        %v4749 = vpack.c.b16 %v3857, %v3853
        %v4750 = vpack.c.b16 %v3862, %v3858
        %v4751 = vpack.c.b16 %v3863, %v3859
        %v4752 = vpack.c.b16 %v3864, %v3860
        %v4753 = vpack.c.b16 %v3865, %v3861
        %v4754 = vpack.c.b16 %v3870, %v3866
        %v4755 = vpack.c.b16 %v3871, %v3867
        %v4756 = vpack.c.b16 %v3872, %v3868
        %v4757 = vpack.c.b16 %v3873, %v3869
        %v4758 = vpack.c.b16 %v3878, %v3874
        %v4759 = vpack.c.b16 %v3879, %v3875
        %v4760 = vpack.c.b16 %v3880, %v3876
        %v4761 = vpack.c.b16 %v3881, %v3877
        %v4762 = vpack.c.b16 %v3886, %v3882
        %v4763 = vpack.c.b16 %v3887, %v3883
        %v4764 = vpack.c.b16 %v3888, %v3884
        %v4765 = vpack.c.b16 %v3889, %v3885
        %v4766 = vpack.c.b16 %v3894, %v3890
        %v4767 = vpack.c.b16 %v3895, %v3891
        %v4768 = vpack.c.b16 %v3896, %v3892
        %v4769 = vpack.c.b16 %v3897, %v3893
        %v4770 = vpack.c.b16 %v3902, %v3898
        %v4771 = vpack.c.b16 %v3903, %v3899
        %v4772 = vpack.c.b16 %v3904, %v3900
        %v4773 = vpack.c.b16 %v3905, %v3901
        %v4774 = vpack.c.b16 %v3910, %v3906
        %v4775 = vpack.c.b16 %v3911, %v3907
        %v4776 = vpack.c.b16 %v3912, %v3908
        %v4777 = vpack.c.b16 %v3913, %v3909
        %v4778 = vpack.c.b16 %v3918, %v3914
        %v4779 = vpack.c.b16 %v3919, %v3915
        %v4780 = vpack.c.b16 %v3920, %v3916
        %v4781 = vpack.c.b16 %v3921, %v3917
        %v4782 = vpack.c.b16 %v3926, %v3922
        %v4783 = vpack.c.b16 %v3927, %v3923
        %v4784 = vpack.c.b16 %v3928, %v3924
        %v4785 = vpack.c.b16 %v3929, %v3925
        %v4786 = vpack.c.b16 %v3934, %v3930
        %v4787 = vpack.c.b16 %v3935, %v3931
        %v4788 = vpack.c.b16 %v3936, %v3932
        %v4789 = vpack.c.b16 %v3937, %v3933
        %v4790 = vpack.c.b16 %v3942, %v3938
        %v4791 = vpack.c.b16 %v3943, %v3939
        %v4792 = vpack.c.b16 %v3944, %v3940
        %v4793 = vpack.c.b16 %v3945, %v3941
        %v4794 = vpack.c.b16 %v3950, %v3946
        %v4795 = vpack.c.b16 %v3951, %v3947
        %v4796 = vpack.c.b16 %v3952, %v3948
        %v4797 = vpack.c.b16 %v3953, %v3949
        %v4798 = vpack.c.b16 %v3958, %v3954
        %v4799 = vpack.c.b16 %v3959, %v3955
        %v4800 = vpack.c.b16 %v3960, %v3956
        %v4801 = vpack.c.b16 %v3961, %v3957
        %v4802 = vpack.c.b16 %v3966, %v3962
        %v4803 = vpack.c.b16 %v3967, %v3963
        %v4804 = vpack.c.b16 %v3968, %v3964
        %v4805 = vpack.c.b16 %v3969, %v3965
        %v4806 = vpack.c.b16 %v3974, %v3970
        %v4807 = vpack.c.b16 %v3975, %v3971
        %v4808 = vpack.c.b16 %v3976, %v3972
        %v4809 = vpack.c.b16 %v3977, %v3973
        %v4810 = vpack.c.b16 %v3982, %v3978
        %v4811 = vpack.c.b16 %v3983, %v3979
        %v4812 = vpack.c.b16 %v3984, %v3980
        %v4813 = vpack.c.b16 %v3985, %v3981
        %v4814 = vpack.c.b16 %v3990, %v3986
        %v4815 = vpack.c.b16 %v3991, %v3987
        %v4816 = vpack.c.b16 %v3992, %v3988
        %v4817 = vpack.c.b16 %v3993, %v3989
        %v4818 = vpack.c.b16 %v3998, %v3994
        %v4819 = vpack.c.b16 %v3999, %v3995
        %v4820 = vpack.c.b16 %v4000, %v3996
        %v4821 = vpack.c.b16 %v4001, %v3997
        %v4822 = vpack.c.b16 %v4006, %v4002
        %v4823 = vpack.c.b16 %v4007, %v4003
        %v4824 = vpack.c.b16 %v4008, %v4004
        %v4825 = vpack.c.b16 %v4009, %v4005
        %v4826 = vpack.c.b16 %v4014, %v4010
        %v4827 = vpack.c.b16 %v4015, %v4011
        %v4828 = vpack.c.b16 %v4016, %v4012
        %v4829 = vpack.c.b16 %v4017, %v4013
        %v4830 = vpack.c.b16 %v4022, %v4018
        %v4831 = vpack.c.b16 %v4023, %v4019
        %v4832 = vpack.c.b16 %v4024, %v4020
        %v4833 = vpack.c.b16 %v4025, %v4021
        %v4834 = vpack.c.b16 %v4030, %v4026
        %v4835 = vpack.c.b16 %v4031, %v4027
        %v4836 = vpack.c.b16 %v4032, %v4028
        %v4837 = vpack.c.b16 %v4033, %v4029
        %v4838 = vpack.c.b16 %v4038, %v4034
        %v4839 = vpack.c.b16 %v4039, %v4035
        %v4840 = vpack.c.b16 %v4040, %v4036
        %v4841 = vpack.c.b16 %v4041, %v4037
        %v4842 = vpack.c.b16 %v4046, %v4042
        %v4843 = vpack.c.b16 %v4047, %v4043
        %v4844 = vpack.c.b16 %v4048, %v4044
        %v4845 = vpack.c.b16 %v4049, %v4045
        %v4846 = vpack.c.b16 %v4054, %v4050
        %v4847 = vpack.c.b16 %v4055, %v4051
        %v4848 = vpack.c.b16 %v4056, %v4052
        %v4849 = vpack.c.b16 %v4057, %v4053
        %v4850 = vpack.c.b16 %v4062, %v4058
        %v4851 = vpack.c.b16 %v4063, %v4059
        %v4852 = vpack.c.b16 %v4064, %v4060
        %v4853 = vpack.c.b16 %v4065, %v4061
        %v4854 = vpack.c.b16 %v4070, %v4066
        %v4855 = vpack.c.b16 %v4071, %v4067
        %v4856 = vpack.c.b16 %v4072, %v4068
        %v4857 = vpack.c.b16 %v4073, %v4069
        %v4858 = vpack.c.b16 %v4078, %v4074
        %v4859 = vpack.c.b16 %v4079, %v4075
        %v4860 = vpack.c.b16 %v4080, %v4076
        %v4861 = vpack.c.b16 %v4081, %v4077
        %v4862 = vpack.c.b16 %v4086, %v4082
        %v4863 = vpack.c.b16 %v4087, %v4083
        %v4864 = vpack.c.b16 %v4088, %v4084
        %v4865 = vpack.c.b16 %v4089, %v4085
        %v4866 = vpack.c.b16 %v4094, %v4090
        %v4867 = vpack.c.b16 %v4095, %v4091
        %v4868 = vpack.c.b16 %v4096, %v4092
        %v4869 = vpack.c.b16 %v4097, %v4093
        %v4870 = vpack.c.b16 %v4102, %v4098
        %v4871 = vpack.c.b16 %v4103, %v4099
        %v4872 = vpack.c.b16 %v4104, %v4100
        %v4873 = vpack.c.b16 %v4105, %v4101
        %5642 = vmatpush.bf16.msra.mxu0 %v4134
        %5643 = vmatpush.bf16.msra.mxu0 %v4130
        %5644 = vmatpush.bf16.msra.mxu0 %v4126
        %5645 = vmatpush.bf16.msra.mxu0 %v4122
        %5646 = vmatpush.bf16.msra.mxu0 %v4118
        %5647 = vmatpush.bf16.msra.mxu0 %v4114
        %5648 = vmatpush.bf16.msra.mxu0 %v4110
        %5649 = vmatpush.bf16.msra.mxu0 %v4106
        %5650 = vmatmul.bf16.gmra.mxu0 %v1754
        %v5651 = vpop.f32.mrf.mxu0
        %v5652 = vadd.f32 %v1710, %v5651
        %v5653 = vpop.f32.mrf.mxu0
        %5654 = vdwg.mxu0
        %5655 = vmatpush.bf16.msra.mxu0 %v4166
        %5656 = vmatpush.bf16.msra.mxu0 %v4162
        %5657 = vmatpush.bf16.msra.mxu0 %v4158
        %5658 = vmatpush.bf16.msra.mxu0 %v4154
        %5659 = vmatpush.bf16.msra.mxu0 %v4150
        %5660 = vmatpush.bf16.msra.mxu0 %v4146
        %5661 = vmatpush.bf16.msra.mxu0 %v4142
        %5662 = vmatpush.bf16.msra.mxu0 %v4138
        %5663 = vmatmul.bf16.gmra.mxu0 %v1755
        %v5664 = vpop.f32.mrf.mxu0
        %v5665 = vadd.f32 %v5652, %v5664
        %v5666 = vpop.f32.mrf.mxu0
        %5667 = vdwg.mxu0
        %5668 = vmatpush.bf16.msra.mxu0 %v4198
        %5669 = vmatpush.bf16.msra.mxu0 %v4194
        %5670 = vmatpush.bf16.msra.mxu0 %v4190
        %5671 = vmatpush.bf16.msra.mxu0 %v4186
        %5672 = vmatpush.bf16.msra.mxu0 %v4182
        %5673 = vmatpush.bf16.msra.mxu0 %v4178
        %5674 = vmatpush.bf16.msra.mxu0 %v4174
        %5675 = vmatpush.bf16.msra.mxu0 %v4170
        %5676 = vmatmul.bf16.gmra.mxu0 %v1756
        %v5677 = vpop.f32.mrf.mxu0
        %v5678 = vadd.f32 %v5665, %v5677
        %v5679 = vpop.f32.mrf.mxu0
        %5680 = vdwg.mxu0
        %5681 = vmatpush.bf16.msra.mxu0 %v4230
        %5682 = vmatpush.bf16.msra.mxu0 %v4226
        %5683 = vmatpush.bf16.msra.mxu0 %v4222
        %5684 = vmatpush.bf16.msra.mxu0 %v4218
        %5685 = vmatpush.bf16.msra.mxu0 %v4214
        %5686 = vmatpush.bf16.msra.mxu0 %v4210
        %5687 = vmatpush.bf16.msra.mxu0 %v4206
        %5688 = vmatpush.bf16.msra.mxu0 %v4202
        %5689 = vmatmul.bf16.gmra.mxu0 %v1757
        %v5690 = vpop.f32.mrf.mxu0
        %v5691 = vadd.f32 %v5678, %v5690
        %v5692 = vpop.f32.mrf.mxu0
        %5693 = vdwg.mxu0
        %5694 = vmatpush.bf16.msra.mxu0 %v4262
        %5695 = vmatpush.bf16.msra.mxu0 %v4258
        %5696 = vmatpush.bf16.msra.mxu0 %v4254
        %5697 = vmatpush.bf16.msra.mxu0 %v4250
        %5698 = vmatpush.bf16.msra.mxu0 %v4246
        %5699 = vmatpush.bf16.msra.mxu0 %v4242
        %5700 = vmatpush.bf16.msra.mxu0 %v4238
        %5701 = vmatpush.bf16.msra.mxu0 %v4234
        %5702 = vmatmul.bf16.gmra.mxu0 %v1758
        %v5703 = vpop.f32.mrf.mxu0
        %v5704 = vadd.f32 %v5691, %v5703
        %v5705 = vpop.f32.mrf.mxu0
        %5706 = vdwg.mxu0
        %5707 = vmatpush.bf16.msra.mxu0 %v4294
        %5708 = vmatpush.bf16.msra.mxu0 %v4290
        %5709 = vmatpush.bf16.msra.mxu0 %v4286
        %5710 = vmatpush.bf16.msra.mxu0 %v4282
        %5711 = vmatpush.bf16.msra.mxu0 %v4278
        %5712 = vmatpush.bf16.msra.mxu0 %v4274
        %5713 = vmatpush.bf16.msra.mxu0 %v4270
        %5714 = vmatpush.bf16.msra.mxu0 %v4266
        %5715 = vmatmul.bf16.gmra.mxu0 %v1759
        %v5716 = vpop.f32.mrf.mxu0
        %v5717 = vadd.f32 %v5704, %v5716
        %v5718 = vpop.f32.mrf.mxu0
        %5719 = vdwg.mxu0
        %5720 = vmatpush.bf16.msra.mxu0 %v4326
        %5721 = vmatpush.bf16.msra.mxu0 %v4322
        %5722 = vmatpush.bf16.msra.mxu0 %v4318
        %5723 = vmatpush.bf16.msra.mxu0 %v4314
        %5724 = vmatpush.bf16.msra.mxu0 %v4310
        %5725 = vmatpush.bf16.msra.mxu0 %v4306
        %5726 = vmatpush.bf16.msra.mxu0 %v4302
        %5727 = vmatpush.bf16.msra.mxu0 %v4298
        %5728 = vmatmul.bf16.gmra.mxu0 %v1760
        %v5729 = vpop.f32.mrf.mxu0
        %v5730 = vadd.f32 %v5717, %v5729
        %v5731 = vpop.f32.mrf.mxu0
        %5732 = vdwg.mxu0
        %5733 = vmatpush.bf16.msra.mxu0 %v4358
        %5734 = vmatpush.bf16.msra.mxu0 %v4354
        %5735 = vmatpush.bf16.msra.mxu0 %v4350
        %5736 = vmatpush.bf16.msra.mxu0 %v4346
        %5737 = vmatpush.bf16.msra.mxu0 %v4342
        %5738 = vmatpush.bf16.msra.mxu0 %v4338
        %5739 = vmatpush.bf16.msra.mxu0 %v4334
        %5740 = vmatpush.bf16.msra.mxu0 %v4330
        %5741 = vmatmul.bf16.gmra.mxu0 %v1761
        %v5742 = vpop.f32.mrf.mxu0
        %v5743 = vadd.f32 %v5730, %v5742
        %v5744 = vpop.f32.mrf.mxu0
        %5745 = vdwg.mxu0
        %5746 = vmatpush.bf16.msra.mxu0 %v4390
        %5747 = vmatpush.bf16.msra.mxu0 %v4386
        %5748 = vmatpush.bf16.msra.mxu0 %v4382
        %5749 = vmatpush.bf16.msra.mxu0 %v4378
        %5750 = vmatpush.bf16.msra.mxu0 %v4374
        %5751 = vmatpush.bf16.msra.mxu0 %v4370
        %5752 = vmatpush.bf16.msra.mxu0 %v4366
        %5753 = vmatpush.bf16.msra.mxu0 %v4362
        %5754 = vmatmul.bf16.gmra.mxu0 %v1762
        %v5755 = vpop.f32.mrf.mxu0
        %v5756 = vadd.f32 %v5743, %v5755
        %v5757 = vpop.f32.mrf.mxu0
        %5758 = vdwg.mxu0
        %5759 = vmatpush.bf16.msra.mxu0 %v4422
        %5760 = vmatpush.bf16.msra.mxu0 %v4418
        %5761 = vmatpush.bf16.msra.mxu0 %v4414
        %5762 = vmatpush.bf16.msra.mxu0 %v4410
        %5763 = vmatpush.bf16.msra.mxu0 %v4406
        %5764 = vmatpush.bf16.msra.mxu0 %v4402
        %5765 = vmatpush.bf16.msra.mxu0 %v4398
        %5766 = vmatpush.bf16.msra.mxu0 %v4394
        %5767 = vmatmul.bf16.gmra.mxu0 %v1763
        %v5768 = vpop.f32.mrf.mxu0
        %v5769 = vadd.f32 %v5756, %v5768
        %v5770 = vpop.f32.mrf.mxu0
        %5771 = vdwg.mxu0
        %5772 = vmatpush.bf16.msra.mxu0 %v4454
        %5773 = vmatpush.bf16.msra.mxu0 %v4450
        %5774 = vmatpush.bf16.msra.mxu0 %v4446
        %5775 = vmatpush.bf16.msra.mxu0 %v4442
        %5776 = vmatpush.bf16.msra.mxu0 %v4438
        %5777 = vmatpush.bf16.msra.mxu0 %v4434
        %5778 = vmatpush.bf16.msra.mxu0 %v4430
        %5779 = vmatpush.bf16.msra.mxu0 %v4426
        %5780 = vmatmul.bf16.gmra.mxu0 %v1764
        %v5781 = vpop.f32.mrf.mxu0
        %v5782 = vadd.f32 %v5769, %v5781
        %v5783 = vpop.f32.mrf.mxu0
        %5784 = vdwg.mxu0
        %5785 = vmatpush.bf16.msra.mxu0 %v4486
        %5786 = vmatpush.bf16.msra.mxu0 %v4482
        %5787 = vmatpush.bf16.msra.mxu0 %v4478
        %5788 = vmatpush.bf16.msra.mxu0 %v4474
        %5789 = vmatpush.bf16.msra.mxu0 %v4470
        %5790 = vmatpush.bf16.msra.mxu0 %v4466
        %5791 = vmatpush.bf16.msra.mxu0 %v4462
        %5792 = vmatpush.bf16.msra.mxu0 %v4458
        %5793 = vmatmul.bf16.gmra.mxu0 %v1765
        %v5794 = vpop.f32.mrf.mxu0
        %v5795 = vadd.f32 %v5782, %v5794
        %v5796 = vpop.f32.mrf.mxu0
        %5797 = vdwg.mxu0
        %5798 = vmatpush.bf16.msra.mxu0 %v4518
        %5799 = vmatpush.bf16.msra.mxu0 %v4514
        %5800 = vmatpush.bf16.msra.mxu0 %v4510
        %5801 = vmatpush.bf16.msra.mxu0 %v4506
        %5802 = vmatpush.bf16.msra.mxu0 %v4502
        %5803 = vmatpush.bf16.msra.mxu0 %v4498
        %5804 = vmatpush.bf16.msra.mxu0 %v4494
        %5805 = vmatpush.bf16.msra.mxu0 %v4490
        %5806 = vmatmul.bf16.gmra.mxu0 %v1766
        %v5807 = vpop.f32.mrf.mxu0
        %v5808 = vadd.f32 %v5795, %v5807
        %v5809 = vpop.f32.mrf.mxu0
        %5810 = vdwg.mxu0
        %5811 = vmatpush.bf16.msra.mxu0 %v4550
        %5812 = vmatpush.bf16.msra.mxu0 %v4546
        %5813 = vmatpush.bf16.msra.mxu0 %v4542
        %5814 = vmatpush.bf16.msra.mxu0 %v4538
        %5815 = vmatpush.bf16.msra.mxu0 %v4534
        %5816 = vmatpush.bf16.msra.mxu0 %v4530
        %5817 = vmatpush.bf16.msra.mxu0 %v4526
        %5818 = vmatpush.bf16.msra.mxu0 %v4522
        %5819 = vmatmul.bf16.gmra.mxu0 %v1767
        %v5820 = vpop.f32.mrf.mxu0
        %v5821 = vadd.f32 %v5808, %v5820
        %v5822 = vpop.f32.mrf.mxu0
        %5823 = vdwg.mxu0
        %5824 = vmatpush.bf16.msra.mxu0 %v4582
        %5825 = vmatpush.bf16.msra.mxu0 %v4578
        %5826 = vmatpush.bf16.msra.mxu0 %v4574
        %5827 = vmatpush.bf16.msra.mxu0 %v4570
        %5828 = vmatpush.bf16.msra.mxu0 %v4566
        %5829 = vmatpush.bf16.msra.mxu0 %v4562
        %5830 = vmatpush.bf16.msra.mxu0 %v4558
        %5831 = vmatpush.bf16.msra.mxu0 %v4554
        %5832 = vmatmul.bf16.gmra.mxu0 %v1768
        %v5833 = vpop.f32.mrf.mxu0
        %v5834 = vadd.f32 %v5821, %v5833
        %v5835 = vpop.f32.mrf.mxu0
        %5836 = vdwg.mxu0
        %5837 = vmatpush.bf16.msra.mxu0 %v4614
        %5838 = vmatpush.bf16.msra.mxu0 %v4610
        %5839 = vmatpush.bf16.msra.mxu0 %v4606
        %5840 = vmatpush.bf16.msra.mxu0 %v4602
        %5841 = vmatpush.bf16.msra.mxu0 %v4598
        %5842 = vmatpush.bf16.msra.mxu0 %v4594
        %5843 = vmatpush.bf16.msra.mxu0 %v4590
        %5844 = vmatpush.bf16.msra.mxu0 %v4586
        %5845 = vmatmul.bf16.gmra.mxu0 %v1769
        %v5846 = vpop.f32.mrf.mxu0
        %v5847 = vadd.f32 %v5834, %v5846
        %v5848 = vpop.f32.mrf.mxu0
        %5849 = vdwg.mxu0
        %5850 = vmatpush.bf16.msra.mxu0 %v4646
        %5851 = vmatpush.bf16.msra.mxu0 %v4642
        %5852 = vmatpush.bf16.msra.mxu0 %v4638
        %5853 = vmatpush.bf16.msra.mxu0 %v4634
        %5854 = vmatpush.bf16.msra.mxu0 %v4630
        %5855 = vmatpush.bf16.msra.mxu0 %v4626
        %5856 = vmatpush.bf16.msra.mxu0 %v4622
        %5857 = vmatpush.bf16.msra.mxu0 %v4618
        %5858 = vmatmul.bf16.gmra.mxu0 %v1770
        %v5859 = vpop.f32.mrf.mxu0
        %v5860 = vadd.f32 %v5847, %v5859
        %v5861 = vpop.f32.mrf.mxu0
        %5862 = vdwg.mxu0
        %5863 = vmatpush.bf16.msra.mxu0 %v4678
        %5864 = vmatpush.bf16.msra.mxu0 %v4674
        %5865 = vmatpush.bf16.msra.mxu0 %v4670
        %5866 = vmatpush.bf16.msra.mxu0 %v4666
        %5867 = vmatpush.bf16.msra.mxu0 %v4662
        %5868 = vmatpush.bf16.msra.mxu0 %v4658
        %5869 = vmatpush.bf16.msra.mxu0 %v4654
        %5870 = vmatpush.bf16.msra.mxu0 %v4650
        %5871 = vmatmul.bf16.gmra.mxu0 %v1771
        %v5872 = vpop.f32.mrf.mxu0
        %v5873 = vadd.f32 %v5860, %v5872
        %v5874 = vpop.f32.mrf.mxu0
        %5875 = vdwg.mxu0
        %5876 = vmatpush.bf16.msra.mxu0 %v4710
        %5877 = vmatpush.bf16.msra.mxu0 %v4706
        %5878 = vmatpush.bf16.msra.mxu0 %v4702
        %5879 = vmatpush.bf16.msra.mxu0 %v4698
        %5880 = vmatpush.bf16.msra.mxu0 %v4694
        %5881 = vmatpush.bf16.msra.mxu0 %v4690
        %5882 = vmatpush.bf16.msra.mxu0 %v4686
        %5883 = vmatpush.bf16.msra.mxu0 %v4682
        %5884 = vmatmul.bf16.gmra.mxu0 %v1772
        %v5885 = vpop.f32.mrf.mxu0
        %v5886 = vadd.f32 %v5873, %v5885
        %v5887 = vpop.f32.mrf.mxu0
        %5888 = vdwg.mxu0
        %5889 = vmatpush.bf16.msra.mxu0 %v4742
        %5890 = vmatpush.bf16.msra.mxu0 %v4738
        %5891 = vmatpush.bf16.msra.mxu0 %v4734
        %5892 = vmatpush.bf16.msra.mxu0 %v4730
        %5893 = vmatpush.bf16.msra.mxu0 %v4726
        %5894 = vmatpush.bf16.msra.mxu0 %v4722
        %5895 = vmatpush.bf16.msra.mxu0 %v4718
        %5896 = vmatpush.bf16.msra.mxu0 %v4714
        %5897 = vmatmul.bf16.gmra.mxu0 %v1773
        %v5898 = vpop.f32.mrf.mxu0
        %v5899 = vadd.f32 %v5886, %v5898
        %v5900 = vpop.f32.mrf.mxu0
        %5901 = vdwg.mxu0
        %5902 = vmatpush.bf16.msra.mxu0 %v4774
        %5903 = vmatpush.bf16.msra.mxu0 %v4770
        %5904 = vmatpush.bf16.msra.mxu0 %v4766
        %5905 = vmatpush.bf16.msra.mxu0 %v4762
        %5906 = vmatpush.bf16.msra.mxu0 %v4758
        %5907 = vmatpush.bf16.msra.mxu0 %v4754
        %5908 = vmatpush.bf16.msra.mxu0 %v4750
        %5909 = vmatpush.bf16.msra.mxu0 %v4746
        %5910 = vmatmul.bf16.gmra.mxu0 %v1774
        %v5911 = vpop.f32.mrf.mxu0
        %v5912 = vadd.f32 %v5899, %v5911
        %v5913 = vpop.f32.mrf.mxu0
        %5914 = vdwg.mxu0
        %5915 = vmatpush.bf16.msra.mxu0 %v4806
        %5916 = vmatpush.bf16.msra.mxu0 %v4802
        %5917 = vmatpush.bf16.msra.mxu0 %v4798
        %5918 = vmatpush.bf16.msra.mxu0 %v4794
        %5919 = vmatpush.bf16.msra.mxu0 %v4790
        %5920 = vmatpush.bf16.msra.mxu0 %v4786
        %5921 = vmatpush.bf16.msra.mxu0 %v4782
        %5922 = vmatpush.bf16.msra.mxu0 %v4778
        %5923 = vmatmul.bf16.gmra.mxu0 %v1775
        %v5924 = vpop.f32.mrf.mxu0
        %v5925 = vadd.f32 %v5912, %v5924
        %v5926 = vpop.f32.mrf.mxu0
        %5927 = vdwg.mxu0
        %5928 = vmatpush.bf16.msra.mxu0 %v4838
        %5929 = vmatpush.bf16.msra.mxu0 %v4834
        %5930 = vmatpush.bf16.msra.mxu0 %v4830
        %5931 = vmatpush.bf16.msra.mxu0 %v4826
        %5932 = vmatpush.bf16.msra.mxu0 %v4822
        %5933 = vmatpush.bf16.msra.mxu0 %v4818
        %5934 = vmatpush.bf16.msra.mxu0 %v4814
        %5935 = vmatpush.bf16.msra.mxu0 %v4810
        %5936 = vmatmul.bf16.gmra.mxu0 %v1776
        %v5937 = vpop.f32.mrf.mxu0
        %v5938 = vadd.f32 %v5925, %v5937
        %v5939 = vpop.f32.mrf.mxu0
        %5940 = vdwg.mxu0
        %5941 = vmatpush.bf16.msra.mxu0 %v4870
        %5942 = vmatpush.bf16.msra.mxu0 %v4866
        %5943 = vmatpush.bf16.msra.mxu0 %v4862
        %5944 = vmatpush.bf16.msra.mxu0 %v4858
        %5945 = vmatpush.bf16.msra.mxu0 %v4854
        %5946 = vmatpush.bf16.msra.mxu0 %v4850
        %5947 = vmatpush.bf16.msra.mxu0 %v4846
        %5948 = vmatpush.bf16.msra.mxu0 %v4842
        %5949 = vmatmul.bf16.gmra.mxu0 %v1777
        %v5950 = vpop.f32.mrf.mxu0
        %v5951 = vadd.f32 %v5938, %v5950
        %v5952 = vpop.f32.mrf.mxu0
        %5953 = vdwg.mxu0
        %5954 = vmatpush.bf16.msra.mxu0 %v4135
        %5955 = vmatpush.bf16.msra.mxu0 %v4131
        %5956 = vmatpush.bf16.msra.mxu0 %v4127
        %5957 = vmatpush.bf16.msra.mxu0 %v4123
        %5958 = vmatpush.bf16.msra.mxu0 %v4119
        %5959 = vmatpush.bf16.msra.mxu0 %v4115
        %5960 = vmatpush.bf16.msra.mxu0 %v4111
        %5961 = vmatpush.bf16.msra.mxu0 %v4107
        %5962 = vmatmul.bf16.gmra.mxu0 %v1754
        %v5963 = vpop.f32.mrf.mxu0
        %v5964 = vadd.f32 %v1711, %v5963
        %v5965 = vpop.f32.mrf.mxu0
        %5966 = vdwg.mxu0
        %5967 = vmatpush.bf16.msra.mxu0 %v4167
        %5968 = vmatpush.bf16.msra.mxu0 %v4163
        %5969 = vmatpush.bf16.msra.mxu0 %v4159
        %5970 = vmatpush.bf16.msra.mxu0 %v4155
        %5971 = vmatpush.bf16.msra.mxu0 %v4151
        %5972 = vmatpush.bf16.msra.mxu0 %v4147
        %5973 = vmatpush.bf16.msra.mxu0 %v4143
        %5974 = vmatpush.bf16.msra.mxu0 %v4139
        %5975 = vmatmul.bf16.gmra.mxu0 %v1755
        %v5976 = vpop.f32.mrf.mxu0
        %v5977 = vadd.f32 %v5964, %v5976
        %v5978 = vpop.f32.mrf.mxu0
        %5979 = vdwg.mxu0
        %5980 = vmatpush.bf16.msra.mxu0 %v4199
        %5981 = vmatpush.bf16.msra.mxu0 %v4195
        %5982 = vmatpush.bf16.msra.mxu0 %v4191
        %5983 = vmatpush.bf16.msra.mxu0 %v4187
        %5984 = vmatpush.bf16.msra.mxu0 %v4183
        %5985 = vmatpush.bf16.msra.mxu0 %v4179
        %5986 = vmatpush.bf16.msra.mxu0 %v4175
        %5987 = vmatpush.bf16.msra.mxu0 %v4171
        %5988 = vmatmul.bf16.gmra.mxu0 %v1756
        %v5989 = vpop.f32.mrf.mxu0
        %v5990 = vadd.f32 %v5977, %v5989
        %v5991 = vpop.f32.mrf.mxu0
        %5992 = vdwg.mxu0
        %5993 = vmatpush.bf16.msra.mxu0 %v4231
        %5994 = vmatpush.bf16.msra.mxu0 %v4227
        %5995 = vmatpush.bf16.msra.mxu0 %v4223
        %5996 = vmatpush.bf16.msra.mxu0 %v4219
        %5997 = vmatpush.bf16.msra.mxu0 %v4215
        %5998 = vmatpush.bf16.msra.mxu0 %v4211
        %5999 = vmatpush.bf16.msra.mxu0 %v4207
        %6000 = vmatpush.bf16.msra.mxu0 %v4203
        %6001 = vmatmul.bf16.gmra.mxu0 %v1757
        %v6002 = vpop.f32.mrf.mxu0
        %v6003 = vadd.f32 %v5990, %v6002
        %v6004 = vpop.f32.mrf.mxu0
        %6005 = vdwg.mxu0
        %6006 = vmatpush.bf16.msra.mxu0 %v4263
        %6007 = vmatpush.bf16.msra.mxu0 %v4259
        %6008 = vmatpush.bf16.msra.mxu0 %v4255
        %6009 = vmatpush.bf16.msra.mxu0 %v4251
        %6010 = vmatpush.bf16.msra.mxu0 %v4247
        %6011 = vmatpush.bf16.msra.mxu0 %v4243
        %6012 = vmatpush.bf16.msra.mxu0 %v4239
        %6013 = vmatpush.bf16.msra.mxu0 %v4235
        %6014 = vmatmul.bf16.gmra.mxu0 %v1758
        %v6015 = vpop.f32.mrf.mxu0
        %v6016 = vadd.f32 %v6003, %v6015
        %v6017 = vpop.f32.mrf.mxu0
        %6018 = vdwg.mxu0
        %6019 = vmatpush.bf16.msra.mxu0 %v4295
        %6020 = vmatpush.bf16.msra.mxu0 %v4291
        %6021 = vmatpush.bf16.msra.mxu0 %v4287
        %6022 = vmatpush.bf16.msra.mxu0 %v4283
        %6023 = vmatpush.bf16.msra.mxu0 %v4279
        %6024 = vmatpush.bf16.msra.mxu0 %v4275
        %6025 = vmatpush.bf16.msra.mxu0 %v4271
        %6026 = vmatpush.bf16.msra.mxu0 %v4267
        %6027 = vmatmul.bf16.gmra.mxu0 %v1759
        %v6028 = vpop.f32.mrf.mxu0
        %v6029 = vadd.f32 %v6016, %v6028
        %v6030 = vpop.f32.mrf.mxu0
        %6031 = vdwg.mxu0
        %6032 = vmatpush.bf16.msra.mxu0 %v4327
        %6033 = vmatpush.bf16.msra.mxu0 %v4323
        %6034 = vmatpush.bf16.msra.mxu0 %v4319
        %6035 = vmatpush.bf16.msra.mxu0 %v4315
        %6036 = vmatpush.bf16.msra.mxu0 %v4311
        %6037 = vmatpush.bf16.msra.mxu0 %v4307
        %6038 = vmatpush.bf16.msra.mxu0 %v4303
        %6039 = vmatpush.bf16.msra.mxu0 %v4299
        %6040 = vmatmul.bf16.gmra.mxu0 %v1760
        %v6041 = vpop.f32.mrf.mxu0
        %v6042 = vadd.f32 %v6029, %v6041
        %v6043 = vpop.f32.mrf.mxu0
        %6044 = vdwg.mxu0
        %6045 = vmatpush.bf16.msra.mxu0 %v4359
        %6046 = vmatpush.bf16.msra.mxu0 %v4355
        %6047 = vmatpush.bf16.msra.mxu0 %v4351
        %6048 = vmatpush.bf16.msra.mxu0 %v4347
        %6049 = vmatpush.bf16.msra.mxu0 %v4343
        %6050 = vmatpush.bf16.msra.mxu0 %v4339
        %6051 = vmatpush.bf16.msra.mxu0 %v4335
        %6052 = vmatpush.bf16.msra.mxu0 %v4331
        %6053 = vmatmul.bf16.gmra.mxu0 %v1761
        %v6054 = vpop.f32.mrf.mxu0
        %v6055 = vadd.f32 %v6042, %v6054
        %v6056 = vpop.f32.mrf.mxu0
        %6057 = vdwg.mxu0
        %6058 = vmatpush.bf16.msra.mxu0 %v4391
        %6059 = vmatpush.bf16.msra.mxu0 %v4387
        %6060 = vmatpush.bf16.msra.mxu0 %v4383
        %6061 = vmatpush.bf16.msra.mxu0 %v4379
        %6062 = vmatpush.bf16.msra.mxu0 %v4375
        %6063 = vmatpush.bf16.msra.mxu0 %v4371
        %6064 = vmatpush.bf16.msra.mxu0 %v4367
        %6065 = vmatpush.bf16.msra.mxu0 %v4363
        %6066 = vmatmul.bf16.gmra.mxu0 %v1762
        %v6067 = vpop.f32.mrf.mxu0
        %v6068 = vadd.f32 %v6055, %v6067
        %v6069 = vpop.f32.mrf.mxu0
        %6070 = vdwg.mxu0
        %6071 = vmatpush.bf16.msra.mxu0 %v4423
        %6072 = vmatpush.bf16.msra.mxu0 %v4419
        %6073 = vmatpush.bf16.msra.mxu0 %v4415
        %6074 = vmatpush.bf16.msra.mxu0 %v4411
        %6075 = vmatpush.bf16.msra.mxu0 %v4407
        %6076 = vmatpush.bf16.msra.mxu0 %v4403
        %6077 = vmatpush.bf16.msra.mxu0 %v4399
        %6078 = vmatpush.bf16.msra.mxu0 %v4395
        %6079 = vmatmul.bf16.gmra.mxu0 %v1763
        %v6080 = vpop.f32.mrf.mxu0
        %v6081 = vadd.f32 %v6068, %v6080
        %v6082 = vpop.f32.mrf.mxu0
        %6083 = vdwg.mxu0
        %6084 = vmatpush.bf16.msra.mxu0 %v4455
        %6085 = vmatpush.bf16.msra.mxu0 %v4451
        %6086 = vmatpush.bf16.msra.mxu0 %v4447
        %6087 = vmatpush.bf16.msra.mxu0 %v4443
        %6088 = vmatpush.bf16.msra.mxu0 %v4439
        %6089 = vmatpush.bf16.msra.mxu0 %v4435
        %6090 = vmatpush.bf16.msra.mxu0 %v4431
        %6091 = vmatpush.bf16.msra.mxu0 %v4427
        %6092 = vmatmul.bf16.gmra.mxu0 %v1764
        %v6093 = vpop.f32.mrf.mxu0
        %v6094 = vadd.f32 %v6081, %v6093
        %v6095 = vpop.f32.mrf.mxu0
        %6096 = vdwg.mxu0
        %6097 = vmatpush.bf16.msra.mxu0 %v4487
        %6098 = vmatpush.bf16.msra.mxu0 %v4483
        %6099 = vmatpush.bf16.msra.mxu0 %v4479
        %6100 = vmatpush.bf16.msra.mxu0 %v4475
        %6101 = vmatpush.bf16.msra.mxu0 %v4471
        %6102 = vmatpush.bf16.msra.mxu0 %v4467
        %6103 = vmatpush.bf16.msra.mxu0 %v4463
        %6104 = vmatpush.bf16.msra.mxu0 %v4459
        %6105 = vmatmul.bf16.gmra.mxu0 %v1765
        %v6106 = vpop.f32.mrf.mxu0
        %v6107 = vadd.f32 %v6094, %v6106
        %v6108 = vpop.f32.mrf.mxu0
        %6109 = vdwg.mxu0
        %6110 = vmatpush.bf16.msra.mxu0 %v4519
        %6111 = vmatpush.bf16.msra.mxu0 %v4515
        %6112 = vmatpush.bf16.msra.mxu0 %v4511
        %6113 = vmatpush.bf16.msra.mxu0 %v4507
        %6114 = vmatpush.bf16.msra.mxu0 %v4503
        %6115 = vmatpush.bf16.msra.mxu0 %v4499
        %6116 = vmatpush.bf16.msra.mxu0 %v4495
        %6117 = vmatpush.bf16.msra.mxu0 %v4491
        %6118 = vmatmul.bf16.gmra.mxu0 %v1766
        %v6119 = vpop.f32.mrf.mxu0
        %v6120 = vadd.f32 %v6107, %v6119
        %v6121 = vpop.f32.mrf.mxu0
        %6122 = vdwg.mxu0
        %6123 = vmatpush.bf16.msra.mxu0 %v4551
        %6124 = vmatpush.bf16.msra.mxu0 %v4547
        %6125 = vmatpush.bf16.msra.mxu0 %v4543
        %6126 = vmatpush.bf16.msra.mxu0 %v4539
        %6127 = vmatpush.bf16.msra.mxu0 %v4535
        %6128 = vmatpush.bf16.msra.mxu0 %v4531
        %6129 = vmatpush.bf16.msra.mxu0 %v4527
        %6130 = vmatpush.bf16.msra.mxu0 %v4523
        %6131 = vmatmul.bf16.gmra.mxu0 %v1767
        %v6132 = vpop.f32.mrf.mxu0
        %v6133 = vadd.f32 %v6120, %v6132
        %v6134 = vpop.f32.mrf.mxu0
        %6135 = vdwg.mxu0
        %6136 = vmatpush.bf16.msra.mxu0 %v4583
        %6137 = vmatpush.bf16.msra.mxu0 %v4579
        %6138 = vmatpush.bf16.msra.mxu0 %v4575
        %6139 = vmatpush.bf16.msra.mxu0 %v4571
        %6140 = vmatpush.bf16.msra.mxu0 %v4567
        %6141 = vmatpush.bf16.msra.mxu0 %v4563
        %6142 = vmatpush.bf16.msra.mxu0 %v4559
        %6143 = vmatpush.bf16.msra.mxu0 %v4555
        %6144 = vmatmul.bf16.gmra.mxu0 %v1768
        %v6145 = vpop.f32.mrf.mxu0
        %v6146 = vadd.f32 %v6133, %v6145
        %v6147 = vpop.f32.mrf.mxu0
        %6148 = vdwg.mxu0
        %6149 = vmatpush.bf16.msra.mxu0 %v4615
        %6150 = vmatpush.bf16.msra.mxu0 %v4611
        %6151 = vmatpush.bf16.msra.mxu0 %v4607
        %6152 = vmatpush.bf16.msra.mxu0 %v4603
        %6153 = vmatpush.bf16.msra.mxu0 %v4599
        %6154 = vmatpush.bf16.msra.mxu0 %v4595
        %6155 = vmatpush.bf16.msra.mxu0 %v4591
        %6156 = vmatpush.bf16.msra.mxu0 %v4587
        %6157 = vmatmul.bf16.gmra.mxu0 %v1769
        %v6158 = vpop.f32.mrf.mxu0
        %v6159 = vadd.f32 %v6146, %v6158
        %v6160 = vpop.f32.mrf.mxu0
        %6161 = vdwg.mxu0
        %6162 = vmatpush.bf16.msra.mxu0 %v4647
        %6163 = vmatpush.bf16.msra.mxu0 %v4643
        %6164 = vmatpush.bf16.msra.mxu0 %v4639
        %6165 = vmatpush.bf16.msra.mxu0 %v4635
        %6166 = vmatpush.bf16.msra.mxu0 %v4631
        %6167 = vmatpush.bf16.msra.mxu0 %v4627
        %6168 = vmatpush.bf16.msra.mxu0 %v4623
        %6169 = vmatpush.bf16.msra.mxu0 %v4619
        %6170 = vmatmul.bf16.gmra.mxu0 %v1770
        %v6171 = vpop.f32.mrf.mxu0
        %v6172 = vadd.f32 %v6159, %v6171
        %v6173 = vpop.f32.mrf.mxu0
        %6174 = vdwg.mxu0
        %6175 = vmatpush.bf16.msra.mxu0 %v4679
        %6176 = vmatpush.bf16.msra.mxu0 %v4675
        %6177 = vmatpush.bf16.msra.mxu0 %v4671
        %6178 = vmatpush.bf16.msra.mxu0 %v4667
        %6179 = vmatpush.bf16.msra.mxu0 %v4663
        %6180 = vmatpush.bf16.msra.mxu0 %v4659
        %6181 = vmatpush.bf16.msra.mxu0 %v4655
        %6182 = vmatpush.bf16.msra.mxu0 %v4651
        %6183 = vmatmul.bf16.gmra.mxu0 %v1771
        %v6184 = vpop.f32.mrf.mxu0
        %v6185 = vadd.f32 %v6172, %v6184
        %v6186 = vpop.f32.mrf.mxu0
        %6187 = vdwg.mxu0
        %6188 = vmatpush.bf16.msra.mxu0 %v4711
        %6189 = vmatpush.bf16.msra.mxu0 %v4707
        %6190 = vmatpush.bf16.msra.mxu0 %v4703
        %6191 = vmatpush.bf16.msra.mxu0 %v4699
        %6192 = vmatpush.bf16.msra.mxu0 %v4695
        %6193 = vmatpush.bf16.msra.mxu0 %v4691
        %6194 = vmatpush.bf16.msra.mxu0 %v4687
        %6195 = vmatpush.bf16.msra.mxu0 %v4683
        %6196 = vmatmul.bf16.gmra.mxu0 %v1772
        %v6197 = vpop.f32.mrf.mxu0
        %v6198 = vadd.f32 %v6185, %v6197
        %v6199 = vpop.f32.mrf.mxu0
        %6200 = vdwg.mxu0
        %6201 = vmatpush.bf16.msra.mxu0 %v4743
        %6202 = vmatpush.bf16.msra.mxu0 %v4739
        %6203 = vmatpush.bf16.msra.mxu0 %v4735
        %6204 = vmatpush.bf16.msra.mxu0 %v4731
        %6205 = vmatpush.bf16.msra.mxu0 %v4727
        %6206 = vmatpush.bf16.msra.mxu0 %v4723
        %6207 = vmatpush.bf16.msra.mxu0 %v4719
        %6208 = vmatpush.bf16.msra.mxu0 %v4715
        %6209 = vmatmul.bf16.gmra.mxu0 %v1773
        %v6210 = vpop.f32.mrf.mxu0
        %v6211 = vadd.f32 %v6198, %v6210
        %v6212 = vpop.f32.mrf.mxu0
        %6213 = vdwg.mxu0
        %6214 = vmatpush.bf16.msra.mxu0 %v4775
        %6215 = vmatpush.bf16.msra.mxu0 %v4771
        %6216 = vmatpush.bf16.msra.mxu0 %v4767
        %6217 = vmatpush.bf16.msra.mxu0 %v4763
        %6218 = vmatpush.bf16.msra.mxu0 %v4759
        %6219 = vmatpush.bf16.msra.mxu0 %v4755
        %6220 = vmatpush.bf16.msra.mxu0 %v4751
        %6221 = vmatpush.bf16.msra.mxu0 %v4747
        %6222 = vmatmul.bf16.gmra.mxu0 %v1774
        %v6223 = vpop.f32.mrf.mxu0
        %v6224 = vadd.f32 %v6211, %v6223
        %v6225 = vpop.f32.mrf.mxu0
        %6226 = vdwg.mxu0
        %6227 = vmatpush.bf16.msra.mxu0 %v4807
        %6228 = vmatpush.bf16.msra.mxu0 %v4803
        %6229 = vmatpush.bf16.msra.mxu0 %v4799
        %6230 = vmatpush.bf16.msra.mxu0 %v4795
        %6231 = vmatpush.bf16.msra.mxu0 %v4791
        %6232 = vmatpush.bf16.msra.mxu0 %v4787
        %6233 = vmatpush.bf16.msra.mxu0 %v4783
        %6234 = vmatpush.bf16.msra.mxu0 %v4779
        %6235 = vmatmul.bf16.gmra.mxu0 %v1775
        %v6236 = vpop.f32.mrf.mxu0
        %v6237 = vadd.f32 %v6224, %v6236
        %v6238 = vpop.f32.mrf.mxu0
        %6239 = vdwg.mxu0
        %6240 = vmatpush.bf16.msra.mxu0 %v4839
        %6241 = vmatpush.bf16.msra.mxu0 %v4835
        %6242 = vmatpush.bf16.msra.mxu0 %v4831
        %6243 = vmatpush.bf16.msra.mxu0 %v4827
        %6244 = vmatpush.bf16.msra.mxu0 %v4823
        %6245 = vmatpush.bf16.msra.mxu0 %v4819
        %6246 = vmatpush.bf16.msra.mxu0 %v4815
        %6247 = vmatpush.bf16.msra.mxu0 %v4811
        %6248 = vmatmul.bf16.gmra.mxu0 %v1776
        %v6249 = vpop.f32.mrf.mxu0
        %v6250 = vadd.f32 %v6237, %v6249
        %v6251 = vpop.f32.mrf.mxu0
        %6252 = vdwg.mxu0
        %6253 = vmatpush.bf16.msra.mxu0 %v4871
        %6254 = vmatpush.bf16.msra.mxu0 %v4867
        %6255 = vmatpush.bf16.msra.mxu0 %v4863
        %6256 = vmatpush.bf16.msra.mxu0 %v4859
        %6257 = vmatpush.bf16.msra.mxu0 %v4855
        %6258 = vmatpush.bf16.msra.mxu0 %v4851
        %6259 = vmatpush.bf16.msra.mxu0 %v4847
        %6260 = vmatpush.bf16.msra.mxu0 %v4843
        %6261 = vmatmul.bf16.gmra.mxu0 %v1777
        %v6262 = vpop.f32.mrf.mxu0
        %v6263 = vadd.f32 %v6250, %v6262
        %v6264 = vpop.f32.mrf.mxu0
        %6265 = vdwg.mxu0
        %6266 = vmatpush.bf16.msra.mxu0 %v4136
        %6267 = vmatpush.bf16.msra.mxu0 %v4132
        %6268 = vmatpush.bf16.msra.mxu0 %v4128
        %6269 = vmatpush.bf16.msra.mxu0 %v4124
        %6270 = vmatpush.bf16.msra.mxu0 %v4120
        %6271 = vmatpush.bf16.msra.mxu0 %v4116
        %6272 = vmatpush.bf16.msra.mxu0 %v4112
        %6273 = vmatpush.bf16.msra.mxu0 %v4108
        %6274 = vmatmul.bf16.gmra.mxu0 %v1754
        %v6275 = vpop.f32.mrf.mxu0
        %v6276 = vadd.f32 %v1712, %v6275
        %v6277 = vpop.f32.mrf.mxu0
        %6278 = vdwg.mxu0
        %6279 = vmatpush.bf16.msra.mxu0 %v4168
        %6280 = vmatpush.bf16.msra.mxu0 %v4164
        %6281 = vmatpush.bf16.msra.mxu0 %v4160
        %6282 = vmatpush.bf16.msra.mxu0 %v4156
        %6283 = vmatpush.bf16.msra.mxu0 %v4152
        %6284 = vmatpush.bf16.msra.mxu0 %v4148
        %6285 = vmatpush.bf16.msra.mxu0 %v4144
        %6286 = vmatpush.bf16.msra.mxu0 %v4140
        %6287 = vmatmul.bf16.gmra.mxu0 %v1755
        %v6288 = vpop.f32.mrf.mxu0
        %v6289 = vadd.f32 %v6276, %v6288
        %v6290 = vpop.f32.mrf.mxu0
        %6291 = vdwg.mxu0
        %6292 = vmatpush.bf16.msra.mxu0 %v4200
        %6293 = vmatpush.bf16.msra.mxu0 %v4196
        %6294 = vmatpush.bf16.msra.mxu0 %v4192
        %6295 = vmatpush.bf16.msra.mxu0 %v4188
        %6296 = vmatpush.bf16.msra.mxu0 %v4184
        %6297 = vmatpush.bf16.msra.mxu0 %v4180
        %6298 = vmatpush.bf16.msra.mxu0 %v4176
        %6299 = vmatpush.bf16.msra.mxu0 %v4172
        %6300 = vmatmul.bf16.gmra.mxu0 %v1756
        %v6301 = vpop.f32.mrf.mxu0
        %v6302 = vadd.f32 %v6289, %v6301
        %v6303 = vpop.f32.mrf.mxu0
        %6304 = vdwg.mxu0
        %6305 = vmatpush.bf16.msra.mxu0 %v4232
        %6306 = vmatpush.bf16.msra.mxu0 %v4228
        %6307 = vmatpush.bf16.msra.mxu0 %v4224
        %6308 = vmatpush.bf16.msra.mxu0 %v4220
        %6309 = vmatpush.bf16.msra.mxu0 %v4216
        %6310 = vmatpush.bf16.msra.mxu0 %v4212
        %6311 = vmatpush.bf16.msra.mxu0 %v4208
        %6312 = vmatpush.bf16.msra.mxu0 %v4204
        %6313 = vmatmul.bf16.gmra.mxu0 %v1757
        %v6314 = vpop.f32.mrf.mxu0
        %v6315 = vadd.f32 %v6302, %v6314
        %v6316 = vpop.f32.mrf.mxu0
        %6317 = vdwg.mxu0
        %6318 = vmatpush.bf16.msra.mxu0 %v4264
        %6319 = vmatpush.bf16.msra.mxu0 %v4260
        %6320 = vmatpush.bf16.msra.mxu0 %v4256
        %6321 = vmatpush.bf16.msra.mxu0 %v4252
        %6322 = vmatpush.bf16.msra.mxu0 %v4248
        %6323 = vmatpush.bf16.msra.mxu0 %v4244
        %6324 = vmatpush.bf16.msra.mxu0 %v4240
        %6325 = vmatpush.bf16.msra.mxu0 %v4236
        %6326 = vmatmul.bf16.gmra.mxu0 %v1758
        %v6327 = vpop.f32.mrf.mxu0
        %v6328 = vadd.f32 %v6315, %v6327
        %v6329 = vpop.f32.mrf.mxu0
        %6330 = vdwg.mxu0
        %6331 = vmatpush.bf16.msra.mxu0 %v4296
        %6332 = vmatpush.bf16.msra.mxu0 %v4292
        %6333 = vmatpush.bf16.msra.mxu0 %v4288
        %6334 = vmatpush.bf16.msra.mxu0 %v4284
        %6335 = vmatpush.bf16.msra.mxu0 %v4280
        %6336 = vmatpush.bf16.msra.mxu0 %v4276
        %6337 = vmatpush.bf16.msra.mxu0 %v4272
        %6338 = vmatpush.bf16.msra.mxu0 %v4268
        %6339 = vmatmul.bf16.gmra.mxu0 %v1759
        %v6340 = vpop.f32.mrf.mxu0
        %v6341 = vadd.f32 %v6328, %v6340
        %v6342 = vpop.f32.mrf.mxu0
        %6343 = vdwg.mxu0
        %6344 = vmatpush.bf16.msra.mxu0 %v4328
        %6345 = vmatpush.bf16.msra.mxu0 %v4324
        %6346 = vmatpush.bf16.msra.mxu0 %v4320
        %6347 = vmatpush.bf16.msra.mxu0 %v4316
        %6348 = vmatpush.bf16.msra.mxu0 %v4312
        %6349 = vmatpush.bf16.msra.mxu0 %v4308
        %6350 = vmatpush.bf16.msra.mxu0 %v4304
        %6351 = vmatpush.bf16.msra.mxu0 %v4300
        %6352 = vmatmul.bf16.gmra.mxu0 %v1760
        %v6353 = vpop.f32.mrf.mxu0
        %v6354 = vadd.f32 %v6341, %v6353
        %v6355 = vpop.f32.mrf.mxu0
        %6356 = vdwg.mxu0
        %6357 = vmatpush.bf16.msra.mxu0 %v4360
        %6358 = vmatpush.bf16.msra.mxu0 %v4356
        %6359 = vmatpush.bf16.msra.mxu0 %v4352
        %6360 = vmatpush.bf16.msra.mxu0 %v4348
        %6361 = vmatpush.bf16.msra.mxu0 %v4344
        %6362 = vmatpush.bf16.msra.mxu0 %v4340
        %6363 = vmatpush.bf16.msra.mxu0 %v4336
        %6364 = vmatpush.bf16.msra.mxu0 %v4332
        %6365 = vmatmul.bf16.gmra.mxu0 %v1761
        %v6366 = vpop.f32.mrf.mxu0
        %v6367 = vadd.f32 %v6354, %v6366
        %v6368 = vpop.f32.mrf.mxu0
        %6369 = vdwg.mxu0
        %6370 = vmatpush.bf16.msra.mxu0 %v4392
        %6371 = vmatpush.bf16.msra.mxu0 %v4388
        %6372 = vmatpush.bf16.msra.mxu0 %v4384
        %6373 = vmatpush.bf16.msra.mxu0 %v4380
        %6374 = vmatpush.bf16.msra.mxu0 %v4376
        %6375 = vmatpush.bf16.msra.mxu0 %v4372
        %6376 = vmatpush.bf16.msra.mxu0 %v4368
        %6377 = vmatpush.bf16.msra.mxu0 %v4364
        %6378 = vmatmul.bf16.gmra.mxu0 %v1762
        %v6379 = vpop.f32.mrf.mxu0
        %v6380 = vadd.f32 %v6367, %v6379
        %v6381 = vpop.f32.mrf.mxu0
        %6382 = vdwg.mxu0
        %6383 = vmatpush.bf16.msra.mxu0 %v4424
        %6384 = vmatpush.bf16.msra.mxu0 %v4420
        %6385 = vmatpush.bf16.msra.mxu0 %v4416
        %6386 = vmatpush.bf16.msra.mxu0 %v4412
        %6387 = vmatpush.bf16.msra.mxu0 %v4408
        %6388 = vmatpush.bf16.msra.mxu0 %v4404
        %6389 = vmatpush.bf16.msra.mxu0 %v4400
        %6390 = vmatpush.bf16.msra.mxu0 %v4396
        %6391 = vmatmul.bf16.gmra.mxu0 %v1763
        %v6392 = vpop.f32.mrf.mxu0
        %v6393 = vadd.f32 %v6380, %v6392
        %v6394 = vpop.f32.mrf.mxu0
        %6395 = vdwg.mxu0
        %6396 = vmatpush.bf16.msra.mxu0 %v4456
        %6397 = vmatpush.bf16.msra.mxu0 %v4452
        %6398 = vmatpush.bf16.msra.mxu0 %v4448
        %6399 = vmatpush.bf16.msra.mxu0 %v4444
        %6400 = vmatpush.bf16.msra.mxu0 %v4440
        %6401 = vmatpush.bf16.msra.mxu0 %v4436
        %6402 = vmatpush.bf16.msra.mxu0 %v4432
        %6403 = vmatpush.bf16.msra.mxu0 %v4428
        %6404 = vmatmul.bf16.gmra.mxu0 %v1764
        %v6405 = vpop.f32.mrf.mxu0
        %v6406 = vadd.f32 %v6393, %v6405
        %v6407 = vpop.f32.mrf.mxu0
        %6408 = vdwg.mxu0
        %6409 = vmatpush.bf16.msra.mxu0 %v4488
        %6410 = vmatpush.bf16.msra.mxu0 %v4484
        %6411 = vmatpush.bf16.msra.mxu0 %v4480
        %6412 = vmatpush.bf16.msra.mxu0 %v4476
        %6413 = vmatpush.bf16.msra.mxu0 %v4472
        %6414 = vmatpush.bf16.msra.mxu0 %v4468
        %6415 = vmatpush.bf16.msra.mxu0 %v4464
        %6416 = vmatpush.bf16.msra.mxu0 %v4460
        %6417 = vmatmul.bf16.gmra.mxu0 %v1765
        %v6418 = vpop.f32.mrf.mxu0
        %v6419 = vadd.f32 %v6406, %v6418
        %v6420 = vpop.f32.mrf.mxu0
        %6421 = vdwg.mxu0
        %6422 = vmatpush.bf16.msra.mxu0 %v4520
        %6423 = vmatpush.bf16.msra.mxu0 %v4516
        %6424 = vmatpush.bf16.msra.mxu0 %v4512
        %6425 = vmatpush.bf16.msra.mxu0 %v4508
        %6426 = vmatpush.bf16.msra.mxu0 %v4504
        %6427 = vmatpush.bf16.msra.mxu0 %v4500
        %6428 = vmatpush.bf16.msra.mxu0 %v4496
        %6429 = vmatpush.bf16.msra.mxu0 %v4492
        %6430 = vmatmul.bf16.gmra.mxu0 %v1766
        %v6431 = vpop.f32.mrf.mxu0
        %v6432 = vadd.f32 %v6419, %v6431
        %v6433 = vpop.f32.mrf.mxu0
        %6434 = vdwg.mxu0
        %6435 = vmatpush.bf16.msra.mxu0 %v4552
        %6436 = vmatpush.bf16.msra.mxu0 %v4548
        %6437 = vmatpush.bf16.msra.mxu0 %v4544
        %6438 = vmatpush.bf16.msra.mxu0 %v4540
        %6439 = vmatpush.bf16.msra.mxu0 %v4536
        %6440 = vmatpush.bf16.msra.mxu0 %v4532
        %6441 = vmatpush.bf16.msra.mxu0 %v4528
        %6442 = vmatpush.bf16.msra.mxu0 %v4524
        %6443 = vmatmul.bf16.gmra.mxu0 %v1767
        %v6444 = vpop.f32.mrf.mxu0
        %v6445 = vadd.f32 %v6432, %v6444
        %v6446 = vpop.f32.mrf.mxu0
        %6447 = vdwg.mxu0
        %6448 = vmatpush.bf16.msra.mxu0 %v4584
        %6449 = vmatpush.bf16.msra.mxu0 %v4580
        %6450 = vmatpush.bf16.msra.mxu0 %v4576
        %6451 = vmatpush.bf16.msra.mxu0 %v4572
        %6452 = vmatpush.bf16.msra.mxu0 %v4568
        %6453 = vmatpush.bf16.msra.mxu0 %v4564
        %6454 = vmatpush.bf16.msra.mxu0 %v4560
        %6455 = vmatpush.bf16.msra.mxu0 %v4556
        %6456 = vmatmul.bf16.gmra.mxu0 %v1768
        %v6457 = vpop.f32.mrf.mxu0
        %v6458 = vadd.f32 %v6445, %v6457
        %v6459 = vpop.f32.mrf.mxu0
        %6460 = vdwg.mxu0
        %6461 = vmatpush.bf16.msra.mxu0 %v4616
        %6462 = vmatpush.bf16.msra.mxu0 %v4612
        %6463 = vmatpush.bf16.msra.mxu0 %v4608
        %6464 = vmatpush.bf16.msra.mxu0 %v4604
        %6465 = vmatpush.bf16.msra.mxu0 %v4600
        %6466 = vmatpush.bf16.msra.mxu0 %v4596
        %6467 = vmatpush.bf16.msra.mxu0 %v4592
        %6468 = vmatpush.bf16.msra.mxu0 %v4588
        %6469 = vmatmul.bf16.gmra.mxu0 %v1769
        %v6470 = vpop.f32.mrf.mxu0
        %v6471 = vadd.f32 %v6458, %v6470
        %v6472 = vpop.f32.mrf.mxu0
        %6473 = vdwg.mxu0
        %6474 = vmatpush.bf16.msra.mxu0 %v4648
        %6475 = vmatpush.bf16.msra.mxu0 %v4644
        %6476 = vmatpush.bf16.msra.mxu0 %v4640
        %6477 = vmatpush.bf16.msra.mxu0 %v4636
        %6478 = vmatpush.bf16.msra.mxu0 %v4632
        %6479 = vmatpush.bf16.msra.mxu0 %v4628
        %6480 = vmatpush.bf16.msra.mxu0 %v4624
        %6481 = vmatpush.bf16.msra.mxu0 %v4620
        %6482 = vmatmul.bf16.gmra.mxu0 %v1770
        %v6483 = vpop.f32.mrf.mxu0
        %v6484 = vadd.f32 %v6471, %v6483
        %v6485 = vpop.f32.mrf.mxu0
        %6486 = vdwg.mxu0
        %6487 = vmatpush.bf16.msra.mxu0 %v4680
        %6488 = vmatpush.bf16.msra.mxu0 %v4676
        %6489 = vmatpush.bf16.msra.mxu0 %v4672
        %6490 = vmatpush.bf16.msra.mxu0 %v4668
        %6491 = vmatpush.bf16.msra.mxu0 %v4664
        %6492 = vmatpush.bf16.msra.mxu0 %v4660
        %6493 = vmatpush.bf16.msra.mxu0 %v4656
        %6494 = vmatpush.bf16.msra.mxu0 %v4652
        %6495 = vmatmul.bf16.gmra.mxu0 %v1771
        %v6496 = vpop.f32.mrf.mxu0
        %v6497 = vadd.f32 %v6484, %v6496
        %v6498 = vpop.f32.mrf.mxu0
        %6499 = vdwg.mxu0
        %6500 = vmatpush.bf16.msra.mxu0 %v4712
        %6501 = vmatpush.bf16.msra.mxu0 %v4708
        %6502 = vmatpush.bf16.msra.mxu0 %v4704
        %6503 = vmatpush.bf16.msra.mxu0 %v4700
        %6504 = vmatpush.bf16.msra.mxu0 %v4696
        %6505 = vmatpush.bf16.msra.mxu0 %v4692
        %6506 = vmatpush.bf16.msra.mxu0 %v4688
        %6507 = vmatpush.bf16.msra.mxu0 %v4684
        %6508 = vmatmul.bf16.gmra.mxu0 %v1772
        %v6509 = vpop.f32.mrf.mxu0
        %v6510 = vadd.f32 %v6497, %v6509
        %v6511 = vpop.f32.mrf.mxu0
        %6512 = vdwg.mxu0
        %6513 = vmatpush.bf16.msra.mxu0 %v4744
        %6514 = vmatpush.bf16.msra.mxu0 %v4740
        %6515 = vmatpush.bf16.msra.mxu0 %v4736
        %6516 = vmatpush.bf16.msra.mxu0 %v4732
        %6517 = vmatpush.bf16.msra.mxu0 %v4728
        %6518 = vmatpush.bf16.msra.mxu0 %v4724
        %6519 = vmatpush.bf16.msra.mxu0 %v4720
        %6520 = vmatpush.bf16.msra.mxu0 %v4716
        %6521 = vmatmul.bf16.gmra.mxu0 %v1773
        %v6522 = vpop.f32.mrf.mxu0
        %v6523 = vadd.f32 %v6510, %v6522
        %v6524 = vpop.f32.mrf.mxu0
        %6525 = vdwg.mxu0
        %6526 = vmatpush.bf16.msra.mxu0 %v4776
        %6527 = vmatpush.bf16.msra.mxu0 %v4772
        %6528 = vmatpush.bf16.msra.mxu0 %v4768
        %6529 = vmatpush.bf16.msra.mxu0 %v4764
        %6530 = vmatpush.bf16.msra.mxu0 %v4760
        %6531 = vmatpush.bf16.msra.mxu0 %v4756
        %6532 = vmatpush.bf16.msra.mxu0 %v4752
        %6533 = vmatpush.bf16.msra.mxu0 %v4748
        %6534 = vmatmul.bf16.gmra.mxu0 %v1774
        %v6535 = vpop.f32.mrf.mxu0
        %v6536 = vadd.f32 %v6523, %v6535
        %v6537 = vpop.f32.mrf.mxu0
        %6538 = vdwg.mxu0
        %6539 = vmatpush.bf16.msra.mxu0 %v4808
        %6540 = vmatpush.bf16.msra.mxu0 %v4804
        %6541 = vmatpush.bf16.msra.mxu0 %v4800
        %6542 = vmatpush.bf16.msra.mxu0 %v4796
        %6543 = vmatpush.bf16.msra.mxu0 %v4792
        %6544 = vmatpush.bf16.msra.mxu0 %v4788
        %6545 = vmatpush.bf16.msra.mxu0 %v4784
        %6546 = vmatpush.bf16.msra.mxu0 %v4780
        %6547 = vmatmul.bf16.gmra.mxu0 %v1775
        %v6548 = vpop.f32.mrf.mxu0
        %v6549 = vadd.f32 %v6536, %v6548
        %v6550 = vpop.f32.mrf.mxu0
        %6551 = vdwg.mxu0
        %6552 = vmatpush.bf16.msra.mxu0 %v4840
        %6553 = vmatpush.bf16.msra.mxu0 %v4836
        %6554 = vmatpush.bf16.msra.mxu0 %v4832
        %6555 = vmatpush.bf16.msra.mxu0 %v4828
        %6556 = vmatpush.bf16.msra.mxu0 %v4824
        %6557 = vmatpush.bf16.msra.mxu0 %v4820
        %6558 = vmatpush.bf16.msra.mxu0 %v4816
        %6559 = vmatpush.bf16.msra.mxu0 %v4812
        %6560 = vmatmul.bf16.gmra.mxu0 %v1776
        %v6561 = vpop.f32.mrf.mxu0
        %v6562 = vadd.f32 %v6549, %v6561
        %v6563 = vpop.f32.mrf.mxu0
        %6564 = vdwg.mxu0
        %6565 = vmatpush.bf16.msra.mxu0 %v4872
        %6566 = vmatpush.bf16.msra.mxu0 %v4868
        %6567 = vmatpush.bf16.msra.mxu0 %v4864
        %6568 = vmatpush.bf16.msra.mxu0 %v4860
        %6569 = vmatpush.bf16.msra.mxu0 %v4856
        %6570 = vmatpush.bf16.msra.mxu0 %v4852
        %6571 = vmatpush.bf16.msra.mxu0 %v4848
        %6572 = vmatpush.bf16.msra.mxu0 %v4844
        %6573 = vmatmul.bf16.gmra.mxu0 %v1777
        %v6574 = vpop.f32.mrf.mxu0
        %v6575 = vadd.f32 %v6562, %v6574
        %v6576 = vpop.f32.mrf.mxu0
        %6577 = vdwg.mxu0
        %6578 = vmatpush.bf16.msra.mxu0 %v4137
        %6579 = vmatpush.bf16.msra.mxu0 %v4133
        %6580 = vmatpush.bf16.msra.mxu0 %v4129
        %6581 = vmatpush.bf16.msra.mxu0 %v4125
        %6582 = vmatpush.bf16.msra.mxu0 %v4121
        %6583 = vmatpush.bf16.msra.mxu0 %v4117
        %6584 = vmatpush.bf16.msra.mxu0 %v4113
        %6585 = vmatpush.bf16.msra.mxu0 %v4109
        %6586 = vmatmul.bf16.gmra.mxu0 %v1754
        %v6587 = vpop.f32.mrf.mxu0
        %v6588 = vadd.f32 %v1713, %v6587
        %v6589 = vpop.f32.mrf.mxu0
        %6590 = vdwg.mxu0
        %6591 = vmatpush.bf16.msra.mxu0 %v4169
        %6592 = vmatpush.bf16.msra.mxu0 %v4165
        %6593 = vmatpush.bf16.msra.mxu0 %v4161
        %6594 = vmatpush.bf16.msra.mxu0 %v4157
        %6595 = vmatpush.bf16.msra.mxu0 %v4153
        %6596 = vmatpush.bf16.msra.mxu0 %v4149
        %6597 = vmatpush.bf16.msra.mxu0 %v4145
        %6598 = vmatpush.bf16.msra.mxu0 %v4141
        %6599 = vmatmul.bf16.gmra.mxu0 %v1755
        %v6600 = vpop.f32.mrf.mxu0
        %v6601 = vadd.f32 %v6588, %v6600
        %v6602 = vpop.f32.mrf.mxu0
        %6603 = vdwg.mxu0
        %6604 = vmatpush.bf16.msra.mxu0 %v4201
        %6605 = vmatpush.bf16.msra.mxu0 %v4197
        %6606 = vmatpush.bf16.msra.mxu0 %v4193
        %6607 = vmatpush.bf16.msra.mxu0 %v4189
        %6608 = vmatpush.bf16.msra.mxu0 %v4185
        %6609 = vmatpush.bf16.msra.mxu0 %v4181
        %6610 = vmatpush.bf16.msra.mxu0 %v4177
        %6611 = vmatpush.bf16.msra.mxu0 %v4173
        %6612 = vmatmul.bf16.gmra.mxu0 %v1756
        %v6613 = vpop.f32.mrf.mxu0
        %v6614 = vadd.f32 %v6601, %v6613
        %v6615 = vpop.f32.mrf.mxu0
        %6616 = vdwg.mxu0
        %6617 = vmatpush.bf16.msra.mxu0 %v4233
        %6618 = vmatpush.bf16.msra.mxu0 %v4229
        %6619 = vmatpush.bf16.msra.mxu0 %v4225
        %6620 = vmatpush.bf16.msra.mxu0 %v4221
        %6621 = vmatpush.bf16.msra.mxu0 %v4217
        %6622 = vmatpush.bf16.msra.mxu0 %v4213
        %6623 = vmatpush.bf16.msra.mxu0 %v4209
        %6624 = vmatpush.bf16.msra.mxu0 %v4205
        %6625 = vmatmul.bf16.gmra.mxu0 %v1757
        %v6626 = vpop.f32.mrf.mxu0
        %v6627 = vadd.f32 %v6614, %v6626
        %v6628 = vpop.f32.mrf.mxu0
        %6629 = vdwg.mxu0
        %6630 = vmatpush.bf16.msra.mxu0 %v4265
        %6631 = vmatpush.bf16.msra.mxu0 %v4261
        %6632 = vmatpush.bf16.msra.mxu0 %v4257
        %6633 = vmatpush.bf16.msra.mxu0 %v4253
        %6634 = vmatpush.bf16.msra.mxu0 %v4249
        %6635 = vmatpush.bf16.msra.mxu0 %v4245
        %6636 = vmatpush.bf16.msra.mxu0 %v4241
        %6637 = vmatpush.bf16.msra.mxu0 %v4237
        %6638 = vmatmul.bf16.gmra.mxu0 %v1758
        %v6639 = vpop.f32.mrf.mxu0
        %v6640 = vadd.f32 %v6627, %v6639
        %v6641 = vpop.f32.mrf.mxu0
        %6642 = vdwg.mxu0
        %6643 = vmatpush.bf16.msra.mxu0 %v4297
        %6644 = vmatpush.bf16.msra.mxu0 %v4293
        %6645 = vmatpush.bf16.msra.mxu0 %v4289
        %6646 = vmatpush.bf16.msra.mxu0 %v4285
        %6647 = vmatpush.bf16.msra.mxu0 %v4281
        %6648 = vmatpush.bf16.msra.mxu0 %v4277
        %6649 = vmatpush.bf16.msra.mxu0 %v4273
        %6650 = vmatpush.bf16.msra.mxu0 %v4269
        %6651 = vmatmul.bf16.gmra.mxu0 %v1759
        %v6652 = vpop.f32.mrf.mxu0
        %v6653 = vadd.f32 %v6640, %v6652
        %v6654 = vpop.f32.mrf.mxu0
        %6655 = vdwg.mxu0
        %6656 = vmatpush.bf16.msra.mxu0 %v4329
        %6657 = vmatpush.bf16.msra.mxu0 %v4325
        %6658 = vmatpush.bf16.msra.mxu0 %v4321
        %6659 = vmatpush.bf16.msra.mxu0 %v4317
        %6660 = vmatpush.bf16.msra.mxu0 %v4313
        %6661 = vmatpush.bf16.msra.mxu0 %v4309
        %6662 = vmatpush.bf16.msra.mxu0 %v4305
        %6663 = vmatpush.bf16.msra.mxu0 %v4301
        %6664 = vmatmul.bf16.gmra.mxu0 %v1760
        %v6665 = vpop.f32.mrf.mxu0
        %v6666 = vadd.f32 %v6653, %v6665
        %v6667 = vpop.f32.mrf.mxu0
        %6668 = vdwg.mxu0
        %6669 = vmatpush.bf16.msra.mxu0 %v4361
        %6670 = vmatpush.bf16.msra.mxu0 %v4357
        %6671 = vmatpush.bf16.msra.mxu0 %v4353
        %6672 = vmatpush.bf16.msra.mxu0 %v4349
        %6673 = vmatpush.bf16.msra.mxu0 %v4345
        %6674 = vmatpush.bf16.msra.mxu0 %v4341
        %6675 = vmatpush.bf16.msra.mxu0 %v4337
        %6676 = vmatpush.bf16.msra.mxu0 %v4333
        %6677 = vmatmul.bf16.gmra.mxu0 %v1761
        %v6678 = vpop.f32.mrf.mxu0
        %v6679 = vadd.f32 %v6666, %v6678
        %v6680 = vpop.f32.mrf.mxu0
        %6681 = vdwg.mxu0
        %6682 = vmatpush.bf16.msra.mxu0 %v4393
        %6683 = vmatpush.bf16.msra.mxu0 %v4389
        %6684 = vmatpush.bf16.msra.mxu0 %v4385
        %6685 = vmatpush.bf16.msra.mxu0 %v4381
        %6686 = vmatpush.bf16.msra.mxu0 %v4377
        %6687 = vmatpush.bf16.msra.mxu0 %v4373
        %6688 = vmatpush.bf16.msra.mxu0 %v4369
        %6689 = vmatpush.bf16.msra.mxu0 %v4365
        %6690 = vmatmul.bf16.gmra.mxu0 %v1762
        %v6691 = vpop.f32.mrf.mxu0
        %v6692 = vadd.f32 %v6679, %v6691
        %v6693 = vpop.f32.mrf.mxu0
        %6694 = vdwg.mxu0
        %6695 = vmatpush.bf16.msra.mxu0 %v4425
        %6696 = vmatpush.bf16.msra.mxu0 %v4421
        %6697 = vmatpush.bf16.msra.mxu0 %v4417
        %6698 = vmatpush.bf16.msra.mxu0 %v4413
        %6699 = vmatpush.bf16.msra.mxu0 %v4409
        %6700 = vmatpush.bf16.msra.mxu0 %v4405
        %6701 = vmatpush.bf16.msra.mxu0 %v4401
        %6702 = vmatpush.bf16.msra.mxu0 %v4397
        %6703 = vmatmul.bf16.gmra.mxu0 %v1763
        %v6704 = vpop.f32.mrf.mxu0
        %v6705 = vadd.f32 %v6692, %v6704
        %v6706 = vpop.f32.mrf.mxu0
        %6707 = vdwg.mxu0
        %6708 = vmatpush.bf16.msra.mxu0 %v4457
        %6709 = vmatpush.bf16.msra.mxu0 %v4453
        %6710 = vmatpush.bf16.msra.mxu0 %v4449
        %6711 = vmatpush.bf16.msra.mxu0 %v4445
        %6712 = vmatpush.bf16.msra.mxu0 %v4441
        %6713 = vmatpush.bf16.msra.mxu0 %v4437
        %6714 = vmatpush.bf16.msra.mxu0 %v4433
        %6715 = vmatpush.bf16.msra.mxu0 %v4429
        %6716 = vmatmul.bf16.gmra.mxu0 %v1764
        %v6717 = vpop.f32.mrf.mxu0
        %v6718 = vadd.f32 %v6705, %v6717
        %v6719 = vpop.f32.mrf.mxu0
        %6720 = vdwg.mxu0
        %6721 = vmatpush.bf16.msra.mxu0 %v4489
        %6722 = vmatpush.bf16.msra.mxu0 %v4485
        %6723 = vmatpush.bf16.msra.mxu0 %v4481
        %6724 = vmatpush.bf16.msra.mxu0 %v4477
        %6725 = vmatpush.bf16.msra.mxu0 %v4473
        %6726 = vmatpush.bf16.msra.mxu0 %v4469
        %6727 = vmatpush.bf16.msra.mxu0 %v4465
        %6728 = vmatpush.bf16.msra.mxu0 %v4461
        %6729 = vmatmul.bf16.gmra.mxu0 %v1765
        %v6730 = vpop.f32.mrf.mxu0
        %v6731 = vadd.f32 %v6718, %v6730
        %v6732 = vpop.f32.mrf.mxu0
        %6733 = vdwg.mxu0
        %6734 = vmatpush.bf16.msra.mxu0 %v4521
        %6735 = vmatpush.bf16.msra.mxu0 %v4517
        %6736 = vmatpush.bf16.msra.mxu0 %v4513
        %6737 = vmatpush.bf16.msra.mxu0 %v4509
        %6738 = vmatpush.bf16.msra.mxu0 %v4505
        %6739 = vmatpush.bf16.msra.mxu0 %v4501
        %6740 = vmatpush.bf16.msra.mxu0 %v4497
        %6741 = vmatpush.bf16.msra.mxu0 %v4493
        %6742 = vmatmul.bf16.gmra.mxu0 %v1766
        %v6743 = vpop.f32.mrf.mxu0
        %v6744 = vadd.f32 %v6731, %v6743
        %v6745 = vpop.f32.mrf.mxu0
        %6746 = vdwg.mxu0
        %6747 = vmatpush.bf16.msra.mxu0 %v4553
        %6748 = vmatpush.bf16.msra.mxu0 %v4549
        %6749 = vmatpush.bf16.msra.mxu0 %v4545
        %6750 = vmatpush.bf16.msra.mxu0 %v4541
        %6751 = vmatpush.bf16.msra.mxu0 %v4537
        %6752 = vmatpush.bf16.msra.mxu0 %v4533
        %6753 = vmatpush.bf16.msra.mxu0 %v4529
        %6754 = vmatpush.bf16.msra.mxu0 %v4525
        %6755 = vmatmul.bf16.gmra.mxu0 %v1767
        %v6756 = vpop.f32.mrf.mxu0
        %v6757 = vadd.f32 %v6744, %v6756
        %v6758 = vpop.f32.mrf.mxu0
        %6759 = vdwg.mxu0
        %6760 = vmatpush.bf16.msra.mxu0 %v4585
        %6761 = vmatpush.bf16.msra.mxu0 %v4581
        %6762 = vmatpush.bf16.msra.mxu0 %v4577
        %6763 = vmatpush.bf16.msra.mxu0 %v4573
        %6764 = vmatpush.bf16.msra.mxu0 %v4569
        %6765 = vmatpush.bf16.msra.mxu0 %v4565
        %6766 = vmatpush.bf16.msra.mxu0 %v4561
        %6767 = vmatpush.bf16.msra.mxu0 %v4557
        %6768 = vmatmul.bf16.gmra.mxu0 %v1768
        %v6769 = vpop.f32.mrf.mxu0
        %v6770 = vadd.f32 %v6757, %v6769
        %v6771 = vpop.f32.mrf.mxu0
        %6772 = vdwg.mxu0
        %6773 = vmatpush.bf16.msra.mxu0 %v4617
        %6774 = vmatpush.bf16.msra.mxu0 %v4613
        %6775 = vmatpush.bf16.msra.mxu0 %v4609
        %6776 = vmatpush.bf16.msra.mxu0 %v4605
        %6777 = vmatpush.bf16.msra.mxu0 %v4601
        %6778 = vmatpush.bf16.msra.mxu0 %v4597
        %6779 = vmatpush.bf16.msra.mxu0 %v4593
        %6780 = vmatpush.bf16.msra.mxu0 %v4589
        %6781 = vmatmul.bf16.gmra.mxu0 %v1769
        %v6782 = vpop.f32.mrf.mxu0
        %v6783 = vadd.f32 %v6770, %v6782
        %v6784 = vpop.f32.mrf.mxu0
        %6785 = vdwg.mxu0
        %6786 = vmatpush.bf16.msra.mxu0 %v4649
        %6787 = vmatpush.bf16.msra.mxu0 %v4645
        %6788 = vmatpush.bf16.msra.mxu0 %v4641
        %6789 = vmatpush.bf16.msra.mxu0 %v4637
        %6790 = vmatpush.bf16.msra.mxu0 %v4633
        %6791 = vmatpush.bf16.msra.mxu0 %v4629
        %6792 = vmatpush.bf16.msra.mxu0 %v4625
        %6793 = vmatpush.bf16.msra.mxu0 %v4621
        %6794 = vmatmul.bf16.gmra.mxu0 %v1770
        %v6795 = vpop.f32.mrf.mxu0
        %v6796 = vadd.f32 %v6783, %v6795
        %v6797 = vpop.f32.mrf.mxu0
        %6798 = vdwg.mxu0
        %6799 = vmatpush.bf16.msra.mxu0 %v4681
        %6800 = vmatpush.bf16.msra.mxu0 %v4677
        %6801 = vmatpush.bf16.msra.mxu0 %v4673
        %6802 = vmatpush.bf16.msra.mxu0 %v4669
        %6803 = vmatpush.bf16.msra.mxu0 %v4665
        %6804 = vmatpush.bf16.msra.mxu0 %v4661
        %6805 = vmatpush.bf16.msra.mxu0 %v4657
        %6806 = vmatpush.bf16.msra.mxu0 %v4653
        %6807 = vmatmul.bf16.gmra.mxu0 %v1771
        %v6808 = vpop.f32.mrf.mxu0
        %v6809 = vadd.f32 %v6796, %v6808
        %v6810 = vpop.f32.mrf.mxu0
        %6811 = vdwg.mxu0
        %6812 = vmatpush.bf16.msra.mxu0 %v4713
        %6813 = vmatpush.bf16.msra.mxu0 %v4709
        %6814 = vmatpush.bf16.msra.mxu0 %v4705
        %6815 = vmatpush.bf16.msra.mxu0 %v4701
        %6816 = vmatpush.bf16.msra.mxu0 %v4697
        %6817 = vmatpush.bf16.msra.mxu0 %v4693
        %6818 = vmatpush.bf16.msra.mxu0 %v4689
        %6819 = vmatpush.bf16.msra.mxu0 %v4685
        %6820 = vmatmul.bf16.gmra.mxu0 %v1772
        %v6821 = vpop.f32.mrf.mxu0
        %v6822 = vadd.f32 %v6809, %v6821
        %v6823 = vpop.f32.mrf.mxu0
        %6824 = vdwg.mxu0
        %6825 = vmatpush.bf16.msra.mxu0 %v4745
        %6826 = vmatpush.bf16.msra.mxu0 %v4741
        %6827 = vmatpush.bf16.msra.mxu0 %v4737
        %6828 = vmatpush.bf16.msra.mxu0 %v4733
        %6829 = vmatpush.bf16.msra.mxu0 %v4729
        %6830 = vmatpush.bf16.msra.mxu0 %v4725
        %6831 = vmatpush.bf16.msra.mxu0 %v4721
        %6832 = vmatpush.bf16.msra.mxu0 %v4717
        %6833 = vmatmul.bf16.gmra.mxu0 %v1773
        %v6834 = vpop.f32.mrf.mxu0
        %v6835 = vadd.f32 %v6822, %v6834
        %v6836 = vpop.f32.mrf.mxu0
        %6837 = vdwg.mxu0
        %6838 = vmatpush.bf16.msra.mxu0 %v4777
        %6839 = vmatpush.bf16.msra.mxu0 %v4773
        %6840 = vmatpush.bf16.msra.mxu0 %v4769
        %6841 = vmatpush.bf16.msra.mxu0 %v4765
        %6842 = vmatpush.bf16.msra.mxu0 %v4761
        %6843 = vmatpush.bf16.msra.mxu0 %v4757
        %6844 = vmatpush.bf16.msra.mxu0 %v4753
        %6845 = vmatpush.bf16.msra.mxu0 %v4749
        %6846 = vmatmul.bf16.gmra.mxu0 %v1774
        %v6847 = vpop.f32.mrf.mxu0
        %v6848 = vadd.f32 %v6835, %v6847
        %v6849 = vpop.f32.mrf.mxu0
        %6850 = vdwg.mxu0
        %6851 = vmatpush.bf16.msra.mxu0 %v4809
        %6852 = vmatpush.bf16.msra.mxu0 %v4805
        %6853 = vmatpush.bf16.msra.mxu0 %v4801
        %6854 = vmatpush.bf16.msra.mxu0 %v4797
        %6855 = vmatpush.bf16.msra.mxu0 %v4793
        %6856 = vmatpush.bf16.msra.mxu0 %v4789
        %6857 = vmatpush.bf16.msra.mxu0 %v4785
        %6858 = vmatpush.bf16.msra.mxu0 %v4781
        %6859 = vmatmul.bf16.gmra.mxu0 %v1775
        %v6860 = vpop.f32.mrf.mxu0
        %v6861 = vadd.f32 %v6848, %v6860
        %v6862 = vpop.f32.mrf.mxu0
        %6863 = vdwg.mxu0
        %6864 = vmatpush.bf16.msra.mxu0 %v4841
        %6865 = vmatpush.bf16.msra.mxu0 %v4837
        %6866 = vmatpush.bf16.msra.mxu0 %v4833
        %6867 = vmatpush.bf16.msra.mxu0 %v4829
        %6868 = vmatpush.bf16.msra.mxu0 %v4825
        %6869 = vmatpush.bf16.msra.mxu0 %v4821
        %6870 = vmatpush.bf16.msra.mxu0 %v4817
        %6871 = vmatpush.bf16.msra.mxu0 %v4813
        %6872 = vmatmul.bf16.gmra.mxu0 %v1776
        %v6873 = vpop.f32.mrf.mxu0
        %v6874 = vadd.f32 %v6861, %v6873
        %v6875 = vpop.f32.mrf.mxu0
        %6876 = vdwg.mxu0
        %6877 = vmatpush.bf16.msra.mxu0 %v4873
        %6878 = vmatpush.bf16.msra.mxu0 %v4869
        %6879 = vmatpush.bf16.msra.mxu0 %v4865
        %6880 = vmatpush.bf16.msra.mxu0 %v4861
        %6881 = vmatpush.bf16.msra.mxu0 %v4857
        %6882 = vmatpush.bf16.msra.mxu0 %v4853
        %6883 = vmatpush.bf16.msra.mxu0 %v4849
        %6884 = vmatpush.bf16.msra.mxu0 %v4845
        %6885 = vmatmul.bf16.gmra.mxu0 %v1777
        %v6886 = vpop.f32.mrf.mxu0
        %v6887 = vadd.f32 %v6874, %v6886
        %v6888 = vpop.f32.mrf.mxu0
        %6889 = vdwg.mxu0
        %v6890 = vpack.c.bf16 %v5951, %v5951
        %v6891 = vpack.c.bf16 %v6263, %v6263
        %v6892 = vpack.c.bf16 %v6575, %v6575
        %v6893 = vpack.c.bf16 %v6887, %v6887
        %v6894 = vld [vmem:[%s5] sm:$0xf]
        %v6895 = vld [vmem:[%s5 + $0x4] sm:$0xf]
        %v6896 = vld [vmem:[%s5 + $0x8] sm:$0xf]
        %v6897 = vld [vmem:[%s5 + $0xc] sm:$0xf]
        %v6898 = vld [vmem:[%s5 + $0x10] sm:$0xf]
        %v6899 = vld [vmem:[%s5 + $0x14] sm:$0xf]
        %v6900 = vld [vmem:[%s5 + $0x18] sm:$0xf]
        %v6901 = vld [vmem:[%s5 + $0x1c] sm:$0xf]
        %v6902 = vld [vmem:[%s5 + $0x20] sm:$0xf]
        %v6903 = vld [vmem:[%s5 + $0x24] sm:$0xf]
        %v6904 = vld [vmem:[%s5 + $0x28] sm:$0xf]
        %v6905 = vld [vmem:[%s5 + $0x2c] sm:$0xf]
        %v6906 = vld [vmem:[%s5 + $0x30] sm:$0xf]
        %v6907 = vld [vmem:[%s5 + $0x34] sm:$0xf]
        %v6908 = vld [vmem:[%s5 + $0x38] sm:$0xf]
        %v6909 = vld [vmem:[%s5 + $0x3c] sm:$0xf]
        %v6910 = vld [vmem:[%s5 + $0x40] sm:$0xf]
        %v6911 = vld [vmem:[%s5 + $0x44] sm:$0xf]
        %v6912 = vld [vmem:[%s5 + $0x48] sm:$0xf]
        %v6913 = vld [vmem:[%s5 + $0x4c] sm:$0xf]
        %v6914 = vld [vmem:[%s5 + $0x50] sm:$0xf]
        %v6915 = vld [vmem:[%s5 + $0x54] sm:$0xf]
        %v6916 = vld [vmem:[%s5 + $0x58] sm:$0xf]
        %v6917 = vld [vmem:[%s5 + $0x5c] sm:$0xf]
        %v6918 = vld [vmem:[%s5 + $0x60] sm:$0xf]
        %v6919 = vld [vmem:[%s5 + $0x64] sm:$0xf]
        %v6920 = vld [vmem:[%s5 + $0x68] sm:$0xf]
        %v6921 = vld [vmem:[%s5 + $0x6c] sm:$0xf]
        %v6922 = vld [vmem:[%s5 + $0x70] sm:$0xf]
        %v6923 = vld [vmem:[%s5 + $0x74] sm:$0xf]
        %v6924 = vld [vmem:[%s5 + $0x78] sm:$0xf]
        %v6925 = vld [vmem:[%s5 + $0x7c] sm:$0xf]
        %v6926 = vld [vmem:[%s5 + $0x80] sm:$0xf]
        %v6927 = vld [vmem:[%s5 + $0x84] sm:$0xf]
        %v6928 = vld [vmem:[%s5 + $0x88] sm:$0xf]
        %v6929 = vld [vmem:[%s5 + $0x8c] sm:$0xf]
        %v6930 = vld [vmem:[%s5 + $0x90] sm:$0xf]
        %v6931 = vld [vmem:[%s5 + $0x94] sm:$0xf]
        %v6932 = vld [vmem:[%s5 + $0x98] sm:$0xf]
        %v6933 = vld [vmem:[%s5 + $0x9c] sm:$0xf]
        %v6934 = vld [vmem:[%s5 + $0xa0] sm:$0xf]
        %v6935 = vld [vmem:[%s5 + $0xa4] sm:$0xf]
        %v6936 = vld [vmem:[%s5 + $0xa8] sm:$0xf]
        %v6937 = vld [vmem:[%s5 + $0xac] sm:$0xf]
        %v6938 = vld [vmem:[%s5 + $0xb0] sm:$0xf]
        %v6939 = vld [vmem:[%s5 + $0xb4] sm:$0xf]
        %v6940 = vld [vmem:[%s5 + $0xb8] sm:$0xf]
        %v6941 = vld [vmem:[%s5 + $0xbc] sm:$0xf]
        %v6942 = vld [vmem:[%s5 + $0xc0] sm:$0xf]
        %v6943 = vld [vmem:[%s5 + $0xc4] sm:$0xf]
        %v6944 = vld [vmem:[%s5 + $0xc8] sm:$0xf]
        %v6945 = vld [vmem:[%s5 + $0xcc] sm:$0xf]
        %v6946 = vld [vmem:[%s5 + $0xd0] sm:$0xf]
        %v6947 = vld [vmem:[%s5 + $0xd4] sm:$0xf]
        %v6948 = vld [vmem:[%s5 + $0xd8] sm:$0xf]
        %v6949 = vld [vmem:[%s5 + $0xdc] sm:$0xf]
        %v6950 = vld [vmem:[%s5 + $0xe0] sm:$0xf]
        %v6951 = vld [vmem:[%s5 + $0xe4] sm:$0xf]
        %v6952 = vld [vmem:[%s5 + $0xe8] sm:$0xf]
        %v6953 = vld [vmem:[%s5 + $0xec] sm:$0xf]
        %v6954 = vld [vmem:[%s5 + $0xf0] sm:$0xf]
        %v6955 = vld [vmem:[%s5 + $0xf4] sm:$0xf]
        %v6956 = vld [vmem:[%s5 + $0xf8] sm:$0xf]
        %v6957 = vld [vmem:[%s5 + $0xfc] sm:$0xf]
        %v6958 = vld [vmem:[#allocation7] sm:$0x1]
        %v6960 = vperm.slane %v6958, 0
        %v7026 = vunpack.c.l.b16 %v6894
        %v7027 = vunpack.c.l.b16 %v6895
        %v7028 = vunpack.c.l.b16 %v6896
        %v7029 = vunpack.c.l.b16 %v6897
        %v7030 = vunpack.c.l.b16 %v6898
        %v7031 = vunpack.c.l.b16 %v6899
        %v7032 = vunpack.c.l.b16 %v6900
        %v7033 = vunpack.c.l.b16 %v6901
        %v7034 = vunpack.c.l.b16 %v6902
        %v7035 = vunpack.c.l.b16 %v6903
        %v7036 = vunpack.c.l.b16 %v6904
        %v7037 = vunpack.c.l.b16 %v6905
        %v7038 = vunpack.c.l.b16 %v6906
        %v7039 = vunpack.c.l.b16 %v6907
        %v7040 = vunpack.c.l.b16 %v6908
        %v7041 = vunpack.c.l.b16 %v6909
        %v7042 = vunpack.c.l.b16 %v6910
        %v7043 = vunpack.c.l.b16 %v6911
        %v7044 = vunpack.c.l.b16 %v6912
        %v7045 = vunpack.c.l.b16 %v6913
        %v7046 = vunpack.c.l.b16 %v6914
        %v7047 = vunpack.c.l.b16 %v6915
        %v7048 = vunpack.c.l.b16 %v6916
        %v7049 = vunpack.c.l.b16 %v6917
        %v7050 = vunpack.c.l.b16 %v6918
        %v7051 = vunpack.c.l.b16 %v6919
        %v7052 = vunpack.c.l.b16 %v6920
        %v7053 = vunpack.c.l.b16 %v6921
        %v7054 = vunpack.c.l.b16 %v6922
        %v7055 = vunpack.c.l.b16 %v6923
        %v7056 = vunpack.c.l.b16 %v6924
        %v7057 = vunpack.c.l.b16 %v6925
        %v7058 = vunpack.c.l.b16 %v6926
        %v7059 = vunpack.c.l.b16 %v6927
        %v7060 = vunpack.c.l.b16 %v6928
        %v7061 = vunpack.c.l.b16 %v6929
        %v7062 = vunpack.c.l.b16 %v6930
        %v7063 = vunpack.c.l.b16 %v6931
        %v7064 = vunpack.c.l.b16 %v6932
        %v7065 = vunpack.c.l.b16 %v6933
        %v7066 = vunpack.c.l.b16 %v6934
        %v7067 = vunpack.c.l.b16 %v6935
        %v7068 = vunpack.c.l.b16 %v6936
        %v7069 = vunpack.c.l.b16 %v6937
        %v7070 = vunpack.c.l.b16 %v6938
        %v7071 = vunpack.c.l.b16 %v6939
        %v7072 = vunpack.c.l.b16 %v6940
        %v7073 = vunpack.c.l.b16 %v6941
        %v7074 = vunpack.c.l.b16 %v6942
        %v7075 = vunpack.c.l.b16 %v6943
        %v7076 = vunpack.c.l.b16 %v6944
        %v7077 = vunpack.c.l.b16 %v6945
        %v7078 = vunpack.c.l.b16 %v6946
        %v7079 = vunpack.c.l.b16 %v6947
        %v7080 = vunpack.c.l.b16 %v6948
        %v7081 = vunpack.c.l.b16 %v6949
        %v7082 = vunpack.c.l.b16 %v6950
        %v7083 = vunpack.c.l.b16 %v6951
        %v7084 = vunpack.c.l.b16 %v6952
        %v7085 = vunpack.c.l.b16 %v6953
        %v7086 = vunpack.c.l.b16 %v6954
        %v7087 = vunpack.c.l.b16 %v6955
        %v7088 = vunpack.c.l.b16 %v6956
        %v7089 = vunpack.c.l.b16 %v6957
        %v7090 = vpack.c.b16 %v7027, %v7026
        %v7091 = vpack.c.b16 %v7029, %v7028
        %v7092 = vpack.c.b16 %v7031, %v7030
        %v7093 = vpack.c.b16 %v7033, %v7032
        %v7094 = vpack.c.b16 %v7035, %v7034
        %v7095 = vpack.c.b16 %v7037, %v7036
        %v7096 = vpack.c.b16 %v7039, %v7038
        %v7097 = vpack.c.b16 %v7041, %v7040
        %v7098 = vpack.c.b16 %v7043, %v7042
        %v7099 = vpack.c.b16 %v7045, %v7044
        %v7100 = vpack.c.b16 %v7047, %v7046
        %v7101 = vpack.c.b16 %v7049, %v7048
        %v7102 = vpack.c.b16 %v7051, %v7050
        %v7103 = vpack.c.b16 %v7053, %v7052
        %v7104 = vpack.c.b16 %v7055, %v7054
        %v7105 = vpack.c.b16 %v7057, %v7056
        %v7106 = vpack.c.b16 %v7059, %v7058
        %v7107 = vpack.c.b16 %v7061, %v7060
        %v7108 = vpack.c.b16 %v7063, %v7062
        %v7109 = vpack.c.b16 %v7065, %v7064
        %v7110 = vpack.c.b16 %v7067, %v7066
        %v7111 = vpack.c.b16 %v7069, %v7068
        %v7112 = vpack.c.b16 %v7071, %v7070
        %v7113 = vpack.c.b16 %v7073, %v7072
        %v7114 = vpack.c.b16 %v7075, %v7074
        %v7115 = vpack.c.b16 %v7077, %v7076
        %v7116 = vpack.c.b16 %v7079, %v7078
        %v7117 = vpack.c.b16 %v7081, %v7080
        %v7118 = vpack.c.b16 %v7083, %v7082
        %v7119 = vpack.c.b16 %v7085, %v7084
        %v7120 = vpack.c.b16 %v7087, %v7086
        %v7121 = vpack.c.b16 %v7089, %v7088
        %7154 = vmatpush.bf16.msra.mxu0 %v7097
        %7155 = vmatpush.bf16.msra.mxu0 %v7096
        %7156 = vmatpush.bf16.msra.mxu0 %v7095
        %7157 = vmatpush.bf16.msra.mxu0 %v7094
        %7158 = vmatpush.bf16.msra.mxu0 %v7093
        %7159 = vmatpush.bf16.msra.mxu0 %v7092
        %7160 = vmatpush.bf16.msra.mxu0 %v7091
        %7161 = vmatpush.bf16.msra.mxu0 %v7090
        %7162 = vmatmul.bf16.gmra.mxu0 %v6890
        %v7163 = vpop.f32.mrf.mxu0
        %v7164 = vadd.f32 %v6960, %v7163
        %v7165 = vpop.f32.mrf.mxu0
        %7166 = vdwg.mxu0
        %7167 = vmatpush.bf16.msra.mxu0 %v7105
        %7168 = vmatpush.bf16.msra.mxu0 %v7104
        %7169 = vmatpush.bf16.msra.mxu0 %v7103
        %7170 = vmatpush.bf16.msra.mxu0 %v7102
        %7171 = vmatpush.bf16.msra.mxu0 %v7101
        %7172 = vmatpush.bf16.msra.mxu0 %v7100
        %7173 = vmatpush.bf16.msra.mxu0 %v7099
        %7174 = vmatpush.bf16.msra.mxu0 %v7098
        %7175 = vmatmul.bf16.gmra.mxu0 %v6891
        %v7176 = vpop.f32.mrf.mxu0
        %v7177 = vadd.f32 %v7164, %v7176
        %v7178 = vpop.f32.mrf.mxu0
        %7179 = vdwg.mxu0
        %7180 = vmatpush.bf16.msra.mxu0 %v7113
        %7181 = vmatpush.bf16.msra.mxu0 %v7112
        %7182 = vmatpush.bf16.msra.mxu0 %v7111
        %7183 = vmatpush.bf16.msra.mxu0 %v7110
        %7184 = vmatpush.bf16.msra.mxu0 %v7109
        %7185 = vmatpush.bf16.msra.mxu0 %v7108
        %7186 = vmatpush.bf16.msra.mxu0 %v7107
        %7187 = vmatpush.bf16.msra.mxu0 %v7106
        %7188 = vmatmul.bf16.gmra.mxu0 %v6892
        %v7189 = vpop.f32.mrf.mxu0
        %v7190 = vadd.f32 %v7177, %v7189
        %v7191 = vpop.f32.mrf.mxu0
        %7192 = vdwg.mxu0
        %7193 = vmatpush.bf16.msra.mxu0 %v7121
        %7194 = vmatpush.bf16.msra.mxu0 %v7120
        %7195 = vmatpush.bf16.msra.mxu0 %v7119
        %7196 = vmatpush.bf16.msra.mxu0 %v7118
        %7197 = vmatpush.bf16.msra.mxu0 %v7117
        %7198 = vmatpush.bf16.msra.mxu0 %v7116
        %7199 = vmatpush.bf16.msra.mxu0 %v7115
        %7200 = vmatpush.bf16.msra.mxu0 %v7114
        %7201 = vmatmul.bf16.gmra.mxu0 %v6893
        %v7202 = vpop.f32.mrf.mxu0
        %v7203 = vadd.f32 %v7190, %v7202
        %v7204 = vpop.f32.mrf.mxu0
        %7205 = vdwg.mxu0
        %v7206 = vld [vmem:[%s2] sm:$0xff]
        %v7207 = vadd.f32 %v7203, %v7206
        %v7208 = vld [vmem:[%s926] sm:$0x1]
        %v7209 = vpack.c.bf16 %v7207, %v7207
        %v7210 = vld [vmem:[#allocation8] sm:$0xf]
        %v7211 = vld [vmem:[#allocation8 + $0x4] sm:$0xf]
        %v7212 = vld [vmem:[#allocation8 + $0x8] sm:$0xf]
        %v7213 = vld [vmem:[#allocation8 + $0xc] sm:$0xf]
        %v7214 = vld [vmem:[#allocation10] sm:$0x1]
        %v7216 = vperm.slane %v7214, 0
        %v7222 = vunpack.c.l.b16 %v7210
        %v7223 = vunpack.c.l.b16 %v7211
        %v7224 = vunpack.c.l.b16 %v7212
        %v7225 = vunpack.c.l.b16 %v7213
        %v7226 = vpack.c.b16 %v7223, %v7222
        %v7227 = vpack.c.b16 %v7225, %v7224
        %vm7230 = vcmask 261120
        %v7232 = vsel %vm7230, %v7209, 0
        %7234 = vmatpush.bf16.msra.mxu0 0
        %7235 = vmatpush.bf16.msra.mxu0 0
        %7236 = vmatpush.bf16.msra.mxu0 0
        %7237 = vmatpush.bf16.msra.mxu0 0
        %7238 = vmatpush.bf16.msra.mxu0 0
        %7239 = vmatpush.bf16.msra.mxu0 0
        %7240 = vmatpush.bf16.msra.mxu0 %v7227
        %7241 = vmatpush.bf16.msra.mxu0 %v7226
        %7242 = vmatmul.bf16.gmra.mxu0 %v7232
        %v7243 = vpop.f32.mrf.mxu0
        %v7244 = vadd.f32 %v7216, %v7243
        %v7245 = vpop.f32.mrf.mxu0
        %7246 = vdwg.mxu0
        %7248 = vrot.lane.b32.xlu0 %v7244, 112
        %v7249 = vpop.permute.xlu0 %7248
        %v7251 = vmul.f32 %v7244, 0.25
        %v7252 = vmul.f32 %v7249, 0.25
        %v7253 = vpack.c.bf16 %v7251, %v7251
        %v7254 = vpack.c.bf16 %v7252, %v7252
        %v7255 = vpack.c.bf16 %v7244, %v7244
        %v7256 = vpack.c.bf16 %v7249, %v7249
        %v7258 = vperm.slane %v7208, 0
        %v7261 = vunpack.c.l.b16 %v7255
        %v7262 = vpack.c.b16 %v7261, %v7261
        %7263 = vrot.lane.b32.xlu0 %v7262, 96
        %v7264 = vpop.permute.xlu0 %7263
        %vm7265 = vcmask 130048
        %v7267 = vsel %vm7265, %v7253, 0
        %v7270 = vsel %vm7265, %v7264, 0
        %7272 = vmatpush.bf16.xpose.msra.mxu0 0
        %7273 = vmatpush.bf16.xpose.msra.mxu0 0
        %7274 = vmatpush.bf16.xpose.msra.mxu0 0
        %7275 = vmatpush.bf16.xpose.msra.mxu0 0
        %7276 = vmatpush.bf16.xpose.msra.mxu0 0
        %7277 = vmatpush.bf16.xpose.msra.mxu0 0
        %7278 = vmatpush.bf16.xpose.msra.mxu0 0
        %7279 = vmatpush.bf16.xpose.msra.mxu0 %v7270
        %7280 = vmatmul.bf16.gmra.mxu0 %v7267
        %v7281 = vpop.f32.mrf.mxu0
        %v7282 = vadd.f32 %v7258, %v7281
        %v7283 = vpop.f32.mrf.mxu0
        %7284 = vdwg.mxu0
        %v7286 = vunpack.c.l.b16 %v7256
        %v7287 = vpack.c.b16 %v7286, %v7286
        %7288 = vrot.lane.b32.xlu0 %v7287, 96
        %v7289 = vpop.permute.xlu0 %7288
        %v7291 = vsel %vm7265, %v7254, 0
        %v7294 = vsel %vm7265, %v7289, 0
        %7296 = vmatpush.bf16.xpose.msra.mxu0 0
        %7297 = vmatpush.bf16.xpose.msra.mxu0 0
        %7298 = vmatpush.bf16.xpose.msra.mxu0 0
        %7299 = vmatpush.bf16.xpose.msra.mxu0 0
        %7300 = vmatpush.bf16.xpose.msra.mxu0 0
        %7301 = vmatpush.bf16.xpose.msra.mxu0 0
        %7302 = vmatpush.bf16.xpose.msra.mxu0 0
        %7303 = vmatpush.bf16.xpose.msra.mxu0 %v7294
        %7304 = vmatmul.bf16.gmra.mxu0 %v7291
        %v7305 = vpop.f32.mrf.mxu0
        %v7306 = vadd.f32 %v7258, %v7305
        %v7307 = vpop.f32.mrf.mxu0
        %7308 = vdwg.mxu0
        %vm7309 = vcmask 64512
        %v7310 = vsel %vm7309, %v7282, -inf
        %7311 = vmax.xlane.f32.xlu0 %v7310
        %v7312 = vpop.xlane.xlu0 %7311
        %v7313 = vsel %vm7309, %v7306, -inf
        %7314 = vmax.xlane.f32.xlu0 %v7313
        %v7315 = vpop.xlane.xlu0 %7314
        %v7316 = vsub.f32 %v7282, %v7312
        %v7317 = vsub.f32 %v7306, %v7315
        %v7318 = vmul.f32 %v7316, 1.442695
        %v7319 = vpow.pop %v7318
        %v7320 = vmul.f32 %v7317, 1.442695
        %v7321 = vpow.pop %v7320
        %v7322 = vsel %vm7309, %v7319, 0.0
        %7323 = vadd.xlane.f32.xlu0 %v7322
        %v7324 = vpop.xlane.xlu0 %7323
        %v7325 = vsel %vm7309, %v7321, 0.0
        %7326 = vadd.xlane.f32.xlu0 %v7325
        %v7327 = vpop.xlane.xlu0 %7326
        %v7328 = vrcp.pop %v7324
        %v7329 = vmul.f32 %v7324, %v7328
        %v7330 = vsub.f32 1.0, %v7329
        %v7331 = vmul.f32 %v7328, %v7330
        %v7332 = vadd.f32 %v7328, %v7331
        %vm7333 = vweird.f32 %v7324
        %vm7334 = vweird.f32 %v7328
        %vm7335 = vmor %vm7333, %vm7334
        %v7336 = vsel %vm7335, %v7328, %v7332
        %v7337 = vand.u32 2147483647, %v7324
        %vm7338 = vcmp.eq.f32.partialorder %v7337, 8.507059e+37
        %v7339 = vand.u32 %v7324, 2147483648
        %v7340 = vor.u32 1.1754944e-38, %v7339
        %v7341 = vsel %vm7338, %v7340, %v7336
        %v7342 = vmul.f32 %v7319, %v7341
        %v7343 = vrcp.pop %v7327
        %v7344 = vmul.f32 %v7327, %v7343
        %v7345 = vsub.f32 1.0, %v7344
        %v7346 = vmul.f32 %v7343, %v7345
        %v7347 = vadd.f32 %v7343, %v7346
        %vm7348 = vweird.f32 %v7327
        %vm7349 = vweird.f32 %v7343
        %vm7350 = vmor %vm7348, %vm7349
        %v7351 = vsel %vm7350, %v7343, %v7347
        %v7352 = vand.u32 2147483647, %v7327
        %vm7353 = vcmp.eq.f32.partialorder %v7352, 8.507059e+37
        %v7354 = vand.u32 %v7327, 2147483648
        %v7355 = vor.u32 1.1754944e-38, %v7354
        %v7356 = vsel %vm7353, %v7355, %v7351
        %v7357 = vmul.f32 %v7321, %v7356
        %v7358 = vpack.c.bf16 %v7342, %v7342
        %v7359 = vpack.c.bf16 %v7357, %v7357
        %7360 = vrot.lane.b32.xlu0 %v7262, 64
        %v7361 = vpop.permute.xlu0 %7360
        %v7363 = vsel %vm7309, %v7358, 0
        %vm7365 = vcmask 1043456
        %v7367 = vsel %vm7365, %v7361, 0
        %7369 = vmatpush.bf16.msra.mxu0 0
        %7370 = vmatpush.bf16.msra.mxu0 0
        %7371 = vmatpush.bf16.msra.mxu0 0
        %7372 = vmatpush.bf16.msra.mxu0 0
        %7373 = vmatpush.bf16.msra.mxu0 0
        %7374 = vmatpush.bf16.msra.mxu0 0
        %7375 = vmatpush.bf16.msra.mxu0 0
        %7376 = vmatpush.bf16.msra.mxu0 %v7367
        %7377 = vmatmul.bf16.gmra.mxu0 %v7363
        %v7378 = vpop.f32.mrf.mxu0
        %v7379 = vadd.f32 0.0, %v7378
        %v7380 = vpop.f32.mrf.mxu0
        %7381 = vdwg.mxu0
        %7382 = vrot.lane.b32.xlu0 %v7287, 64
        %v7383 = vpop.permute.xlu0 %7382
        %v7385 = vsel %vm7309, %v7359, 0
        %v7388 = vsel %vm7365, %v7383, 0
        %7390 = vmatpush.bf16.msra.mxu0 0
        %7391 = vmatpush.bf16.msra.mxu0 0
        %7392 = vmatpush.bf16.msra.mxu0 0
        %7393 = vmatpush.bf16.msra.mxu0 0
        %7394 = vmatpush.bf16.msra.mxu0 0
        %7395 = vmatpush.bf16.msra.mxu0 0
        %7396 = vmatpush.bf16.msra.mxu0 0
        %7397 = vmatpush.bf16.msra.mxu0 %v7388
        %7398 = vmatmul.bf16.gmra.mxu0 %v7385
        %v7399 = vpop.f32.mrf.mxu0
        %v7400 = vadd.f32 0.0, %v7399
        %v7401 = vpop.f32.mrf.mxu0
        %7402 = vdwg.mxu0
        %v7403 = vpack.c.bf16 %v7379, %v7379
        %v7404 = vpack.c.bf16 %v7400, %v7400
        %v7405 = vld [vmem:[#allocation11] sm:$0xf]
        %v7406 = vld [vmem:[#allocation11 + $0x4] sm:$0xf]
        %v7407 = vld [vmem:[#allocation11 + $0x8] sm:$0xf]
        %v7408 = vld [vmem:[#allocation11 + $0xc] sm:$0xf]
        %v7411 = vunpack.c.l.b16 %v7405
        %v7412 = vunpack.c.l.b16 %v7406
        %v7413 = vpack.c.b16 %v7412, %v7411
        %v7416 = vsel %vm7265, %v7403, 0
        %7418 = vmatpush.bf16.msra.mxu0 0
        %7419 = vmatpush.bf16.msra.mxu0 0
        %7420 = vmatpush.bf16.msra.mxu0 0
        %7421 = vmatpush.bf16.msra.mxu0 0
        %7422 = vmatpush.bf16.msra.mxu0 0
        %7423 = vmatpush.bf16.msra.mxu0 0
        %7424 = vmatpush.bf16.msra.mxu0 0
        %7425 = vmatpush.bf16.msra.mxu0 %v7413
        %7426 = vmatmul.bf16.gmra.mxu0 %v7416
        %v7427 = vpop.f32.mrf.mxu0
        %v7428 = vadd.f32 0.0, %v7427
        %v7429 = vpop.f32.mrf.mxu0
        %7430 = vdwg.mxu0
        %v7433 = vunpack.c.l.b16 %v7407
        %v7434 = vunpack.c.l.b16 %v7408
        %v7435 = vpack.c.b16 %v7434, %v7433
        %v7438 = vsel %vm7265, %v7404, 0
        %7440 = vmatpush.bf16.msra.mxu0 0
        %7441 = vmatpush.bf16.msra.mxu0 0
        %7442 = vmatpush.bf16.msra.mxu0 0
        %7443 = vmatpush.bf16.msra.mxu0 0
        %7444 = vmatpush.bf16.msra.mxu0 0
        %7445 = vmatpush.bf16.msra.mxu0 0
        %7446 = vmatpush.bf16.msra.mxu0 0
        %7447 = vmatpush.bf16.msra.mxu0 %v7435
        %7448 = vmatmul.bf16.gmra.mxu0 %v7438
        %v7449 = vpop.f32.mrf.mxu0
        %v7450 = vadd.f32 0.0, %v7449
        %v7451 = vpop.f32.mrf.mxu0
        %7452 = vdwg.mxu0
        %v7453 = vld [vmem:[#allocation13] sm:$0x1]
        %v7455 = vperm.slane %v7453, 0
        %v7457 = vadd.f32 %v7455, %v7428
        %v7458 = vadd.f32 %v7457, %v7450
        %v7459 = vadd.f32 %v7207, %v7458
        %v7460 = vld [vmem:[#allocation19] sm:$0x1]
        %v7461 = vld [vmem:[#allocation20] sm:$0x1]
        %v7462 = vsel %vm7230, %v7459, 0.0
        %7463 = vadd.xlane.f32.xlu0 %v7462
        %v7464 = vpop.xlane.xlu0 %7463
        %v7465 = vrcp.pop 32.0
        %v7466 = vmul.f32 32.0, %v7465
        %v7467 = vsub.f32 1.0, %v7466
        %v7468 = vmul.f32 %v7465, %v7467
        %v7469 = vadd.f32 %v7465, %v7468
        %vm7470 = vweird.f32 %v7465
        %v7471 = vsel %vm7470, %v7465, %v7469
        %v7472 = vmul.f32 %v7464, %v7471
        %v7473 = vsub.f32 %v7459, %v7472
        %v7474 = vmul.f32 %v7473, %v7473
        %v7475 = vsel %vm7230, %v7474, 0.0
        %7476 = vadd.xlane.f32.xlu0 %v7475
        %v7477 = vpop.xlane.xlu0 %7476
        %v7478 = vmul.f32 %v7477, %v7471
        %v7479 = vadd.f32 %v7478, 1e-05
        %v7480 = vrsqrt.pop %v7479
        %v7481 = vmul.f32 %v7480, %v7479
        %v7482 = vmul.f32 %v7481, %v7480
        %v7483 = vmul.f32 0.5, %v7482
        %v7484 = vsub.f32 1.5, %v7483
        %v7485 = vmul.f32 %v7480, %v7484
        %vm7486 = vweird.f32 %v7479
        %vm7487 = vweird.f32 %v7480
        %vm7488 = vmor %vm7486, %vm7487
        %v7489 = vsel %vm7488, %v7480, %v7485
        %v7490 = vmul.f32 %v7473, %v7489
        %v7492 = vperm.slane %v7460, 0
        %v7494 = vmul.f32 %v7490, %v7492
        %v7496 = vperm.slane %v7461, 0
        %v7498 = vadd.f32 %v7494, %v7496
        %v7499 = vpack.c.bf16 %v7498, %v7498
        %v7500 = vld [vmem:[#allocation14] sm:$0xf]
        %v7501 = vld [vmem:[#allocation14 + $0x4] sm:$0xf]
        %v7502 = vld [vmem:[#allocation14 + $0x8] sm:$0xf]
        %v7503 = vld [vmem:[#allocation14 + $0xc] sm:$0xf]
        %v7504 = vld [vmem:[#allocation16] sm:$0x1]
        %v7506 = vperm.slane %v7504, 0
        %v7512 = vunpack.c.l.b16 %v7500
        %v7513 = vunpack.c.l.b16 %v7501
        %v7514 = vunpack.c.l.b16 %v7502
        %v7515 = vunpack.c.l.b16 %v7503
        %v7516 = vpack.c.b16 %v7513, %v7512
        %v7517 = vpack.c.b16 %v7515, %v7514
        %v7521 = vsel %vm7230, %v7499, 0
        %7523 = vmatpush.bf16.msra.mxu0 0
        %7524 = vmatpush.bf16.msra.mxu0 0
        %7525 = vmatpush.bf16.msra.mxu0 0
        %7526 = vmatpush.bf16.msra.mxu0 0
        %7527 = vmatpush.bf16.msra.mxu0 0
        %7528 = vmatpush.bf16.msra.mxu0 0
        %7529 = vmatpush.bf16.msra.mxu0 %v7517
        %7530 = vmatpush.bf16.msra.mxu0 %v7516
        %7531 = vmatmul.bf16.gmra.mxu0 %v7521
        %v7532 = vpop.f32.mrf.mxu0
        %v7533 = vadd.f32 %v7506, %v7532
        %v7534 = vpop.f32.mrf.mxu0
        %7535 = vdwg.mxu0
        %v7536 = vmax.f32 %v7533, 0.0
        %v7537 = vpack.c.bf16 %v7536, %v7536
        %v7538 = vld [vmem:[%s13] sm:$0xf]
        %v7539 = vld [vmem:[%s13 + $0x4] sm:$0xf]
        %v7540 = vld [vmem:[%s13 + $0x8] sm:$0xf]
        %v7541 = vld [vmem:[%s13 + $0xc] sm:$0xf]
        %v7542 = vld [vmem:[%s13 + $0x10] sm:$0xf]
        %v7543 = vld [vmem:[%s13 + $0x14] sm:$0xf]
        %v7544 = vld [vmem:[%s13 + $0x18] sm:$0xf]
        %v7545 = vld [vmem:[%s13 + $0x1c] sm:$0xf]
        %v7546 = vld [vmem:[#allocation17] sm:$0x1]
        %v7548 = vperm.slane %v7546, 0
        %v7558 = vunpack.c.l.b16 %v7538
        %v7559 = vunpack.c.l.b16 %v7539
        %v7560 = vunpack.c.l.b16 %v7540
        %v7561 = vunpack.c.l.b16 %v7541
        %v7562 = vunpack.c.l.b16 %v7542
        %v7563 = vunpack.c.l.b16 %v7543
        %v7564 = vunpack.c.l.b16 %v7544
        %v7565 = vunpack.c.l.b16 %v7545
        %v7566 = vpack.c.b16 %v7559, %v7558
        %v7567 = vpack.c.b16 %v7561, %v7560
        %v7568 = vpack.c.b16 %v7563, %v7562
        %v7569 = vpack.c.b16 %v7565, %v7564
        %vm7574 = vcmask 523264
        %v7576 = vsel %vm7574, %v7537, 0
        %7578 = vmatpush.bf16.msra.mxu0 0
        %7579 = vmatpush.bf16.msra.mxu0 0
        %7580 = vmatpush.bf16.msra.mxu0 0
        %7581 = vmatpush.bf16.msra.mxu0 0
        %7582 = vmatpush.bf16.msra.mxu0 %v7569
        %7583 = vmatpush.bf16.msra.mxu0 %v7568
        %7584 = vmatpush.bf16.msra.mxu0 %v7567
        %7585 = vmatpush.bf16.msra.mxu0 %v7566
        %7586 = vmatmul.bf16.gmra.mxu0 %v7576
        %v7587 = vpop.f32.mrf.mxu0
        %v7588 = vadd.f32 %v7548, %v7587
        %v7589 = vpop.f32.mrf.mxu0
        %7590 = vdwg.mxu0
        %v7591 = vadd.f32 %v7498, %v7588
        %v7592 = vld [vmem:[#allocation22] sm:$0x1]
        %v7593 = vld [vmem:[#allocation23] sm:$0x1]
        %v7594 = vsel %vm7230, %v7591, 0.0
        %7595 = vadd.xlane.f32.xlu0 %v7594
        %v7596 = vpop.xlane.xlu0 %7595
        %v7597 = vmul.f32 %v7596, %v7471
        %v7598 = vsub.f32 %v7591, %v7597
        %v7599 = vmul.f32 %v7598, %v7598
        %v7600 = vsel %vm7230, %v7599, 0.0
        %7601 = vadd.xlane.f32.xlu0 %v7600
        %v7602 = vpop.xlane.xlu0 %7601
        %v7603 = vmul.f32 %v7602, %v7471
        %v7604 = vadd.f32 %v7603, 1e-05
        %v7605 = vrsqrt.pop %v7604
        %v7606 = vmul.f32 %v7605, %v7604
        %v7607 = vmul.f32 %v7606, %v7605
        %v7608 = vmul.f32 0.5, %v7607
        %v7609 = vsub.f32 1.5, %v7608
        %v7610 = vmul.f32 %v7605, %v7609
        %vm7611 = vweird.f32 %v7604
        %vm7612 = vweird.f32 %v7605
        %vm7613 = vmor %vm7611, %vm7612
        %v7614 = vsel %vm7613, %v7605, %v7610
        %v7615 = vmul.f32 %v7598, %v7614
        %v7617 = vperm.slane %v7592, 0
        %v7619 = vmul.f32 %v7615, %v7617
        %v7621 = vperm.slane %v7593, 0
        %v7623 = vadd.f32 %v7619, %v7621
        %v7624 = vpack.c.bf16 %v7623, %v7623
        %s7625 = scalar_lea.vmem [#allocation8], 16
        %v7626 = vld [vmem:[%s7625] sm:$0xf]
        %v7627 = vld [vmem:[%s7625 + $0x4] sm:$0xf]
        %v7628 = vld [vmem:[%s7625 + $0x8] sm:$0xf]
        %v7629 = vld [vmem:[%s7625 + $0xc] sm:$0xf]
        %s7630 = scalar_lea.vmem [#allocation10], 1
        %v7631 = vld [vmem:[%s7630] sm:$0x1]
        %v7633 = vperm.slane %v7631, 0
        %v7639 = vunpack.c.l.b16 %v7626
        %v7640 = vunpack.c.l.b16 %v7627
        %v7641 = vunpack.c.l.b16 %v7628
        %v7642 = vunpack.c.l.b16 %v7629
        %v7643 = vpack.c.b16 %v7640, %v7639
        %v7644 = vpack.c.b16 %v7642, %v7641
        %v7648 = vsel %vm7230, %v7624, 0
        %7650 = vmatpush.bf16.msra.mxu0 0
        %7651 = vmatpush.bf16.msra.mxu0 0
        %7652 = vmatpush.bf16.msra.mxu0 0
        %7653 = vmatpush.bf16.msra.mxu0 0
        %7654 = vmatpush.bf16.msra.mxu0 0
        %7655 = vmatpush.bf16.msra.mxu0 0
        %7656 = vmatpush.bf16.msra.mxu0 %v7644
        %7657 = vmatpush.bf16.msra.mxu0 %v7643
        %7658 = vmatmul.bf16.gmra.mxu0 %v7648
        %v7659 = vpop.f32.mrf.mxu0
        %v7660 = vadd.f32 %v7633, %v7659
        %v7661 = vpop.f32.mrf.mxu0
        %7662 = vdwg.mxu0
        %7664 = vrot.lane.b32.xlu0 %v7660, 112
        %v7665 = vpop.permute.xlu0 %7664
        %v7667 = vmul.f32 %v7660, 0.25
        %v7668 = vmul.f32 %v7665, 0.25
        %v7669 = vpack.c.bf16 %v7667, %v7667
        %v7670 = vpack.c.bf16 %v7668, %v7668
        %v7671 = vpack.c.bf16 %v7660, %v7660
        %v7672 = vpack.c.bf16 %v7665, %v7665
        %v7674 = vunpack.c.l.b16 %v7671
        %v7675 = vpack.c.b16 %v7674, %v7674
        %7676 = vrot.lane.b32.xlu0 %v7675, 96
        %v7677 = vpop.permute.xlu0 %7676
        %v7679 = vsel %vm7265, %v7669, 0
        %v7682 = vsel %vm7265, %v7677, 0
        %7684 = vmatpush.bf16.xpose.msra.mxu0 0
        %7685 = vmatpush.bf16.xpose.msra.mxu0 0
        %7686 = vmatpush.bf16.xpose.msra.mxu0 0
        %7687 = vmatpush.bf16.xpose.msra.mxu0 0
        %7688 = vmatpush.bf16.xpose.msra.mxu0 0
        %7689 = vmatpush.bf16.xpose.msra.mxu0 0
        %7690 = vmatpush.bf16.xpose.msra.mxu0 0
        %7691 = vmatpush.bf16.xpose.msra.mxu0 %v7682
        %7692 = vmatmul.bf16.gmra.mxu0 %v7679
        %v7693 = vpop.f32.mrf.mxu0
        %v7694 = vadd.f32 %v7258, %v7693
        %v7695 = vpop.f32.mrf.mxu0
        %7696 = vdwg.mxu0
        %v7698 = vunpack.c.l.b16 %v7672
        %v7699 = vpack.c.b16 %v7698, %v7698
        %7700 = vrot.lane.b32.xlu0 %v7699, 96
        %v7701 = vpop.permute.xlu0 %7700
        %v7703 = vsel %vm7265, %v7670, 0
        %v7706 = vsel %vm7265, %v7701, 0
        %7708 = vmatpush.bf16.xpose.msra.mxu0 0
        %7709 = vmatpush.bf16.xpose.msra.mxu0 0
        %7710 = vmatpush.bf16.xpose.msra.mxu0 0
        %7711 = vmatpush.bf16.xpose.msra.mxu0 0
        %7712 = vmatpush.bf16.xpose.msra.mxu0 0
        %7713 = vmatpush.bf16.xpose.msra.mxu0 0
        %7714 = vmatpush.bf16.xpose.msra.mxu0 0
        %7715 = vmatpush.bf16.xpose.msra.mxu0 %v7706
        %7716 = vmatmul.bf16.gmra.mxu0 %v7703
        %v7717 = vpop.f32.mrf.mxu0
        %v7718 = vadd.f32 %v7258, %v7717
        %v7719 = vpop.f32.mrf.mxu0
        %7720 = vdwg.mxu0
        %v7721 = vsel %vm7309, %v7694, -inf
        %7722 = vmax.xlane.f32.xlu0 %v7721
        %v7723 = vpop.xlane.xlu0 %7722
        %v7724 = vsel %vm7309, %v7718, -inf
        %7725 = vmax.xlane.f32.xlu0 %v7724
        %v7726 = vpop.xlane.xlu0 %7725
        %v7727 = vsub.f32 %v7694, %v7723
        %v7728 = vsub.f32 %v7718, %v7726
        %v7729 = vmul.f32 %v7727, 1.442695
        %v7730 = vpow.pop %v7729
        %v7731 = vmul.f32 %v7728, 1.442695
        %v7732 = vpow.pop %v7731
        %v7733 = vsel %vm7309, %v7730, 0.0
        %7734 = vadd.xlane.f32.xlu0 %v7733
        %v7735 = vpop.xlane.xlu0 %7734
        %v7736 = vsel %vm7309, %v7732, 0.0
        %7737 = vadd.xlane.f32.xlu0 %v7736
        %v7738 = vpop.xlane.xlu0 %7737
        %v7739 = vrcp.pop %v7735
        %v7740 = vmul.f32 %v7735, %v7739
        %v7741 = vsub.f32 1.0, %v7740
        %v7742 = vmul.f32 %v7739, %v7741
        %v7743 = vadd.f32 %v7739, %v7742
        %vm7744 = vweird.f32 %v7735
        %vm7745 = vweird.f32 %v7739
        %vm7746 = vmor %vm7744, %vm7745
        %v7747 = vsel %vm7746, %v7739, %v7743
        %v7748 = vand.u32 2147483647, %v7735
        %vm7749 = vcmp.eq.f32.partialorder %v7748, 8.507059e+37
        %v7750 = vand.u32 %v7735, 2147483648
        %v7751 = vor.u32 1.1754944e-38, %v7750
        %v7752 = vsel %vm7749, %v7751, %v7747
        %v7753 = vmul.f32 %v7730, %v7752
        %v7754 = vrcp.pop %v7738
        %v7755 = vmul.f32 %v7738, %v7754
        %v7756 = vsub.f32 1.0, %v7755
        %v7757 = vmul.f32 %v7754, %v7756
        %v7758 = vadd.f32 %v7754, %v7757
        %vm7759 = vweird.f32 %v7738
        %vm7760 = vweird.f32 %v7754
        %vm7761 = vmor %vm7759, %vm7760
        %v7762 = vsel %vm7761, %v7754, %v7758
        %v7763 = vand.u32 2147483647, %v7738
        %vm7764 = vcmp.eq.f32.partialorder %v7763, 8.507059e+37
        %v7765 = vand.u32 %v7738, 2147483648
        %v7766 = vor.u32 1.1754944e-38, %v7765
        %v7767 = vsel %vm7764, %v7766, %v7762
        %v7768 = vmul.f32 %v7732, %v7767
        %v7769 = vpack.c.bf16 %v7753, %v7753
        %v7770 = vpack.c.bf16 %v7768, %v7768
        %7771 = vrot.lane.b32.xlu0 %v7675, 64
        %v7772 = vpop.permute.xlu0 %7771
        %v7774 = vsel %vm7309, %v7769, 0
        %v7777 = vsel %vm7365, %v7772, 0
        %7779 = vmatpush.bf16.msra.mxu0 0
        %7780 = vmatpush.bf16.msra.mxu0 0
        %7781 = vmatpush.bf16.msra.mxu0 0
        %7782 = vmatpush.bf16.msra.mxu0 0
        %7783 = vmatpush.bf16.msra.mxu0 0
        %7784 = vmatpush.bf16.msra.mxu0 0
        %7785 = vmatpush.bf16.msra.mxu0 0
        %7786 = vmatpush.bf16.msra.mxu0 %v7777
        %7787 = vmatmul.bf16.gmra.mxu0 %v7774
        %v7788 = vpop.f32.mrf.mxu0
        %v7789 = vadd.f32 0.0, %v7788
        %v7790 = vpop.f32.mrf.mxu0
        %7791 = vdwg.mxu0
        %7792 = vrot.lane.b32.xlu0 %v7699, 64
        %v7793 = vpop.permute.xlu0 %7792
        %v7795 = vsel %vm7309, %v7770, 0
        %v7798 = vsel %vm7365, %v7793, 0
        %7800 = vmatpush.bf16.msra.mxu0 0
        %7801 = vmatpush.bf16.msra.mxu0 0
        %7802 = vmatpush.bf16.msra.mxu0 0
        %7803 = vmatpush.bf16.msra.mxu0 0
        %7804 = vmatpush.bf16.msra.mxu0 0
        %7805 = vmatpush.bf16.msra.mxu0 0
        %7806 = vmatpush.bf16.msra.mxu0 0
        %7807 = vmatpush.bf16.msra.mxu0 %v7798
        %7808 = vmatmul.bf16.gmra.mxu0 %v7795
        %v7809 = vpop.f32.mrf.mxu0
        %v7810 = vadd.f32 0.0, %v7809
        %v7811 = vpop.f32.mrf.mxu0
        %7812 = vdwg.mxu0
        %v7813 = vpack.c.bf16 %v7789, %v7789
        %v7814 = vpack.c.bf16 %v7810, %v7810
        %s7815 = scalar_lea.vmem [#allocation11], 16
        %v7816 = vld [vmem:[%s7815] sm:$0xf]
        %v7817 = vld [vmem:[%s7815 + $0x4] sm:$0xf]
        %v7818 = vld [vmem:[%s7815 + $0x8] sm:$0xf]
        %v7819 = vld [vmem:[%s7815 + $0xc] sm:$0xf]
        %v7822 = vunpack.c.l.b16 %v7816
        %v7823 = vunpack.c.l.b16 %v7817
        %v7824 = vpack.c.b16 %v7823, %v7822
        %v7827 = vsel %vm7265, %v7813, 0
        %7829 = vmatpush.bf16.msra.mxu0 0
        %7830 = vmatpush.bf16.msra.mxu0 0
        %7831 = vmatpush.bf16.msra.mxu0 0
        %7832 = vmatpush.bf16.msra.mxu0 0
        %7833 = vmatpush.bf16.msra.mxu0 0
        %7834 = vmatpush.bf16.msra.mxu0 0
        %7835 = vmatpush.bf16.msra.mxu0 0
        %7836 = vmatpush.bf16.msra.mxu0 %v7824
        %7837 = vmatmul.bf16.gmra.mxu0 %v7827
        %v7838 = vpop.f32.mrf.mxu0
        %v7839 = vadd.f32 0.0, %v7838
        %v7840 = vpop.f32.mrf.mxu0
        %7841 = vdwg.mxu0
        %v7844 = vunpack.c.l.b16 %v7818
        %v7845 = vunpack.c.l.b16 %v7819
        %v7846 = vpack.c.b16 %v7845, %v7844
        %v7849 = vsel %vm7265, %v7814, 0
        %7851 = vmatpush.bf16.msra.mxu0 0
        %7852 = vmatpush.bf16.msra.mxu0 0
        %7853 = vmatpush.bf16.msra.mxu0 0
        %7854 = vmatpush.bf16.msra.mxu0 0
        %7855 = vmatpush.bf16.msra.mxu0 0
        %7856 = vmatpush.bf16.msra.mxu0 0
        %7857 = vmatpush.bf16.msra.mxu0 0
        %7858 = vmatpush.bf16.msra.mxu0 %v7846
        %7859 = vmatmul.bf16.gmra.mxu0 %v7849
        %v7860 = vpop.f32.mrf.mxu0
        %v7861 = vadd.f32 0.0, %v7860
        %v7862 = vpop.f32.mrf.mxu0
        %7863 = vdwg.mxu0
        %s7864 = scalar_lea.vmem [#allocation13], 1
        %v7865 = vld [vmem:[%s7864] sm:$0x1]
        %v7867 = vperm.slane %v7865, 0
        %v7869 = vadd.f32 %v7867, %v7839
        %v7870 = vadd.f32 %v7869, %v7861
        %v7871 = vadd.f32 %v7623, %v7870
        %s7872 = scalar_lea.vmem [#allocation19], 1
        %v7873 = vld [vmem:[%s7872] sm:$0x1]
        %s7874 = scalar_lea.vmem [#allocation20], 1
        %v7875 = vld [vmem:[%s7874] sm:$0x1]
        %v7876 = vsel %vm7230, %v7871, 0.0
        %7877 = vadd.xlane.f32.xlu0 %v7876
        %v7878 = vpop.xlane.xlu0 %7877
        %v7879 = vmul.f32 %v7878, %v7471
        %v7880 = vsub.f32 %v7871, %v7879
        %v7881 = vmul.f32 %v7880, %v7880
        %v7882 = vsel %vm7230, %v7881, 0.0
        %7883 = vadd.xlane.f32.xlu0 %v7882
        %v7884 = vpop.xlane.xlu0 %7883
        %v7885 = vmul.f32 %v7884, %v7471
        %v7886 = vadd.f32 %v7885, 1e-05
        %v7887 = vrsqrt.pop %v7886
        %v7888 = vmul.f32 %v7887, %v7886
        %v7889 = vmul.f32 %v7888, %v7887
        %v7890 = vmul.f32 0.5, %v7889
        %v7891 = vsub.f32 1.5, %v7890
        %v7892 = vmul.f32 %v7887, %v7891
        %vm7893 = vweird.f32 %v7886
        %vm7894 = vweird.f32 %v7887
        %vm7895 = vmor %vm7893, %vm7894
        %v7896 = vsel %vm7895, %v7887, %v7892
        %v7897 = vmul.f32 %v7880, %v7896
        %v7899 = vperm.slane %v7873, 0
        %v7901 = vmul.f32 %v7897, %v7899
        %v7903 = vperm.slane %v7875, 0
        %v7905 = vadd.f32 %v7901, %v7903
        %v7906 = vpack.c.bf16 %v7905, %v7905
        %s7907 = scalar_lea.vmem [#allocation14], 16
        %v7908 = vld [vmem:[%s7907] sm:$0xf]
        %v7909 = vld [vmem:[%s7907 + $0x4] sm:$0xf]
        %v7910 = vld [vmem:[%s7907 + $0x8] sm:$0xf]
        %v7911 = vld [vmem:[%s7907 + $0xc] sm:$0xf]
        %s7912 = scalar_lea.vmem [#allocation16], 1
        %v7913 = vld [vmem:[%s7912] sm:$0x1]
        %v7915 = vperm.slane %v7913, 0
        %v7921 = vunpack.c.l.b16 %v7908
        %v7922 = vunpack.c.l.b16 %v7909
        %v7923 = vunpack.c.l.b16 %v7910
        %v7924 = vunpack.c.l.b16 %v7911
        %v7925 = vpack.c.b16 %v7922, %v7921
        %v7926 = vpack.c.b16 %v7924, %v7923
        %v7930 = vsel %vm7230, %v7906, 0
        %7932 = vmatpush.bf16.msra.mxu0 0
        %7933 = vmatpush.bf16.msra.mxu0 0
        %7934 = vmatpush.bf16.msra.mxu0 0
        %7935 = vmatpush.bf16.msra.mxu0 0
        %7936 = vmatpush.bf16.msra.mxu0 0
        %7937 = vmatpush.bf16.msra.mxu0 0
        %7938 = vmatpush.bf16.msra.mxu0 %v7926
        %7939 = vmatpush.bf16.msra.mxu0 %v7925
        %7940 = vmatmul.bf16.gmra.mxu0 %v7930
        %v7941 = vpop.f32.mrf.mxu0
        %v7942 = vadd.f32 %v7915, %v7941
        %v7943 = vpop.f32.mrf.mxu0
        %7944 = vdwg.mxu0
        %v7945 = vmax.f32 %v7942, 0.0
        %v7946 = vpack.c.bf16 %v7945, %v7945
        %s7947 = scalar_lea.vmem %s13, 32
        %v7948 = vld [vmem:[%s7947] sm:$0xf]
        %v7949 = vld [vmem:[%s7947 + $0x4] sm:$0xf]
        %v7950 = vld [vmem:[%s7947 + $0x8] sm:$0xf]
        %v7951 = vld [vmem:[%s7947 + $0xc] sm:$0xf]
        %v7952 = vld [vmem:[%s7947 + $0x10] sm:$0xf]
        %v7953 = vld [vmem:[%s7947 + $0x14] sm:$0xf]
        %v7954 = vld [vmem:[%s7947 + $0x18] sm:$0xf]
        %v7955 = vld [vmem:[%s7947 + $0x1c] sm:$0xf]
        %s7956 = scalar_lea.vmem [#allocation17], 1
        %v7957 = vld [vmem:[%s7956] sm:$0x1]
        %v7959 = vperm.slane %v7957, 0
        %v7969 = vunpack.c.l.b16 %v7948
        %v7970 = vunpack.c.l.b16 %v7949
        %v7971 = vunpack.c.l.b16 %v7950
        %v7972 = vunpack.c.l.b16 %v7951
        %v7973 = vunpack.c.l.b16 %v7952
        %v7974 = vunpack.c.l.b16 %v7953
        %v7975 = vunpack.c.l.b16 %v7954
        %v7976 = vunpack.c.l.b16 %v7955
        %v7977 = vpack.c.b16 %v7970, %v7969
        %v7978 = vpack.c.b16 %v7972, %v7971
        %v7979 = vpack.c.b16 %v7974, %v7973
        %v7980 = vpack.c.b16 %v7976, %v7975
        %v7986 = vsel %vm7574, %v7946, 0
        %7988 = vmatpush.bf16.msra.mxu0 0
        %7989 = vmatpush.bf16.msra.mxu0 0
        %7990 = vmatpush.bf16.msra.mxu0 0
        %7991 = vmatpush.bf16.msra.mxu0 0
        %7992 = vmatpush.bf16.msra.mxu0 %v7980
        %7993 = vmatpush.bf16.msra.mxu0 %v7979
        %7994 = vmatpush.bf16.msra.mxu0 %v7978
        %7995 = vmatpush.bf16.msra.mxu0 %v7977
        %7996 = vmatmul.bf16.gmra.mxu0 %v7986
        %v7997 = vpop.f32.mrf.mxu0
        %v7998 = vadd.f32 %v7959, %v7997
        %v7999 = vpop.f32.mrf.mxu0
        %8000 = vdwg.mxu0
        %v8001 = vadd.f32 %v7905, %v7998
        %s8002 = scalar_lea.vmem [#allocation22], 1
        %v8003 = vld [vmem:[%s8002] sm:$0x1]
        %s8004 = scalar_lea.vmem [#allocation23], 1
        %v8005 = vld [vmem:[%s8004] sm:$0x1]
        %v8006 = vsel %vm7230, %v8001, 0.0
        %8007 = vadd.xlane.f32.xlu0 %v8006
        %v8008 = vpop.xlane.xlu0 %8007
        %v8009 = vmul.f32 %v8008, %v7471
        %v8010 = vsub.f32 %v8001, %v8009
        %v8011 = vmul.f32 %v8010, %v8010
        %v8012 = vsel %vm7230, %v8011, 0.0
        %8013 = vadd.xlane.f32.xlu0 %v8012
        %v8014 = vpop.xlane.xlu0 %8013
        %v8015 = vmul.f32 %v8014, %v7471
        %v8016 = vadd.f32 %v8015, 1e-05
        %v8017 = vrsqrt.pop %v8016
        %v8018 = vmul.f32 %v8017, %v8016
        %v8019 = vmul.f32 %v8018, %v8017
        %v8020 = vmul.f32 0.5, %v8019
        %v8021 = vsub.f32 1.5, %v8020
        %v8022 = vmul.f32 %v8017, %v8021
        %vm8023 = vweird.f32 %v8016
        %vm8024 = vweird.f32 %v8017
        %vm8025 = vmor %vm8023, %vm8024
        %v8026 = vsel %vm8025, %v8017, %v8022
        %v8027 = vmul.f32 %v8010, %v8026
        %v8029 = vperm.slane %v8003, 0
        %v8031 = vmul.f32 %v8027, %v8029
        %v8033 = vperm.slane %v8005, 0
        %v8035 = vadd.f32 %v8031, %v8033
        %v8036 = vpack.c.bf16 %v8035, %v8035
        %s8037 = scalar_lea.vmem [#allocation8], 32
        %v8038 = vld [vmem:[%s8037] sm:$0xf]
        %v8039 = vld [vmem:[%s8037 + $0x4] sm:$0xf]
        %v8040 = vld [vmem:[%s8037 + $0x8] sm:$0xf]
        %v8041 = vld [vmem:[%s8037 + $0xc] sm:$0xf]
        %s8042 = scalar_lea.vmem [#allocation10], 2
        %v8043 = vld [vmem:[%s8042] sm:$0x1]
        %v8045 = vperm.slane %v8043, 0
        %v8051 = vunpack.c.l.b16 %v8038
        %v8052 = vunpack.c.l.b16 %v8039
        %v8053 = vunpack.c.l.b16 %v8040
        %v8054 = vunpack.c.l.b16 %v8041
        %v8055 = vpack.c.b16 %v8052, %v8051
        %v8056 = vpack.c.b16 %v8054, %v8053
        %v8060 = vsel %vm7230, %v8036, 0
        %8062 = vmatpush.bf16.msra.mxu0 0
        %8063 = vmatpush.bf16.msra.mxu0 0
        %8064 = vmatpush.bf16.msra.mxu0 0
        %8065 = vmatpush.bf16.msra.mxu0 0
        %8066 = vmatpush.bf16.msra.mxu0 0
        %8067 = vmatpush.bf16.msra.mxu0 0
        %8068 = vmatpush.bf16.msra.mxu0 %v8056
        %8069 = vmatpush.bf16.msra.mxu0 %v8055
        %8070 = vmatmul.bf16.gmra.mxu0 %v8060
        %v8071 = vpop.f32.mrf.mxu0
        %v8072 = vadd.f32 %v8045, %v8071
        %v8073 = vpop.f32.mrf.mxu0
        %8074 = vdwg.mxu0
        %8076 = vrot.lane.b32.xlu0 %v8072, 112
        %v8077 = vpop.permute.xlu0 %8076
        %v8079 = vmul.f32 %v8072, 0.25
        %v8080 = vmul.f32 %v8077, 0.25
        %v8081 = vpack.c.bf16 %v8079, %v8079
        %v8082 = vpack.c.bf16 %v8080, %v8080
        %v8083 = vpack.c.bf16 %v8072, %v8072
        %v8084 = vpack.c.bf16 %v8077, %v8077
        %v8086 = vunpack.c.l.b16 %v8083
        %v8087 = vpack.c.b16 %v8086, %v8086
        %8088 = vrot.lane.b32.xlu0 %v8087, 96
        %v8089 = vpop.permute.xlu0 %8088
        %v8091 = vsel %vm7265, %v8081, 0
        %v8094 = vsel %vm7265, %v8089, 0
        %8096 = vmatpush.bf16.xpose.msra.mxu0 0
        %8097 = vmatpush.bf16.xpose.msra.mxu0 0
        %8098 = vmatpush.bf16.xpose.msra.mxu0 0
        %8099 = vmatpush.bf16.xpose.msra.mxu0 0
        %8100 = vmatpush.bf16.xpose.msra.mxu0 0
        %8101 = vmatpush.bf16.xpose.msra.mxu0 0
        %8102 = vmatpush.bf16.xpose.msra.mxu0 0
        %8103 = vmatpush.bf16.xpose.msra.mxu0 %v8094
        %8104 = vmatmul.bf16.gmra.mxu0 %v8091
        %v8105 = vpop.f32.mrf.mxu0
        %v8106 = vadd.f32 %v7258, %v8105
        %v8107 = vpop.f32.mrf.mxu0
        %8108 = vdwg.mxu0
        %v8110 = vunpack.c.l.b16 %v8084
        %v8111 = vpack.c.b16 %v8110, %v8110
        %8112 = vrot.lane.b32.xlu0 %v8111, 96
        %v8113 = vpop.permute.xlu0 %8112
        %v8115 = vsel %vm7265, %v8082, 0
        %v8118 = vsel %vm7265, %v8113, 0
        %8120 = vmatpush.bf16.xpose.msra.mxu0 0
        %8121 = vmatpush.bf16.xpose.msra.mxu0 0
        %8122 = vmatpush.bf16.xpose.msra.mxu0 0
        %8123 = vmatpush.bf16.xpose.msra.mxu0 0
        %8124 = vmatpush.bf16.xpose.msra.mxu0 0
        %8125 = vmatpush.bf16.xpose.msra.mxu0 0
        %8126 = vmatpush.bf16.xpose.msra.mxu0 0
        %8127 = vmatpush.bf16.xpose.msra.mxu0 %v8118
        %8128 = vmatmul.bf16.gmra.mxu0 %v8115
        %v8129 = vpop.f32.mrf.mxu0
        %v8130 = vadd.f32 %v7258, %v8129
        %v8131 = vpop.f32.mrf.mxu0
        %8132 = vdwg.mxu0
        %v8133 = vsel %vm7309, %v8106, -inf
        %8134 = vmax.xlane.f32.xlu0 %v8133
        %v8135 = vpop.xlane.xlu0 %8134
        %v8136 = vsel %vm7309, %v8130, -inf
        %8137 = vmax.xlane.f32.xlu0 %v8136
        %v8138 = vpop.xlane.xlu0 %8137
        %v8139 = vsub.f32 %v8106, %v8135
        %v8140 = vsub.f32 %v8130, %v8138
        %v8141 = vmul.f32 %v8139, 1.442695
        %v8142 = vpow.pop %v8141
        %v8143 = vmul.f32 %v8140, 1.442695
        %v8144 = vpow.pop %v8143
        %v8145 = vsel %vm7309, %v8142, 0.0
        %8146 = vadd.xlane.f32.xlu0 %v8145
        %v8147 = vpop.xlane.xlu0 %8146
        %v8148 = vsel %vm7309, %v8144, 0.0
        %8149 = vadd.xlane.f32.xlu0 %v8148
        %v8150 = vpop.xlane.xlu0 %8149
        %v8151 = vrcp.pop %v8147
        %v8152 = vmul.f32 %v8147, %v8151
        %v8153 = vsub.f32 1.0, %v8152
        %v8154 = vmul.f32 %v8151, %v8153
        %v8155 = vadd.f32 %v8151, %v8154
        %vm8156 = vweird.f32 %v8147
        %vm8157 = vweird.f32 %v8151
        %vm8158 = vmor %vm8156, %vm8157
        %v8159 = vsel %vm8158, %v8151, %v8155
        %v8160 = vand.u32 2147483647, %v8147
        %vm8161 = vcmp.eq.f32.partialorder %v8160, 8.507059e+37
        %v8162 = vand.u32 %v8147, 2147483648
        %v8163 = vor.u32 1.1754944e-38, %v8162
        %v8164 = vsel %vm8161, %v8163, %v8159
        %v8165 = vmul.f32 %v8142, %v8164
        %v8166 = vrcp.pop %v8150
        %v8167 = vmul.f32 %v8150, %v8166
        %v8168 = vsub.f32 1.0, %v8167
        %v8169 = vmul.f32 %v8166, %v8168
        %v8170 = vadd.f32 %v8166, %v8169
        %vm8171 = vweird.f32 %v8150
        %vm8172 = vweird.f32 %v8166
        %vm8173 = vmor %vm8171, %vm8172
        %v8174 = vsel %vm8173, %v8166, %v8170
        %v8175 = vand.u32 2147483647, %v8150
        %vm8176 = vcmp.eq.f32.partialorder %v8175, 8.507059e+37
        %v8177 = vand.u32 %v8150, 2147483648
        %v8178 = vor.u32 1.1754944e-38, %v8177
        %v8179 = vsel %vm8176, %v8178, %v8174
        %v8180 = vmul.f32 %v8144, %v8179
        %v8181 = vpack.c.bf16 %v8165, %v8165
        %v8182 = vpack.c.bf16 %v8180, %v8180
        %8183 = vrot.lane.b32.xlu0 %v8087, 64
        %v8184 = vpop.permute.xlu0 %8183
        %v8186 = vsel %vm7309, %v8181, 0
        %v8189 = vsel %vm7365, %v8184, 0
        %8191 = vmatpush.bf16.msra.mxu0 0
        %8192 = vmatpush.bf16.msra.mxu0 0
        %8193 = vmatpush.bf16.msra.mxu0 0
        %8194 = vmatpush.bf16.msra.mxu0 0
        %8195 = vmatpush.bf16.msra.mxu0 0
        %8196 = vmatpush.bf16.msra.mxu0 0
        %8197 = vmatpush.bf16.msra.mxu0 0
        %8198 = vmatpush.bf16.msra.mxu0 %v8189
        %8199 = vmatmul.bf16.gmra.mxu0 %v8186
        %v8200 = vpop.f32.mrf.mxu0
        %v8201 = vadd.f32 0.0, %v8200
        %v8202 = vpop.f32.mrf.mxu0
        %8203 = vdwg.mxu0
        %8204 = vrot.lane.b32.xlu0 %v8111, 64
        %v8205 = vpop.permute.xlu0 %8204
        %v8207 = vsel %vm7309, %v8182, 0
        %v8210 = vsel %vm7365, %v8205, 0
        %8212 = vmatpush.bf16.msra.mxu0 0
        %8213 = vmatpush.bf16.msra.mxu0 0
        %8214 = vmatpush.bf16.msra.mxu0 0
        %8215 = vmatpush.bf16.msra.mxu0 0
        %8216 = vmatpush.bf16.msra.mxu0 0
        %8217 = vmatpush.bf16.msra.mxu0 0
        %8218 = vmatpush.bf16.msra.mxu0 0
        %8219 = vmatpush.bf16.msra.mxu0 %v8210
        %8220 = vmatmul.bf16.gmra.mxu0 %v8207
        %v8221 = vpop.f32.mrf.mxu0
        %v8222 = vadd.f32 0.0, %v8221
        %v8223 = vpop.f32.mrf.mxu0
        %8224 = vdwg.mxu0
        %v8225 = vpack.c.bf16 %v8201, %v8201
        %v8226 = vpack.c.bf16 %v8222, %v8222
        %s8227 = scalar_lea.vmem [#allocation11], 32
        %v8228 = vld [vmem:[%s8227] sm:$0xf]
        %v8229 = vld [vmem:[%s8227 + $0x4] sm:$0xf]
        %v8230 = vld [vmem:[%s8227 + $0x8] sm:$0xf]
        %v8231 = vld [vmem:[%s8227 + $0xc] sm:$0xf]
        %v8234 = vunpack.c.l.b16 %v8228
        %v8235 = vunpack.c.l.b16 %v8229
        %v8236 = vpack.c.b16 %v8235, %v8234
        %v8239 = vsel %vm7265, %v8225, 0
        %8241 = vmatpush.bf16.msra.mxu0 0
        %8242 = vmatpush.bf16.msra.mxu0 0
        %8243 = vmatpush.bf16.msra.mxu0 0
        %8244 = vmatpush.bf16.msra.mxu0 0
        %8245 = vmatpush.bf16.msra.mxu0 0
        %8246 = vmatpush.bf16.msra.mxu0 0
        %8247 = vmatpush.bf16.msra.mxu0 0
        %8248 = vmatpush.bf16.msra.mxu0 %v8236
        %8249 = vmatmul.bf16.gmra.mxu0 %v8239
        %v8250 = vpop.f32.mrf.mxu0
        %v8251 = vadd.f32 0.0, %v8250
        %v8252 = vpop.f32.mrf.mxu0
        %8253 = vdwg.mxu0
        %v8256 = vunpack.c.l.b16 %v8230
        %v8257 = vunpack.c.l.b16 %v8231
        %v8258 = vpack.c.b16 %v8257, %v8256
        %v8261 = vsel %vm7265, %v8226, 0
        %8263 = vmatpush.bf16.msra.mxu0 0
        %8264 = vmatpush.bf16.msra.mxu0 0
        %8265 = vmatpush.bf16.msra.mxu0 0
        %8266 = vmatpush.bf16.msra.mxu0 0
        %8267 = vmatpush.bf16.msra.mxu0 0
        %8268 = vmatpush.bf16.msra.mxu0 0
        %8269 = vmatpush.bf16.msra.mxu0 0
        %8270 = vmatpush.bf16.msra.mxu0 %v8258
        %8271 = vmatmul.bf16.gmra.mxu0 %v8261
        %v8272 = vpop.f32.mrf.mxu0
        %v8273 = vadd.f32 0.0, %v8272
        %v8274 = vpop.f32.mrf.mxu0
        %8275 = vdwg.mxu0
        %s8276 = scalar_lea.vmem [#allocation13], 2
        %v8277 = vld [vmem:[%s8276] sm:$0x1]
        %v8279 = vperm.slane %v8277, 0
        %v8281 = vadd.f32 %v8279, %v8251
        %v8282 = vadd.f32 %v8281, %v8273
        %v8283 = vadd.f32 %v8035, %v8282
        %s8284 = scalar_lea.vmem [#allocation19], 2
        %v8285 = vld [vmem:[%s8284] sm:$0x1]
        %s8286 = scalar_lea.vmem [#allocation20], 2
        %v8287 = vld [vmem:[%s8286] sm:$0x1]
        %v8288 = vsel %vm7230, %v8283, 0.0
        %8289 = vadd.xlane.f32.xlu0 %v8288
        %v8290 = vpop.xlane.xlu0 %8289
        %v8291 = vmul.f32 %v8290, %v7471
        %v8292 = vsub.f32 %v8283, %v8291
        %v8293 = vmul.f32 %v8292, %v8292
        %v8294 = vsel %vm7230, %v8293, 0.0
        %8295 = vadd.xlane.f32.xlu0 %v8294
        %v8296 = vpop.xlane.xlu0 %8295
        %v8297 = vmul.f32 %v8296, %v7471
        %v8298 = vadd.f32 %v8297, 1e-05
        %v8299 = vrsqrt.pop %v8298
        %v8300 = vmul.f32 %v8299, %v8298
        %v8301 = vmul.f32 %v8300, %v8299
        %v8302 = vmul.f32 0.5, %v8301
        %v8303 = vsub.f32 1.5, %v8302
        %v8304 = vmul.f32 %v8299, %v8303
        %vm8305 = vweird.f32 %v8298
        %vm8306 = vweird.f32 %v8299
        %vm8307 = vmor %vm8305, %vm8306
        %v8308 = vsel %vm8307, %v8299, %v8304
        %v8309 = vmul.f32 %v8292, %v8308
        %v8311 = vperm.slane %v8285, 0
        %v8313 = vmul.f32 %v8309, %v8311
        %v8315 = vperm.slane %v8287, 0
        %v8317 = vadd.f32 %v8313, %v8315
        %v8318 = vpack.c.bf16 %v8317, %v8317
        %s8319 = scalar_lea.vmem [#allocation14], 32
        %v8320 = vld [vmem:[%s8319] sm:$0xf]
        %v8321 = vld [vmem:[%s8319 + $0x4] sm:$0xf]
        %v8322 = vld [vmem:[%s8319 + $0x8] sm:$0xf]
        %v8323 = vld [vmem:[%s8319 + $0xc] sm:$0xf]
        %s8324 = scalar_lea.vmem [#allocation16], 2
        %v8325 = vld [vmem:[%s8324] sm:$0x1]
        %v8327 = vperm.slane %v8325, 0
        %v8333 = vunpack.c.l.b16 %v8320
        %v8334 = vunpack.c.l.b16 %v8321
        %v8335 = vunpack.c.l.b16 %v8322
        %v8336 = vunpack.c.l.b16 %v8323
        %v8337 = vpack.c.b16 %v8334, %v8333
        %v8338 = vpack.c.b16 %v8336, %v8335
        %v8342 = vsel %vm7230, %v8318, 0
        %8344 = vmatpush.bf16.msra.mxu0 0
        %8345 = vmatpush.bf16.msra.mxu0 0
        %8346 = vmatpush.bf16.msra.mxu0 0
        %8347 = vmatpush.bf16.msra.mxu0 0
        %8348 = vmatpush.bf16.msra.mxu0 0
        %8349 = vmatpush.bf16.msra.mxu0 0
        %8350 = vmatpush.bf16.msra.mxu0 %v8338
        %8351 = vmatpush.bf16.msra.mxu0 %v8337
        %8352 = vmatmul.bf16.gmra.mxu0 %v8342
        %v8353 = vpop.f32.mrf.mxu0
        %v8354 = vadd.f32 %v8327, %v8353
        %v8355 = vpop.f32.mrf.mxu0
        %8356 = vdwg.mxu0
        %v8357 = vmax.f32 %v8354, 0.0
        %v8358 = vpack.c.bf16 %v8357, %v8357
        %s8359 = scalar_lea.vmem %s13, 64
        %v8360 = vld [vmem:[%s8359] sm:$0xf]
        %v8361 = vld [vmem:[%s8359 + $0x4] sm:$0xf]
        %v8362 = vld [vmem:[%s8359 + $0x8] sm:$0xf]
        %v8363 = vld [vmem:[%s8359 + $0xc] sm:$0xf]
        %v8364 = vld [vmem:[%s8359 + $0x10] sm:$0xf]
        %v8365 = vld [vmem:[%s8359 + $0x14] sm:$0xf]
        %v8366 = vld [vmem:[%s8359 + $0x18] sm:$0xf]
        %v8367 = vld [vmem:[%s8359 + $0x1c] sm:$0xf]
        %s8368 = scalar_lea.vmem [#allocation17], 2
        %v8369 = vld [vmem:[%s8368] sm:$0x1]
        %v8371 = vperm.slane %v8369, 0
        %v8381 = vunpack.c.l.b16 %v8360
        %v8382 = vunpack.c.l.b16 %v8361
        %v8383 = vunpack.c.l.b16 %v8362
        %v8384 = vunpack.c.l.b16 %v8363
        %v8385 = vunpack.c.l.b16 %v8364
        %v8386 = vunpack.c.l.b16 %v8365
        %v8387 = vunpack.c.l.b16 %v8366
        %v8388 = vunpack.c.l.b16 %v8367
        %v8389 = vpack.c.b16 %v8382, %v8381
        %v8390 = vpack.c.b16 %v8384, %v8383
        %v8391 = vpack.c.b16 %v8386, %v8385
        %v8392 = vpack.c.b16 %v8388, %v8387
        %v8398 = vsel %vm7574, %v8358, 0
        %8400 = vmatpush.bf16.msra.mxu0 0
        %8401 = vmatpush.bf16.msra.mxu0 0
        %8402 = vmatpush.bf16.msra.mxu0 0
        %8403 = vmatpush.bf16.msra.mxu0 0
        %8404 = vmatpush.bf16.msra.mxu0 %v8392
        %8405 = vmatpush.bf16.msra.mxu0 %v8391
        %8406 = vmatpush.bf16.msra.mxu0 %v8390
        %8407 = vmatpush.bf16.msra.mxu0 %v8389
        %8408 = vmatmul.bf16.gmra.mxu0 %v8398
        %v8409 = vpop.f32.mrf.mxu0
        %v8410 = vadd.f32 %v8371, %v8409
        %v8411 = vpop.f32.mrf.mxu0
        %8412 = vdwg.mxu0
        %v8413 = vadd.f32 %v8317, %v8410
        %s8414 = scalar_lea.vmem [#allocation22], 2
        %v8415 = vld [vmem:[%s8414] sm:$0x1]
        %s8416 = scalar_lea.vmem [#allocation23], 2
        %v8417 = vld [vmem:[%s8416] sm:$0x1]
        %v8418 = vsel %vm7230, %v8413, 0.0
        %8419 = vadd.xlane.f32.xlu0 %v8418
        %v8420 = vpop.xlane.xlu0 %8419
        %v8421 = vmul.f32 %v8420, %v7471
        %v8422 = vsub.f32 %v8413, %v8421
        %v8423 = vmul.f32 %v8422, %v8422
        %v8424 = vsel %vm7230, %v8423, 0.0
        %8425 = vadd.xlane.f32.xlu0 %v8424
        %v8426 = vpop.xlane.xlu0 %8425
        %v8427 = vmul.f32 %v8426, %v7471
        %v8428 = vadd.f32 %v8427, 1e-05
        %v8429 = vrsqrt.pop %v8428
        %v8430 = vmul.f32 %v8429, %v8428
        %v8431 = vmul.f32 %v8430, %v8429
        %v8432 = vmul.f32 0.5, %v8431
        %v8433 = vsub.f32 1.5, %v8432
        %v8434 = vmul.f32 %v8429, %v8433
        %vm8435 = vweird.f32 %v8428
        %vm8436 = vweird.f32 %v8429
        %vm8437 = vmor %vm8435, %vm8436
        %v8438 = vsel %vm8437, %v8429, %v8434
        %v8439 = vmul.f32 %v8422, %v8438
        %v8441 = vperm.slane %v8415, 0
        %v8443 = vmul.f32 %v8439, %v8441
        %v8445 = vperm.slane %v8417, 0
        %v8447 = vadd.f32 %v8443, %v8445
        %v8448 = vsel %vm7230, %v8447, 0.0
        %v8449 = vrot.slane %v8448, 4
        %v8450 = vadd.f32 %v8448, %v8449
        %v8451 = vrot.slane %v8450, 2
        %v8452 = vadd.f32 %v8450, %v8451
        %v8453 = vrot.slane %v8452, 1
        %v8454 = vadd.f32 %v8452, %v8453
        %v8455 = vrcp.pop 8.0
        %v8456 = vmul.f32 8.0, %v8455
        %v8457 = vsub.f32 1.0, %v8456
        %v8458 = vmul.f32 %v8455, %v8457
        %v8459 = vadd.f32 %v8455, %v8458
        %vm8460 = vweird.f32 %v8455
        %v8461 = vsel %vm8460, %v8455, %v8459
        %v8462 = vmul.f32 %v8454, %v8461
        %v8463 = vpack.c.bf16 %v8462, %v8462
        %v8464 = vld [vmem:[#allocation25] sm:$0xf]
        %v8465 = vld [vmem:[#allocation25 + $0x4] sm:$0xf]
        %v8466 = vld [vmem:[#allocation25 + $0x8] sm:$0xf]
        %v8467 = vld [vmem:[#allocation25 + $0xc] sm:$0xf]
        %v8468 = vld [vmem:[#allocation26] sm:$0x1]
        %v8473 = vunpack.c.l.b16 %v8464
        %v8474 = vunpack.c.l.b16 %v8465
        %v8475 = vunpack.c.l.b16 %v8466
        %v8476 = vunpack.c.l.b16 %v8467
        %v8477 = vpack.c.b16 %v8474, %v8473
        %v8478 = vpack.c.b16 %v8476, %v8475
        %v8482 = vsel %vm7230, %v8463, 0
        %8484 = vmatpush.bf16.msra.mxu0 0
        %8485 = vmatpush.bf16.msra.mxu0 0
        %8486 = vmatpush.bf16.msra.mxu0 0
        %8487 = vmatpush.bf16.msra.mxu0 0
        %8488 = vmatpush.bf16.msra.mxu0 0
        %8489 = vmatpush.bf16.msra.mxu0 0
        %8490 = vmatpush.bf16.msra.mxu0 %v8478
        %8491 = vmatpush.bf16.msra.mxu0 %v8477
        %8492 = vmatmul.bf16.gmra.mxu0 %v8482
        %v8493 = vpop.f32.mrf.mxu0
        %v8494 = vadd.f32 %v8468, %v8493
        %v8495 = vpop.f32.mrf.mxu0
        %8496 = vdwg.mxu0
        %vm8497 = vcmask 1040384
        %v8498 = vsel %vm8497, %v8494, -inf
        %8499 = vmax.xlane.f32.xlu0 %v8498
        %v8500 = vpop.xlane.xlu0 %8499
        %v8501 = vsub.f32 %v8494, %v8500
        %v8502 = vmul.f32 %v8501, 1.442695
        %v8503 = vpow.pop %v8502
        %v8504 = vsel %vm8497, %v8503, 0.0
        %8505 = vadd.xlane.f32.xlu0 %v8504
        %v8506 = vpop.xlane.xlu0 %8505
        %v8507 = vlog2.pop %v8506
        %v8508 = vmul.f32 %v8507, 0.6931472
        %v8509 = vsub.f32 %v8501, %v8508
        %8510 = vst [vmem:[%s918] sm:$0x1] %v8509
        %s8511 = sand.u32 %s503, 1
        %s8512 = scalar_lea.sflag [#allocation4], %s8511
        %s8513 = sand.u32 %s503, 1
        %s8514 = scalar_lea.vmem [#allocation28], %s8513
        // Predicated region
        $region169: #{mynet_video_forward.1} parent=103 // pred_check
          %p8515 = pneg %p513
        $region170: #{mynet_video_forward.1} parent=103 // pred_check_branch
          %8517 = sbr.rel (%p8515) target = $region172
        $region171: #{mynet_video_forward.1} parent=103 // pred_region
          %8519 = vsyncadd %s8512, 0
          %s8520 = scalar_lea.hbm %s21, %s44
          %s8522 = sshll.u32 %s8514, 4
          %s8523 = int_to_ptr.vmem [resolvable:$true] %s8522
          %s8524 = sshll.u32 %s8520, 4
          %s8525 = int_to_ptr.hbm [resolvable:$true] %s8524
          %8527 = dma.vmem_to_hbm [thread:$0]  %s8523, 16, %s8525, %s8512
        $region172: #{mynet_video_forward.1} parent=103 // pred_fallthru
          _
      $region104: #{mynet_video_forward.1} parent=5 // pred_fallthru
        _
      %p8528 = scmp.le.s32.totalorder 2, %s39
      // Predicated region
      $region173: #{mynet_video_forward.1} parent=5 // pred_check
        %p8529 = pneg %p8528
      $region174: #{mynet_video_forward.1} parent=5 // pred_check_branch
        %8531 = sbr.rel (%p8529) target = $region176
      $region175: #{mynet_video_forward.1} parent=5 // pred_region
        %s8532 = ssub.s32 %s39, 2
        // Predicated region
        $region177: #{mynet_video_forward.1} parent=175 // pred_check
          %p8533 = pneg %p519
        $region178: #{mynet_video_forward.1} parent=175 // pred_check_branch
          %8535 = sbr.rel (%p8533) target = $region180
        $region179: #{mynet_video_forward.1} parent=175 // pred_region
          %s8536 = sand.u32 %s504, 1
          %s8537 = scalar_lea.sflag [#allocation4], %s8536
          %s8538 = sand.u32 %s504, 1
          %s8539 = scalar_lea.vmem [#allocation28], %s8538
          %8541 = dma.done %s8537, 16
        $region180: #{mynet_video_forward.1} parent=175 // pred_fallthru
          _
      $region176: #{mynet_video_forward.1} parent=5 // pred_fallthru
        _
    $region6: #{mynet_video_forward.1} parent=1 // loop_footer
      %s43 = sadd.s32 1, %s39
    $region7: #{mynet_video_forward.1} parent=1 // loop_footer_branch
      %38 = sbr.rel target = $region3
    $region8: #{mynet_video_forward.1} parent=1 // loop_exit
      _
    %8542 = vsyncpa [#allocation3], 1
    %s8543 = scalar_lea.sflag [#allocation3], 1
    %8544 = vsyncpa %s8543, 1
    %8545 = vsyncpa [#allocation6], 1
    %8546 = vsyncpa [#allocation9], 1
    %8547 = vsyncpa [#allocation12], 1
    %8548 = vsyncpa [#allocation15], 1
    %8549 = vsyncpa [#allocation18], 1
    %8550 = vsyncpa [#allocation21], 1
    %8551 = vsyncpa [#allocation24], 1
    %8552 = vsyncpa [#allocation27], 1
    %8553 = vsyncpa [#allocation4], 1
    %s8554 = scalar_lea.sflag [#allocation4], 1
    %8555 = vsyncpa %s8554, 1

</llo_original>
